<compile_context>
chip_gen: v6e
topology: v6e:2x2x1
jax: 0.10.0
libtpu: 0.0.40
codegen_flags: <defaults>
</compile_context>

<pallas_src>
import functools

import jax
import jax.numpy as jnp
import numpy as np
from jax.experimental import pallas as pl
from jax.experimental.pallas import tpu as pltpu


def _round_up(x, m):
    return (x + m - 1) // m * m


# ---------------------------------------------------------------------------
# Pallas kernel: grid = (N,).  One batch element per grid step.
# ---------------------------------------------------------------------------
def _inception_kernel(x_ref, w_ref, b_ref, o_ref, patch_ref, *,
                      K, Cin_p, Wp, L_OUT, L_SLAB):
    """
    x_ref:     (1, Cin_p, FL)        bf16 zero-padded, spatially-flattened NCHW image
    w_ref:     (Cout_p, K*K*Cin_p)   bf16 folded weights; column = (kh*K + kw)*Cin_p + c
    b_ref:     (Cout_p, 1)           f32 folded bias
    o_ref:     (1, Cout_p, L_OUT)    f32 flat output (valid columns extracted in wrapper)
    patch_ref: (K*K*Cin_p, L_OUT)    bf16 im2col patch scratch (single buffer)
    """
    # im2col build: one hoisted slab load per kh; the K kw-shifted copies are static
    # register slices of that slab (XLU lane shifts, off the vld slot); every store
    # is a sublane-aligned bf16 block.
    for kh in range(K):                          # static unroll: all offsets compile-time
        base = kh * Wp
        slab = x_ref[0, :, base:base + L_SLAB]   # (Cin_p, L_SLAB), ONE load per kh
        for kw in range(K):
            r0 = (kh * K + kw) * Cin_p
            patch_ref[r0:r0 + Cin_p, :] = slab[:, kw:kw + L_OUT]

    # ONE deep MXU matmul per image (contraction depth K*K*Cin_p), f32 accumulation.
    acc = jnp.dot(w_ref[...], patch_ref[...], preferred_element_type=jnp.float32)
    o_ref[0] = (acc + b_ref[...]).astype(o_ref.dtype)


# ---------------------------------------------------------------------------
# Wrapper: parameter folding + layout glue + pallas_call (NCHW in, NCHW out)
# ---------------------------------------------------------------------------
def inception_block_v1_pallas(x_nchw, weights, biases, num_kernels=6):
    """weights[i]: (Cout, Cin, 2i+1, 2i+1) OIHW; biases[i]: (Cout,); x: NCHW."""
    N, Cin, H, W = x_nchw.shape
    Cout = weights[0].shape[0]
    K = 2 * (num_kernels - 1) + 1               # largest kernel size (11)
    pad = (K - 1) // 2
    Hp, Wp = H + 2 * pad, W + 2 * pad

    cdt = jnp.bfloat16                          # MXU-input dtype for x / weights / patch
    sub = 16                                    # bf16 sublane tile -> aligned patch stores
    Cin_p = _round_up(Cin, sub)
    Cout_p = _round_up(Cout, 8)                 # output stays f32
    L_OUT = _round_up(H * Wp, 128)              # lane-dense output width
    L_SLAB = L_OUT + (K - 1)                    # per-kh slab width
    # Flat input length: one pad call (extra bottom rows) covers halo + im2col overrun.
    needed = (K - 1) * Wp + L_SLAB
    extra_rows = max(0, -(-(needed - Hp * Wp) // Wp))
    FL = (Hp + extra_rows) * Wp

    # --- fold the 6 branches into one effective K x K conv (exact for zero padding) ---
    w_eff = jnp.zeros((Cout_p, Cin_p, K, K), jnp.float32)
    b_eff = jnp.zeros((Cout_p,), jnp.float32)
    for i, (w, b) in enumerate(zip(weights, biases)):
        s = 2 * i + 1
        p = (K - s) // 2
        w_eff = w_eff.at[:Cout, :Cin, p:p + s, p:p + s].add(w.astype(jnp.float32))
        b_eff = b_eff.at[:Cout].add(b.astype(jnp.float32))
    w_eff = w_eff / num_kernels
    b_eff = (b_eff / num_kernels).reshape(Cout_p, 1)
    # (co, c, kh, kw) -> (co, kh, kw, c) -> (Cout_p, K*K*Cin_p); col = (kh*K+kw)*Cin_p + c
    w_arr = jnp.transpose(w_eff, (0, 2, 3, 1)).reshape(Cout_p, K * K * Cin_p).astype(cdt)

    # --- input: NCHW, bf16, ONE pad (channels + spatial halo + extra rows), flatten ---
    x_p = jnp.pad(x_nchw.astype(cdt),
                  ((0, 0), (0, Cin_p - Cin), (pad, pad + extra_rows), (pad, pad)))
    x_flat = x_p.reshape(N, Cin_p, FL)

    kernel = functools.partial(_inception_kernel, K=K, Cin_p=Cin_p, Wp=Wp,
                               L_OUT=L_OUT, L_SLAB=L_SLAB)

    def _const_spec(shape, nbytes):
        imap = lambda n: (0,) * len(shape)
        # Grid-invariant block: single-buffer it once it is big enough for the second
        # pipeline buffer to matter for VMEM (v7x 64 MiB budget); tiny blocks keep the
        # default pipeline.
        if nbytes >= (1 << 20):
            try:
                return pl.BlockSpec(shape, imap, pipeline_mode=pl.Buffered(1))
            except (TypeError, AttributeError):
                pass
        return pl.BlockSpec(shape, imap)

    flops = 2 * N * Cout_p * (K * K * Cin_p) * L_OUT
    bytes_accessed = (x_flat.size * 2 + w_arr.size * 2
                      + b_eff.size * 4 + N * Cout_p * L_OUT * 4)

    out_flat = pl.pallas_call(
        kernel,
        out_shape=jax.ShapeDtypeStruct((N, Cout_p, L_OUT), jnp.float32),
        grid=(N,),
        in_specs=[
            pl.BlockSpec((1, Cin_p, FL), lambda n: (n, 0, 0)),
            _const_spec((Cout_p, K * K * Cin_p), Cout_p * K * K * Cin_p * 2),
            _const_spec((Cout_p, 1), Cout_p * 4),
        ],
        out_specs=pl.BlockSpec((1, Cout_p, L_OUT), lambda n: (n, 0, 0)),
        scratch_shapes=[pltpu.VMEM((K * K * Cin_p, L_OUT), cdt)],
        compiler_params=pltpu.CompilerParams(dimension_semantics=("parallel",)),
        cost_estimate=pl.CostEstimate(flops=int(flops), transcendentals=0,
                                      bytes_accessed=int(bytes_accessed)),
    )(x_flat, w_arr, b_eff)

    # Un-flatten: drop padded channels / garbage columns.  Already NCHW-ordered.
    out = out_flat[:, :Cout, :H * Wp].reshape(N, Cout, H, Wp)[:, :, :, :W]
    return out.astype(x_nchw.dtype)


# ---------------------------------------------------------------------------
# Pure-JAX reference (branch-by-branch, like the PyTorch forward)
# ---------------------------------------------------------------------------
def inception_block_v1_ref(x_nchw, weights, biases, num_kernels=6):
    outs = []
    for i, (w, b) in enumerate(zip(weights, biases)):
        y = jax.lax.conv_general_dilated(
            x_nchw, w, window_strides=(1, 1), padding=((i, i), (i, i)),
            dimension_numbers=("NCHW", "OIHW", "NCHW"),
        )
        outs.append(y + b.reshape(1, -1, 1, 1))
    return jnp.mean(jnp.stack(outs, axis=-1), axis=-1)


# ---------------------------------------------------------------------------
# Deterministic parameter init (kaiming_normal, mode='fan_out', relu; bias=0)
# ---------------------------------------------------------------------------
def init_params(key, in_channels, out_channels, num_kernels=6):
    weights, biases = [], []
    for i in range(num_kernels):
        s = 2 * i + 1
        key, sub = jax.random.split(key)
        fan_out = out_channels * s * s
        std = float(np.sqrt(2.0 / fan_out))
        w = std * jax.random.normal(sub, (out_channels, in_channels, s, s),
                                    dtype=jnp.float32)
        weights.append(w)
        biases.append(jnp.zeros((out_channels,), jnp.float32))
    return weights, biases


if __name__ == "__main__":
    key = jax.random.PRNGKey(0)
    N, Cin, Cout, H, W = 2, 4, 8, 16, 16
    num_kernels = 6

    key, xk = jax.random.split(key)
    x = jax.random.normal(xk, (N, Cin, H, W), dtype=jnp.float32)
    weights, biases = init_params(key, Cin, Cout, num_kernels)

    fwd = jax.jit(functools.partial(inception_block_v1_pallas,
                                    num_kernels=num_kernels))
    out = jax.block_until_ready(fwd(x, weights, biases))

    ref = inception_block_v1_ref(x, weights, biases, num_kernels)
    assert out.shape == (N, Cout, H, W), out.shape
    # bf16 data path with f32 accumulation: ~1e-2 relative tolerance.
    np.testing.assert_allclose(np.asarray(out), np.asarray(ref),
                               rtol=2e-2, atol=2e-2)
    print("KERNEL_OK")
</pallas_src>

<mosaic_0001>
module attributes {stable_mosaic.version = 11 : i64} {
  func.func @_inception_kernel(%arg0: i32, %arg1: memref<1x16x806xbf16, #tpu.memory_space<vmem>>, %arg2: memref<8x1936xbf16, #tpu.memory_space<vmem>>, %arg3: memref<8x1xf32, #tpu.memory_space<vmem>>, %arg4: memref<1x8x512xf32, #tpu.memory_space<vmem>>, %arg5: memref<1936x512xbf16, #tpu.memory_space<vmem>>) attributes {dimension_semantics = [#tpu.dimension_semantics<parallel>], iteration_bounds = array<i64: 2>, scalar_prefetch = 0 : i64, scratch_operands = 1 : i64, tpu.core_type = #tpu.core_type<tc>, window_params = [{transform_indices = @transform_0, window_bounds = array<i64: 1, 16, 806>}, {pipeline_mode = #tpu.pipeline_mode<synchronous>, transform_indices = @transform_1, window_bounds = array<i64: 8, 1936>}, {pipeline_mode = #tpu.pipeline_mode<synchronous>, transform_indices = @transform_2, window_bounds = array<i64: 8, 1>}, {transform_indices = @transform_3, window_bounds = array<i64: 1, 8, 512>}]} {
    %c0 = arith.constant 0 : index
    %c0_0 = arith.constant 0 : index
    %c0_1 = arith.constant 0 : index
    %0 = vector.load %arg1[%c0, %c0_0, %c0_1] : memref<1x16x806xbf16, #tpu.memory_space<vmem>>, vector<1x16x522xbf16>
    %1 = vector.shape_cast %0 : vector<1x16x522xbf16> to vector<16x522xbf16>
    %2 = vector.extract_strided_slice %1 {offsets = [0, 0], sizes = [16, 512], strides = [1, 1]} : vector<16x522xbf16> to vector<16x512xbf16>
    %c0_2 = arith.constant 0 : index
    %c0_3 = arith.constant 0 : index
    %3 = vector.load %arg5[%c0_2, %c0_3] : memref<1936x512xbf16, #tpu.memory_space<vmem>>, vector<16x512xbf16>
    tpu.vector_store %arg5[%c0_2, %c0_3], %2 {strides = array<i32>} : memref<1936x512xbf16, #tpu.memory_space<vmem>>, vector<16x512xbf16>,
    %4 = vector.extract_strided_slice %1 {offsets = [0, 1], sizes = [16, 512], strides = [1, 1]} : vector<16x522xbf16> to vector<16x512xbf16>
    %c16 = arith.constant 16 : index
    %c0_4 = arith.constant 0 : index
    %5 = vector.load %arg5[%c16, %c0_4] : memref<1936x512xbf16, #tpu.memory_space<vmem>>, vector<16x512xbf16>
    tpu.vector_store %arg5[%c16, %c0_4], %4 {strides = array<i32>} : memref<1936x512xbf16, #tpu.memory_space<vmem>>, vector<16x512xbf16>,
    %6 = vector.extract_strided_slice %1 {offsets = [0, 2], sizes = [16, 512], strides = [1, 1]} : vector<16x522xbf16> to vector<16x512xbf16>
    %c32 = arith.constant 32 : index
    %c0_5 = arith.constant 0 : index
    %7 = vector.load %arg5[%c32, %c0_5] : memref<1936x512xbf16, #tpu.memory_space<vmem>>, vector<16x512xbf16>
    tpu.vector_store %arg5[%c32, %c0_5], %6 {strides = array<i32>} : memref<1936x512xbf16, #tpu.memory_space<vmem>>, vector<16x512xbf16>,
    %8 = vector.extract_strided_slice %1 {offsets = [0, 3], sizes = [16, 512], strides = [1, 1]} : vector<16x522xbf16> to vector<16x512xbf16>
    %c48 = arith.constant 48 : index
    %c0_6 = arith.constant 0 : index
    %9 = vector.load %arg5[%c48, %c0_6] : memref<1936x512xbf16, #tpu.memory_space<vmem>>, vector<16x512xbf16>
    tpu.vector_store %arg5[%c48, %c0_6], %8 {strides = array<i32>} : memref<1936x512xbf16, #tpu.memory_space<vmem>>, vector<16x512xbf16>,
    %10 = vector.extract_strided_slice %1 {offsets = [0, 4], sizes = [16, 512], strides = [1, 1]} : vector<16x522xbf16> to vector<16x512xbf16>
    %c64 = arith.constant 64 : index
    %c0_7 = arith.constant 0 : index
    %11 = vector.load %arg5[%c64, %c0_7] : memref<1936x512xbf16, #tpu.memory_space<vmem>>, vector<16x512xbf16>
    tpu.vector_store %arg5[%c64, %c0_7], %10 {strides = array<i32>} : memref<1936x512xbf16, #tpu.memory_space<vmem>>, vector<16x512xbf16>,
    %12 = vector.extract_strided_slice %1 {offsets = [0, 5], sizes = [16, 512], strides = [1, 1]} : vector<16x522xbf16> to vector<16x512xbf16>
    %c80 = arith.constant 80 : index
    %c0_8 = arith.constant 0 : index
    %13 = vector.load %arg5[%c80, %c0_8] : memref<1936x512xbf16, #tpu.memory_space<vmem>>, vector<16x512xbf16>
    tpu.vector_store %arg5[%c80, %c0_8], %12 {strides = array<i32>} : memref<1936x512xbf16, #tpu.memory_space<vmem>>, vector<16x512xbf16>,
    %14 = vector.extract_strided_slice %1 {offsets = [0, 6], sizes = [16, 512], strides = [1, 1]} : vector<16x522xbf16> to vector<16x512xbf16>
    %c96 = arith.constant 96 : index
    %c0_9 = arith.constant 0 : index
    %15 = vector.load %arg5[%c96, %c0_9] : memref<1936x512xbf16, #tpu.memory_space<vmem>>, vector<16x512xbf16>
    tpu.vector_store %arg5[%c96, %c0_9], %14 {strides = array<i32>} : memref<1936x512xbf16, #tpu.memory_space<vmem>>, vector<16x512xbf16>,
    %16 = vector.extract_strided_slice %1 {offsets = [0, 7], sizes = [16, 512], strides = [1, 1]} : vector<16x522xbf16> to vector<16x512xbf16>
    %c112 = arith.constant 112 : index
    %c0_10 = arith.constant 0 : index
    %17 = vector.load %arg5[%c112, %c0_10] : memref<1936x512xbf16, #tpu.memory_space<vmem>>, vector<16x512xbf16>
    tpu.vector_store %arg5[%c112, %c0_10], %16 {strides = array<i32>} : memref<1936x512xbf16, #tpu.memory_space<vmem>>, vector<16x512xbf16>,
    %18 = vector.extract_strided_slice %1 {offsets = [0, 8], sizes = [16, 512], strides = [1, 1]} : vector<16x522xbf16> to vector<16x512xbf16>
    %c128 = arith.constant 128 : index
    %c0_11 = arith.constant 0 : index
    %19 = vector.load %arg5[%c128, %c0_11] : memref<1936x512xbf16, #tpu.memory_space<vmem>>, vector<16x512xbf16>
    tpu.vector_store %arg5[%c128, %c0_11], %18 {strides = array<i32>} : memref<1936x512xbf16, #tpu.memory_space<vmem>>, vector<16x512xbf16>,
    %20 = vector.extract_strided_slice %1 {offsets = [0, 9], sizes = [16, 512], strides = [1, 1]} : vector<16x522xbf16> to vector<16x512xbf16>
    %c144 = arith.constant 144 : index
    %c0_12 = arith.constant 0 : index
    %21 = vector.load %arg5[%c144, %c0_12] : memref<1936x512xbf16, #tpu.memory_space<vmem>>, vector<16x512xbf16>
    tpu.vector_store %arg5[%c144, %c0_12], %20 {strides = array<i32>} : memref<1936x512xbf16, #tpu.memory_space<vmem>>, vector<16x512xbf16>,
    %22 = vector.extract_strided_slice %1 {offsets = [0, 10], sizes = [16, 512], strides = [1, 1]} : vector<16x522xbf16> to vector<16x512xbf16>
    %c160 = arith.constant 160 : index
    %c0_13 = arith.constant 0 : index
    %23 = vector.load %arg5[%c160, %c0_13] : memref<1936x512xbf16, #tpu.memory_space<vmem>>, vector<16x512xbf16>
    tpu.vector_store %arg5[%c160, %c0_13], %22 {strides = array<i32>} : memref<1936x512xbf16, #tpu.memory_space<vmem>>, vector<16x512xbf16>,
    %c0_14 = arith.constant 0 : index
    %c0_15 = arith.constant 0 : index
    %c26 = arith.constant 26 : index
    %24 = vector.load %arg1[%c0_14, %c0_15, %c26] : memref<1x16x806xbf16, #tpu.memory_space<vmem>>, vector<1x16x522xbf16>
    %25 = vector.shape_cast %24 : vector<1x16x522xbf16> to vector<16x522xbf16>
    %26 = vector.extract_strided_slice %25 {offsets = [0, 0], sizes = [16, 512], strides = [1, 1]} : vector<16x522xbf16> to vector<16x512xbf16>
    %c176 = arith.constant 176 : index
    %c0_16 = arith.constant 0 : index
    %27 = vector.load %arg5[%c176, %c0_16] : memref<1936x512xbf16, #tpu.memory_space<vmem>>, vector<16x512xbf16>
    tpu.vector_store %arg5[%c176, %c0_16], %26 {strides = array<i32>} : memref<1936x512xbf16, #tpu.memory_space<vmem>>, vector<16x512xbf16>,
    %28 = vector.extract_strided_slice %25 {offsets = [0, 1], sizes = [16, 512], strides = [1, 1]} : vector<16x522xbf16> to vector<16x512xbf16>
    %c192 = arith.constant 192 : index
    %c0_17 = arith.constant 0 : index
    %29 = vector.load %arg5[%c192, %c0_17] : memref<1936x512xbf16, #tpu.memory_space<vmem>>, vector<16x512xbf16>
    tpu.vector_store %arg5[%c192, %c0_17], %28 {strides = array<i32>} : memref<1936x512xbf16, #tpu.memory_space<vmem>>, vector<16x512xbf16>,
    %30 = vector.extract_strided_slice %25 {offsets = [0, 2], sizes = [16, 512], strides = [1, 1]} : vector<16x522xbf16> to vector<16x512xbf16>
    %c208 = arith.constant 208 : index
    %c0_18 = arith.constant 0 : index
    %31 = vector.load %arg5[%c208, %c0_18] : memref<1936x512xbf16, #tpu.memory_space<vmem>>, vector<16x512xbf16>
    tpu.vector_store %arg5[%c208, %c0_18], %30 {strides = array<i32>} : memref<1936x512xbf16, #tpu.memory_space<vmem>>, vector<16x512xbf16>,
    %32 = vector.extract_strided_slice %25 {offsets = [0, 3], sizes = [16, 512], strides = [1, 1]} : vector<16x522xbf16> to vector<16x512xbf16>
    %c224 = arith.constant 224 : index
    %c0_19 = arith.constant 0 : index
    %33 = vector.load %arg5[%c224, %c0_19] : memref<1936x512xbf16, #tpu.memory_space<vmem>>, vector<16x512xbf16>
    tpu.vector_store %arg5[%c224, %c0_19], %32 {strides = array<i32>} : memref<1936x512xbf16, #tpu.memory_space<vmem>>, vector<16x512xbf16>,
    %34 = vector.extract_strided_slice %25 {offsets = [0, 4], sizes = [16, 512], strides = [1, 1]} : vector<16x522xbf16> to vector<16x512xbf16>
    %c240 = arith.constant 240 : index
    %c0_20 = arith.constant 0 : index
    %35 = vector.load %arg5[%c240, %c0_20] : memref<1936x512xbf16, #tpu.memory_space<vmem>>, vector<16x512xbf16>
    tpu.vector_store %arg5[%c240, %c0_20], %34 {strides = array<i32>} : memref<1936x512xbf16, #tpu.memory_space<vmem>>, vector<16x512xbf16>,
    %36 = vector.extract_strided_slice %25 {offsets = [0, 5], sizes = [16, 512], strides = [1, 1]} : vector<16x522xbf16> to vector<16x512xbf16>
    %c256 = arith.constant 256 : index
    %c0_21 = arith.constant 0 : index
    %37 = vector.load %arg5[%c256, %c0_21] : memref<1936x512xbf16, #tpu.memory_space<vmem>>, vector<16x512xbf16>
    tpu.vector_store %arg5[%c256, %c0_21], %36 {strides = array<i32>} : memref<1936x512xbf16, #tpu.memory_space<vmem>>, vector<16x512xbf16>,
    %38 = vector.extract_strided_slice %25 {offsets = [0, 6], sizes = [16, 512], strides = [1, 1]} : vector<16x522xbf16> to vector<16x512xbf16>
    %c272 = arith.constant 272 : index
    %c0_22 = arith.constant 0 : index
    %39 = vector.load %arg5[%c272, %c0_22] : memref<1936x512xbf16, #tpu.memory_space<vmem>>, vector<16x512xbf16>
    tpu.vector_store %arg5[%c272, %c0_22], %38 {strides = array<i32>} : memref<1936x512xbf16, #tpu.memory_space<vmem>>, vector<16x512xbf16>,
    %40 = vector.extract_strided_slice %25 {offsets = [0, 7], sizes = [16, 512], strides = [1, 1]} : vector<16x522xbf16> to vector<16x512xbf16>
    %c288 = arith.constant 288 : index
    %c0_23 = arith.constant 0 : index
    %41 = vector.load %arg5[%c288, %c0_23] : memref<1936x512xbf16, #tpu.memory_space<vmem>>, vector<16x512xbf16>
    tpu.vector_store %arg5[%c288, %c0_23], %40 {strides = array<i32>} : memref<1936x512xbf16, #tpu.memory_space<vmem>>, vector<16x512xbf16>,
    %42 = vector.extract_strided_slice %25 {offsets = [0, 8], sizes = [16, 512], strides = [1, 1]} : vector<16x522xbf16> to vector<16x512xbf16>
    %c304 = arith.constant 304 : index
    %c0_24 = arith.constant 0 : index
    %43 = vector.load %arg5[%c304, %c0_24] : memref<1936x512xbf16, #tpu.memory_space<vmem>>, vector<16x512xbf16>
    tpu.vector_store %arg5[%c304, %c0_24], %42 {strides = array<i32>} : memref<1936x512xbf16, #tpu.memory_space<vmem>>, vector<16x512xbf16>,
    %44 = vector.extract_strided_slice %25 {offsets = [0, 9], sizes = [16, 512], strides = [1, 1]} : vector<16x522xbf16> to vector<16x512xbf16>
    %c320 = arith.constant 320 : index
    %c0_25 = arith.constant 0 : index
    %45 = vector.load %arg5[%c320, %c0_25] : memref<1936x512xbf16, #tpu.memory_space<vmem>>, vector<16x512xbf16>
    tpu.vector_store %arg5[%c320, %c0_25], %44 {strides = array<i32>} : memref<1936x512xbf16, #tpu.memory_space<vmem>>, vector<16x512xbf16>,
    %46 = vector.extract_strided_slice %25 {offsets = [0, 10], sizes = [16, 512], strides = [1, 1]} : vector<16x522xbf16> to vector<16x512xbf16>
    %c336 = arith.constant 336 : index
    %c0_26 = arith.constant 0 : index
    %47 = vector.load %arg5[%c336, %c0_26] : memref<1936x512xbf16, #tpu.memory_space<vmem>>, vector<16x512xbf16>
    tpu.vector_store %arg5[%c336, %c0_26], %46 {strides = array<i32>} : memref<1936x512xbf16, #tpu.memory_space<vmem>>, vector<16x512xbf16>,
    %c0_27 = arith.constant 0 : index
    %c0_28 = arith.constant 0 : index
    %c52 = arith.constant 52 : index
    %48 = vector.load %arg1[%c0_27, %c0_28, %c52] : memref<1x16x806xbf16, #tpu.memory_space<vmem>>, vector<1x16x522xbf16>
    %49 = vector.shape_cast %48 : vector<1x16x522xbf16> to vector<16x522xbf16>
    %50 = vector.extract_strided_slice %49 {offsets = [0, 0], sizes = [16, 512], strides = [1, 1]} : vector<16x522xbf16> to vector<16x512xbf16>
    %c352 = arith.constant 352 : index
    %c0_29 = arith.constant 0 : index
    %51 = vector.load %arg5[%c352, %c0_29] : memref<1936x512xbf16, #tpu.memory_space<vmem>>, vector<16x512xbf16>
    tpu.vector_store %arg5[%c352, %c0_29], %50 {strides = array<i32>} : memref<1936x512xbf16, #tpu.memory_space<vmem>>, vector<16x512xbf16>,
    %52 = vector.extract_strided_slice %49 {offsets = [0, 1], sizes = [16, 512], strides = [1, 1]} : vector<16x522xbf16> to vector<16x512xbf16>
    %c368 = arith.constant 368 : index
    %c0_30 = arith.constant 0 : index
    %53 = vector.load %arg5[%c368, %c0_30] : memref<1936x512xbf16, #tpu.memory_space<vmem>>, vector<16x512xbf16>
    tpu.vector_store %arg5[%c368, %c0_30], %52 {strides = array<i32>} : memref<1936x512xbf16, #tpu.memory_space<vmem>>, vector<16x512xbf16>,
    %54 = vector.extract_strided_slice %49 {offsets = [0, 2], sizes = [16, 512], strides = [1, 1]} : vector<16x522xbf16> to vector<16x512xbf16>
    %c384 = arith.constant 384 : index
    %c0_31 = arith.constant 0 : index
    %55 = vector.load %arg5[%c384, %c0_31] : memref<1936x512xbf16, #tpu.memory_space<vmem>>, vector<16x512xbf16>
    tpu.vector_store %arg5[%c384, %c0_31], %54 {strides = array<i32>} : memref<1936x512xbf16, #tpu.memory_space<vmem>>, vector<16x512xbf16>,
    %56 = vector.extract_strided_slice %49 {offsets = [0, 3], sizes = [16, 512], strides = [1, 1]} : vector<16x522xbf16> to vector<16x512xbf16>
    %c400 = arith.constant 400 : index
    %c0_32 = arith.constant 0 : index
    %57 = vector.load %arg5[%c400, %c0_32] : memref<1936x512xbf16, #tpu.memory_space<vmem>>, vector<16x512xbf16>
    tpu.vector_store %arg5[%c400, %c0_32], %56 {strides = array<i32>} : memref<1936x512xbf16, #tpu.memory_space<vmem>>, vector<16x512xbf16>,
    %58 = vector.extract_strided_slice %49 {offsets = [0, 4], sizes = [16, 512], strides = [1, 1]} : vector<16x522xbf16> to vector<16x512xbf16>
    %c416 = arith.constant 416 : index
    %c0_33 = arith.constant 0 : index
    %59 = vector.load %arg5[%c416, %c0_33] : memref<1936x512xbf16, #tpu.memory_space<vmem>>, vector<16x512xbf16>
    tpu.vector_store %arg5[%c416, %c0_33], %58 {strides = array<i32>} : memref<1936x512xbf16, #tpu.memory_space<vmem>>, vector<16x512xbf16>,
    %60 = vector.extract_strided_slice %49 {offsets = [0, 5], sizes = [16, 512], strides = [1, 1]} : vector<16x522xbf16> to vector<16x512xbf16>
    %c432 = arith.constant 432 : index
    %c0_34 = arith.constant 0 : index
    %61 = vector.load %arg5[%c432, %c0_34] : memref<1936x512xbf16, #tpu.memory_space<vmem>>, vector<16x512xbf16>
    tpu.vector_store %arg5[%c432, %c0_34], %60 {strides = array<i32>} : memref<1936x512xbf16, #tpu.memory_space<vmem>>, vector<16x512xbf16>,
    %62 = vector.extract_strided_slice %49 {offsets = [0, 6], sizes = [16, 512], strides = [1, 1]} : vector<16x522xbf16> to vector<16x512xbf16>
    %c448 = arith.constant 448 : index
    %c0_35 = arith.constant 0 : index
    %63 = vector.load %arg5[%c448, %c0_35] : memref<1936x512xbf16, #tpu.memory_space<vmem>>, vector<16x512xbf16>
    tpu.vector_store %arg5[%c448, %c0_35], %62 {strides = array<i32>} : memref<1936x512xbf16, #tpu.memory_space<vmem>>, vector<16x512xbf16>,
    %64 = vector.extract_strided_slice %49 {offsets = [0, 7], sizes = [16, 512], strides = [1, 1]} : vector<16x522xbf16> to vector<16x512xbf16>
    %c464 = arith.constant 464 : index
    %c0_36 = arith.constant 0 : index
    %65 = vector.load %arg5[%c464, %c0_36] : memref<1936x512xbf16, #tpu.memory_space<vmem>>, vector<16x512xbf16>
    tpu.vector_store %arg5[%c464, %c0_36], %64 {strides = array<i32>} : memref<1936x512xbf16, #tpu.memory_space<vmem>>, vector<16x512xbf16>,
    %66 = vector.extract_strided_slice %49 {offsets = [0, 8], sizes = [16, 512], strides = [1, 1]} : vector<16x522xbf16> to vector<16x512xbf16>
    %c480 = arith.constant 480 : index
    %c0_37 = arith.constant 0 : index
    %67 = vector.load %arg5[%c480, %c0_37] : memref<1936x512xbf16, #tpu.memory_space<vmem>>, vector<16x512xbf16>
    tpu.vector_store %arg5[%c480, %c0_37], %66 {strides = array<i32>} : memref<1936x512xbf16, #tpu.memory_space<vmem>>, vector<16x512xbf16>,
    %68 = vector.extract_strided_slice %49 {offsets = [0, 9], sizes = [16, 512], strides = [1, 1]} : vector<16x522xbf16> to vector<16x512xbf16>
    %c496 = arith.constant 496 : index
    %c0_38 = arith.constant 0 : index
    %69 = vector.load %arg5[%c496, %c0_38] : memref<1936x512xbf16, #tpu.memory_space<vmem>>, vector<16x512xbf16>
    tpu.vector_store %arg5[%c496, %c0_38], %68 {strides = array<i32>} : memref<1936x512xbf16, #tpu.memory_space<vmem>>, vector<16x512xbf16>,
    %70 = vector.extract_strided_slice %49 {offsets = [0, 10], sizes = [16, 512], strides = [1, 1]} : vector<16x522xbf16> to vector<16x512xbf16>
    %c512 = arith.constant 512 : index
    %c0_39 = arith.constant 0 : index
    %71 = vector.load %arg5[%c512, %c0_39] : memref<1936x512xbf16, #tpu.memory_space<vmem>>, vector<16x512xbf16>
    tpu.vector_store %arg5[%c512, %c0_39], %70 {strides = array<i32>} : memref<1936x512xbf16, #tpu.memory_space<vmem>>, vector<16x512xbf16>,
    %c0_40 = arith.constant 0 : index
    %c0_41 = arith.constant 0 : index
    %c78 = arith.constant 78 : index
    %72 = vector.load %arg1[%c0_40, %c0_41, %c78] : memref<1x16x806xbf16, #tpu.memory_space<vmem>>, vector<1x16x522xbf16>
    %73 = vector.shape_cast %72 : vector<1x16x522xbf16> to vector<16x522xbf16>
    %74 = vector.extract_strided_slice %73 {offsets = [0, 0], sizes = [16, 512], strides = [1, 1]} : vector<16x522xbf16> to vector<16x512xbf16>
    %c528 = arith.constant 528 : index
    %c0_42 = arith.constant 0 : index
    %75 = vector.load %arg5[%c528, %c0_42] : memref<1936x512xbf16, #tpu.memory_space<vmem>>, vector<16x512xbf16>
    tpu.vector_store %arg5[%c528, %c0_42], %74 {strides = array<i32>} : memref<1936x512xbf16, #tpu.memory_space<vmem>>, vector<16x512xbf16>,
    %76 = vector.extract_strided_slice %73 {offsets = [0, 1], sizes = [16, 512], strides = [1, 1]} : vector<16x522xbf16> to vector<16x512xbf16>
    %c544 = arith.constant 544 : index
    %c0_43 = arith.constant 0 : index
    %77 = vector.load %arg5[%c544, %c0_43] : memref<1936x512xbf16, #tpu.memory_space<vmem>>, vector<16x512xbf16>
    tpu.vector_store %arg5[%c544, %c0_43], %76 {strides = array<i32>} : memref<1936x512xbf16, #tpu.memory_space<vmem>>, vector<16x512xbf16>,
    %78 = vector.extract_strided_slice %73 {offsets = [0, 2], sizes = [16, 512], strides = [1, 1]} : vector<16x522xbf16> to vector<16x512xbf16>
    %c560 = arith.constant 560 : index
    %c0_44 = arith.constant 0 : index
    %79 = vector.load %arg5[%c560, %c0_44] : memref<1936x512xbf16, #tpu.memory_space<vmem>>, vector<16x512xbf16>
    tpu.vector_store %arg5[%c560, %c0_44], %78 {strides = array<i32>} : memref<1936x512xbf16, #tpu.memory_space<vmem>>, vector<16x512xbf16>,
    %80 = vector.extract_strided_slice %73 {offsets = [0, 3], sizes = [16, 512], strides = [1, 1]} : vector<16x522xbf16> to vector<16x512xbf16>
    %c576 = arith.constant 576 : index
    %c0_45 = arith.constant 0 : index
    %81 = vector.load %arg5[%c576, %c0_45] : memref<1936x512xbf16, #tpu.memory_space<vmem>>, vector<16x512xbf16>
    tpu.vector_store %arg5[%c576, %c0_45], %80 {strides = array<i32>} : memref<1936x512xbf16, #tpu.memory_space<vmem>>, vector<16x512xbf16>,
    %82 = vector.extract_strided_slice %73 {offsets = [0, 4], sizes = [16, 512], strides = [1, 1]} : vector<16x522xbf16> to vector<16x512xbf16>
    %c592 = arith.constant 592 : index
    %c0_46 = arith.constant 0 : index
    %83 = vector.load %arg5[%c592, %c0_46] : memref<1936x512xbf16, #tpu.memory_space<vmem>>, vector<16x512xbf16>
    tpu.vector_store %arg5[%c592, %c0_46], %82 {strides = array<i32>} : memref<1936x512xbf16, #tpu.memory_space<vmem>>, vector<16x512xbf16>,
    %84 = vector.extract_strided_slice %73 {offsets = [0, 5], sizes = [16, 512], strides = [1, 1]} : vector<16x522xbf16> to vector<16x512xbf16>
    %c608 = arith.constant 608 : index
    %c0_47 = arith.constant 0 : index
    %85 = vector.load %arg5[%c608, %c0_47] : memref<1936x512xbf16, #tpu.memory_space<vmem>>, vector<16x512xbf16>
    tpu.vector_store %arg5[%c608, %c0_47], %84 {strides = array<i32>} : memref<1936x512xbf16, #tpu.memory_space<vmem>>, vector<16x512xbf16>,
    %86 = vector.extract_strided_slice %73 {offsets = [0, 6], sizes = [16, 512], strides = [1, 1]} : vector<16x522xbf16> to vector<16x512xbf16>
    %c624 = arith.constant 624 : index
    %c0_48 = arith.constant 0 : index
    %87 = vector.load %arg5[%c624, %c0_48] : memref<1936x512xbf16, #tpu.memory_space<vmem>>, vector<16x512xbf16>
    tpu.vector_store %arg5[%c624, %c0_48], %86 {strides = array<i32>} : memref<1936x512xbf16, #tpu.memory_space<vmem>>, vector<16x512xbf16>,
    %88 = vector.extract_strided_slice %73 {offsets = [0, 7], sizes = [16, 512], strides = [1, 1]} : vector<16x522xbf16> to vector<16x512xbf16>
    %c640 = arith.constant 640 : index
    %c0_49 = arith.constant 0 : index
    %89 = vector.load %arg5[%c640, %c0_49] : memref<1936x512xbf16, #tpu.memory_space<vmem>>, vector<16x512xbf16>
    tpu.vector_store %arg5[%c640, %c0_49], %88 {strides = array<i32>} : memref<1936x512xbf16, #tpu.memory_space<vmem>>, vector<16x512xbf16>,
    %90 = vector.extract_strided_slice %73 {offsets = [0, 8], sizes = [16, 512], strides = [1, 1]} : vector<16x522xbf16> to vector<16x512xbf16>
    %c656 = arith.constant 656 : index
    %c0_50 = arith.constant 0 : index
    %91 = vector.load %arg5[%c656, %c0_50] : memref<1936x512xbf16, #tpu.memory_space<vmem>>, vector<16x512xbf16>
    tpu.vector_store %arg5[%c656, %c0_50], %90 {strides = array<i32>} : memref<1936x512xbf16, #tpu.memory_space<vmem>>, vector<16x512xbf16>,
    %92 = vector.extract_strided_slice %73 {offsets = [0, 9], sizes = [16, 512], strides = [1, 1]} : vector<16x522xbf16> to vector<16x512xbf16>
    %c672 = arith.constant 672 : index
    %c0_51 = arith.constant 0 : index
    %93 = vector.load %arg5[%c672, %c0_51] : memref<1936x512xbf16, #tpu.memory_space<vmem>>, vector<16x512xbf16>
    tpu.vector_store %arg5[%c672, %c0_51], %92 {strides = array<i32>} : memref<1936x512xbf16, #tpu.memory_space<vmem>>, vector<16x512xbf16>,
    %94 = vector.extract_strided_slice %73 {offsets = [0, 10], sizes = [16, 512], strides = [1, 1]} : vector<16x522xbf16> to vector<16x512xbf16>
    %c688 = arith.constant 688 : index
    %c0_52 = arith.constant 0 : index
    %95 = vector.load %arg5[%c688, %c0_52] : memref<1936x512xbf16, #tpu.memory_space<vmem>>, vector<16x512xbf16>
    tpu.vector_store %arg5[%c688, %c0_52], %94 {strides = array<i32>} : memref<1936x512xbf16, #tpu.memory_space<vmem>>, vector<16x512xbf16>,
    %c0_53 = arith.constant 0 : index
    %c0_54 = arith.constant 0 : index
    %c104 = arith.constant 104 : index
    %96 = vector.load %arg1[%c0_53, %c0_54, %c104] : memref<1x16x806xbf16, #tpu.memory_space<vmem>>, vector<1x16x522xbf16>
    %97 = vector.shape_cast %96 : vector<1x16x522xbf16> to vector<16x522xbf16>
    %98 = vector.extract_strided_slice %97 {offsets = [0, 0], sizes = [16, 512], strides = [1, 1]} : vector<16x522xbf16> to vector<16x512xbf16>
    %c704 = arith.constant 704 : index
    %c0_55 = arith.constant 0 : index
    %99 = vector.load %arg5[%c704, %c0_55] : memref<1936x512xbf16, #tpu.memory_space<vmem>>, vector<16x512xbf16>
    tpu.vector_store %arg5[%c704, %c0_55], %98 {strides = array<i32>} : memref<1936x512xbf16, #tpu.memory_space<vmem>>, vector<16x512xbf16>,
    %100 = vector.extract_strided_slice %97 {offsets = [0, 1], sizes = [16, 512], strides = [1, 1]} : vector<16x522xbf16> to vector<16x512xbf16>
    %c720 = arith.constant 720 : index
    %c0_56 = arith.constant 0 : index
    %101 = vector.load %arg5[%c720, %c0_56] : memref<1936x512xbf16, #tpu.memory_space<vmem>>, vector<16x512xbf16>
    tpu.vector_store %arg5[%c720, %c0_56], %100 {strides = array<i32>} : memref<1936x512xbf16, #tpu.memory_space<vmem>>, vector<16x512xbf16>,
    %102 = vector.extract_strided_slice %97 {offsets = [0, 2], sizes = [16, 512], strides = [1, 1]} : vector<16x522xbf16> to vector<16x512xbf16>
    %c736 = arith.constant 736 : index
    %c0_57 = arith.constant 0 : index
    %103 = vector.load %arg5[%c736, %c0_57] : memref<1936x512xbf16, #tpu.memory_space<vmem>>, vector<16x512xbf16>
    tpu.vector_store %arg5[%c736, %c0_57], %102 {strides = array<i32>} : memref<1936x512xbf16, #tpu.memory_space<vmem>>, vector<16x512xbf16>,
    %104 = vector.extract_strided_slice %97 {offsets = [0, 3], sizes = [16, 512], strides = [1, 1]} : vector<16x522xbf16> to vector<16x512xbf16>
    %c752 = arith.constant 752 : index
    %c0_58 = arith.constant 0 : index
    %105 = vector.load %arg5[%c752, %c0_58] : memref<1936x512xbf16, #tpu.memory_space<vmem>>, vector<16x512xbf16>
    tpu.vector_store %arg5[%c752, %c0_58], %104 {strides = array<i32>} : memref<1936x512xbf16, #tpu.memory_space<vmem>>, vector<16x512xbf16>,
    %106 = vector.extract_strided_slice %97 {offsets = [0, 4], sizes = [16, 512], strides = [1, 1]} : vector<16x522xbf16> to vector<16x512xbf16>
    %c768 = arith.constant 768 : index
    %c0_59 = arith.constant 0 : index
    %107 = vector.load %arg5[%c768, %c0_59] : memref<1936x512xbf16, #tpu.memory_space<vmem>>, vector<16x512xbf16>
    tpu.vector_store %arg5[%c768, %c0_59], %106 {strides = array<i32>} : memref<1936x512xbf16, #tpu.memory_space<vmem>>, vector<16x512xbf16>,
    %108 = vector.extract_strided_slice %97 {offsets = [0, 5], sizes = [16, 512], strides = [1, 1]} : vector<16x522xbf16> to vector<16x512xbf16>
    %c784 = arith.constant 784 : index
    %c0_60 = arith.constant 0 : index
    %109 = vector.load %arg5[%c784, %c0_60] : memref<1936x512xbf16, #tpu.memory_space<vmem>>, vector<16x512xbf16>
    tpu.vector_store %arg5[%c784, %c0_60], %108 {strides = array<i32>} : memref<1936x512xbf16, #tpu.memory_space<vmem>>, vector<16x512xbf16>,
    %110 = vector.extract_strided_slice %97 {offsets = [0, 6], sizes = [16, 512], strides = [1, 1]} : vector<16x522xbf16> to vector<16x512xbf16>
    %c800 = arith.constant 800 : index
    %c0_61 = arith.constant 0 : index
    %111 = vector.load %arg5[%c800, %c0_61] : memref<1936x512xbf16, #tpu.memory_space<vmem>>, vector<16x512xbf16>
    tpu.vector_store %arg5[%c800, %c0_61], %110 {strides = array<i32>} : memref<1936x512xbf16, #tpu.memory_space<vmem>>, vector<16x512xbf16>,
    %112 = vector.extract_strided_slice %97 {offsets = [0, 7], sizes = [16, 512], strides = [1, 1]} : vector<16x522xbf16> to vector<16x512xbf16>
    %c816 = arith.constant 816 : index
    %c0_62 = arith.constant 0 : index
    %113 = vector.load %arg5[%c816, %c0_62] : memref<1936x512xbf16, #tpu.memory_space<vmem>>, vector<16x512xbf16>
    tpu.vector_store %arg5[%c816, %c0_62], %112 {strides = array<i32>} : memref<1936x512xbf16, #tpu.memory_space<vmem>>, vector<16x512xbf16>,
    %114 = vector.extract_strided_slice %97 {offsets = [0, 8], sizes = [16, 512], strides = [1, 1]} : vector<16x522xbf16> to vector<16x512xbf16>
    %c832 = arith.constant 832 : index
    %c0_63 = arith.constant 0 : index
    %115 = vector.load %arg5[%c832, %c0_63] : memref<1936x512xbf16, #tpu.memory_space<vmem>>, vector<16x512xbf16>
    tpu.vector_store %arg5[%c832, %c0_63], %114 {strides = array<i32>} : memref<1936x512xbf16, #tpu.memory_space<vmem>>, vector<16x512xbf16>,
    %116 = vector.extract_strided_slice %97 {offsets = [0, 9], sizes = [16, 512], strides = [1, 1]} : vector<16x522xbf16> to vector<16x512xbf16>
    %c848 = arith.constant 848 : index
    %c0_64 = arith.constant 0 : index
    %117 = vector.load %arg5[%c848, %c0_64] : memref<1936x512xbf16, #tpu.memory_space<vmem>>, vector<16x512xbf16>
    tpu.vector_store %arg5[%c848, %c0_64], %116 {strides = array<i32>} : memref<1936x512xbf16, #tpu.memory_space<vmem>>, vector<16x512xbf16>,
    %118 = vector.extract_strided_slice %97 {offsets = [0, 10], sizes = [16, 512], strides = [1, 1]} : vector<16x522xbf16> to vector<16x512xbf16>
    %c864 = arith.constant 864 : index
    %c0_65 = arith.constant 0 : index
    %119 = vector.load %arg5[%c864, %c0_65] : memref<1936x512xbf16, #tpu.memory_space<vmem>>, vector<16x512xbf16>
    tpu.vector_store %arg5[%c864, %c0_65], %118 {strides = array<i32>} : memref<1936x512xbf16, #tpu.memory_space<vmem>>, vector<16x512xbf16>,
    %c0_66 = arith.constant 0 : index
    %c0_67 = arith.constant 0 : index
    %c130 = arith.constant 130 : index
    %120 = vector.load %arg1[%c0_66, %c0_67, %c130] : memref<1x16x806xbf16, #tpu.memory_space<vmem>>, vector<1x16x522xbf16>
    %121 = vector.shape_cast %120 : vector<1x16x522xbf16> to vector<16x522xbf16>
    %122 = vector.extract_strided_slice %121 {offsets = [0, 0], sizes = [16, 512], strides = [1, 1]} : vector<16x522xbf16> to vector<16x512xbf16>
    %c880 = arith.constant 880 : index
    %c0_68 = arith.constant 0 : index
    %123 = vector.load %arg5[%c880, %c0_68] : memref<1936x512xbf16, #tpu.memory_space<vmem>>, vector<16x512xbf16>
    tpu.vector_store %arg5[%c880, %c0_68], %122 {strides = array<i32>} : memref<1936x512xbf16, #tpu.memory_space<vmem>>, vector<16x512xbf16>,
    %124 = vector.extract_strided_slice %121 {offsets = [0, 1], sizes = [16, 512], strides = [1, 1]} : vector<16x522xbf16> to vector<16x512xbf16>
    %c896 = arith.constant 896 : index
    %c0_69 = arith.constant 0 : index
    %125 = vector.load %arg5[%c896, %c0_69] : memref<1936x512xbf16, #tpu.memory_space<vmem>>, vector<16x512xbf16>
    tpu.vector_store %arg5[%c896, %c0_69], %124 {strides = array<i32>} : memref<1936x512xbf16, #tpu.memory_space<vmem>>, vector<16x512xbf16>,
    %126 = vector.extract_strided_slice %121 {offsets = [0, 2], sizes = [16, 512], strides = [1, 1]} : vector<16x522xbf16> to vector<16x512xbf16>
    %c912 = arith.constant 912 : index
    %c0_70 = arith.constant 0 : index
    %127 = vector.load %arg5[%c912, %c0_70] : memref<1936x512xbf16, #tpu.memory_space<vmem>>, vector<16x512xbf16>
    tpu.vector_store %arg5[%c912, %c0_70], %126 {strides = array<i32>} : memref<1936x512xbf16, #tpu.memory_space<vmem>>, vector<16x512xbf16>,
    %128 = vector.extract_strided_slice %121 {offsets = [0, 3], sizes = [16, 512], strides = [1, 1]} : vector<16x522xbf16> to vector<16x512xbf16>
    %c928 = arith.constant 928 : index
    %c0_71 = arith.constant 0 : index
    %129 = vector.load %arg5[%c928, %c0_71] : memref<1936x512xbf16, #tpu.memory_space<vmem>>, vector<16x512xbf16>
    tpu.vector_store %arg5[%c928, %c0_71], %128 {strides = array<i32>} : memref<1936x512xbf16, #tpu.memory_space<vmem>>, vector<16x512xbf16>,
    %130 = vector.extract_strided_slice %121 {offsets = [0, 4], sizes = [16, 512], strides = [1, 1]} : vector<16x522xbf16> to vector<16x512xbf16>
    %c944 = arith.constant 944 : index
    %c0_72 = arith.constant 0 : index
    %131 = vector.load %arg5[%c944, %c0_72] : memref<1936x512xbf16, #tpu.memory_space<vmem>>, vector<16x512xbf16>
    tpu.vector_store %arg5[%c944, %c0_72], %130 {strides = array<i32>} : memref<1936x512xbf16, #tpu.memory_space<vmem>>, vector<16x512xbf16>,
    %132 = vector.extract_strided_slice %121 {offsets = [0, 5], sizes = [16, 512], strides = [1, 1]} : vector<16x522xbf16> to vector<16x512xbf16>
    %c960 = arith.constant 960 : index
    %c0_73 = arith.constant 0 : index
    %133 = vector.load %arg5[%c960, %c0_73] : memref<1936x512xbf16, #tpu.memory_space<vmem>>, vector<16x512xbf16>
    tpu.vector_store %arg5[%c960, %c0_73], %132 {strides = array<i32>} : memref<1936x512xbf16, #tpu.memory_space<vmem>>, vector<16x512xbf16>,
    %134 = vector.extract_strided_slice %121 {offsets = [0, 6], sizes = [16, 512], strides = [1, 1]} : vector<16x522xbf16> to vector<16x512xbf16>
    %c976 = arith.constant 976 : index
    %c0_74 = arith.constant 0 : index
    %135 = vector.load %arg5[%c976, %c0_74] : memref<1936x512xbf16, #tpu.memory_space<vmem>>, vector<16x512xbf16>
    tpu.vector_store %arg5[%c976, %c0_74], %134 {strides = array<i32>} : memref<1936x512xbf16, #tpu.memory_space<vmem>>, vector<16x512xbf16>,
    %136 = vector.extract_strided_slice %121 {offsets = [0, 7], sizes = [16, 512], strides = [1, 1]} : vector<16x522xbf16> to vector<16x512xbf16>
    %c992 = arith.constant 992 : index
    %c0_75 = arith.constant 0 : index
    %137 = vector.load %arg5[%c992, %c0_75] : memref<1936x512xbf16, #tpu.memory_space<vmem>>, vector<16x512xbf16>
    tpu.vector_store %arg5[%c992, %c0_75], %136 {strides = array<i32>} : memref<1936x512xbf16, #tpu.memory_space<vmem>>, vector<16x512xbf16>,
    %138 = vector.extract_strided_slice %121 {offsets = [0, 8], sizes = [16, 512], strides = [1, 1]} : vector<16x522xbf16> to vector<16x512xbf16>
    %c1008 = arith.constant 1008 : index
    %c0_76 = arith.constant 0 : index
    %139 = vector.load %arg5[%c1008, %c0_76] : memref<1936x512xbf16, #tpu.memory_space<vmem>>, vector<16x512xbf16>
    tpu.vector_store %arg5[%c1008, %c0_76], %138 {strides = array<i32>} : memref<1936x512xbf16, #tpu.memory_space<vmem>>, vector<16x512xbf16>,
    %140 = vector.extract_strided_slice %121 {offsets = [0, 9], sizes = [16, 512], strides = [1, 1]} : vector<16x522xbf16> to vector<16x512xbf16>
    %c1024 = arith.constant 1024 : index
    %c0_77 = arith.constant 0 : index
    %141 = vector.load %arg5[%c1024, %c0_77] : memref<1936x512xbf16, #tpu.memory_space<vmem>>, vector<16x512xbf16>
    tpu.vector_store %arg5[%c1024, %c0_77], %140 {strides = array<i32>} : memref<1936x512xbf16, #tpu.memory_space<vmem>>, vector<16x512xbf16>,
    %142 = vector.extract_strided_slice %121 {offsets = [0, 10], sizes = [16, 512], strides = [1, 1]} : vector<16x522xbf16> to vector<16x512xbf16>
    %c1040 = arith.constant 1040 : index
    %c0_78 = arith.constant 0 : index
    %143 = vector.load %arg5[%c1040, %c0_78] : memref<1936x512xbf16, #tpu.memory_space<vmem>>, vector<16x512xbf16>
    tpu.vector_store %arg5[%c1040, %c0_78], %142 {strides = array<i32>} : memref<1936x512xbf16, #tpu.memory_space<vmem>>, vector<16x512xbf16>,
    %c0_79 = arith.constant 0 : index
    %c0_80 = arith.constant 0 : index
    %c156 = arith.constant 156 : index
    %144 = vector.load %arg1[%c0_79, %c0_80, %c156] : memref<1x16x806xbf16, #tpu.memory_space<vmem>>, vector<1x16x522xbf16>
    %145 = vector.shape_cast %144 : vector<1x16x522xbf16> to vector<16x522xbf16>
    %146 = vector.extract_strided_slice %145 {offsets = [0, 0], sizes = [16, 512], strides = [1, 1]} : vector<16x522xbf16> to vector<16x512xbf16>
    %c1056 = arith.constant 1056 : index
    %c0_81 = arith.constant 0 : index
    %147 = vector.load %arg5[%c1056, %c0_81] : memref<1936x512xbf16, #tpu.memory_space<vmem>>, vector<16x512xbf16>
    tpu.vector_store %arg5[%c1056, %c0_81], %146 {strides = array<i32>} : memref<1936x512xbf16, #tpu.memory_space<vmem>>, vector<16x512xbf16>,
    %148 = vector.extract_strided_slice %145 {offsets = [0, 1], sizes = [16, 512], strides = [1, 1]} : vector<16x522xbf16> to vector<16x512xbf16>
    %c1072 = arith.constant 1072 : index
    %c0_82 = arith.constant 0 : index
    %149 = vector.load %arg5[%c1072, %c0_82] : memref<1936x512xbf16, #tpu.memory_space<vmem>>, vector<16x512xbf16>
    tpu.vector_store %arg5[%c1072, %c0_82], %148 {strides = array<i32>} : memref<1936x512xbf16, #tpu.memory_space<vmem>>, vector<16x512xbf16>,
    %150 = vector.extract_strided_slice %145 {offsets = [0, 2], sizes = [16, 512], strides = [1, 1]} : vector<16x522xbf16> to vector<16x512xbf16>
    %c1088 = arith.constant 1088 : index
    %c0_83 = arith.constant 0 : index
    %151 = vector.load %arg5[%c1088, %c0_83] : memref<1936x512xbf16, #tpu.memory_space<vmem>>, vector<16x512xbf16>
    tpu.vector_store %arg5[%c1088, %c0_83], %150 {strides = array<i32>} : memref<1936x512xbf16, #tpu.memory_space<vmem>>, vector<16x512xbf16>,
    %152 = vector.extract_strided_slice %145 {offsets = [0, 3], sizes = [16, 512], strides = [1, 1]} : vector<16x522xbf16> to vector<16x512xbf16>
    %c1104 = arith.constant 1104 : index
    %c0_84 = arith.constant 0 : index
    %153 = vector.load %arg5[%c1104, %c0_84] : memref<1936x512xbf16, #tpu.memory_space<vmem>>, vector<16x512xbf16>
    tpu.vector_store %arg5[%c1104, %c0_84], %152 {strides = array<i32>} : memref<1936x512xbf16, #tpu.memory_space<vmem>>, vector<16x512xbf16>,
    %154 = vector.extract_strided_slice %145 {offsets = [0, 4], sizes = [16, 512], strides = [1, 1]} : vector<16x522xbf16> to vector<16x512xbf16>
    %c1120 = arith.constant 1120 : index
    %c0_85 = arith.constant 0 : index
    %155 = vector.load %arg5[%c1120, %c0_85] : memref<1936x512xbf16, #tpu.memory_space<vmem>>, vector<16x512xbf16>
    tpu.vector_store %arg5[%c1120, %c0_85], %154 {strides = array<i32>} : memref<1936x512xbf16, #tpu.memory_space<vmem>>, vector<16x512xbf16>,
    %156 = vector.extract_strided_slice %145 {offsets = [0, 5], sizes = [16, 512], strides = [1, 1]} : vector<16x522xbf16> to vector<16x512xbf16>
    %c1136 = arith.constant 1136 : index
    %c0_86 = arith.constant 0 : index
    %157 = vector.load %arg5[%c1136, %c0_86] : memref<1936x512xbf16, #tpu.memory_space<vmem>>, vector<16x512xbf16>
    tpu.vector_store %arg5[%c1136, %c0_86], %156 {strides = array<i32>} : memref<1936x512xbf16, #tpu.memory_space<vmem>>, vector<16x512xbf16>,
    %158 = vector.extract_strided_slice %145 {offsets = [0, 6], sizes = [16, 512], strides = [1, 1]} : vector<16x522xbf16> to vector<16x512xbf16>
    %c1152 = arith.constant 1152 : index
    %c0_87 = arith.constant 0 : index
    %159 = vector.load %arg5[%c1152, %c0_87] : memref<1936x512xbf16, #tpu.memory_space<vmem>>, vector<16x512xbf16>
    tpu.vector_store %arg5[%c1152, %c0_87], %158 {strides = array<i32>} : memref<1936x512xbf16, #tpu.memory_space<vmem>>, vector<16x512xbf16>,
    %160 = vector.extract_strided_slice %145 {offsets = [0, 7], sizes = [16, 512], strides = [1, 1]} : vector<16x522xbf16> to vector<16x512xbf16>
    %c1168 = arith.constant 1168 : index
    %c0_88 = arith.constant 0 : index
    %161 = vector.load %arg5[%c1168, %c0_88] : memref<1936x512xbf16, #tpu.memory_space<vmem>>, vector<16x512xbf16>
    tpu.vector_store %arg5[%c1168, %c0_88], %160 {strides = array<i32>} : memref<1936x512xbf16, #tpu.memory_space<vmem>>, vector<16x512xbf16>,
    %162 = vector.extract_strided_slice %145 {offsets = [0, 8], sizes = [16, 512], strides = [1, 1]} : vector<16x522xbf16> to vector<16x512xbf16>
    %c1184 = arith.constant 1184 : index
    %c0_89 = arith.constant 0 : index
    %163 = vector.load %arg5[%c1184, %c0_89] : memref<1936x512xbf16, #tpu.memory_space<vmem>>, vector<16x512xbf16>
    tpu.vector_store %arg5[%c1184, %c0_89], %162 {strides = array<i32>} : memref<1936x512xbf16, #tpu.memory_space<vmem>>, vector<16x512xbf16>,
    %164 = vector.extract_strided_slice %145 {offsets = [0, 9], sizes = [16, 512], strides = [1, 1]} : vector<16x522xbf16> to vector<16x512xbf16>
    %c1200 = arith.constant 1200 : index
    %c0_90 = arith.constant 0 : index
    %165 = vector.load %arg5[%c1200, %c0_90] : memref<1936x512xbf16, #tpu.memory_space<vmem>>, vector<16x512xbf16>
    tpu.vector_store %arg5[%c1200, %c0_90], %164 {strides = array<i32>} : memref<1936x512xbf16, #tpu.memory_space<vmem>>, vector<16x512xbf16>,
    %166 = vector.extract_strided_slice %145 {offsets = [0, 10], sizes = [16, 512], strides = [1, 1]} : vector<16x522xbf16> to vector<16x512xbf16>
    %c1216 = arith.constant 1216 : index
    %c0_91 = arith.constant 0 : index
    %167 = vector.load %arg5[%c1216, %c0_91] : memref<1936x512xbf16, #tpu.memory_space<vmem>>, vector<16x512xbf16>
    tpu.vector_store %arg5[%c1216, %c0_91], %166 {strides = array<i32>} : memref<1936x512xbf16, #tpu.memory_space<vmem>>, vector<16x512xbf16>,
    %c0_92 = arith.constant 0 : index
    %c0_93 = arith.constant 0 : index
    %c182 = arith.constant 182 : index
    %168 = vector.load %arg1[%c0_92, %c0_93, %c182] : memref<1x16x806xbf16, #tpu.memory_space<vmem>>, vector<1x16x522xbf16>
    %169 = vector.shape_cast %168 : vector<1x16x522xbf16> to vector<16x522xbf16>
    %170 = vector.extract_strided_slice %169 {offsets = [0, 0], sizes = [16, 512], strides = [1, 1]} : vector<16x522xbf16> to vector<16x512xbf16>
    %c1232 = arith.constant 1232 : index
    %c0_94 = arith.constant 0 : index
    %171 = vector.load %arg5[%c1232, %c0_94] : memref<1936x512xbf16, #tpu.memory_space<vmem>>, vector<16x512xbf16>
    tpu.vector_store %arg5[%c1232, %c0_94], %170 {strides = array<i32>} : memref<1936x512xbf16, #tpu.memory_space<vmem>>, vector<16x512xbf16>,
    %172 = vector.extract_strided_slice %169 {offsets = [0, 1], sizes = [16, 512], strides = [1, 1]} : vector<16x522xbf16> to vector<16x512xbf16>
    %c1248 = arith.constant 1248 : index
    %c0_95 = arith.constant 0 : index
    %173 = vector.load %arg5[%c1248, %c0_95] : memref<1936x512xbf16, #tpu.memory_space<vmem>>, vector<16x512xbf16>
    tpu.vector_store %arg5[%c1248, %c0_95], %172 {strides = array<i32>} : memref<1936x512xbf16, #tpu.memory_space<vmem>>, vector<16x512xbf16>,
    %174 = vector.extract_strided_slice %169 {offsets = [0, 2], sizes = [16, 512], strides = [1, 1]} : vector<16x522xbf16> to vector<16x512xbf16>
    %c1264 = arith.constant 1264 : index
    %c0_96 = arith.constant 0 : index
    %175 = vector.load %arg5[%c1264, %c0_96] : memref<1936x512xbf16, #tpu.memory_space<vmem>>, vector<16x512xbf16>
    tpu.vector_store %arg5[%c1264, %c0_96], %174 {strides = array<i32>} : memref<1936x512xbf16, #tpu.memory_space<vmem>>, vector<16x512xbf16>,
    %176 = vector.extract_strided_slice %169 {offsets = [0, 3], sizes = [16, 512], strides = [1, 1]} : vector<16x522xbf16> to vector<16x512xbf16>
    %c1280 = arith.constant 1280 : index
    %c0_97 = arith.constant 0 : index
    %177 = vector.load %arg5[%c1280, %c0_97] : memref<1936x512xbf16, #tpu.memory_space<vmem>>, vector<16x512xbf16>
    tpu.vector_store %arg5[%c1280, %c0_97], %176 {strides = array<i32>} : memref<1936x512xbf16, #tpu.memory_space<vmem>>, vector<16x512xbf16>,
    %178 = vector.extract_strided_slice %169 {offsets = [0, 4], sizes = [16, 512], strides = [1, 1]} : vector<16x522xbf16> to vector<16x512xbf16>
    %c1296 = arith.constant 1296 : index
    %c0_98 = arith.constant 0 : index
    %179 = vector.load %arg5[%c1296, %c0_98] : memref<1936x512xbf16, #tpu.memory_space<vmem>>, vector<16x512xbf16>
    tpu.vector_store %arg5[%c1296, %c0_98], %178 {strides = array<i32>} : memref<1936x512xbf16, #tpu.memory_space<vmem>>, vector<16x512xbf16>,
    %180 = vector.extract_strided_slice %169 {offsets = [0, 5], sizes = [16, 512], strides = [1, 1]} : vector<16x522xbf16> to vector<16x512xbf16>
    %c1312 = arith.constant 1312 : index
    %c0_99 = arith.constant 0 : index
    %181 = vector.load %arg5[%c1312, %c0_99] : memref<1936x512xbf16, #tpu.memory_space<vmem>>, vector<16x512xbf16>
    tpu.vector_store %arg5[%c1312, %c0_99], %180 {strides = array<i32>} : memref<1936x512xbf16, #tpu.memory_space<vmem>>, vector<16x512xbf16>,
    %182 = vector.extract_strided_slice %169 {offsets = [0, 6], sizes = [16, 512], strides = [1, 1]} : vector<16x522xbf16> to vector<16x512xbf16>
    %c1328 = arith.constant 1328 : index
    %c0_100 = arith.constant 0 : index
    %183 = vector.load %arg5[%c1328, %c0_100] : memref<1936x512xbf16, #tpu.memory_space<vmem>>, vector<16x512xbf16>
    tpu.vector_store %arg5[%c1328, %c0_100], %182 {strides = array<i32>} : memref<1936x512xbf16, #tpu.memory_space<vmem>>, vector<16x512xbf16>,
    %184 = vector.extract_strided_slice %169 {offsets = [0, 7], sizes = [16, 512], strides = [1, 1]} : vector<16x522xbf16> to vector<16x512xbf16>
    %c1344 = arith.constant 1344 : index
    %c0_101 = arith.constant 0 : index
    %185 = vector.load %arg5[%c1344, %c0_101] : memref<1936x512xbf16, #tpu.memory_space<vmem>>, vector<16x512xbf16>
    tpu.vector_store %arg5[%c1344, %c0_101], %184 {strides = array<i32>} : memref<1936x512xbf16, #tpu.memory_space<vmem>>, vector<16x512xbf16>,
    %186 = vector.extract_strided_slice %169 {offsets = [0, 8], sizes = [16, 512], strides = [1, 1]} : vector<16x522xbf16> to vector<16x512xbf16>
    %c1360 = arith.constant 1360 : index
    %c0_102 = arith.constant 0 : index
    %187 = vector.load %arg5[%c1360, %c0_102] : memref<1936x512xbf16, #tpu.memory_space<vmem>>, vector<16x512xbf16>
    tpu.vector_store %arg5[%c1360, %c0_102], %186 {strides = array<i32>} : memref<1936x512xbf16, #tpu.memory_space<vmem>>, vector<16x512xbf16>,
    %188 = vector.extract_strided_slice %169 {offsets = [0, 9], sizes = [16, 512], strides = [1, 1]} : vector<16x522xbf16> to vector<16x512xbf16>
    %c1376 = arith.constant 1376 : index
    %c0_103 = arith.constant 0 : index
    %189 = vector.load %arg5[%c1376, %c0_103] : memref<1936x512xbf16, #tpu.memory_space<vmem>>, vector<16x512xbf16>
    tpu.vector_store %arg5[%c1376, %c0_103], %188 {strides = array<i32>} : memref<1936x512xbf16, #tpu.memory_space<vmem>>, vector<16x512xbf16>,
    %190 = vector.extract_strided_slice %169 {offsets = [0, 10], sizes = [16, 512], strides = [1, 1]} : vector<16x522xbf16> to vector<16x512xbf16>
    %c1392 = arith.constant 1392 : index
    %c0_104 = arith.constant 0 : index
    %191 = vector.load %arg5[%c1392, %c0_104] : memref<1936x512xbf16, #tpu.memory_space<vmem>>, vector<16x512xbf16>
    tpu.vector_store %arg5[%c1392, %c0_104], %190 {strides = array<i32>} : memref<1936x512xbf16, #tpu.memory_space<vmem>>, vector<16x512xbf16>,
    %c0_105 = arith.constant 0 : index
    %c0_106 = arith.constant 0 : index
    %c208_107 = arith.constant 208 : index
    %192 = vector.load %arg1[%c0_105, %c0_106, %c208_107] : memref<1x16x806xbf16, #tpu.memory_space<vmem>>, vector<1x16x522xbf16>
    %193 = vector.shape_cast %192 : vector<1x16x522xbf16> to vector<16x522xbf16>
    %194 = vector.extract_strided_slice %193 {offsets = [0, 0], sizes = [16, 512], strides = [1, 1]} : vector<16x522xbf16> to vector<16x512xbf16>
    %c1408 = arith.constant 1408 : index
    %c0_108 = arith.constant 0 : index
    %195 = vector.load %arg5[%c1408, %c0_108] : memref<1936x512xbf16, #tpu.memory_space<vmem>>, vector<16x512xbf16>
    tpu.vector_store %arg5[%c1408, %c0_108], %194 {strides = array<i32>} : memref<1936x512xbf16, #tpu.memory_space<vmem>>, vector<16x512xbf16>,
    %196 = vector.extract_strided_slice %193 {offsets = [0, 1], sizes = [16, 512], strides = [1, 1]} : vector<16x522xbf16> to vector<16x512xbf16>
    %c1424 = arith.constant 1424 : index
    %c0_109 = arith.constant 0 : index
    %197 = vector.load %arg5[%c1424, %c0_109] : memref<1936x512xbf16, #tpu.memory_space<vmem>>, vector<16x512xbf16>
    tpu.vector_store %arg5[%c1424, %c0_109], %196 {strides = array<i32>} : memref<1936x512xbf16, #tpu.memory_space<vmem>>, vector<16x512xbf16>,
    %198 = vector.extract_strided_slice %193 {offsets = [0, 2], sizes = [16, 512], strides = [1, 1]} : vector<16x522xbf16> to vector<16x512xbf16>
    %c1440 = arith.constant 1440 : index
    %c0_110 = arith.constant 0 : index
    %199 = vector.load %arg5[%c1440, %c0_110] : memref<1936x512xbf16, #tpu.memory_space<vmem>>, vector<16x512xbf16>
    tpu.vector_store %arg5[%c1440, %c0_110], %198 {strides = array<i32>} : memref<1936x512xbf16, #tpu.memory_space<vmem>>, vector<16x512xbf16>,
    %200 = vector.extract_strided_slice %193 {offsets = [0, 3], sizes = [16, 512], strides = [1, 1]} : vector<16x522xbf16> to vector<16x512xbf16>
    %c1456 = arith.constant 1456 : index
    %c0_111 = arith.constant 0 : index
    %201 = vector.load %arg5[%c1456, %c0_111] : memref<1936x512xbf16, #tpu.memory_space<vmem>>, vector<16x512xbf16>
    tpu.vector_store %arg5[%c1456, %c0_111], %200 {strides = array<i32>} : memref<1936x512xbf16, #tpu.memory_space<vmem>>, vector<16x512xbf16>,
    %202 = vector.extract_strided_slice %193 {offsets = [0, 4], sizes = [16, 512], strides = [1, 1]} : vector<16x522xbf16> to vector<16x512xbf16>
    %c1472 = arith.constant 1472 : index
    %c0_112 = arith.constant 0 : index
    %203 = vector.load %arg5[%c1472, %c0_112] : memref<1936x512xbf16, #tpu.memory_space<vmem>>, vector<16x512xbf16>
    tpu.vector_store %arg5[%c1472, %c0_112], %202 {strides = array<i32>} : memref<1936x512xbf16, #tpu.memory_space<vmem>>, vector<16x512xbf16>,
    %204 = vector.extract_strided_slice %193 {offsets = [0, 5], sizes = [16, 512], strides = [1, 1]} : vector<16x522xbf16> to vector<16x512xbf16>
    %c1488 = arith.constant 1488 : index
    %c0_113 = arith.constant 0 : index
    %205 = vector.load %arg5[%c1488, %c0_113] : memref<1936x512xbf16, #tpu.memory_space<vmem>>, vector<16x512xbf16>
    tpu.vector_store %arg5[%c1488, %c0_113], %204 {strides = array<i32>} : memref<1936x512xbf16, #tpu.memory_space<vmem>>, vector<16x512xbf16>,
    %206 = vector.extract_strided_slice %193 {offsets = [0, 6], sizes = [16, 512], strides = [1, 1]} : vector<16x522xbf16> to vector<16x512xbf16>
    %c1504 = arith.constant 1504 : index
    %c0_114 = arith.constant 0 : index
    %207 = vector.load %arg5[%c1504, %c0_114] : memref<1936x512xbf16, #tpu.memory_space<vmem>>, vector<16x512xbf16>
    tpu.vector_store %arg5[%c1504, %c0_114], %206 {strides = array<i32>} : memref<1936x512xbf16, #tpu.memory_space<vmem>>, vector<16x512xbf16>,
    %208 = vector.extract_strided_slice %193 {offsets = [0, 7], sizes = [16, 512], strides = [1, 1]} : vector<16x522xbf16> to vector<16x512xbf16>
    %c1520 = arith.constant 1520 : index
    %c0_115 = arith.constant 0 : index
    %209 = vector.load %arg5[%c1520, %c0_115] : memref<1936x512xbf16, #tpu.memory_space<vmem>>, vector<16x512xbf16>
    tpu.vector_store %arg5[%c1520, %c0_115], %208 {strides = array<i32>} : memref<1936x512xbf16, #tpu.memory_space<vmem>>, vector<16x512xbf16>,
    %210 = vector.extract_strided_slice %193 {offsets = [0, 8], sizes = [16, 512], strides = [1, 1]} : vector<16x522xbf16> to vector<16x512xbf16>
    %c1536 = arith.constant 1536 : index
    %c0_116 = arith.constant 0 : index
    %211 = vector.load %arg5[%c1536, %c0_116] : memref<1936x512xbf16, #tpu.memory_space<vmem>>, vector<16x512xbf16>
    tpu.vector_store %arg5[%c1536, %c0_116], %210 {strides = array<i32>} : memref<1936x512xbf16, #tpu.memory_space<vmem>>, vector<16x512xbf16>,
    %212 = vector.extract_strided_slice %193 {offsets = [0, 9], sizes = [16, 512], strides = [1, 1]} : vector<16x522xbf16> to vector<16x512xbf16>
    %c1552 = arith.constant 1552 : index
    %c0_117 = arith.constant 0 : index
    %213 = vector.load %arg5[%c1552, %c0_117] : memref<1936x512xbf16, #tpu.memory_space<vmem>>, vector<16x512xbf16>
    tpu.vector_store %arg5[%c1552, %c0_117], %212 {strides = array<i32>} : memref<1936x512xbf16, #tpu.memory_space<vmem>>, vector<16x512xbf16>,
    %214 = vector.extract_strided_slice %193 {offsets = [0, 10], sizes = [16, 512], strides = [1, 1]} : vector<16x522xbf16> to vector<16x512xbf16>
    %c1568 = arith.constant 1568 : index
    %c0_118 = arith.constant 0 : index
    %215 = vector.load %arg5[%c1568, %c0_118] : memref<1936x512xbf16, #tpu.memory_space<vmem>>, vector<16x512xbf16>
    tpu.vector_store %arg5[%c1568, %c0_118], %214 {strides = array<i32>} : memref<1936x512xbf16, #tpu.memory_space<vmem>>, vector<16x512xbf16>,
    %c0_119 = arith.constant 0 : index
    %c0_120 = arith.constant 0 : index
    %c234 = arith.constant 234 : index
    %216 = vector.load %arg1[%c0_119, %c0_120, %c234] : memref<1x16x806xbf16, #tpu.memory_space<vmem>>, vector<1x16x522xbf16>
    %217 = vector.shape_cast %216 : vector<1x16x522xbf16> to vector<16x522xbf16>
    %218 = vector.extract_strided_slice %217 {offsets = [0, 0], sizes = [16, 512], strides = [1, 1]} : vector<16x522xbf16> to vector<16x512xbf16>
    %c1584 = arith.constant 1584 : index
    %c0_121 = arith.constant 0 : index
    %219 = vector.load %arg5[%c1584, %c0_121] : memref<1936x512xbf16, #tpu.memory_space<vmem>>, vector<16x512xbf16>
    tpu.vector_store %arg5[%c1584, %c0_121], %218 {strides = array<i32>} : memref<1936x512xbf16, #tpu.memory_space<vmem>>, vector<16x512xbf16>,
    %220 = vector.extract_strided_slice %217 {offsets = [0, 1], sizes = [16, 512], strides = [1, 1]} : vector<16x522xbf16> to vector<16x512xbf16>
    %c1600 = arith.constant 1600 : index
    %c0_122 = arith.constant 0 : index
    %221 = vector.load %arg5[%c1600, %c0_122] : memref<1936x512xbf16, #tpu.memory_space<vmem>>, vector<16x512xbf16>
    tpu.vector_store %arg5[%c1600, %c0_122], %220 {strides = array<i32>} : memref<1936x512xbf16, #tpu.memory_space<vmem>>, vector<16x512xbf16>,
    %222 = vector.extract_strided_slice %217 {offsets = [0, 2], sizes = [16, 512], strides = [1, 1]} : vector<16x522xbf16> to vector<16x512xbf16>
    %c1616 = arith.constant 1616 : index
    %c0_123 = arith.constant 0 : index
    %223 = vector.load %arg5[%c1616, %c0_123] : memref<1936x512xbf16, #tpu.memory_space<vmem>>, vector<16x512xbf16>
    tpu.vector_store %arg5[%c1616, %c0_123], %222 {strides = array<i32>} : memref<1936x512xbf16, #tpu.memory_space<vmem>>, vector<16x512xbf16>,
    %224 = vector.extract_strided_slice %217 {offsets = [0, 3], sizes = [16, 512], strides = [1, 1]} : vector<16x522xbf16> to vector<16x512xbf16>
    %c1632 = arith.constant 1632 : index
    %c0_124 = arith.constant 0 : index
    %225 = vector.load %arg5[%c1632, %c0_124] : memref<1936x512xbf16, #tpu.memory_space<vmem>>, vector<16x512xbf16>
    tpu.vector_store %arg5[%c1632, %c0_124], %224 {strides = array<i32>} : memref<1936x512xbf16, #tpu.memory_space<vmem>>, vector<16x512xbf16>,
    %226 = vector.extract_strided_slice %217 {offsets = [0, 4], sizes = [16, 512], strides = [1, 1]} : vector<16x522xbf16> to vector<16x512xbf16>
    %c1648 = arith.constant 1648 : index
    %c0_125 = arith.constant 0 : index
    %227 = vector.load %arg5[%c1648, %c0_125] : memref<1936x512xbf16, #tpu.memory_space<vmem>>, vector<16x512xbf16>
    tpu.vector_store %arg5[%c1648, %c0_125], %226 {strides = array<i32>} : memref<1936x512xbf16, #tpu.memory_space<vmem>>, vector<16x512xbf16>,
    %228 = vector.extract_strided_slice %217 {offsets = [0, 5], sizes = [16, 512], strides = [1, 1]} : vector<16x522xbf16> to vector<16x512xbf16>
    %c1664 = arith.constant 1664 : index
    %c0_126 = arith.constant 0 : index
    %229 = vector.load %arg5[%c1664, %c0_126] : memref<1936x512xbf16, #tpu.memory_space<vmem>>, vector<16x512xbf16>
    tpu.vector_store %arg5[%c1664, %c0_126], %228 {strides = array<i32>} : memref<1936x512xbf16, #tpu.memory_space<vmem>>, vector<16x512xbf16>,
    %230 = vector.extract_strided_slice %217 {offsets = [0, 6], sizes = [16, 512], strides = [1, 1]} : vector<16x522xbf16> to vector<16x512xbf16>
    %c1680 = arith.constant 1680 : index
    %c0_127 = arith.constant 0 : index
    %231 = vector.load %arg5[%c1680, %c0_127] : memref<1936x512xbf16, #tpu.memory_space<vmem>>, vector<16x512xbf16>
    tpu.vector_store %arg5[%c1680, %c0_127], %230 {strides = array<i32>} : memref<1936x512xbf16, #tpu.memory_space<vmem>>, vector<16x512xbf16>,
    %232 = vector.extract_strided_slice %217 {offsets = [0, 7], sizes = [16, 512], strides = [1, 1]} : vector<16x522xbf16> to vector<16x512xbf16>
    %c1696 = arith.constant 1696 : index
    %c0_128 = arith.constant 0 : index
    %233 = vector.load %arg5[%c1696, %c0_128] : memref<1936x512xbf16, #tpu.memory_space<vmem>>, vector<16x512xbf16>
    tpu.vector_store %arg5[%c1696, %c0_128], %232 {strides = array<i32>} : memref<1936x512xbf16, #tpu.memory_space<vmem>>, vector<16x512xbf16>,
    %234 = vector.extract_strided_slice %217 {offsets = [0, 8], sizes = [16, 512], strides = [1, 1]} : vector<16x522xbf16> to vector<16x512xbf16>
    %c1712 = arith.constant 1712 : index
    %c0_129 = arith.constant 0 : index
    %235 = vector.load %arg5[%c1712, %c0_129] : memref<1936x512xbf16, #tpu.memory_space<vmem>>, vector<16x512xbf16>
    tpu.vector_store %arg5[%c1712, %c0_129], %234 {strides = array<i32>} : memref<1936x512xbf16, #tpu.memory_space<vmem>>, vector<16x512xbf16>,
    %236 = vector.extract_strided_slice %217 {offsets = [0, 9], sizes = [16, 512], strides = [1, 1]} : vector<16x522xbf16> to vector<16x512xbf16>
    %c1728 = arith.constant 1728 : index
    %c0_130 = arith.constant 0 : index
    %237 = vector.load %arg5[%c1728, %c0_130] : memref<1936x512xbf16, #tpu.memory_space<vmem>>, vector<16x512xbf16>
    tpu.vector_store %arg5[%c1728, %c0_130], %236 {strides = array<i32>} : memref<1936x512xbf16, #tpu.memory_space<vmem>>, vector<16x512xbf16>,
    %238 = vector.extract_strided_slice %217 {offsets = [0, 10], sizes = [16, 512], strides = [1, 1]} : vector<16x522xbf16> to vector<16x512xbf16>
    %c1744 = arith.constant 1744 : index
    %c0_131 = arith.constant 0 : index
    %239 = vector.load %arg5[%c1744, %c0_131] : memref<1936x512xbf16, #tpu.memory_space<vmem>>, vector<16x512xbf16>
    tpu.vector_store %arg5[%c1744, %c0_131], %238 {strides = array<i32>} : memref<1936x512xbf16, #tpu.memory_space<vmem>>, vector<16x512xbf16>,
    %c0_132 = arith.constant 0 : index
    %c0_133 = arith.constant 0 : index
    %c260 = arith.constant 260 : index
    %240 = vector.load %arg1[%c0_132, %c0_133, %c260] : memref<1x16x806xbf16, #tpu.memory_space<vmem>>, vector<1x16x522xbf16>
    %241 = vector.shape_cast %240 : vector<1x16x522xbf16> to vector<16x522xbf16>
    %242 = vector.extract_strided_slice %241 {offsets = [0, 0], sizes = [16, 512], strides = [1, 1]} : vector<16x522xbf16> to vector<16x512xbf16>
    %c1760 = arith.constant 1760 : index
    %c0_134 = arith.constant 0 : index
    %243 = vector.load %arg5[%c1760, %c0_134] : memref<1936x512xbf16, #tpu.memory_space<vmem>>, vector<16x512xbf16>
    tpu.vector_store %arg5[%c1760, %c0_134], %242 {strides = array<i32>} : memref<1936x512xbf16, #tpu.memory_space<vmem>>, vector<16x512xbf16>,
    %244 = vector.extract_strided_slice %241 {offsets = [0, 1], sizes = [16, 512], strides = [1, 1]} : vector<16x522xbf16> to vector<16x512xbf16>
    %c1776 = arith.constant 1776 : index
    %c0_135 = arith.constant 0 : index
    %245 = vector.load %arg5[%c1776, %c0_135] : memref<1936x512xbf16, #tpu.memory_space<vmem>>, vector<16x512xbf16>
    tpu.vector_store %arg5[%c1776, %c0_135], %244 {strides = array<i32>} : memref<1936x512xbf16, #tpu.memory_space<vmem>>, vector<16x512xbf16>,
    %246 = vector.extract_strided_slice %241 {offsets = [0, 2], sizes = [16, 512], strides = [1, 1]} : vector<16x522xbf16> to vector<16x512xbf16>
    %c1792 = arith.constant 1792 : index
    %c0_136 = arith.constant 0 : index
    %247 = vector.load %arg5[%c1792, %c0_136] : memref<1936x512xbf16, #tpu.memory_space<vmem>>, vector<16x512xbf16>
    tpu.vector_store %arg5[%c1792, %c0_136], %246 {strides = array<i32>} : memref<1936x512xbf16, #tpu.memory_space<vmem>>, vector<16x512xbf16>,
    %248 = vector.extract_strided_slice %241 {offsets = [0, 3], sizes = [16, 512], strides = [1, 1]} : vector<16x522xbf16> to vector<16x512xbf16>
    %c1808 = arith.constant 1808 : index
    %c0_137 = arith.constant 0 : index
    %249 = vector.load %arg5[%c1808, %c0_137] : memref<1936x512xbf16, #tpu.memory_space<vmem>>, vector<16x512xbf16>
    tpu.vector_store %arg5[%c1808, %c0_137], %248 {strides = array<i32>} : memref<1936x512xbf16, #tpu.memory_space<vmem>>, vector<16x512xbf16>,
    %250 = vector.extract_strided_slice %241 {offsets = [0, 4], sizes = [16, 512], strides = [1, 1]} : vector<16x522xbf16> to vector<16x512xbf16>
    %c1824 = arith.constant 1824 : index
    %c0_138 = arith.constant 0 : index
    %251 = vector.load %arg5[%c1824, %c0_138] : memref<1936x512xbf16, #tpu.memory_space<vmem>>, vector<16x512xbf16>
    tpu.vector_store %arg5[%c1824, %c0_138], %250 {strides = array<i32>} : memref<1936x512xbf16, #tpu.memory_space<vmem>>, vector<16x512xbf16>,
    %252 = vector.extract_strided_slice %241 {offsets = [0, 5], sizes = [16, 512], strides = [1, 1]} : vector<16x522xbf16> to vector<16x512xbf16>
    %c1840 = arith.constant 1840 : index
    %c0_139 = arith.constant 0 : index
    %253 = vector.load %arg5[%c1840, %c0_139] : memref<1936x512xbf16, #tpu.memory_space<vmem>>, vector<16x512xbf16>
    tpu.vector_store %arg5[%c1840, %c0_139], %252 {strides = array<i32>} : memref<1936x512xbf16, #tpu.memory_space<vmem>>, vector<16x512xbf16>,
    %254 = vector.extract_strided_slice %241 {offsets = [0, 6], sizes = [16, 512], strides = [1, 1]} : vector<16x522xbf16> to vector<16x512xbf16>
    %c1856 = arith.constant 1856 : index
    %c0_140 = arith.constant 0 : index
    %255 = vector.load %arg5[%c1856, %c0_140] : memref<1936x512xbf16, #tpu.memory_space<vmem>>, vector<16x512xbf16>
    tpu.vector_store %arg5[%c1856, %c0_140], %254 {strides = array<i32>} : memref<1936x512xbf16, #tpu.memory_space<vmem>>, vector<16x512xbf16>,
    %256 = vector.extract_strided_slice %241 {offsets = [0, 7], sizes = [16, 512], strides = [1, 1]} : vector<16x522xbf16> to vector<16x512xbf16>
    %c1872 = arith.constant 1872 : index
    %c0_141 = arith.constant 0 : index
    %257 = vector.load %arg5[%c1872, %c0_141] : memref<1936x512xbf16, #tpu.memory_space<vmem>>, vector<16x512xbf16>
    tpu.vector_store %arg5[%c1872, %c0_141], %256 {strides = array<i32>} : memref<1936x512xbf16, #tpu.memory_space<vmem>>, vector<16x512xbf16>,
    %258 = vector.extract_strided_slice %241 {offsets = [0, 8], sizes = [16, 512], strides = [1, 1]} : vector<16x522xbf16> to vector<16x512xbf16>
    %c1888 = arith.constant 1888 : index
    %c0_142 = arith.constant 0 : index
    %259 = vector.load %arg5[%c1888, %c0_142] : memref<1936x512xbf16, #tpu.memory_space<vmem>>, vector<16x512xbf16>
    tpu.vector_store %arg5[%c1888, %c0_142], %258 {strides = array<i32>} : memref<1936x512xbf16, #tpu.memory_space<vmem>>, vector<16x512xbf16>,
    %260 = vector.extract_strided_slice %241 {offsets = [0, 9], sizes = [16, 512], strides = [1, 1]} : vector<16x522xbf16> to vector<16x512xbf16>
    %c1904 = arith.constant 1904 : index
    %c0_143 = arith.constant 0 : index
    %261 = vector.load %arg5[%c1904, %c0_143] : memref<1936x512xbf16, #tpu.memory_space<vmem>>, vector<16x512xbf16>
    tpu.vector_store %arg5[%c1904, %c0_143], %260 {strides = array<i32>} : memref<1936x512xbf16, #tpu.memory_space<vmem>>, vector<16x512xbf16>,
    %262 = vector.extract_strided_slice %241 {offsets = [0, 10], sizes = [16, 512], strides = [1, 1]} : vector<16x522xbf16> to vector<16x512xbf16>
    %c1920 = arith.constant 1920 : index
    %c0_144 = arith.constant 0 : index
    %263 = vector.load %arg5[%c1920, %c0_144] : memref<1936x512xbf16, #tpu.memory_space<vmem>>, vector<16x512xbf16>
    tpu.vector_store %arg5[%c1920, %c0_144], %262 {strides = array<i32>} : memref<1936x512xbf16, #tpu.memory_space<vmem>>, vector<16x512xbf16>,
    %c0_145 = arith.constant 0 : index
    %c0_146 = arith.constant 0 : index
    %264 = vector.load %arg2[%c0_145, %c0_146] : memref<8x1936xbf16, #tpu.memory_space<vmem>>, vector<8x1936xbf16>
    %c0_147 = arith.constant 0 : index
    %c0_148 = arith.constant 0 : index
    %265 = vector.load %arg5[%c0_147, %c0_148] : memref<1936x512xbf16, #tpu.memory_space<vmem>>, vector<1936x512xbf16>
    %cst = arith.constant dense<0.000000e+00> : vector<8x512xf32>
    %266 = tpu.matmul %264, %265, %cst {dimension_numbers = #tpu.dot_dimension_numbers<[1], [0], [0], [1], [0, 0, 1, 1], [], []>} : vector<8x1936xbf16>, vector<1936x512xbf16>, vector<8x512xf32> -> vector<8x512xf32>
    %c0_149 = arith.constant 0 : index
    %c0_150 = arith.constant 0 : index
    %267 = vector.load %arg3[%c0_149, %c0_150] : memref<8x1xf32, #tpu.memory_space<vmem>>, vector<8x1xf32>
    %268 = vector.broadcast %267 : vector<8x1xf32> to vector<8x512xf32>
    %269 = arith.addf %266, %268 : vector<8x512xf32>
    %c0_151 = arith.constant 0 : index
    %c0_152 = arith.constant 0 : index
    %c0_153 = arith.constant 0 : index
    %270 = vector.load %arg4[%c0_151, %c0_152, %c0_153] : memref<1x8x512xf32, #tpu.memory_space<vmem>>, vector<1x8x512xf32>
    %271 = vector.shape_cast %270 : vector<1x8x512xf32> to vector<8x512xf32>
    %272 = vector.shape_cast %269 : vector<8x512xf32> to vector<1x8x512xf32>
    tpu.vector_store %arg4[%c0_151, %c0_152, %c0_153], %272 {strides = array<i32>} : memref<1x8x512xf32, #tpu.memory_space<vmem>>, vector<1x8x512xf32>,
    return
  }
  func.func @transform_0(%arg0: i32) -> (i32, i32, i32) {
    %c0_i32 = arith.constant 0 : i32
    %c0_i32_0 = arith.constant 0 : i32
    %c0_i32_1 = arith.constant 0 : i32
    return %arg0, %c0_i32, %c0_i32_0 : i32, i32, i32
  }
  func.func @transform_1(%arg0: i32) -> (i32, i32) {
    %c0_i32 = arith.constant 0 : i32
    %c0_i32_0 = arith.constant 0 : i32
    %c0_i32_1 = arith.constant 0 : i32
    return %c0_i32, %c0_i32_0 : i32, i32
  }
  func.func @transform_2(%arg0: i32) -> (i32, i32) {
    %c0_i32 = arith.constant 0 : i32
    %c0_i32_0 = arith.constant 0 : i32
    %c0_i32_1 = arith.constant 0 : i32
    return %c0_i32, %c0_i32_0 : i32, i32
  }
  func.func @transform_3(%arg0: i32) -> (i32, i32, i32) {
    %c0_i32 = arith.constant 0 : i32
    %c0_i32_0 = arith.constant 0 : i32
    %c0_i32_1 = arith.constant 0 : i32
    return %arg0, %c0_i32, %c0_i32_0 : i32, i32, i32
  }
}

</mosaic_0001>

<llo_original>
// kernel: inception_block_v1_pallas.1
$region0: #{inception_block_v1_pallas.1}
  #allocation0 [shape = 'u32[]', space=smem, size = 0x4, offset = 0x4, fixed_abs, tag = 'smem constant byte address 0x4 - core index']
  #allocation1 [shape = 'u32[144,128]{1,0:T(1,128)}', space=vmem, size = 0x12000, scoped, tag = 'internal scratch']
  #allocation2 [shape = 'bf16[1936,512]{1,0:T(8,128)(2,1)}', space=vmem, size = 0x1e4000, scoped, tag = 'scratch operand']
  %s0 = inlined_call_operand.vmem [shape: bf16[2,16,806], index: 0, kind: input, shape index: {}]
  %s1 = inlined_call_operand.vmem [shape: bf16[8,1936], index: 1, kind: input, shape index: {}]
  %s2 = inlined_call_operand.vmem [shape: f32[8,1], index: 2, kind: input, shape index: {}]
  %s3 = inlined_call_operand.vmem [shape: f32[2,8,512], index: 3, kind: output, shape index: {}]
  %s4 = sld [smem:[#allocation0]]
  $region45: #{inception_block_v1_pallas.1} parent=0
    _
  %s6 = ssub.s32 1, %s4
  %s7 = scalar_select 0, %s6, %s4
  loop: start=0, step=1, limit=4
  $region2: #{inception_block_v1_pallas.1} parent=0 // loop_pre_header
    _
  $region3: #{inception_block_v1_pallas.1} parent=0 // loop_header
    %s9 = sphi 0, %s13
    %p10 = scmp.ge.s32.totalorder %s9, 4
    %s19 = sphi 0, %s21
    %s22 = sphi 0, %s19
    %s23 = sphi 0, %s22
    %s39 = sphi 0, %s23
    %s43 = sphi 0, %s43
    %s45 = sphi 0, %s43
    %s46 = sphi 0, %s45
    %s60 = sphi 0, %s46
    %s64 = sphi 0, %s64
    %s66 = sphi 0, %s64
    %s67 = sphi 0, %s66
    %s81 = sphi 0, %s67
    %s87 = sphi 0, %s89
    %s90 = sphi 0, %s87
    %s91 = sphi 0, %s90
    %s107 = sphi 0, %s91
  $region4: #{inception_block_v1_pallas.1} parent=0 // loop_header_branch
    %12 = sbr.rel (%p10) target = $region8
  $region5: #{inception_block_v1_pallas.1} parent=0 // loop_body
    %s14 = ssub.s32 %s9, 1
    %s15 = ssub.s32 %s9, 2
    %s16 = sadd.s32 %s9, 1
    %s17 = ssub.s32 %s9, %s16
    %p18 = scmp.eq.s32.totalorder %s17, 0
    %s20 = sadd.s32 %s19, 1
    %s21 = scalar_select %p18, %s19, %s20
    %p24 = pneg %p18
    %p25 = scmp.eq.s32.totalorder %s9, 1
    %p26 = por %p24, %p25
    %p27 = scmp.ne.s32.totalorder %s19, %s22
    %p28 = scmp.eq.s32.totalorder %s9, 0
    %p29 = por %p27, %p28
    %p30 = scmp.ne.s32.totalorder %s19, %s22
    %p31 = scmp.eq.s32.totalorder %s14, 1
    %p32 = por %p30, %p31
    %p33 = scmp.ne.s32.totalorder %s22, %s23
    %p34 = scmp.eq.s32.totalorder %s14, 0
    %p35 = por %p33, %p34
    %p36 = scmp.ne.s32.totalorder %s22, %s23
    %p37 = scmp.eq.s32.totalorder %s15, 1
    %p38 = por %p36, %p37
    %p40 = scmp.ne.s32.totalorder %s23, %s39
    %p41 = scmp.eq.s32.totalorder %s15, 0
    %p42 = por %p40, %p41
    %s44 = sadd.s32 %s43, 1
    %p47 = scmp.eq.s32.totalorder %s9, 1
    %p48 = scmp.ne.s32.totalorder %s43, %s45
    %p49 = scmp.eq.s32.totalorder %s9, 0
    %p50 = por %p48, %p49
    %p51 = scmp.ne.s32.totalorder %s43, %s45
    %p52 = scmp.eq.s32.totalorder %s14, 1
    %p53 = por %p51, %p52
    %p54 = scmp.ne.s32.totalorder %s45, %s46
    %p55 = scmp.eq.s32.totalorder %s14, 0
    %p56 = por %p54, %p55
    %p57 = scmp.ne.s32.totalorder %s45, %s46
    %p58 = scmp.eq.s32.totalorder %s15, 1
    %p59 = por %p57, %p58
    %p61 = scmp.ne.s32.totalorder %s46, %s60
    %p62 = scmp.eq.s32.totalorder %s15, 0
    %p63 = por %p61, %p62
    %s65 = sadd.s32 %s64, 1
    %p68 = scmp.eq.s32.totalorder %s9, 1
    %p69 = scmp.ne.s32.totalorder %s64, %s66
    %p70 = scmp.eq.s32.totalorder %s9, 0
    %p71 = por %p69, %p70
    %p72 = scmp.ne.s32.totalorder %s64, %s66
    %p73 = scmp.eq.s32.totalorder %s14, 1
    %p74 = por %p72, %p73
    %p75 = scmp.ne.s32.totalorder %s66, %s67
    %p76 = scmp.eq.s32.totalorder %s14, 0
    %p77 = por %p75, %p76
    %p78 = scmp.ne.s32.totalorder %s66, %s67
    %p79 = scmp.eq.s32.totalorder %s15, 1
    %p80 = por %p78, %p79
    %p82 = scmp.ne.s32.totalorder %s67, %s81
    %p83 = scmp.eq.s32.totalorder %s15, 0
    %p84 = por %p82, %p83
    %s85 = ssub.s32 %s9, %s16
    %p86 = scmp.eq.s32.totalorder %s85, 0
    %s88 = sadd.s32 %s87, 1
    %s89 = scalar_select %p86, %s87, %s88
    %p92 = pneg %p86
    %p93 = scmp.eq.s32.totalorder %s9, 1
    %p94 = por %p92, %p93
    %p95 = scmp.ne.s32.totalorder %s87, %s90
    %p96 = scmp.eq.s32.totalorder %s9, 0
    %p97 = por %p95, %p96
    %p98 = scmp.ne.s32.totalorder %s87, %s90
    %p99 = scmp.eq.s32.totalorder %s14, 1
    %p100 = por %p98, %p99
    %p101 = scmp.ne.s32.totalorder %s90, %s91
    %p102 = scmp.eq.s32.totalorder %s14, 0
    %p103 = por %p101, %p102
    %p104 = scmp.ne.s32.totalorder %s90, %s91
    %p105 = scmp.eq.s32.totalorder %s15, 1
    %p106 = por %p104, %p105
    %p108 = scmp.ne.s32.totalorder %s91, %s107
    %p109 = scmp.eq.s32.totalorder %s15, 0
    %p110 = por %p108, %p109
    %p111 = scmp.le.s32.totalorder 1, %s9
    %p112 = scmp.lt.s32.totalorder %s9, 3
    %p113 = pnand %p111, %p112
    %p114 = pneg %p113
    // Predicated region
    $region9: #{inception_block_v1_pallas.1} parent=5 // pred_check
      _
    $region10: #{inception_block_v1_pallas.1} parent=5 // pred_check_branch
      %116 = sbr.rel (%p113) target = $region12
    $region11: #{inception_block_v1_pallas.1} parent=5 // pred_region
      %s117 = ssub.s32 %s9, 1
      // Predicated region
      $region13: #{inception_block_v1_pallas.1} parent=11 // pred_check
        %p118 = pneg %p56
      $region14: #{inception_block_v1_pallas.1} parent=11 // pred_check_branch
        %120 = sbr.rel (%p118) target = $region16
      $region15: #{inception_block_v1_pallas.1} parent=11 // pred_region
        _
      $region16: #{inception_block_v1_pallas.1} parent=11 // pred_fallthru
        _
      // Predicated region
      $region17: #{inception_block_v1_pallas.1} parent=11 // pred_check
        %p121 = pneg %p77
      $region18: #{inception_block_v1_pallas.1} parent=11 // pred_check_branch
        %123 = sbr.rel (%p121) target = $region20
      $region19: #{inception_block_v1_pallas.1} parent=11 // pred_region
        _
      $region20: #{inception_block_v1_pallas.1} parent=11 // pred_fallthru
        _
    $region12: #{inception_block_v1_pallas.1} parent=5 // pred_fallthru
      _
    %p124 = scmp.lt.s32.totalorder %s9, 2
    // Predicated region
    $region21: #{inception_block_v1_pallas.1} parent=5 // pred_check
      %p125 = pneg %p124
    $region22: #{inception_block_v1_pallas.1} parent=5 // pred_check_branch
      %127 = sbr.rel (%p125) target = $region24
    $region23: #{inception_block_v1_pallas.1} parent=5 // pred_region
      // Predicated region
      $region25: #{inception_block_v1_pallas.1} parent=23 // pred_check
        %p128 = pneg %p29
      $region26: #{inception_block_v1_pallas.1} parent=23 // pred_check_branch
        %130 = sbr.rel (%p128) target = $region28
      $region27: #{inception_block_v1_pallas.1} parent=23 // pred_region
        %p131 = scmp.lt.s32.totalorder %s9, 1
        %s132 = scalar_select %p131, %s9, 1
        %s133 = smul.addr %s132, 14
        %s134 = smul.addr %s133, 4
        %s135 = scalar_lea.vmem %s0, %s134
      $region28: #{inception_block_v1_pallas.1} parent=23 // pred_fallthru
        _
    $region24: #{inception_block_v1_pallas.1} parent=5 // pred_fallthru
      _
    %p136 = scmp.le.s32.totalorder 1, %s9
    %p137 = scmp.lt.s32.totalorder %s9, 3
    %p138 = pnand %p136, %p137
    %p139 = pneg %p138
    // Predicated region
    $region29: #{inception_block_v1_pallas.1} parent=5 // pred_check
      _
    $region30: #{inception_block_v1_pallas.1} parent=5 // pred_check_branch
      %141 = sbr.rel (%p138) target = $region32
    $region31: #{inception_block_v1_pallas.1} parent=5 // pred_region
      %s142 = ssub.s32 %s9, 1
      %p143 = scmp.lt.s32.totalorder %s14, 1
      %s144 = scalar_select %p143, %s14, 1
      %s145 = smul.addr %s144, 14
      %s146 = smul.addr %s145, 4
      %s147 = scalar_lea.vmem %s0, %s146
      %p148 = pneg %p35
      %p149 = pneg %p32
      %p150 = pneg %p56
      %p151 = pneg %p53
      %p152 = pneg %p77
      %p153 = pneg %p74
      %p154 = pneg %p103
      %p155 = pneg %p100
      %p156 = scmp.lt.s32.totalorder %s14, 1
      %s157 = scalar_select %p156, %s14, 1
      %s158 = smul.addr %s157, 4
      %s159 = smul.addr %s158, 8
      %s160 = scalar_lea.vmem %s3, %s159
      %p161 = scmp.lt.s32.totalorder %s14, 1
      %s162 = scalar_select %p161, %s14, 1
      %s163 = smul.addr %s162, 14
      %s164 = smul.addr %s163, 4
      %s165 = scalar_lea.vmem %s0, %s164
      %p166 = scmp.lt.s32.totalorder %s14, 1
      %s167 = scalar_select %p166, %s14, 1
      %s168 = smul.addr %s167, 4
      %s169 = smul.addr %s168, 8
      %s170 = scalar_lea.vmem %s3, %s169
      %v172 = vld [vmem:[%s165] sm:$0xff]
      %v173 = vld [vmem:[%s165 + $0x8] sm:$0xff]
      %v174 = vld [vmem:[%s165 + $0x10] sm:$0xf]
      %v175 = vld [vmem:[%s165 + $0x1c] sm:$0xff]
      %v176 = vld [vmem:[%s165 + $0x24] sm:$0xff]
      %v177 = vld [vmem:[%s165 + $0x2c] sm:$0xf]
      %178 = vst [vmem:[#allocation2] sm:$0xff] %v172
      %179 = vst [vmem:[#allocation2 + $0x8] sm:$0xff] %v173
      %180 = vst [vmem:[#allocation2 + $0x10] sm:$0xff] %v175
      %181 = vst [vmem:[#allocation2 + $0x18] sm:$0xff] %v176
      %188 = vrot.lane.b32.xlu0 %v172, 127
      %v189 = vpop.permute.xlu0 %188
      %190 = vrot.lane.b32.xlu0 %v173, 127
      %v191 = vpop.permute.xlu0 %190
      %192 = vrot.lane.b32.xlu0 %v174, 127
      %v193 = vpop.permute.xlu0 %192
      %194 = vrot.lane.b32.xlu0 %v175, 127
      %v195 = vpop.permute.xlu0 %194
      %196 = vrot.lane.b32.xlu0 %v176, 127
      %v197 = vpop.permute.xlu0 %196
      %198 = vrot.lane.b32.xlu0 %v177, 127
      %v199 = vpop.permute.xlu0 %198
      %v200 = vrot.slane %v189, 4
      %v201 = vrot.slane %v191, 4
      %v202 = vrot.slane %v193, 4
      %v203 = vrot.slane %v195, 4
      %v204 = vrot.slane %v197, 4
      %v205 = vrot.slane %v199, 4
      %vm206 = vcmask 1043456
      %v207 = vsel %vm206, %v200, %v201
      %vm208 = vcmask 1039360
      %v209 = vsel %vm208, %v189, %v207
      %v210 = vsel %vm206, %v201, %v202
      %v211 = vsel %vm208, %v191, %v210
      %v212 = vsel %vm206, %v203, %v204
      %v213 = vsel %vm208, %v195, %v212
      %v214 = vsel %vm206, %v204, %v205
      %v215 = vsel %vm208, %v197, %v214
      %220 = vst [vmem:[#allocation2 + $0x20] sm:$0xff] %v209
      %221 = vst [vmem:[#allocation2 + $0x28] sm:$0xff] %v211
      %222 = vst [vmem:[#allocation2 + $0x30] sm:$0xff] %v213
      %223 = vst [vmem:[#allocation2 + $0x38] sm:$0xff] %v215
      %224 = vrot.lane.b32.xlu0 %v172, 126
      %v225 = vpop.permute.xlu0 %224
      %226 = vrot.lane.b32.xlu0 %v173, 126
      %v227 = vpop.permute.xlu0 %226
      %228 = vrot.lane.b32.xlu0 %v174, 126
      %v229 = vpop.permute.xlu0 %228
      %230 = vrot.lane.b32.xlu0 %v175, 126
      %v231 = vpop.permute.xlu0 %230
      %232 = vrot.lane.b32.xlu0 %v176, 126
      %v233 = vpop.permute.xlu0 %232
      %234 = vrot.lane.b32.xlu0 %v177, 126
      %v235 = vpop.permute.xlu0 %234
      %v236 = vrot.slane %v225, 4
      %v237 = vrot.slane %v227, 4
      %v238 = vrot.slane %v229, 4
      %v239 = vrot.slane %v231, 4
      %v240 = vrot.slane %v233, 4
      %v241 = vrot.slane %v235, 4
      %v242 = vsel %vm206, %v236, %v237
      %vm243 = vcmask 1031168
      %v244 = vsel %vm243, %v225, %v242
      %v245 = vsel %vm206, %v237, %v238
      %v246 = vsel %vm243, %v227, %v245
      %v247 = vsel %vm206, %v239, %v240
      %v248 = vsel %vm243, %v231, %v247
      %v249 = vsel %vm206, %v240, %v241
      %v250 = vsel %vm243, %v233, %v249
      %255 = vst [vmem:[#allocation2 + $0x40] sm:$0xff] %v244
      %256 = vst [vmem:[#allocation2 + $0x48] sm:$0xff] %v246
      %257 = vst [vmem:[#allocation2 + $0x50] sm:$0xff] %v248
      %258 = vst [vmem:[#allocation2 + $0x58] sm:$0xff] %v250
      %259 = vrot.lane.b32.xlu0 %v172, 125
      %v260 = vpop.permute.xlu0 %259
      %261 = vrot.lane.b32.xlu0 %v173, 125
      %v262 = vpop.permute.xlu0 %261
      %263 = vrot.lane.b32.xlu0 %v174, 125
      %v264 = vpop.permute.xlu0 %263
      %265 = vrot.lane.b32.xlu0 %v175, 125
      %v266 = vpop.permute.xlu0 %265
      %267 = vrot.lane.b32.xlu0 %v176, 125
      %v268 = vpop.permute.xlu0 %267
      %269 = vrot.lane.b32.xlu0 %v177, 125
      %v270 = vpop.permute.xlu0 %269
      %v271 = vrot.slane %v260, 4
      %v272 = vrot.slane %v262, 4
      %v273 = vrot.slane %v264, 4
      %v274 = vrot.slane %v266, 4
      %v275 = vrot.slane %v268, 4
      %v276 = vrot.slane %v270, 4
      %v277 = vsel %vm206, %v271, %v272
      %vm278 = vcmask 1022976
      %v279 = vsel %vm278, %v260, %v277
      %v280 = vsel %vm206, %v272, %v273
      %v281 = vsel %vm278, %v262, %v280
      %v282 = vsel %vm206, %v274, %v275
      %v283 = vsel %vm278, %v266, %v282
      %v284 = vsel %vm206, %v275, %v276
      %v285 = vsel %vm278, %v268, %v284
      %290 = vst [vmem:[#allocation2 + $0x60] sm:$0xff] %v279
      %291 = vst [vmem:[#allocation2 + $0x68] sm:$0xff] %v281
      %292 = vst [vmem:[#allocation2 + $0x70] sm:$0xff] %v283
      %293 = vst [vmem:[#allocation2 + $0x78] sm:$0xff] %v285
      %294 = vrot.lane.b32.xlu0 %v172, 124
      %v295 = vpop.permute.xlu0 %294
      %296 = vrot.lane.b32.xlu0 %v173, 124
      %v297 = vpop.permute.xlu0 %296
      %298 = vrot.lane.b32.xlu0 %v174, 124
      %v299 = vpop.permute.xlu0 %298
      %300 = vrot.lane.b32.xlu0 %v175, 124
      %v301 = vpop.permute.xlu0 %300
      %302 = vrot.lane.b32.xlu0 %v176, 124
      %v303 = vpop.permute.xlu0 %302
      %304 = vrot.lane.b32.xlu0 %v177, 124
      %v305 = vpop.permute.xlu0 %304
      %v306 = vrot.slane %v295, 4
      %v307 = vrot.slane %v297, 4
      %v308 = vrot.slane %v299, 4
      %v309 = vrot.slane %v301, 4
      %v310 = vrot.slane %v303, 4
      %v311 = vrot.slane %v305, 4
      %v312 = vsel %vm206, %v306, %v307
      %vm313 = vcmask 1014784
      %v314 = vsel %vm313, %v295, %v312
      %v315 = vsel %vm206, %v307, %v308
      %v316 = vsel %vm313, %v297, %v315
      %v317 = vsel %vm206, %v309, %v310
      %v318 = vsel %vm313, %v301, %v317
      %v319 = vsel %vm206, %v310, %v311
      %v320 = vsel %vm313, %v303, %v319
      %325 = vst [vmem:[#allocation2 + $0x80] sm:$0xff] %v314
      %326 = vst [vmem:[#allocation2 + $0x88] sm:$0xff] %v316
      %327 = vst [vmem:[#allocation2 + $0x90] sm:$0xff] %v318
      %328 = vst [vmem:[#allocation2 + $0x98] sm:$0xff] %v320
      %329 = vrot.lane.b32.xlu0 %v172, 123
      %v330 = vpop.permute.xlu0 %329
      %331 = vrot.lane.b32.xlu0 %v173, 123
      %v332 = vpop.permute.xlu0 %331
      %333 = vrot.lane.b32.xlu0 %v174, 123
      %v334 = vpop.permute.xlu0 %333
      %335 = vrot.lane.b32.xlu0 %v175, 123
      %v336 = vpop.permute.xlu0 %335
      %337 = vrot.lane.b32.xlu0 %v176, 123
      %v338 = vpop.permute.xlu0 %337
      %339 = vrot.lane.b32.xlu0 %v177, 123
      %v340 = vpop.permute.xlu0 %339
      %v341 = vrot.slane %v330, 4
      %v342 = vrot.slane %v332, 4
      %v343 = vrot.slane %v334, 4
      %v344 = vrot.slane %v336, 4
      %v345 = vrot.slane %v338, 4
      %v346 = vrot.slane %v340, 4
      %v347 = vsel %vm206, %v341, %v342
      %vm348 = vcmask 1006592
      %v349 = vsel %vm348, %v330, %v347
      %v350 = vsel %vm206, %v342, %v343
      %v351 = vsel %vm348, %v332, %v350
      %v352 = vsel %vm206, %v344, %v345
      %v353 = vsel %vm348, %v336, %v352
      %v354 = vsel %vm206, %v345, %v346
      %v355 = vsel %vm348, %v338, %v354
      %360 = vst [vmem:[#allocation2 + $0xa0] sm:$0xff] %v349
      %361 = vst [vmem:[#allocation2 + $0xa8] sm:$0xff] %v351
      %362 = vst [vmem:[#allocation2 + $0xb0] sm:$0xff] %v353
      %363 = vst [vmem:[#allocation2 + $0xb8] sm:$0xff] %v355
      %364 = vrot.lane.b32.xlu0 %v172, 122
      %v365 = vpop.permute.xlu0 %364
      %366 = vrot.lane.b32.xlu0 %v173, 122
      %v367 = vpop.permute.xlu0 %366
      %368 = vrot.lane.b32.xlu0 %v174, 122
      %v369 = vpop.permute.xlu0 %368
      %370 = vrot.lane.b32.xlu0 %v175, 122
      %v371 = vpop.permute.xlu0 %370
      %372 = vrot.lane.b32.xlu0 %v176, 122
      %v373 = vpop.permute.xlu0 %372
      %374 = vrot.lane.b32.xlu0 %v177, 122
      %v375 = vpop.permute.xlu0 %374
      %v376 = vrot.slane %v365, 4
      %v377 = vrot.slane %v367, 4
      %v378 = vrot.slane %v369, 4
      %v379 = vrot.slane %v371, 4
      %v380 = vrot.slane %v373, 4
      %v381 = vrot.slane %v375, 4
      %v382 = vsel %vm206, %v376, %v377
      %vm383 = vcmask 998400
      %v384 = vsel %vm383, %v365, %v382
      %v385 = vsel %vm206, %v377, %v378
      %v386 = vsel %vm383, %v367, %v385
      %v387 = vsel %vm206, %v379, %v380
      %v388 = vsel %vm383, %v371, %v387
      %v389 = vsel %vm206, %v380, %v381
      %v390 = vsel %vm383, %v373, %v389
      %395 = vst [vmem:[#allocation2 + $0xc0] sm:$0xff] %v384
      %396 = vst [vmem:[#allocation2 + $0xc8] sm:$0xff] %v386
      %397 = vst [vmem:[#allocation2 + $0xd0] sm:$0xff] %v388
      %398 = vst [vmem:[#allocation2 + $0xd8] sm:$0xff] %v390
      %399 = vrot.lane.b32.xlu0 %v172, 121
      %v400 = vpop.permute.xlu0 %399
      %401 = vrot.lane.b32.xlu0 %v173, 121
      %v402 = vpop.permute.xlu0 %401
      %403 = vrot.lane.b32.xlu0 %v174, 121
      %v404 = vpop.permute.xlu0 %403
      %405 = vrot.lane.b32.xlu0 %v175, 121
      %v406 = vpop.permute.xlu0 %405
      %407 = vrot.lane.b32.xlu0 %v176, 121
      %v408 = vpop.permute.xlu0 %407
      %409 = vrot.lane.b32.xlu0 %v177, 121
      %v410 = vpop.permute.xlu0 %409
      %v411 = vrot.slane %v400, 4
      %v412 = vrot.slane %v402, 4
      %v413 = vrot.slane %v404, 4
      %v414 = vrot.slane %v406, 4
      %v415 = vrot.slane %v408, 4
      %v416 = vrot.slane %v410, 4
      %v417 = vsel %vm206, %v411, %v412
      %vm418 = vcmask 990208
      %v419 = vsel %vm418, %v400, %v417
      %v420 = vsel %vm206, %v412, %v413
      %v421 = vsel %vm418, %v402, %v420
      %v422 = vsel %vm206, %v414, %v415
      %v423 = vsel %vm418, %v406, %v422
      %v424 = vsel %vm206, %v415, %v416
      %v425 = vsel %vm418, %v408, %v424
      %430 = vst [vmem:[#allocation2 + $0xe0] sm:$0xff] %v419
      %431 = vst [vmem:[#allocation2 + $0xe8] sm:$0xff] %v421
      %432 = vst [vmem:[#allocation2 + $0xf0] sm:$0xff] %v423
      %433 = vst [vmem:[#allocation2 + $0xf8] sm:$0xff] %v425
      %434 = vrot.lane.b32.xlu0 %v172, 120
      %v435 = vpop.permute.xlu0 %434
      %436 = vrot.lane.b32.xlu0 %v173, 120
      %v437 = vpop.permute.xlu0 %436
      %438 = vrot.lane.b32.xlu0 %v174, 120
      %v439 = vpop.permute.xlu0 %438
      %440 = vrot.lane.b32.xlu0 %v175, 120
      %v441 = vpop.permute.xlu0 %440
      %442 = vrot.lane.b32.xlu0 %v176, 120
      %v443 = vpop.permute.xlu0 %442
      %444 = vrot.lane.b32.xlu0 %v177, 120
      %v445 = vpop.permute.xlu0 %444
      %v446 = vrot.slane %v435, 4
      %v447 = vrot.slane %v437, 4
      %v448 = vrot.slane %v439, 4
      %v449 = vrot.slane %v441, 4
      %v450 = vrot.slane %v443, 4
      %v451 = vrot.slane %v445, 4
      %v452 = vsel %vm206, %v446, %v447
      %vm453 = vcmask 982016
      %v454 = vsel %vm453, %v435, %v452
      %v455 = vsel %vm206, %v447, %v448
      %v456 = vsel %vm453, %v437, %v455
      %v457 = vsel %vm206, %v449, %v450
      %v458 = vsel %vm453, %v441, %v457
      %v459 = vsel %vm206, %v450, %v451
      %v460 = vsel %vm453, %v443, %v459
      %465 = vst [vmem:[#allocation2 + $0x100] sm:$0xff] %v454
      %466 = vst [vmem:[#allocation2 + $0x108] sm:$0xff] %v456
      %467 = vst [vmem:[#allocation2 + $0x110] sm:$0xff] %v458
      %468 = vst [vmem:[#allocation2 + $0x118] sm:$0xff] %v460
      %469 = vrot.lane.b32.xlu0 %v172, 119
      %v470 = vpop.permute.xlu0 %469
      %471 = vrot.lane.b32.xlu0 %v173, 119
      %v472 = vpop.permute.xlu0 %471
      %473 = vrot.lane.b32.xlu0 %v174, 119
      %v474 = vpop.permute.xlu0 %473
      %475 = vrot.lane.b32.xlu0 %v175, 119
      %v476 = vpop.permute.xlu0 %475
      %477 = vrot.lane.b32.xlu0 %v176, 119
      %v478 = vpop.permute.xlu0 %477
      %479 = vrot.lane.b32.xlu0 %v177, 119
      %v480 = vpop.permute.xlu0 %479
      %v481 = vrot.slane %v470, 4
      %v482 = vrot.slane %v472, 4
      %v483 = vrot.slane %v474, 4
      %v484 = vrot.slane %v476, 4
      %v485 = vrot.slane %v478, 4
      %v486 = vrot.slane %v480, 4
      %v487 = vsel %vm206, %v481, %v482
      %vm488 = vcmask 973824
      %v489 = vsel %vm488, %v470, %v487
      %v490 = vsel %vm206, %v482, %v483
      %v491 = vsel %vm488, %v472, %v490
      %v492 = vsel %vm206, %v484, %v485
      %v493 = vsel %vm488, %v476, %v492
      %v494 = vsel %vm206, %v485, %v486
      %v495 = vsel %vm488, %v478, %v494
      %500 = vst [vmem:[#allocation2 + $0x120] sm:$0xff] %v489
      %501 = vst [vmem:[#allocation2 + $0x128] sm:$0xff] %v491
      %502 = vst [vmem:[#allocation2 + $0x130] sm:$0xff] %v493
      %503 = vst [vmem:[#allocation2 + $0x138] sm:$0xff] %v495
      %504 = vrot.lane.b32.xlu0 %v172, 118
      %v505 = vpop.permute.xlu0 %504
      %506 = vrot.lane.b32.xlu0 %v173, 118
      %v507 = vpop.permute.xlu0 %506
      %508 = vrot.lane.b32.xlu0 %v174, 118
      %v509 = vpop.permute.xlu0 %508
      %510 = vrot.lane.b32.xlu0 %v175, 118
      %v511 = vpop.permute.xlu0 %510
      %512 = vrot.lane.b32.xlu0 %v176, 118
      %v513 = vpop.permute.xlu0 %512
      %514 = vrot.lane.b32.xlu0 %v177, 118
      %v515 = vpop.permute.xlu0 %514
      %v516 = vrot.slane %v505, 4
      %v517 = vrot.slane %v507, 4
      %v518 = vrot.slane %v509, 4
      %v519 = vrot.slane %v511, 4
      %v520 = vrot.slane %v513, 4
      %v521 = vrot.slane %v515, 4
      %v522 = vsel %vm206, %v516, %v517
      %vm523 = vcmask 965632
      %v524 = vsel %vm523, %v505, %v522
      %v525 = vsel %vm206, %v517, %v518
      %v526 = vsel %vm523, %v507, %v525
      %v527 = vsel %vm206, %v519, %v520
      %v528 = vsel %vm523, %v511, %v527
      %v529 = vsel %vm206, %v520, %v521
      %v530 = vsel %vm523, %v513, %v529
      %535 = vst [vmem:[#allocation2 + $0x140] sm:$0xff] %v524
      %536 = vst [vmem:[#allocation2 + $0x148] sm:$0xff] %v526
      %537 = vst [vmem:[#allocation2 + $0x150] sm:$0xff] %v528
      %538 = vst [vmem:[#allocation2 + $0x158] sm:$0xff] %v530
      %v539 = vld [vmem:[%s165] sm:$0xff]
      %v540 = vld [vmem:[%s165 + $0x8] sm:$0xff]
      %v541 = vld [vmem:[%s165 + $0x10] sm:$0xf]
      %v542 = vld [vmem:[%s165 + $0x1c] sm:$0xff]
      %v543 = vld [vmem:[%s165 + $0x24] sm:$0xff]
      %v544 = vld [vmem:[%s165 + $0x2c] sm:$0xf]
      %551 = vrot.lane.b32.xlu0 %v539, 102
      %v552 = vpop.permute.xlu0 %551
      %553 = vrot.lane.b32.xlu0 %v540, 102
      %v554 = vpop.permute.xlu0 %553
      %555 = vrot.lane.b32.xlu0 %v541, 102
      %v556 = vpop.permute.xlu0 %555
      %557 = vrot.lane.b32.xlu0 %v542, 102
      %v558 = vpop.permute.xlu0 %557
      %559 = vrot.lane.b32.xlu0 %v543, 102
      %v560 = vpop.permute.xlu0 %559
      %561 = vrot.lane.b32.xlu0 %v544, 102
      %v562 = vpop.permute.xlu0 %561
      %v563 = vrot.slane %v552, 4
      %v564 = vrot.slane %v554, 4
      %v565 = vrot.slane %v556, 4
      %v566 = vrot.slane %v558, 4
      %v567 = vrot.slane %v560, 4
      %v568 = vrot.slane %v562, 4
      %v569 = vsel %vm206, %v563, %v564
      %vm570 = vcmask 834560
      %v571 = vsel %vm570, %v552, %v569
      %v572 = vsel %vm206, %v564, %v565
      %v573 = vsel %vm570, %v554, %v572
      %v574 = vsel %vm206, %v566, %v567
      %v575 = vsel %vm570, %v558, %v574
      %v576 = vsel %vm206, %v567, %v568
      %v577 = vsel %vm570, %v560, %v576
      %582 = vst [vmem:[#allocation2 + $0x160] sm:$0xff] %v571
      %583 = vst [vmem:[#allocation2 + $0x168] sm:$0xff] %v573
      %584 = vst [vmem:[#allocation2 + $0x170] sm:$0xff] %v575
      %585 = vst [vmem:[#allocation2 + $0x178] sm:$0xff] %v577
      %586 = vrot.lane.b32.xlu0 %v539, 101
      %v587 = vpop.permute.xlu0 %586
      %588 = vrot.lane.b32.xlu0 %v540, 101
      %v589 = vpop.permute.xlu0 %588
      %590 = vrot.lane.b32.xlu0 %v541, 101
      %v591 = vpop.permute.xlu0 %590
      %592 = vrot.lane.b32.xlu0 %v542, 101
      %v593 = vpop.permute.xlu0 %592
      %594 = vrot.lane.b32.xlu0 %v543, 101
      %v595 = vpop.permute.xlu0 %594
      %596 = vrot.lane.b32.xlu0 %v544, 101
      %v597 = vpop.permute.xlu0 %596
      %v598 = vrot.slane %v587, 4
      %v599 = vrot.slane %v589, 4
      %v600 = vrot.slane %v591, 4
      %v601 = vrot.slane %v593, 4
      %v602 = vrot.slane %v595, 4
      %v603 = vrot.slane %v597, 4
      %v604 = vsel %vm206, %v598, %v599
      %vm605 = vcmask 826368
      %v606 = vsel %vm605, %v587, %v604
      %v607 = vsel %vm206, %v599, %v600
      %v608 = vsel %vm605, %v589, %v607
      %v609 = vsel %vm206, %v601, %v602
      %v610 = vsel %vm605, %v593, %v609
      %v611 = vsel %vm206, %v602, %v603
      %v612 = vsel %vm605, %v595, %v611
      %617 = vst [vmem:[#allocation2 + $0x180] sm:$0xff] %v606
      %618 = vst [vmem:[#allocation2 + $0x188] sm:$0xff] %v608
      %619 = vst [vmem:[#allocation2 + $0x190] sm:$0xff] %v610
      %620 = vst [vmem:[#allocation2 + $0x198] sm:$0xff] %v612
      %621 = vrot.lane.b32.xlu0 %v539, 100
      %v622 = vpop.permute.xlu0 %621
      %623 = vrot.lane.b32.xlu0 %v540, 100
      %v624 = vpop.permute.xlu0 %623
      %625 = vrot.lane.b32.xlu0 %v541, 100
      %v626 = vpop.permute.xlu0 %625
      %627 = vrot.lane.b32.xlu0 %v542, 100
      %v628 = vpop.permute.xlu0 %627
      %629 = vrot.lane.b32.xlu0 %v543, 100
      %v630 = vpop.permute.xlu0 %629
      %631 = vrot.lane.b32.xlu0 %v544, 100
      %v632 = vpop.permute.xlu0 %631
      %v633 = vrot.slane %v622, 4
      %v634 = vrot.slane %v624, 4
      %v635 = vrot.slane %v626, 4
      %v636 = vrot.slane %v628, 4
      %v637 = vrot.slane %v630, 4
      %v638 = vrot.slane %v632, 4
      %v639 = vsel %vm206, %v633, %v634
      %vm640 = vcmask 818176
      %v641 = vsel %vm640, %v622, %v639
      %v642 = vsel %vm206, %v634, %v635
      %v643 = vsel %vm640, %v624, %v642
      %v644 = vsel %vm206, %v636, %v637
      %v645 = vsel %vm640, %v628, %v644
      %v646 = vsel %vm206, %v637, %v638
      %v647 = vsel %vm640, %v630, %v646
      %652 = vst [vmem:[#allocation2 + $0x1a0] sm:$0xff] %v641
      %653 = vst [vmem:[#allocation2 + $0x1a8] sm:$0xff] %v643
      %654 = vst [vmem:[#allocation2 + $0x1b0] sm:$0xff] %v645
      %655 = vst [vmem:[#allocation2 + $0x1b8] sm:$0xff] %v647
      %656 = vrot.lane.b32.xlu0 %v539, 99
      %v657 = vpop.permute.xlu0 %656
      %658 = vrot.lane.b32.xlu0 %v540, 99
      %v659 = vpop.permute.xlu0 %658
      %660 = vrot.lane.b32.xlu0 %v541, 99
      %v661 = vpop.permute.xlu0 %660
      %662 = vrot.lane.b32.xlu0 %v542, 99
      %v663 = vpop.permute.xlu0 %662
      %664 = vrot.lane.b32.xlu0 %v543, 99
      %v665 = vpop.permute.xlu0 %664
      %666 = vrot.lane.b32.xlu0 %v544, 99
      %v667 = vpop.permute.xlu0 %666
      %v668 = vrot.slane %v657, 4
      %v669 = vrot.slane %v659, 4
      %v670 = vrot.slane %v661, 4
      %v671 = vrot.slane %v663, 4
      %v672 = vrot.slane %v665, 4
      %v673 = vrot.slane %v667, 4
      %v674 = vsel %vm206, %v668, %v669
      %vm675 = vcmask 809984
      %v676 = vsel %vm675, %v657, %v674
      %v677 = vsel %vm206, %v669, %v670
      %v678 = vsel %vm675, %v659, %v677
      %v679 = vsel %vm206, %v671, %v672
      %v680 = vsel %vm675, %v663, %v679
      %v681 = vsel %vm206, %v672, %v673
      %v682 = vsel %vm675, %v665, %v681
      %687 = vst [vmem:[#allocation2 + $0x1c0] sm:$0xff] %v676
      %688 = vst [vmem:[#allocation2 + $0x1c8] sm:$0xff] %v678
      %689 = vst [vmem:[#allocation2 + $0x1d0] sm:$0xff] %v680
      %690 = vst [vmem:[#allocation2 + $0x1d8] sm:$0xff] %v682
      %691 = vrot.lane.b32.xlu0 %v539, 98
      %v692 = vpop.permute.xlu0 %691
      %693 = vrot.lane.b32.xlu0 %v540, 98
      %v694 = vpop.permute.xlu0 %693
      %695 = vrot.lane.b32.xlu0 %v541, 98
      %v696 = vpop.permute.xlu0 %695
      %697 = vrot.lane.b32.xlu0 %v542, 98
      %v698 = vpop.permute.xlu0 %697
      %699 = vrot.lane.b32.xlu0 %v543, 98
      %v700 = vpop.permute.xlu0 %699
      %701 = vrot.lane.b32.xlu0 %v544, 98
      %v702 = vpop.permute.xlu0 %701
      %v703 = vrot.slane %v692, 4
      %v704 = vrot.slane %v694, 4
      %v705 = vrot.slane %v696, 4
      %v706 = vrot.slane %v698, 4
      %v707 = vrot.slane %v700, 4
      %v708 = vrot.slane %v702, 4
      %v709 = vsel %vm206, %v703, %v704
      %vm710 = vcmask 801792
      %v711 = vsel %vm710, %v692, %v709
      %v712 = vsel %vm206, %v704, %v705
      %v713 = vsel %vm710, %v694, %v712
      %v714 = vsel %vm206, %v706, %v707
      %v715 = vsel %vm710, %v698, %v714
      %v716 = vsel %vm206, %v707, %v708
      %v717 = vsel %vm710, %v700, %v716
      %722 = vst [vmem:[#allocation2 + $0x1e0] sm:$0xff] %v711
      %723 = vst [vmem:[#allocation2 + $0x1e8] sm:$0xff] %v713
      %724 = vst [vmem:[#allocation2 + $0x1f0] sm:$0xff] %v715
      %725 = vst [vmem:[#allocation2 + $0x1f8] sm:$0xff] %v717
      %726 = vrot.lane.b32.xlu0 %v539, 97
      %v727 = vpop.permute.xlu0 %726
      %728 = vrot.lane.b32.xlu0 %v540, 97
      %v729 = vpop.permute.xlu0 %728
      %730 = vrot.lane.b32.xlu0 %v541, 97
      %v731 = vpop.permute.xlu0 %730
      %732 = vrot.lane.b32.xlu0 %v542, 97
      %v733 = vpop.permute.xlu0 %732
      %734 = vrot.lane.b32.xlu0 %v543, 97
      %v735 = vpop.permute.xlu0 %734
      %736 = vrot.lane.b32.xlu0 %v544, 97
      %v737 = vpop.permute.xlu0 %736
      %v738 = vrot.slane %v727, 4
      %v739 = vrot.slane %v729, 4
      %v740 = vrot.slane %v731, 4
      %v741 = vrot.slane %v733, 4
      %v742 = vrot.slane %v735, 4
      %v743 = vrot.slane %v737, 4
      %v744 = vsel %vm206, %v738, %v739
      %vm745 = vcmask 793600
      %v746 = vsel %vm745, %v727, %v744
      %v747 = vsel %vm206, %v739, %v740
      %v748 = vsel %vm745, %v729, %v747
      %v749 = vsel %vm206, %v741, %v742
      %v750 = vsel %vm745, %v733, %v749
      %v751 = vsel %vm206, %v742, %v743
      %v752 = vsel %vm745, %v735, %v751
      %757 = vst [vmem:[#allocation2 + $0x200] sm:$0xff] %v746
      %758 = vst [vmem:[#allocation2 + $0x208] sm:$0xff] %v748
      %759 = vst [vmem:[#allocation2 + $0x210] sm:$0xff] %v750
      %760 = vst [vmem:[#allocation2 + $0x218] sm:$0xff] %v752
      %761 = vrot.lane.b32.xlu0 %v539, 96
      %v762 = vpop.permute.xlu0 %761
      %763 = vrot.lane.b32.xlu0 %v540, 96
      %v764 = vpop.permute.xlu0 %763
      %765 = vrot.lane.b32.xlu0 %v541, 96
      %v766 = vpop.permute.xlu0 %765
      %767 = vrot.lane.b32.xlu0 %v542, 96
      %v768 = vpop.permute.xlu0 %767
      %769 = vrot.lane.b32.xlu0 %v543, 96
      %v770 = vpop.permute.xlu0 %769
      %771 = vrot.lane.b32.xlu0 %v544, 96
      %v772 = vpop.permute.xlu0 %771
      %v773 = vrot.slane %v762, 4
      %v774 = vrot.slane %v764, 4
      %v775 = vrot.slane %v766, 4
      %v776 = vrot.slane %v768, 4
      %v777 = vrot.slane %v770, 4
      %v778 = vrot.slane %v772, 4
      %v779 = vsel %vm206, %v773, %v774
      %vm780 = vcmask 785408
      %v781 = vsel %vm780, %v762, %v779
      %v782 = vsel %vm206, %v774, %v775
      %v783 = vsel %vm780, %v764, %v782
      %v784 = vsel %vm206, %v776, %v777
      %v785 = vsel %vm780, %v768, %v784
      %v786 = vsel %vm206, %v777, %v778
      %v787 = vsel %vm780, %v770, %v786
      %792 = vst [vmem:[#allocation2 + $0x220] sm:$0xff] %v781
      %793 = vst [vmem:[#allocation2 + $0x228] sm:$0xff] %v783
      %794 = vst [vmem:[#allocation2 + $0x230] sm:$0xff] %v785
      %795 = vst [vmem:[#allocation2 + $0x238] sm:$0xff] %v787
      %796 = vrot.lane.b32.xlu0 %v539, 95
      %v797 = vpop.permute.xlu0 %796
      %798 = vrot.lane.b32.xlu0 %v540, 95
      %v799 = vpop.permute.xlu0 %798
      %800 = vrot.lane.b32.xlu0 %v541, 95
      %v801 = vpop.permute.xlu0 %800
      %802 = vrot.lane.b32.xlu0 %v542, 95
      %v803 = vpop.permute.xlu0 %802
      %804 = vrot.lane.b32.xlu0 %v543, 95
      %v805 = vpop.permute.xlu0 %804
      %806 = vrot.lane.b32.xlu0 %v544, 95
      %v807 = vpop.permute.xlu0 %806
      %v808 = vrot.slane %v797, 4
      %v809 = vrot.slane %v799, 4
      %v810 = vrot.slane %v801, 4
      %v811 = vrot.slane %v803, 4
      %v812 = vrot.slane %v805, 4
      %v813 = vrot.slane %v807, 4
      %v814 = vsel %vm206, %v808, %v809
      %vm815 = vcmask 777216
      %v816 = vsel %vm815, %v797, %v814
      %v817 = vsel %vm206, %v809, %v810
      %v818 = vsel %vm815, %v799, %v817
      %v819 = vsel %vm206, %v811, %v812
      %v820 = vsel %vm815, %v803, %v819
      %v821 = vsel %vm206, %v812, %v813
      %v822 = vsel %vm815, %v805, %v821
      %827 = vst [vmem:[#allocation2 + $0x240] sm:$0xff] %v816
      %828 = vst [vmem:[#allocation2 + $0x248] sm:$0xff] %v818
      %829 = vst [vmem:[#allocation2 + $0x250] sm:$0xff] %v820
      %830 = vst [vmem:[#allocation2 + $0x258] sm:$0xff] %v822
      %831 = vrot.lane.b32.xlu0 %v539, 94
      %v832 = vpop.permute.xlu0 %831
      %833 = vrot.lane.b32.xlu0 %v540, 94
      %v834 = vpop.permute.xlu0 %833
      %835 = vrot.lane.b32.xlu0 %v541, 94
      %v836 = vpop.permute.xlu0 %835
      %837 = vrot.lane.b32.xlu0 %v542, 94
      %v838 = vpop.permute.xlu0 %837
      %839 = vrot.lane.b32.xlu0 %v543, 94
      %v840 = vpop.permute.xlu0 %839
      %841 = vrot.lane.b32.xlu0 %v544, 94
      %v842 = vpop.permute.xlu0 %841
      %v843 = vrot.slane %v832, 4
      %v844 = vrot.slane %v834, 4
      %v845 = vrot.slane %v836, 4
      %v846 = vrot.slane %v838, 4
      %v847 = vrot.slane %v840, 4
      %v848 = vrot.slane %v842, 4
      %v849 = vsel %vm206, %v843, %v844
      %vm850 = vcmask 769024
      %v851 = vsel %vm850, %v832, %v849
      %v852 = vsel %vm206, %v844, %v845
      %v853 = vsel %vm850, %v834, %v852
      %v854 = vsel %vm206, %v846, %v847
      %v855 = vsel %vm850, %v838, %v854
      %v856 = vsel %vm206, %v847, %v848
      %v857 = vsel %vm850, %v840, %v856
      %862 = vst [vmem:[#allocation2 + $0x260] sm:$0xff] %v851
      %863 = vst [vmem:[#allocation2 + $0x268] sm:$0xff] %v853
      %864 = vst [vmem:[#allocation2 + $0x270] sm:$0xff] %v855
      %865 = vst [vmem:[#allocation2 + $0x278] sm:$0xff] %v857
      %866 = vrot.lane.b32.xlu0 %v539, 93
      %v867 = vpop.permute.xlu0 %866
      %868 = vrot.lane.b32.xlu0 %v540, 93
      %v869 = vpop.permute.xlu0 %868
      %870 = vrot.lane.b32.xlu0 %v541, 93
      %v871 = vpop.permute.xlu0 %870
      %872 = vrot.lane.b32.xlu0 %v542, 93
      %v873 = vpop.permute.xlu0 %872
      %874 = vrot.lane.b32.xlu0 %v543, 93
      %v875 = vpop.permute.xlu0 %874
      %876 = vrot.lane.b32.xlu0 %v544, 93
      %v877 = vpop.permute.xlu0 %876
      %v878 = vrot.slane %v867, 4
      %v879 = vrot.slane %v869, 4
      %v880 = vrot.slane %v871, 4
      %v881 = vrot.slane %v873, 4
      %v882 = vrot.slane %v875, 4
      %v883 = vrot.slane %v877, 4
      %v884 = vsel %vm206, %v878, %v879
      %vm885 = vcmask 760832
      %v886 = vsel %vm885, %v867, %v884
      %v887 = vsel %vm206, %v879, %v880
      %v888 = vsel %vm885, %v869, %v887
      %v889 = vsel %vm206, %v881, %v882
      %v890 = vsel %vm885, %v873, %v889
      %v891 = vsel %vm206, %v882, %v883
      %v892 = vsel %vm885, %v875, %v891
      %897 = vst [vmem:[#allocation2 + $0x280] sm:$0xff] %v886
      %898 = vst [vmem:[#allocation2 + $0x288] sm:$0xff] %v888
      %899 = vst [vmem:[#allocation2 + $0x290] sm:$0xff] %v890
      %900 = vst [vmem:[#allocation2 + $0x298] sm:$0xff] %v892
      %901 = vrot.lane.b32.xlu0 %v539, 92
      %v902 = vpop.permute.xlu0 %901
      %903 = vrot.lane.b32.xlu0 %v540, 92
      %v904 = vpop.permute.xlu0 %903
      %905 = vrot.lane.b32.xlu0 %v541, 92
      %v906 = vpop.permute.xlu0 %905
      %907 = vrot.lane.b32.xlu0 %v542, 92
      %v908 = vpop.permute.xlu0 %907
      %909 = vrot.lane.b32.xlu0 %v543, 92
      %v910 = vpop.permute.xlu0 %909
      %911 = vrot.lane.b32.xlu0 %v544, 92
      %v912 = vpop.permute.xlu0 %911
      %v913 = vrot.slane %v902, 4
      %v914 = vrot.slane %v904, 4
      %v915 = vrot.slane %v906, 4
      %v916 = vrot.slane %v908, 4
      %v917 = vrot.slane %v910, 4
      %v918 = vrot.slane %v912, 4
      %v919 = vsel %vm206, %v913, %v914
      %vm920 = vcmask 752640
      %v921 = vsel %vm920, %v902, %v919
      %v922 = vsel %vm206, %v914, %v915
      %v923 = vsel %vm920, %v904, %v922
      %v924 = vsel %vm206, %v916, %v917
      %v925 = vsel %vm920, %v908, %v924
      %v926 = vsel %vm206, %v917, %v918
      %v927 = vsel %vm920, %v910, %v926
      %932 = vst [vmem:[#allocation2 + $0x2a0] sm:$0xff] %v921
      %933 = vst [vmem:[#allocation2 + $0x2a8] sm:$0xff] %v923
      %934 = vst [vmem:[#allocation2 + $0x2b0] sm:$0xff] %v925
      %935 = vst [vmem:[#allocation2 + $0x2b8] sm:$0xff] %v927
      %v936 = vld [vmem:[%s165] sm:$0xff]
      %v937 = vld [vmem:[%s165 + $0x8] sm:$0xff]
      %v938 = vld [vmem:[%s165 + $0x10] sm:$0xf]
      %v939 = vld [vmem:[%s165 + $0x1c] sm:$0xff]
      %v940 = vld [vmem:[%s165 + $0x24] sm:$0xff]
      %v941 = vld [vmem:[%s165 + $0x2c] sm:$0xf]
      %948 = vrot.lane.b32.xlu0 %v936, 76
      %v949 = vpop.permute.xlu0 %948
      %950 = vrot.lane.b32.xlu0 %v937, 76
      %v951 = vpop.permute.xlu0 %950
      %952 = vrot.lane.b32.xlu0 %v938, 76
      %v953 = vpop.permute.xlu0 %952
      %954 = vrot.lane.b32.xlu0 %v939, 76
      %v955 = vpop.permute.xlu0 %954
      %956 = vrot.lane.b32.xlu0 %v940, 76
      %v957 = vpop.permute.xlu0 %956
      %958 = vrot.lane.b32.xlu0 %v941, 76
      %v959 = vpop.permute.xlu0 %958
      %v960 = vrot.slane %v949, 4
      %v961 = vrot.slane %v951, 4
      %v962 = vrot.slane %v953, 4
      %v963 = vrot.slane %v955, 4
      %v964 = vrot.slane %v957, 4
      %v965 = vrot.slane %v959, 4
      %v966 = vsel %vm206, %v960, %v961
      %vm967 = vcmask 621568
      %v968 = vsel %vm967, %v949, %v966
      %v969 = vsel %vm206, %v961, %v962
      %v970 = vsel %vm967, %v951, %v969
      %v971 = vsel %vm206, %v963, %v964
      %v972 = vsel %vm967, %v955, %v971
      %v973 = vsel %vm206, %v964, %v965
      %v974 = vsel %vm967, %v957, %v973
      %979 = vst [vmem:[#allocation2 + $0x2c0] sm:$0xff] %v968
      %980 = vst [vmem:[#allocation2 + $0x2c8] sm:$0xff] %v970
      %981 = vst [vmem:[#allocation2 + $0x2d0] sm:$0xff] %v972
      %982 = vst [vmem:[#allocation2 + $0x2d8] sm:$0xff] %v974
      %983 = vrot.lane.b32.xlu0 %v936, 75
      %v984 = vpop.permute.xlu0 %983
      %985 = vrot.lane.b32.xlu0 %v937, 75
      %v986 = vpop.permute.xlu0 %985
      %987 = vrot.lane.b32.xlu0 %v938, 75
      %v988 = vpop.permute.xlu0 %987
      %989 = vrot.lane.b32.xlu0 %v939, 75
      %v990 = vpop.permute.xlu0 %989
      %991 = vrot.lane.b32.xlu0 %v940, 75
      %v992 = vpop.permute.xlu0 %991
      %993 = vrot.lane.b32.xlu0 %v941, 75
      %v994 = vpop.permute.xlu0 %993
      %v995 = vrot.slane %v984, 4
      %v996 = vrot.slane %v986, 4
      %v997 = vrot.slane %v988, 4
      %v998 = vrot.slane %v990, 4
      %v999 = vrot.slane %v992, 4
      %v1000 = vrot.slane %v994, 4
      %v1001 = vsel %vm206, %v995, %v996
      %vm1002 = vcmask 613376
      %v1003 = vsel %vm1002, %v984, %v1001
      %v1004 = vsel %vm206, %v996, %v997
      %v1005 = vsel %vm1002, %v986, %v1004
      %v1006 = vsel %vm206, %v998, %v999
      %v1007 = vsel %vm1002, %v990, %v1006
      %v1008 = vsel %vm206, %v999, %v1000
      %v1009 = vsel %vm1002, %v992, %v1008
      %1014 = vst [vmem:[#allocation2 + $0x2e0] sm:$0xff] %v1003
      %1015 = vst [vmem:[#allocation2 + $0x2e8] sm:$0xff] %v1005
      %1016 = vst [vmem:[#allocation2 + $0x2f0] sm:$0xff] %v1007
      %1017 = vst [vmem:[#allocation2 + $0x2f8] sm:$0xff] %v1009
      %1018 = vrot.lane.b32.xlu0 %v936, 74
      %v1019 = vpop.permute.xlu0 %1018
      %1020 = vrot.lane.b32.xlu0 %v937, 74
      %v1021 = vpop.permute.xlu0 %1020
      %1022 = vrot.lane.b32.xlu0 %v938, 74
      %v1023 = vpop.permute.xlu0 %1022
      %1024 = vrot.lane.b32.xlu0 %v939, 74
      %v1025 = vpop.permute.xlu0 %1024
      %1026 = vrot.lane.b32.xlu0 %v940, 74
      %v1027 = vpop.permute.xlu0 %1026
      %1028 = vrot.lane.b32.xlu0 %v941, 74
      %v1029 = vpop.permute.xlu0 %1028
      %v1030 = vrot.slane %v1019, 4
      %v1031 = vrot.slane %v1021, 4
      %v1032 = vrot.slane %v1023, 4
      %v1033 = vrot.slane %v1025, 4
      %v1034 = vrot.slane %v1027, 4
      %v1035 = vrot.slane %v1029, 4
      %v1036 = vsel %vm206, %v1030, %v1031
      %vm1037 = vcmask 605184
      %v1038 = vsel %vm1037, %v1019, %v1036
      %v1039 = vsel %vm206, %v1031, %v1032
      %v1040 = vsel %vm1037, %v1021, %v1039
      %v1041 = vsel %vm206, %v1033, %v1034
      %v1042 = vsel %vm1037, %v1025, %v1041
      %v1043 = vsel %vm206, %v1034, %v1035
      %v1044 = vsel %vm1037, %v1027, %v1043
      %1049 = vst [vmem:[#allocation2 + $0x300] sm:$0xff] %v1038
      %1050 = vst [vmem:[#allocation2 + $0x308] sm:$0xff] %v1040
      %1051 = vst [vmem:[#allocation2 + $0x310] sm:$0xff] %v1042
      %1052 = vst [vmem:[#allocation2 + $0x318] sm:$0xff] %v1044
      %1053 = vrot.lane.b32.xlu0 %v936, 73
      %v1054 = vpop.permute.xlu0 %1053
      %1055 = vrot.lane.b32.xlu0 %v937, 73
      %v1056 = vpop.permute.xlu0 %1055
      %1057 = vrot.lane.b32.xlu0 %v938, 73
      %v1058 = vpop.permute.xlu0 %1057
      %1059 = vrot.lane.b32.xlu0 %v939, 73
      %v1060 = vpop.permute.xlu0 %1059
      %1061 = vrot.lane.b32.xlu0 %v940, 73
      %v1062 = vpop.permute.xlu0 %1061
      %1063 = vrot.lane.b32.xlu0 %v941, 73
      %v1064 = vpop.permute.xlu0 %1063
      %v1065 = vrot.slane %v1054, 4
      %v1066 = vrot.slane %v1056, 4
      %v1067 = vrot.slane %v1058, 4
      %v1068 = vrot.slane %v1060, 4
      %v1069 = vrot.slane %v1062, 4
      %v1070 = vrot.slane %v1064, 4
      %v1071 = vsel %vm206, %v1065, %v1066
      %vm1072 = vcmask 596992
      %v1073 = vsel %vm1072, %v1054, %v1071
      %v1074 = vsel %vm206, %v1066, %v1067
      %v1075 = vsel %vm1072, %v1056, %v1074
      %v1076 = vsel %vm206, %v1068, %v1069
      %v1077 = vsel %vm1072, %v1060, %v1076
      %v1078 = vsel %vm206, %v1069, %v1070
      %v1079 = vsel %vm1072, %v1062, %v1078
      %1084 = vst [vmem:[#allocation2 + $0x320] sm:$0xff] %v1073
      %1085 = vst [vmem:[#allocation2 + $0x328] sm:$0xff] %v1075
      %1086 = vst [vmem:[#allocation2 + $0x330] sm:$0xff] %v1077
      %1087 = vst [vmem:[#allocation2 + $0x338] sm:$0xff] %v1079
      %1088 = vrot.lane.b32.xlu0 %v936, 72
      %v1089 = vpop.permute.xlu0 %1088
      %1090 = vrot.lane.b32.xlu0 %v937, 72
      %v1091 = vpop.permute.xlu0 %1090
      %1092 = vrot.lane.b32.xlu0 %v938, 72
      %v1093 = vpop.permute.xlu0 %1092
      %1094 = vrot.lane.b32.xlu0 %v939, 72
      %v1095 = vpop.permute.xlu0 %1094
      %1096 = vrot.lane.b32.xlu0 %v940, 72
      %v1097 = vpop.permute.xlu0 %1096
      %1098 = vrot.lane.b32.xlu0 %v941, 72
      %v1099 = vpop.permute.xlu0 %1098
      %v1100 = vrot.slane %v1089, 4
      %v1101 = vrot.slane %v1091, 4
      %v1102 = vrot.slane %v1093, 4
      %v1103 = vrot.slane %v1095, 4
      %v1104 = vrot.slane %v1097, 4
      %v1105 = vrot.slane %v1099, 4
      %v1106 = vsel %vm206, %v1100, %v1101
      %vm1107 = vcmask 588800
      %v1108 = vsel %vm1107, %v1089, %v1106
      %v1109 = vsel %vm206, %v1101, %v1102
      %v1110 = vsel %vm1107, %v1091, %v1109
      %v1111 = vsel %vm206, %v1103, %v1104
      %v1112 = vsel %vm1107, %v1095, %v1111
      %v1113 = vsel %vm206, %v1104, %v1105
      %v1114 = vsel %vm1107, %v1097, %v1113
      %1119 = vst [vmem:[#allocation2 + $0x340] sm:$0xff] %v1108
      %1120 = vst [vmem:[#allocation2 + $0x348] sm:$0xff] %v1110
      %1121 = vst [vmem:[#allocation2 + $0x350] sm:$0xff] %v1112
      %1122 = vst [vmem:[#allocation2 + $0x358] sm:$0xff] %v1114
      %1123 = vrot.lane.b32.xlu0 %v936, 71
      %v1124 = vpop.permute.xlu0 %1123
      %1125 = vrot.lane.b32.xlu0 %v937, 71
      %v1126 = vpop.permute.xlu0 %1125
      %1127 = vrot.lane.b32.xlu0 %v938, 71
      %v1128 = vpop.permute.xlu0 %1127
      %1129 = vrot.lane.b32.xlu0 %v939, 71
      %v1130 = vpop.permute.xlu0 %1129
      %1131 = vrot.lane.b32.xlu0 %v940, 71
      %v1132 = vpop.permute.xlu0 %1131
      %1133 = vrot.lane.b32.xlu0 %v941, 71
      %v1134 = vpop.permute.xlu0 %1133
      %v1135 = vrot.slane %v1124, 4
      %v1136 = vrot.slane %v1126, 4
      %v1137 = vrot.slane %v1128, 4
      %v1138 = vrot.slane %v1130, 4
      %v1139 = vrot.slane %v1132, 4
      %v1140 = vrot.slane %v1134, 4
      %v1141 = vsel %vm206, %v1135, %v1136
      %vm1142 = vcmask 580608
      %v1143 = vsel %vm1142, %v1124, %v1141
      %v1144 = vsel %vm206, %v1136, %v1137
      %v1145 = vsel %vm1142, %v1126, %v1144
      %v1146 = vsel %vm206, %v1138, %v1139
      %v1147 = vsel %vm1142, %v1130, %v1146
      %v1148 = vsel %vm206, %v1139, %v1140
      %v1149 = vsel %vm1142, %v1132, %v1148
      %1154 = vst [vmem:[#allocation2 + $0x360] sm:$0xff] %v1143
      %1155 = vst [vmem:[#allocation2 + $0x368] sm:$0xff] %v1145
      %1156 = vst [vmem:[#allocation2 + $0x370] sm:$0xff] %v1147
      %1157 = vst [vmem:[#allocation2 + $0x378] sm:$0xff] %v1149
      %1158 = vrot.lane.b32.xlu0 %v936, 70
      %v1159 = vpop.permute.xlu0 %1158
      %1160 = vrot.lane.b32.xlu0 %v937, 70
      %v1161 = vpop.permute.xlu0 %1160
      %1162 = vrot.lane.b32.xlu0 %v938, 70
      %v1163 = vpop.permute.xlu0 %1162
      %1164 = vrot.lane.b32.xlu0 %v939, 70
      %v1165 = vpop.permute.xlu0 %1164
      %1166 = vrot.lane.b32.xlu0 %v940, 70
      %v1167 = vpop.permute.xlu0 %1166
      %1168 = vrot.lane.b32.xlu0 %v941, 70
      %v1169 = vpop.permute.xlu0 %1168
      %v1170 = vrot.slane %v1159, 4
      %v1171 = vrot.slane %v1161, 4
      %v1172 = vrot.slane %v1163, 4
      %v1173 = vrot.slane %v1165, 4
      %v1174 = vrot.slane %v1167, 4
      %v1175 = vrot.slane %v1169, 4
      %v1176 = vsel %vm206, %v1170, %v1171
      %vm1177 = vcmask 572416
      %v1178 = vsel %vm1177, %v1159, %v1176
      %v1179 = vsel %vm206, %v1171, %v1172
      %v1180 = vsel %vm1177, %v1161, %v1179
      %v1181 = vsel %vm206, %v1173, %v1174
      %v1182 = vsel %vm1177, %v1165, %v1181
      %v1183 = vsel %vm206, %v1174, %v1175
      %v1184 = vsel %vm1177, %v1167, %v1183
      %1189 = vst [vmem:[#allocation2 + $0x380] sm:$0xff] %v1178
      %1190 = vst [vmem:[#allocation2 + $0x388] sm:$0xff] %v1180
      %1191 = vst [vmem:[#allocation2 + $0x390] sm:$0xff] %v1182
      %1192 = vst [vmem:[#allocation2 + $0x398] sm:$0xff] %v1184
      %1193 = vrot.lane.b32.xlu0 %v936, 69
      %v1194 = vpop.permute.xlu0 %1193
      %1195 = vrot.lane.b32.xlu0 %v937, 69
      %v1196 = vpop.permute.xlu0 %1195
      %1197 = vrot.lane.b32.xlu0 %v938, 69
      %v1198 = vpop.permute.xlu0 %1197
      %1199 = vrot.lane.b32.xlu0 %v939, 69
      %v1200 = vpop.permute.xlu0 %1199
      %1201 = vrot.lane.b32.xlu0 %v940, 69
      %v1202 = vpop.permute.xlu0 %1201
      %1203 = vrot.lane.b32.xlu0 %v941, 69
      %v1204 = vpop.permute.xlu0 %1203
      %v1205 = vrot.slane %v1194, 4
      %v1206 = vrot.slane %v1196, 4
      %v1207 = vrot.slane %v1198, 4
      %v1208 = vrot.slane %v1200, 4
      %v1209 = vrot.slane %v1202, 4
      %v1210 = vrot.slane %v1204, 4
      %v1211 = vsel %vm206, %v1205, %v1206
      %vm1212 = vcmask 564224
      %v1213 = vsel %vm1212, %v1194, %v1211
      %v1214 = vsel %vm206, %v1206, %v1207
      %v1215 = vsel %vm1212, %v1196, %v1214
      %v1216 = vsel %vm206, %v1208, %v1209
      %v1217 = vsel %vm1212, %v1200, %v1216
      %v1218 = vsel %vm206, %v1209, %v1210
      %v1219 = vsel %vm1212, %v1202, %v1218
      %1224 = vst [vmem:[#allocation2 + $0x3a0] sm:$0xff] %v1213
      %1225 = vst [vmem:[#allocation2 + $0x3a8] sm:$0xff] %v1215
      %1226 = vst [vmem:[#allocation2 + $0x3b0] sm:$0xff] %v1217
      %1227 = vst [vmem:[#allocation2 + $0x3b8] sm:$0xff] %v1219
      %1228 = vrot.lane.b32.xlu0 %v936, 68
      %v1229 = vpop.permute.xlu0 %1228
      %1230 = vrot.lane.b32.xlu0 %v937, 68
      %v1231 = vpop.permute.xlu0 %1230
      %1232 = vrot.lane.b32.xlu0 %v938, 68
      %v1233 = vpop.permute.xlu0 %1232
      %1234 = vrot.lane.b32.xlu0 %v939, 68
      %v1235 = vpop.permute.xlu0 %1234
      %1236 = vrot.lane.b32.xlu0 %v940, 68
      %v1237 = vpop.permute.xlu0 %1236
      %1238 = vrot.lane.b32.xlu0 %v941, 68
      %v1239 = vpop.permute.xlu0 %1238
      %v1240 = vrot.slane %v1229, 4
      %v1241 = vrot.slane %v1231, 4
      %v1242 = vrot.slane %v1233, 4
      %v1243 = vrot.slane %v1235, 4
      %v1244 = vrot.slane %v1237, 4
      %v1245 = vrot.slane %v1239, 4
      %v1246 = vsel %vm206, %v1240, %v1241
      %vm1247 = vcmask 556032
      %v1248 = vsel %vm1247, %v1229, %v1246
      %v1249 = vsel %vm206, %v1241, %v1242
      %v1250 = vsel %vm1247, %v1231, %v1249
      %v1251 = vsel %vm206, %v1243, %v1244
      %v1252 = vsel %vm1247, %v1235, %v1251
      %v1253 = vsel %vm206, %v1244, %v1245
      %v1254 = vsel %vm1247, %v1237, %v1253
      %1259 = vst [vmem:[#allocation2 + $0x3c0] sm:$0xff] %v1248
      %1260 = vst [vmem:[#allocation2 + $0x3c8] sm:$0xff] %v1250
      %1261 = vst [vmem:[#allocation2 + $0x3d0] sm:$0xff] %v1252
      %1262 = vst [vmem:[#allocation2 + $0x3d8] sm:$0xff] %v1254
      %1263 = vrot.lane.b32.xlu0 %v936, 67
      %v1264 = vpop.permute.xlu0 %1263
      %1265 = vrot.lane.b32.xlu0 %v937, 67
      %v1266 = vpop.permute.xlu0 %1265
      %1267 = vrot.lane.b32.xlu0 %v938, 67
      %v1268 = vpop.permute.xlu0 %1267
      %1269 = vrot.lane.b32.xlu0 %v939, 67
      %v1270 = vpop.permute.xlu0 %1269
      %1271 = vrot.lane.b32.xlu0 %v940, 67
      %v1272 = vpop.permute.xlu0 %1271
      %1273 = vrot.lane.b32.xlu0 %v941, 67
      %v1274 = vpop.permute.xlu0 %1273
      %v1275 = vrot.slane %v1264, 4
      %v1276 = vrot.slane %v1266, 4
      %v1277 = vrot.slane %v1268, 4
      %v1278 = vrot.slane %v1270, 4
      %v1279 = vrot.slane %v1272, 4
      %v1280 = vrot.slane %v1274, 4
      %v1281 = vsel %vm206, %v1275, %v1276
      %vm1282 = vcmask 547840
      %v1283 = vsel %vm1282, %v1264, %v1281
      %v1284 = vsel %vm206, %v1276, %v1277
      %v1285 = vsel %vm1282, %v1266, %v1284
      %v1286 = vsel %vm206, %v1278, %v1279
      %v1287 = vsel %vm1282, %v1270, %v1286
      %v1288 = vsel %vm206, %v1279, %v1280
      %v1289 = vsel %vm1282, %v1272, %v1288
      %1294 = vst [vmem:[#allocation2 + $0x3e0] sm:$0xff] %v1283
      %1295 = vst [vmem:[#allocation2 + $0x3e8] sm:$0xff] %v1285
      %1296 = vst [vmem:[#allocation2 + $0x3f0] sm:$0xff] %v1287
      %1297 = vst [vmem:[#allocation2 + $0x3f8] sm:$0xff] %v1289
      %1298 = vrot.lane.b32.xlu0 %v936, 66
      %v1299 = vpop.permute.xlu0 %1298
      %1300 = vrot.lane.b32.xlu0 %v937, 66
      %v1301 = vpop.permute.xlu0 %1300
      %1302 = vrot.lane.b32.xlu0 %v938, 66
      %v1303 = vpop.permute.xlu0 %1302
      %1304 = vrot.lane.b32.xlu0 %v939, 66
      %v1305 = vpop.permute.xlu0 %1304
      %1306 = vrot.lane.b32.xlu0 %v940, 66
      %v1307 = vpop.permute.xlu0 %1306
      %1308 = vrot.lane.b32.xlu0 %v941, 66
      %v1309 = vpop.permute.xlu0 %1308
      %v1310 = vrot.slane %v1299, 4
      %v1311 = vrot.slane %v1301, 4
      %v1312 = vrot.slane %v1303, 4
      %v1313 = vrot.slane %v1305, 4
      %v1314 = vrot.slane %v1307, 4
      %v1315 = vrot.slane %v1309, 4
      %v1316 = vsel %vm206, %v1310, %v1311
      %vm1317 = vcmask 539648
      %v1318 = vsel %vm1317, %v1299, %v1316
      %v1319 = vsel %vm206, %v1311, %v1312
      %v1320 = vsel %vm1317, %v1301, %v1319
      %v1321 = vsel %vm206, %v1313, %v1314
      %v1322 = vsel %vm1317, %v1305, %v1321
      %v1323 = vsel %vm206, %v1314, %v1315
      %v1324 = vsel %vm1317, %v1307, %v1323
      %1329 = vst [vmem:[#allocation2 + $0x400] sm:$0xff] %v1318
      %1330 = vst [vmem:[#allocation2 + $0x408] sm:$0xff] %v1320
      %1331 = vst [vmem:[#allocation2 + $0x410] sm:$0xff] %v1322
      %1332 = vst [vmem:[#allocation2 + $0x418] sm:$0xff] %v1324
      %v1333 = vld [vmem:[%s165] sm:$0xff]
      %v1334 = vld [vmem:[%s165 + $0x8] sm:$0xff]
      %v1335 = vld [vmem:[%s165 + $0x10] sm:$0xf]
      %v1336 = vld [vmem:[%s165 + $0x1c] sm:$0xff]
      %v1337 = vld [vmem:[%s165 + $0x24] sm:$0xff]
      %v1338 = vld [vmem:[%s165 + $0x2c] sm:$0xf]
      %1345 = vrot.lane.b32.xlu0 %v1333, 50
      %v1346 = vpop.permute.xlu0 %1345
      %1347 = vrot.lane.b32.xlu0 %v1334, 50
      %v1348 = vpop.permute.xlu0 %1347
      %1349 = vrot.lane.b32.xlu0 %v1335, 50
      %v1350 = vpop.permute.xlu0 %1349
      %1351 = vrot.lane.b32.xlu0 %v1336, 50
      %v1352 = vpop.permute.xlu0 %1351
      %1353 = vrot.lane.b32.xlu0 %v1337, 50
      %v1354 = vpop.permute.xlu0 %1353
      %1355 = vrot.lane.b32.xlu0 %v1338, 50
      %v1356 = vpop.permute.xlu0 %1355
      %v1357 = vrot.slane %v1346, 4
      %v1358 = vrot.slane %v1348, 4
      %v1359 = vrot.slane %v1350, 4
      %v1360 = vrot.slane %v1352, 4
      %v1361 = vrot.slane %v1354, 4
      %v1362 = vrot.slane %v1356, 4
      %v1363 = vsel %vm206, %v1357, %v1358
      %vm1364 = vcmask 408576
      %v1365 = vsel %vm1364, %v1346, %v1363
      %v1366 = vsel %vm206, %v1358, %v1359
      %v1367 = vsel %vm1364, %v1348, %v1366
      %v1368 = vsel %vm206, %v1360, %v1361
      %v1369 = vsel %vm1364, %v1352, %v1368
      %v1370 = vsel %vm206, %v1361, %v1362
      %v1371 = vsel %vm1364, %v1354, %v1370
      %1376 = vst [vmem:[#allocation2 + $0x420] sm:$0xff] %v1365
      %1377 = vst [vmem:[#allocation2 + $0x428] sm:$0xff] %v1367
      %1378 = vst [vmem:[#allocation2 + $0x430] sm:$0xff] %v1369
      %1379 = vst [vmem:[#allocation2 + $0x438] sm:$0xff] %v1371
      %1380 = vrot.lane.b32.xlu0 %v1333, 49
      %v1381 = vpop.permute.xlu0 %1380
      %1382 = vrot.lane.b32.xlu0 %v1334, 49
      %v1383 = vpop.permute.xlu0 %1382
      %1384 = vrot.lane.b32.xlu0 %v1335, 49
      %v1385 = vpop.permute.xlu0 %1384
      %1386 = vrot.lane.b32.xlu0 %v1336, 49
      %v1387 = vpop.permute.xlu0 %1386
      %1388 = vrot.lane.b32.xlu0 %v1337, 49
      %v1389 = vpop.permute.xlu0 %1388
      %1390 = vrot.lane.b32.xlu0 %v1338, 49
      %v1391 = vpop.permute.xlu0 %1390
      %v1392 = vrot.slane %v1381, 4
      %v1393 = vrot.slane %v1383, 4
      %v1394 = vrot.slane %v1385, 4
      %v1395 = vrot.slane %v1387, 4
      %v1396 = vrot.slane %v1389, 4
      %v1397 = vrot.slane %v1391, 4
      %v1398 = vsel %vm206, %v1392, %v1393
      %vm1399 = vcmask 400384
      %v1400 = vsel %vm1399, %v1381, %v1398
      %v1401 = vsel %vm206, %v1393, %v1394
      %v1402 = vsel %vm1399, %v1383, %v1401
      %v1403 = vsel %vm206, %v1395, %v1396
      %v1404 = vsel %vm1399, %v1387, %v1403
      %v1405 = vsel %vm206, %v1396, %v1397
      %v1406 = vsel %vm1399, %v1389, %v1405
      %1411 = vst [vmem:[#allocation2 + $0x440] sm:$0xff] %v1400
      %1412 = vst [vmem:[#allocation2 + $0x448] sm:$0xff] %v1402
      %1413 = vst [vmem:[#allocation2 + $0x450] sm:$0xff] %v1404
      %1414 = vst [vmem:[#allocation2 + $0x458] sm:$0xff] %v1406
      %1415 = vrot.lane.b32.xlu0 %v1333, 48
      %v1416 = vpop.permute.xlu0 %1415
      %1417 = vrot.lane.b32.xlu0 %v1334, 48
      %v1418 = vpop.permute.xlu0 %1417
      %1419 = vrot.lane.b32.xlu0 %v1335, 48
      %v1420 = vpop.permute.xlu0 %1419
      %1421 = vrot.lane.b32.xlu0 %v1336, 48
      %v1422 = vpop.permute.xlu0 %1421
      %1423 = vrot.lane.b32.xlu0 %v1337, 48
      %v1424 = vpop.permute.xlu0 %1423
      %1425 = vrot.lane.b32.xlu0 %v1338, 48
      %v1426 = vpop.permute.xlu0 %1425
      %v1427 = vrot.slane %v1416, 4
      %v1428 = vrot.slane %v1418, 4
      %v1429 = vrot.slane %v1420, 4
      %v1430 = vrot.slane %v1422, 4
      %v1431 = vrot.slane %v1424, 4
      %v1432 = vrot.slane %v1426, 4
      %v1433 = vsel %vm206, %v1427, %v1428
      %vm1434 = vcmask 392192
      %v1435 = vsel %vm1434, %v1416, %v1433
      %v1436 = vsel %vm206, %v1428, %v1429
      %v1437 = vsel %vm1434, %v1418, %v1436
      %v1438 = vsel %vm206, %v1430, %v1431
      %v1439 = vsel %vm1434, %v1422, %v1438
      %v1440 = vsel %vm206, %v1431, %v1432
      %v1441 = vsel %vm1434, %v1424, %v1440
      %1446 = vst [vmem:[#allocation2 + $0x460] sm:$0xff] %v1435
      %1447 = vst [vmem:[#allocation2 + $0x468] sm:$0xff] %v1437
      %1448 = vst [vmem:[#allocation2 + $0x470] sm:$0xff] %v1439
      %1449 = vst [vmem:[#allocation2 + $0x478] sm:$0xff] %v1441
      %1450 = vrot.lane.b32.xlu0 %v1333, 47
      %v1451 = vpop.permute.xlu0 %1450
      %1452 = vrot.lane.b32.xlu0 %v1334, 47
      %v1453 = vpop.permute.xlu0 %1452
      %1454 = vrot.lane.b32.xlu0 %v1335, 47
      %v1455 = vpop.permute.xlu0 %1454
      %1456 = vrot.lane.b32.xlu0 %v1336, 47
      %v1457 = vpop.permute.xlu0 %1456
      %1458 = vrot.lane.b32.xlu0 %v1337, 47
      %v1459 = vpop.permute.xlu0 %1458
      %1460 = vrot.lane.b32.xlu0 %v1338, 47
      %v1461 = vpop.permute.xlu0 %1460
      %v1462 = vrot.slane %v1451, 4
      %v1463 = vrot.slane %v1453, 4
      %v1464 = vrot.slane %v1455, 4
      %v1465 = vrot.slane %v1457, 4
      %v1466 = vrot.slane %v1459, 4
      %v1467 = vrot.slane %v1461, 4
      %v1468 = vsel %vm206, %v1462, %v1463
      %vm1469 = vcmask 384000
      %v1470 = vsel %vm1469, %v1451, %v1468
      %v1471 = vsel %vm206, %v1463, %v1464
      %v1472 = vsel %vm1469, %v1453, %v1471
      %v1473 = vsel %vm206, %v1465, %v1466
      %v1474 = vsel %vm1469, %v1457, %v1473
      %v1475 = vsel %vm206, %v1466, %v1467
      %v1476 = vsel %vm1469, %v1459, %v1475
      %1481 = vst [vmem:[#allocation2 + $0x480] sm:$0xff] %v1470
      %1482 = vst [vmem:[#allocation2 + $0x488] sm:$0xff] %v1472
      %1483 = vst [vmem:[#allocation2 + $0x490] sm:$0xff] %v1474
      %1484 = vst [vmem:[#allocation2 + $0x498] sm:$0xff] %v1476
      %1485 = vrot.lane.b32.xlu0 %v1333, 46
      %v1486 = vpop.permute.xlu0 %1485
      %1487 = vrot.lane.b32.xlu0 %v1334, 46
      %v1488 = vpop.permute.xlu0 %1487
      %1489 = vrot.lane.b32.xlu0 %v1335, 46
      %v1490 = vpop.permute.xlu0 %1489
      %1491 = vrot.lane.b32.xlu0 %v1336, 46
      %v1492 = vpop.permute.xlu0 %1491
      %1493 = vrot.lane.b32.xlu0 %v1337, 46
      %v1494 = vpop.permute.xlu0 %1493
      %1495 = vrot.lane.b32.xlu0 %v1338, 46
      %v1496 = vpop.permute.xlu0 %1495
      %v1497 = vrot.slane %v1486, 4
      %v1498 = vrot.slane %v1488, 4
      %v1499 = vrot.slane %v1490, 4
      %v1500 = vrot.slane %v1492, 4
      %v1501 = vrot.slane %v1494, 4
      %v1502 = vrot.slane %v1496, 4
      %v1503 = vsel %vm206, %v1497, %v1498
      %vm1504 = vcmask 375808
      %v1505 = vsel %vm1504, %v1486, %v1503
      %v1506 = vsel %vm206, %v1498, %v1499
      %v1507 = vsel %vm1504, %v1488, %v1506
      %v1508 = vsel %vm206, %v1500, %v1501
      %v1509 = vsel %vm1504, %v1492, %v1508
      %v1510 = vsel %vm206, %v1501, %v1502
      %v1511 = vsel %vm1504, %v1494, %v1510
      %1516 = vst [vmem:[#allocation2 + $0x4a0] sm:$0xff] %v1505
      %1517 = vst [vmem:[#allocation2 + $0x4a8] sm:$0xff] %v1507
      %1518 = vst [vmem:[#allocation2 + $0x4b0] sm:$0xff] %v1509
      %1519 = vst [vmem:[#allocation2 + $0x4b8] sm:$0xff] %v1511
      %1520 = vrot.lane.b32.xlu0 %v1333, 45
      %v1521 = vpop.permute.xlu0 %1520
      %1522 = vrot.lane.b32.xlu0 %v1334, 45
      %v1523 = vpop.permute.xlu0 %1522
      %1524 = vrot.lane.b32.xlu0 %v1335, 45
      %v1525 = vpop.permute.xlu0 %1524
      %1526 = vrot.lane.b32.xlu0 %v1336, 45
      %v1527 = vpop.permute.xlu0 %1526
      %1528 = vrot.lane.b32.xlu0 %v1337, 45
      %v1529 = vpop.permute.xlu0 %1528
      %1530 = vrot.lane.b32.xlu0 %v1338, 45
      %v1531 = vpop.permute.xlu0 %1530
      %v1532 = vrot.slane %v1521, 4
      %v1533 = vrot.slane %v1523, 4
      %v1534 = vrot.slane %v1525, 4
      %v1535 = vrot.slane %v1527, 4
      %v1536 = vrot.slane %v1529, 4
      %v1537 = vrot.slane %v1531, 4
      %v1538 = vsel %vm206, %v1532, %v1533
      %vm1539 = vcmask 367616
      %v1540 = vsel %vm1539, %v1521, %v1538
      %v1541 = vsel %vm206, %v1533, %v1534
      %v1542 = vsel %vm1539, %v1523, %v1541
      %v1543 = vsel %vm206, %v1535, %v1536
      %v1544 = vsel %vm1539, %v1527, %v1543
      %v1545 = vsel %vm206, %v1536, %v1537
      %v1546 = vsel %vm1539, %v1529, %v1545
      %1551 = vst [vmem:[#allocation2 + $0x4c0] sm:$0xff] %v1540
      %1552 = vst [vmem:[#allocation2 + $0x4c8] sm:$0xff] %v1542
      %1553 = vst [vmem:[#allocation2 + $0x4d0] sm:$0xff] %v1544
      %1554 = vst [vmem:[#allocation2 + $0x4d8] sm:$0xff] %v1546
      %1555 = vrot.lane.b32.xlu0 %v1333, 44
      %v1556 = vpop.permute.xlu0 %1555
      %1557 = vrot.lane.b32.xlu0 %v1334, 44
      %v1558 = vpop.permute.xlu0 %1557
      %1559 = vrot.lane.b32.xlu0 %v1335, 44
      %v1560 = vpop.permute.xlu0 %1559
      %1561 = vrot.lane.b32.xlu0 %v1336, 44
      %v1562 = vpop.permute.xlu0 %1561
      %1563 = vrot.lane.b32.xlu0 %v1337, 44
      %v1564 = vpop.permute.xlu0 %1563
      %1565 = vrot.lane.b32.xlu0 %v1338, 44
      %v1566 = vpop.permute.xlu0 %1565
      %v1567 = vrot.slane %v1556, 4
      %v1568 = vrot.slane %v1558, 4
      %v1569 = vrot.slane %v1560, 4
      %v1570 = vrot.slane %v1562, 4
      %v1571 = vrot.slane %v1564, 4
      %v1572 = vrot.slane %v1566, 4
      %v1573 = vsel %vm206, %v1567, %v1568
      %vm1574 = vcmask 359424
      %v1575 = vsel %vm1574, %v1556, %v1573
      %v1576 = vsel %vm206, %v1568, %v1569
      %v1577 = vsel %vm1574, %v1558, %v1576
      %v1578 = vsel %vm206, %v1570, %v1571
      %v1579 = vsel %vm1574, %v1562, %v1578
      %v1580 = vsel %vm206, %v1571, %v1572
      %v1581 = vsel %vm1574, %v1564, %v1580
      %1586 = vst [vmem:[#allocation2 + $0x4e0] sm:$0xff] %v1575
      %1587 = vst [vmem:[#allocation2 + $0x4e8] sm:$0xff] %v1577
      %1588 = vst [vmem:[#allocation2 + $0x4f0] sm:$0xff] %v1579
      %1589 = vst [vmem:[#allocation2 + $0x4f8] sm:$0xff] %v1581
      %1590 = vrot.lane.b32.xlu0 %v1333, 43
      %v1591 = vpop.permute.xlu0 %1590
      %1592 = vrot.lane.b32.xlu0 %v1334, 43
      %v1593 = vpop.permute.xlu0 %1592
      %1594 = vrot.lane.b32.xlu0 %v1335, 43
      %v1595 = vpop.permute.xlu0 %1594
      %1596 = vrot.lane.b32.xlu0 %v1336, 43
      %v1597 = vpop.permute.xlu0 %1596
      %1598 = vrot.lane.b32.xlu0 %v1337, 43
      %v1599 = vpop.permute.xlu0 %1598
      %1600 = vrot.lane.b32.xlu0 %v1338, 43
      %v1601 = vpop.permute.xlu0 %1600
      %v1602 = vrot.slane %v1591, 4
      %v1603 = vrot.slane %v1593, 4
      %v1604 = vrot.slane %v1595, 4
      %v1605 = vrot.slane %v1597, 4
      %v1606 = vrot.slane %v1599, 4
      %v1607 = vrot.slane %v1601, 4
      %v1608 = vsel %vm206, %v1602, %v1603
      %vm1609 = vcmask 351232
      %v1610 = vsel %vm1609, %v1591, %v1608
      %v1611 = vsel %vm206, %v1603, %v1604
      %v1612 = vsel %vm1609, %v1593, %v1611
      %v1613 = vsel %vm206, %v1605, %v1606
      %v1614 = vsel %vm1609, %v1597, %v1613
      %v1615 = vsel %vm206, %v1606, %v1607
      %v1616 = vsel %vm1609, %v1599, %v1615
      %1621 = vst [vmem:[#allocation2 + $0x500] sm:$0xff] %v1610
      %1622 = vst [vmem:[#allocation2 + $0x508] sm:$0xff] %v1612
      %1623 = vst [vmem:[#allocation2 + $0x510] sm:$0xff] %v1614
      %1624 = vst [vmem:[#allocation2 + $0x518] sm:$0xff] %v1616
      %1625 = vrot.lane.b32.xlu0 %v1333, 42
      %v1626 = vpop.permute.xlu0 %1625
      %1627 = vrot.lane.b32.xlu0 %v1334, 42
      %v1628 = vpop.permute.xlu0 %1627
      %1629 = vrot.lane.b32.xlu0 %v1335, 42
      %v1630 = vpop.permute.xlu0 %1629
      %1631 = vrot.lane.b32.xlu0 %v1336, 42
      %v1632 = vpop.permute.xlu0 %1631
      %1633 = vrot.lane.b32.xlu0 %v1337, 42
      %v1634 = vpop.permute.xlu0 %1633
      %1635 = vrot.lane.b32.xlu0 %v1338, 42
      %v1636 = vpop.permute.xlu0 %1635
      %v1637 = vrot.slane %v1626, 4
      %v1638 = vrot.slane %v1628, 4
      %v1639 = vrot.slane %v1630, 4
      %v1640 = vrot.slane %v1632, 4
      %v1641 = vrot.slane %v1634, 4
      %v1642 = vrot.slane %v1636, 4
      %v1643 = vsel %vm206, %v1637, %v1638
      %vm1644 = vcmask 343040
      %v1645 = vsel %vm1644, %v1626, %v1643
      %v1646 = vsel %vm206, %v1638, %v1639
      %v1647 = vsel %vm1644, %v1628, %v1646
      %v1648 = vsel %vm206, %v1640, %v1641
      %v1649 = vsel %vm1644, %v1632, %v1648
      %v1650 = vsel %vm206, %v1641, %v1642
      %v1651 = vsel %vm1644, %v1634, %v1650
      %1656 = vst [vmem:[#allocation2 + $0x520] sm:$0xff] %v1645
      %1657 = vst [vmem:[#allocation2 + $0x528] sm:$0xff] %v1647
      %1658 = vst [vmem:[#allocation2 + $0x530] sm:$0xff] %v1649
      %1659 = vst [vmem:[#allocation2 + $0x538] sm:$0xff] %v1651
      %1660 = vrot.lane.b32.xlu0 %v1333, 41
      %v1661 = vpop.permute.xlu0 %1660
      %1662 = vrot.lane.b32.xlu0 %v1334, 41
      %v1663 = vpop.permute.xlu0 %1662
      %1664 = vrot.lane.b32.xlu0 %v1335, 41
      %v1665 = vpop.permute.xlu0 %1664
      %1666 = vrot.lane.b32.xlu0 %v1336, 41
      %v1667 = vpop.permute.xlu0 %1666
      %1668 = vrot.lane.b32.xlu0 %v1337, 41
      %v1669 = vpop.permute.xlu0 %1668
      %1670 = vrot.lane.b32.xlu0 %v1338, 41
      %v1671 = vpop.permute.xlu0 %1670
      %v1672 = vrot.slane %v1661, 4
      %v1673 = vrot.slane %v1663, 4
      %v1674 = vrot.slane %v1665, 4
      %v1675 = vrot.slane %v1667, 4
      %v1676 = vrot.slane %v1669, 4
      %v1677 = vrot.slane %v1671, 4
      %v1678 = vsel %vm206, %v1672, %v1673
      %vm1679 = vcmask 334848
      %v1680 = vsel %vm1679, %v1661, %v1678
      %v1681 = vsel %vm206, %v1673, %v1674
      %v1682 = vsel %vm1679, %v1663, %v1681
      %v1683 = vsel %vm206, %v1675, %v1676
      %v1684 = vsel %vm1679, %v1667, %v1683
      %v1685 = vsel %vm206, %v1676, %v1677
      %v1686 = vsel %vm1679, %v1669, %v1685
      %1691 = vst [vmem:[#allocation2 + $0x540] sm:$0xff] %v1680
      %1692 = vst [vmem:[#allocation2 + $0x548] sm:$0xff] %v1682
      %1693 = vst [vmem:[#allocation2 + $0x550] sm:$0xff] %v1684
      %1694 = vst [vmem:[#allocation2 + $0x558] sm:$0xff] %v1686
      %1695 = vrot.lane.b32.xlu0 %v1333, 40
      %v1696 = vpop.permute.xlu0 %1695
      %1697 = vrot.lane.b32.xlu0 %v1334, 40
      %v1698 = vpop.permute.xlu0 %1697
      %1699 = vrot.lane.b32.xlu0 %v1335, 40
      %v1700 = vpop.permute.xlu0 %1699
      %1701 = vrot.lane.b32.xlu0 %v1336, 40
      %v1702 = vpop.permute.xlu0 %1701
      %1703 = vrot.lane.b32.xlu0 %v1337, 40
      %v1704 = vpop.permute.xlu0 %1703
      %1705 = vrot.lane.b32.xlu0 %v1338, 40
      %v1706 = vpop.permute.xlu0 %1705
      %v1707 = vrot.slane %v1696, 4
      %v1708 = vrot.slane %v1698, 4
      %v1709 = vrot.slane %v1700, 4
      %v1710 = vrot.slane %v1702, 4
      %v1711 = vrot.slane %v1704, 4
      %v1712 = vrot.slane %v1706, 4
      %v1713 = vsel %vm206, %v1707, %v1708
      %vm1714 = vcmask 326656
      %v1715 = vsel %vm1714, %v1696, %v1713
      %v1716 = vsel %vm206, %v1708, %v1709
      %v1717 = vsel %vm1714, %v1698, %v1716
      %v1718 = vsel %vm206, %v1710, %v1711
      %v1719 = vsel %vm1714, %v1702, %v1718
      %v1720 = vsel %vm206, %v1711, %v1712
      %v1721 = vsel %vm1714, %v1704, %v1720
      %1726 = vst [vmem:[#allocation2 + $0x560] sm:$0xff] %v1715
      %1727 = vst [vmem:[#allocation2 + $0x568] sm:$0xff] %v1717
      %1728 = vst [vmem:[#allocation2 + $0x570] sm:$0xff] %v1719
      %1729 = vst [vmem:[#allocation2 + $0x578] sm:$0xff] %v1721
      %v1730 = vld [vmem:[%s165] sm:$0xff]
      %v1731 = vld [vmem:[%s165 + $0x8] sm:$0xff]
      %v1732 = vld [vmem:[%s165 + $0x10] sm:$0xf]
      %v1733 = vld [vmem:[%s165 + $0x1c] sm:$0xff]
      %v1734 = vld [vmem:[%s165 + $0x24] sm:$0xff]
      %v1735 = vld [vmem:[%s165 + $0x2c] sm:$0xf]
      %1742 = vrot.lane.b32.xlu0 %v1730, 24
      %v1743 = vpop.permute.xlu0 %1742
      %1744 = vrot.lane.b32.xlu0 %v1731, 24
      %v1745 = vpop.permute.xlu0 %1744
      %1746 = vrot.lane.b32.xlu0 %v1732, 24
      %v1747 = vpop.permute.xlu0 %1746
      %1748 = vrot.lane.b32.xlu0 %v1733, 24
      %v1749 = vpop.permute.xlu0 %1748
      %1750 = vrot.lane.b32.xlu0 %v1734, 24
      %v1751 = vpop.permute.xlu0 %1750
      %1752 = vrot.lane.b32.xlu0 %v1735, 24
      %v1753 = vpop.permute.xlu0 %1752
      %v1754 = vrot.slane %v1743, 4
      %v1755 = vrot.slane %v1745, 4
      %v1756 = vrot.slane %v1747, 4
      %v1757 = vrot.slane %v1749, 4
      %v1758 = vrot.slane %v1751, 4
      %v1759 = vrot.slane %v1753, 4
      %v1760 = vsel %vm206, %v1754, %v1755
      %vm1761 = vcmask 195584
      %v1762 = vsel %vm1761, %v1743, %v1760
      %v1763 = vsel %vm206, %v1755, %v1756
      %v1764 = vsel %vm1761, %v1745, %v1763
      %v1765 = vsel %vm206, %v1757, %v1758
      %v1766 = vsel %vm1761, %v1749, %v1765
      %v1767 = vsel %vm206, %v1758, %v1759
      %v1768 = vsel %vm1761, %v1751, %v1767
      %1773 = vst [vmem:[#allocation2 + $0x580] sm:$0xff] %v1762
      %1774 = vst [vmem:[#allocation2 + $0x588] sm:$0xff] %v1764
      %1775 = vst [vmem:[#allocation2 + $0x590] sm:$0xff] %v1766
      %1776 = vst [vmem:[#allocation2 + $0x598] sm:$0xff] %v1768
      %1777 = vrot.lane.b32.xlu0 %v1730, 23
      %v1778 = vpop.permute.xlu0 %1777
      %1779 = vrot.lane.b32.xlu0 %v1731, 23
      %v1780 = vpop.permute.xlu0 %1779
      %1781 = vrot.lane.b32.xlu0 %v1732, 23
      %v1782 = vpop.permute.xlu0 %1781
      %1783 = vrot.lane.b32.xlu0 %v1733, 23
      %v1784 = vpop.permute.xlu0 %1783
      %1785 = vrot.lane.b32.xlu0 %v1734, 23
      %v1786 = vpop.permute.xlu0 %1785
      %1787 = vrot.lane.b32.xlu0 %v1735, 23
      %v1788 = vpop.permute.xlu0 %1787
      %v1789 = vrot.slane %v1778, 4
      %v1790 = vrot.slane %v1780, 4
      %v1791 = vrot.slane %v1782, 4
      %v1792 = vrot.slane %v1784, 4
      %v1793 = vrot.slane %v1786, 4
      %v1794 = vrot.slane %v1788, 4
      %v1795 = vsel %vm206, %v1789, %v1790
      %vm1796 = vcmask 187392
      %v1797 = vsel %vm1796, %v1778, %v1795
      %v1798 = vsel %vm206, %v1790, %v1791
      %v1799 = vsel %vm1796, %v1780, %v1798
      %v1800 = vsel %vm206, %v1792, %v1793
      %v1801 = vsel %vm1796, %v1784, %v1800
      %v1802 = vsel %vm206, %v1793, %v1794
      %v1803 = vsel %vm1796, %v1786, %v1802
      %1808 = vst [vmem:[#allocation2 + $0x5a0] sm:$0xff] %v1797
      %1809 = vst [vmem:[#allocation2 + $0x5a8] sm:$0xff] %v1799
      %1810 = vst [vmem:[#allocation2 + $0x5b0] sm:$0xff] %v1801
      %1811 = vst [vmem:[#allocation2 + $0x5b8] sm:$0xff] %v1803
      %1812 = vrot.lane.b32.xlu0 %v1730, 22
      %v1813 = vpop.permute.xlu0 %1812
      %1814 = vrot.lane.b32.xlu0 %v1731, 22
      %v1815 = vpop.permute.xlu0 %1814
      %1816 = vrot.lane.b32.xlu0 %v1732, 22
      %v1817 = vpop.permute.xlu0 %1816
      %1818 = vrot.lane.b32.xlu0 %v1733, 22
      %v1819 = vpop.permute.xlu0 %1818
      %1820 = vrot.lane.b32.xlu0 %v1734, 22
      %v1821 = vpop.permute.xlu0 %1820
      %1822 = vrot.lane.b32.xlu0 %v1735, 22
      %v1823 = vpop.permute.xlu0 %1822
      %v1824 = vrot.slane %v1813, 4
      %v1825 = vrot.slane %v1815, 4
      %v1826 = vrot.slane %v1817, 4
      %v1827 = vrot.slane %v1819, 4
      %v1828 = vrot.slane %v1821, 4
      %v1829 = vrot.slane %v1823, 4
      %v1830 = vsel %vm206, %v1824, %v1825
      %vm1831 = vcmask 179200
      %v1832 = vsel %vm1831, %v1813, %v1830
      %v1833 = vsel %vm206, %v1825, %v1826
      %v1834 = vsel %vm1831, %v1815, %v1833
      %v1835 = vsel %vm206, %v1827, %v1828
      %v1836 = vsel %vm1831, %v1819, %v1835
      %v1837 = vsel %vm206, %v1828, %v1829
      %v1838 = vsel %vm1831, %v1821, %v1837
      %1843 = vst [vmem:[#allocation2 + $0x5c0] sm:$0xff] %v1832
      %1844 = vst [vmem:[#allocation2 + $0x5c8] sm:$0xff] %v1834
      %1845 = vst [vmem:[#allocation2 + $0x5d0] sm:$0xff] %v1836
      %1846 = vst [vmem:[#allocation2 + $0x5d8] sm:$0xff] %v1838
      %1847 = vrot.lane.b32.xlu0 %v1730, 21
      %v1848 = vpop.permute.xlu0 %1847
      %1849 = vrot.lane.b32.xlu0 %v1731, 21
      %v1850 = vpop.permute.xlu0 %1849
      %1851 = vrot.lane.b32.xlu0 %v1732, 21
      %v1852 = vpop.permute.xlu0 %1851
      %1853 = vrot.lane.b32.xlu0 %v1733, 21
      %v1854 = vpop.permute.xlu0 %1853
      %1855 = vrot.lane.b32.xlu0 %v1734, 21
      %v1856 = vpop.permute.xlu0 %1855
      %1857 = vrot.lane.b32.xlu0 %v1735, 21
      %v1858 = vpop.permute.xlu0 %1857
      %v1859 = vrot.slane %v1848, 4
      %v1860 = vrot.slane %v1850, 4
      %v1861 = vrot.slane %v1852, 4
      %v1862 = vrot.slane %v1854, 4
      %v1863 = vrot.slane %v1856, 4
      %v1864 = vrot.slane %v1858, 4
      %v1865 = vsel %vm206, %v1859, %v1860
      %vm1866 = vcmask 171008
      %v1867 = vsel %vm1866, %v1848, %v1865
      %v1868 = vsel %vm206, %v1860, %v1861
      %v1869 = vsel %vm1866, %v1850, %v1868
      %v1870 = vsel %vm206, %v1862, %v1863
      %v1871 = vsel %vm1866, %v1854, %v1870
      %v1872 = vsel %vm206, %v1863, %v1864
      %v1873 = vsel %vm1866, %v1856, %v1872
      %1878 = vst [vmem:[#allocation2 + $0x5e0] sm:$0xff] %v1867
      %1879 = vst [vmem:[#allocation2 + $0x5e8] sm:$0xff] %v1869
      %1880 = vst [vmem:[#allocation2 + $0x5f0] sm:$0xff] %v1871
      %1881 = vst [vmem:[#allocation2 + $0x5f8] sm:$0xff] %v1873
      %1882 = vrot.lane.b32.xlu0 %v1730, 20
      %v1883 = vpop.permute.xlu0 %1882
      %1884 = vrot.lane.b32.xlu0 %v1731, 20
      %v1885 = vpop.permute.xlu0 %1884
      %1886 = vrot.lane.b32.xlu0 %v1732, 20
      %v1887 = vpop.permute.xlu0 %1886
      %1888 = vrot.lane.b32.xlu0 %v1733, 20
      %v1889 = vpop.permute.xlu0 %1888
      %1890 = vrot.lane.b32.xlu0 %v1734, 20
      %v1891 = vpop.permute.xlu0 %1890
      %1892 = vrot.lane.b32.xlu0 %v1735, 20
      %v1893 = vpop.permute.xlu0 %1892
      %v1894 = vrot.slane %v1883, 4
      %v1895 = vrot.slane %v1885, 4
      %v1896 = vrot.slane %v1887, 4
      %v1897 = vrot.slane %v1889, 4
      %v1898 = vrot.slane %v1891, 4
      %v1899 = vrot.slane %v1893, 4
      %v1900 = vsel %vm206, %v1894, %v1895
      %vm1901 = vcmask 162816
      %v1902 = vsel %vm1901, %v1883, %v1900
      %v1903 = vsel %vm206, %v1895, %v1896
      %v1904 = vsel %vm1901, %v1885, %v1903
      %v1905 = vsel %vm206, %v1897, %v1898
      %v1906 = vsel %vm1901, %v1889, %v1905
      %v1907 = vsel %vm206, %v1898, %v1899
      %v1908 = vsel %vm1901, %v1891, %v1907
      %1913 = vst [vmem:[#allocation2 + $0x600] sm:$0xff] %v1902
      %1914 = vst [vmem:[#allocation2 + $0x608] sm:$0xff] %v1904
      %1915 = vst [vmem:[#allocation2 + $0x610] sm:$0xff] %v1906
      %1916 = vst [vmem:[#allocation2 + $0x618] sm:$0xff] %v1908
      %1917 = vrot.lane.b32.xlu0 %v1730, 19
      %v1918 = vpop.permute.xlu0 %1917
      %1919 = vrot.lane.b32.xlu0 %v1731, 19
      %v1920 = vpop.permute.xlu0 %1919
      %1921 = vrot.lane.b32.xlu0 %v1732, 19
      %v1922 = vpop.permute.xlu0 %1921
      %1923 = vrot.lane.b32.xlu0 %v1733, 19
      %v1924 = vpop.permute.xlu0 %1923
      %1925 = vrot.lane.b32.xlu0 %v1734, 19
      %v1926 = vpop.permute.xlu0 %1925
      %1927 = vrot.lane.b32.xlu0 %v1735, 19
      %v1928 = vpop.permute.xlu0 %1927
      %v1929 = vrot.slane %v1918, 4
      %v1930 = vrot.slane %v1920, 4
      %v1931 = vrot.slane %v1922, 4
      %v1932 = vrot.slane %v1924, 4
      %v1933 = vrot.slane %v1926, 4
      %v1934 = vrot.slane %v1928, 4
      %v1935 = vsel %vm206, %v1929, %v1930
      %vm1936 = vcmask 154624
      %v1937 = vsel %vm1936, %v1918, %v1935
      %v1938 = vsel %vm206, %v1930, %v1931
      %v1939 = vsel %vm1936, %v1920, %v1938
      %v1940 = vsel %vm206, %v1932, %v1933
      %v1941 = vsel %vm1936, %v1924, %v1940
      %v1942 = vsel %vm206, %v1933, %v1934
      %v1943 = vsel %vm1936, %v1926, %v1942
      %1948 = vst [vmem:[#allocation2 + $0x620] sm:$0xff] %v1937
      %1949 = vst [vmem:[#allocation2 + $0x628] sm:$0xff] %v1939
      %1950 = vst [vmem:[#allocation2 + $0x630] sm:$0xff] %v1941
      %1951 = vst [vmem:[#allocation2 + $0x638] sm:$0xff] %v1943
      %1952 = vrot.lane.b32.xlu0 %v1730, 18
      %v1953 = vpop.permute.xlu0 %1952
      %1954 = vrot.lane.b32.xlu0 %v1731, 18
      %v1955 = vpop.permute.xlu0 %1954
      %1956 = vrot.lane.b32.xlu0 %v1732, 18
      %v1957 = vpop.permute.xlu0 %1956
      %1958 = vrot.lane.b32.xlu0 %v1733, 18
      %v1959 = vpop.permute.xlu0 %1958
      %1960 = vrot.lane.b32.xlu0 %v1734, 18
      %v1961 = vpop.permute.xlu0 %1960
      %1962 = vrot.lane.b32.xlu0 %v1735, 18
      %v1963 = vpop.permute.xlu0 %1962
      %v1964 = vrot.slane %v1953, 4
      %v1965 = vrot.slane %v1955, 4
      %v1966 = vrot.slane %v1957, 4
      %v1967 = vrot.slane %v1959, 4
      %v1968 = vrot.slane %v1961, 4
      %v1969 = vrot.slane %v1963, 4
      %v1970 = vsel %vm206, %v1964, %v1965
      %vm1971 = vcmask 146432
      %v1972 = vsel %vm1971, %v1953, %v1970
      %v1973 = vsel %vm206, %v1965, %v1966
      %v1974 = vsel %vm1971, %v1955, %v1973
      %v1975 = vsel %vm206, %v1967, %v1968
      %v1976 = vsel %vm1971, %v1959, %v1975
      %v1977 = vsel %vm206, %v1968, %v1969
      %v1978 = vsel %vm1971, %v1961, %v1977
      %1983 = vst [vmem:[#allocation2 + $0x640] sm:$0xff] %v1972
      %1984 = vst [vmem:[#allocation2 + $0x648] sm:$0xff] %v1974
      %1985 = vst [vmem:[#allocation2 + $0x650] sm:$0xff] %v1976
      %1986 = vst [vmem:[#allocation2 + $0x658] sm:$0xff] %v1978
      %1987 = vrot.lane.b32.xlu0 %v1730, 17
      %v1988 = vpop.permute.xlu0 %1987
      %1989 = vrot.lane.b32.xlu0 %v1731, 17
      %v1990 = vpop.permute.xlu0 %1989
      %1991 = vrot.lane.b32.xlu0 %v1732, 17
      %v1992 = vpop.permute.xlu0 %1991
      %1993 = vrot.lane.b32.xlu0 %v1733, 17
      %v1994 = vpop.permute.xlu0 %1993
      %1995 = vrot.lane.b32.xlu0 %v1734, 17
      %v1996 = vpop.permute.xlu0 %1995
      %1997 = vrot.lane.b32.xlu0 %v1735, 17
      %v1998 = vpop.permute.xlu0 %1997
      %v1999 = vrot.slane %v1988, 4
      %v2000 = vrot.slane %v1990, 4
      %v2001 = vrot.slane %v1992, 4
      %v2002 = vrot.slane %v1994, 4
      %v2003 = vrot.slane %v1996, 4
      %v2004 = vrot.slane %v1998, 4
      %v2005 = vsel %vm206, %v1999, %v2000
      %vm2006 = vcmask 138240
      %v2007 = vsel %vm2006, %v1988, %v2005
      %v2008 = vsel %vm206, %v2000, %v2001
      %v2009 = vsel %vm2006, %v1990, %v2008
      %v2010 = vsel %vm206, %v2002, %v2003
      %v2011 = vsel %vm2006, %v1994, %v2010
      %v2012 = vsel %vm206, %v2003, %v2004
      %v2013 = vsel %vm2006, %v1996, %v2012
      %2018 = vst [vmem:[#allocation2 + $0x660] sm:$0xff] %v2007
      %2019 = vst [vmem:[#allocation2 + $0x668] sm:$0xff] %v2009
      %2020 = vst [vmem:[#allocation2 + $0x670] sm:$0xff] %v2011
      %2021 = vst [vmem:[#allocation2 + $0x678] sm:$0xff] %v2013
      %2022 = vrot.lane.b32.xlu0 %v1730, 16
      %v2023 = vpop.permute.xlu0 %2022
      %2024 = vrot.lane.b32.xlu0 %v1731, 16
      %v2025 = vpop.permute.xlu0 %2024
      %2026 = vrot.lane.b32.xlu0 %v1732, 16
      %v2027 = vpop.permute.xlu0 %2026
      %2028 = vrot.lane.b32.xlu0 %v1733, 16
      %v2029 = vpop.permute.xlu0 %2028
      %2030 = vrot.lane.b32.xlu0 %v1734, 16
      %v2031 = vpop.permute.xlu0 %2030
      %2032 = vrot.lane.b32.xlu0 %v1735, 16
      %v2033 = vpop.permute.xlu0 %2032
      %v2034 = vrot.slane %v2023, 4
      %v2035 = vrot.slane %v2025, 4
      %v2036 = vrot.slane %v2027, 4
      %v2037 = vrot.slane %v2029, 4
      %v2038 = vrot.slane %v2031, 4
      %v2039 = vrot.slane %v2033, 4
      %v2040 = vsel %vm206, %v2034, %v2035
      %vm2041 = vcmask 130048
      %v2042 = vsel %vm2041, %v2023, %v2040
      %v2043 = vsel %vm206, %v2035, %v2036
      %v2044 = vsel %vm2041, %v2025, %v2043
      %v2045 = vsel %vm206, %v2037, %v2038
      %v2046 = vsel %vm2041, %v2029, %v2045
      %v2047 = vsel %vm206, %v2038, %v2039
      %v2048 = vsel %vm2041, %v2031, %v2047
      %2053 = vst [vmem:[#allocation2 + $0x680] sm:$0xff] %v2042
      %2054 = vst [vmem:[#allocation2 + $0x688] sm:$0xff] %v2044
      %2055 = vst [vmem:[#allocation2 + $0x690] sm:$0xff] %v2046
      %2056 = vst [vmem:[#allocation2 + $0x698] sm:$0xff] %v2048
      %2057 = vrot.lane.b32.xlu0 %v1730, 15
      %v2058 = vpop.permute.xlu0 %2057
      %2059 = vrot.lane.b32.xlu0 %v1731, 15
      %v2060 = vpop.permute.xlu0 %2059
      %2061 = vrot.lane.b32.xlu0 %v1732, 15
      %v2062 = vpop.permute.xlu0 %2061
      %2063 = vrot.lane.b32.xlu0 %v1733, 15
      %v2064 = vpop.permute.xlu0 %2063
      %2065 = vrot.lane.b32.xlu0 %v1734, 15
      %v2066 = vpop.permute.xlu0 %2065
      %2067 = vrot.lane.b32.xlu0 %v1735, 15
      %v2068 = vpop.permute.xlu0 %2067
      %v2069 = vrot.slane %v2058, 4
      %v2070 = vrot.slane %v2060, 4
      %v2071 = vrot.slane %v2062, 4
      %v2072 = vrot.slane %v2064, 4
      %v2073 = vrot.slane %v2066, 4
      %v2074 = vrot.slane %v2068, 4
      %v2075 = vsel %vm206, %v2069, %v2070
      %vm2076 = vcmask 121856
      %v2077 = vsel %vm2076, %v2058, %v2075
      %v2078 = vsel %vm206, %v2070, %v2071
      %v2079 = vsel %vm2076, %v2060, %v2078
      %v2080 = vsel %vm206, %v2072, %v2073
      %v2081 = vsel %vm2076, %v2064, %v2080
      %v2082 = vsel %vm206, %v2073, %v2074
      %v2083 = vsel %vm2076, %v2066, %v2082
      %2088 = vst [vmem:[#allocation2 + $0x6a0] sm:$0xff] %v2077
      %2089 = vst [vmem:[#allocation2 + $0x6a8] sm:$0xff] %v2079
      %2090 = vst [vmem:[#allocation2 + $0x6b0] sm:$0xff] %v2081
      %2091 = vst [vmem:[#allocation2 + $0x6b8] sm:$0xff] %v2083
      %2092 = vrot.lane.b32.xlu0 %v1730, 14
      %v2093 = vpop.permute.xlu0 %2092
      %2094 = vrot.lane.b32.xlu0 %v1731, 14
      %v2095 = vpop.permute.xlu0 %2094
      %2096 = vrot.lane.b32.xlu0 %v1732, 14
      %v2097 = vpop.permute.xlu0 %2096
      %2098 = vrot.lane.b32.xlu0 %v1733, 14
      %v2099 = vpop.permute.xlu0 %2098
      %2100 = vrot.lane.b32.xlu0 %v1734, 14
      %v2101 = vpop.permute.xlu0 %2100
      %2102 = vrot.lane.b32.xlu0 %v1735, 14
      %v2103 = vpop.permute.xlu0 %2102
      %v2104 = vrot.slane %v2093, 4
      %v2105 = vrot.slane %v2095, 4
      %v2106 = vrot.slane %v2097, 4
      %v2107 = vrot.slane %v2099, 4
      %v2108 = vrot.slane %v2101, 4
      %v2109 = vrot.slane %v2103, 4
      %v2110 = vsel %vm206, %v2104, %v2105
      %vm2111 = vcmask 113664
      %v2112 = vsel %vm2111, %v2093, %v2110
      %v2113 = vsel %vm206, %v2105, %v2106
      %v2114 = vsel %vm2111, %v2095, %v2113
      %v2115 = vsel %vm206, %v2107, %v2108
      %v2116 = vsel %vm2111, %v2099, %v2115
      %v2117 = vsel %vm206, %v2108, %v2109
      %v2118 = vsel %vm2111, %v2101, %v2117
      %2123 = vst [vmem:[#allocation2 + $0x6c0] sm:$0xff] %v2112
      %2124 = vst [vmem:[#allocation2 + $0x6c8] sm:$0xff] %v2114
      %2125 = vst [vmem:[#allocation2 + $0x6d0] sm:$0xff] %v2116
      %2126 = vst [vmem:[#allocation2 + $0x6d8] sm:$0xff] %v2118
      %v2127 = vld [vmem:[%s165 + $0x4] sm:$0xff]
      %v2128 = vld [vmem:[%s165 + $0xc] sm:$0xff]
      %v2129 = vld [vmem:[%s165 + $0x14] sm:$0xf]
      %v2130 = vld [vmem:[%s165 + $0x20] sm:$0xff]
      %v2131 = vld [vmem:[%s165 + $0x28] sm:$0xff]
      %v2132 = vld [vmem:[%s165 + $0x30] sm:$0xf]
      %2139 = vrot.lane.b32.xlu0 %v2127, 126
      %v2140 = vpop.permute.xlu0 %2139
      %2141 = vrot.lane.b32.xlu0 %v2128, 126
      %v2142 = vpop.permute.xlu0 %2141
      %2143 = vrot.lane.b32.xlu0 %v2129, 126
      %v2144 = vpop.permute.xlu0 %2143
      %2145 = vrot.lane.b32.xlu0 %v2130, 126
      %v2146 = vpop.permute.xlu0 %2145
      %2147 = vrot.lane.b32.xlu0 %v2131, 126
      %v2148 = vpop.permute.xlu0 %2147
      %2149 = vrot.lane.b32.xlu0 %v2132, 126
      %v2150 = vpop.permute.xlu0 %2149
      %v2151 = vrot.slane %v2140, 4
      %v2152 = vrot.slane %v2142, 4
      %v2153 = vrot.slane %v2144, 4
      %v2154 = vrot.slane %v2146, 4
      %v2155 = vrot.slane %v2148, 4
      %v2156 = vrot.slane %v2150, 4
      %v2157 = vsel %vm206, %v2151, %v2152
      %v2158 = vsel %vm243, %v2140, %v2157
      %v2159 = vsel %vm206, %v2152, %v2153
      %v2160 = vsel %vm243, %v2142, %v2159
      %v2161 = vsel %vm206, %v2154, %v2155
      %v2162 = vsel %vm243, %v2146, %v2161
      %v2163 = vsel %vm206, %v2155, %v2156
      %v2164 = vsel %vm243, %v2148, %v2163
      %2169 = vst [vmem:[#allocation2 + $0x6e0] sm:$0xff] %v2158
      %2170 = vst [vmem:[#allocation2 + $0x6e8] sm:$0xff] %v2160
      %2171 = vst [vmem:[#allocation2 + $0x6f0] sm:$0xff] %v2162
      %2172 = vst [vmem:[#allocation2 + $0x6f8] sm:$0xff] %v2164
      %2173 = vrot.lane.b32.xlu0 %v2127, 125
      %v2174 = vpop.permute.xlu0 %2173
      %2175 = vrot.lane.b32.xlu0 %v2128, 125
      %v2176 = vpop.permute.xlu0 %2175
      %2177 = vrot.lane.b32.xlu0 %v2129, 125
      %v2178 = vpop.permute.xlu0 %2177
      %2179 = vrot.lane.b32.xlu0 %v2130, 125
      %v2180 = vpop.permute.xlu0 %2179
      %2181 = vrot.lane.b32.xlu0 %v2131, 125
      %v2182 = vpop.permute.xlu0 %2181
      %2183 = vrot.lane.b32.xlu0 %v2132, 125
      %v2184 = vpop.permute.xlu0 %2183
      %v2185 = vrot.slane %v2174, 4
      %v2186 = vrot.slane %v2176, 4
      %v2187 = vrot.slane %v2178, 4
      %v2188 = vrot.slane %v2180, 4
      %v2189 = vrot.slane %v2182, 4
      %v2190 = vrot.slane %v2184, 4
      %v2191 = vsel %vm206, %v2185, %v2186
      %v2192 = vsel %vm278, %v2174, %v2191
      %v2193 = vsel %vm206, %v2186, %v2187
      %v2194 = vsel %vm278, %v2176, %v2193
      %v2195 = vsel %vm206, %v2188, %v2189
      %v2196 = vsel %vm278, %v2180, %v2195
      %v2197 = vsel %vm206, %v2189, %v2190
      %v2198 = vsel %vm278, %v2182, %v2197
      %2203 = vst [vmem:[#allocation2 + $0x700] sm:$0xff] %v2192
      %2204 = vst [vmem:[#allocation2 + $0x708] sm:$0xff] %v2194
      %2205 = vst [vmem:[#allocation2 + $0x710] sm:$0xff] %v2196
      %2206 = vst [vmem:[#allocation2 + $0x718] sm:$0xff] %v2198
      %2207 = vrot.lane.b32.xlu0 %v2127, 124
      %v2208 = vpop.permute.xlu0 %2207
      %2209 = vrot.lane.b32.xlu0 %v2128, 124
      %v2210 = vpop.permute.xlu0 %2209
      %2211 = vrot.lane.b32.xlu0 %v2129, 124
      %v2212 = vpop.permute.xlu0 %2211
      %2213 = vrot.lane.b32.xlu0 %v2130, 124
      %v2214 = vpop.permute.xlu0 %2213
      %2215 = vrot.lane.b32.xlu0 %v2131, 124
      %v2216 = vpop.permute.xlu0 %2215
      %2217 = vrot.lane.b32.xlu0 %v2132, 124
      %v2218 = vpop.permute.xlu0 %2217
      %v2219 = vrot.slane %v2208, 4
      %v2220 = vrot.slane %v2210, 4
      %v2221 = vrot.slane %v2212, 4
      %v2222 = vrot.slane %v2214, 4
      %v2223 = vrot.slane %v2216, 4
      %v2224 = vrot.slane %v2218, 4
      %v2225 = vsel %vm206, %v2219, %v2220
      %v2226 = vsel %vm313, %v2208, %v2225
      %v2227 = vsel %vm206, %v2220, %v2221
      %v2228 = vsel %vm313, %v2210, %v2227
      %v2229 = vsel %vm206, %v2222, %v2223
      %v2230 = vsel %vm313, %v2214, %v2229
      %v2231 = vsel %vm206, %v2223, %v2224
      %v2232 = vsel %vm313, %v2216, %v2231
      %2237 = vst [vmem:[#allocation2 + $0x720] sm:$0xff] %v2226
      %2238 = vst [vmem:[#allocation2 + $0x728] sm:$0xff] %v2228
      %2239 = vst [vmem:[#allocation2 + $0x730] sm:$0xff] %v2230
      %2240 = vst [vmem:[#allocation2 + $0x738] sm:$0xff] %v2232
      %2241 = vrot.lane.b32.xlu0 %v2127, 123
      %v2242 = vpop.permute.xlu0 %2241
      %2243 = vrot.lane.b32.xlu0 %v2128, 123
      %v2244 = vpop.permute.xlu0 %2243
      %2245 = vrot.lane.b32.xlu0 %v2129, 123
      %v2246 = vpop.permute.xlu0 %2245
      %2247 = vrot.lane.b32.xlu0 %v2130, 123
      %v2248 = vpop.permute.xlu0 %2247
      %2249 = vrot.lane.b32.xlu0 %v2131, 123
      %v2250 = vpop.permute.xlu0 %2249
      %2251 = vrot.lane.b32.xlu0 %v2132, 123
      %v2252 = vpop.permute.xlu0 %2251
      %v2253 = vrot.slane %v2242, 4
      %v2254 = vrot.slane %v2244, 4
      %v2255 = vrot.slane %v2246, 4
      %v2256 = vrot.slane %v2248, 4
      %v2257 = vrot.slane %v2250, 4
      %v2258 = vrot.slane %v2252, 4
      %v2259 = vsel %vm206, %v2253, %v2254
      %v2260 = vsel %vm348, %v2242, %v2259
      %v2261 = vsel %vm206, %v2254, %v2255
      %v2262 = vsel %vm348, %v2244, %v2261
      %v2263 = vsel %vm206, %v2256, %v2257
      %v2264 = vsel %vm348, %v2248, %v2263
      %v2265 = vsel %vm206, %v2257, %v2258
      %v2266 = vsel %vm348, %v2250, %v2265
      %2271 = vst [vmem:[#allocation2 + $0x740] sm:$0xff] %v2260
      %2272 = vst [vmem:[#allocation2 + $0x748] sm:$0xff] %v2262
      %2273 = vst [vmem:[#allocation2 + $0x750] sm:$0xff] %v2264
      %2274 = vst [vmem:[#allocation2 + $0x758] sm:$0xff] %v2266
      %2275 = vrot.lane.b32.xlu0 %v2127, 122
      %v2276 = vpop.permute.xlu0 %2275
      %2277 = vrot.lane.b32.xlu0 %v2128, 122
      %v2278 = vpop.permute.xlu0 %2277
      %2279 = vrot.lane.b32.xlu0 %v2129, 122
      %v2280 = vpop.permute.xlu0 %2279
      %2281 = vrot.lane.b32.xlu0 %v2130, 122
      %v2282 = vpop.permute.xlu0 %2281
      %2283 = vrot.lane.b32.xlu0 %v2131, 122
      %v2284 = vpop.permute.xlu0 %2283
      %2285 = vrot.lane.b32.xlu0 %v2132, 122
      %v2286 = vpop.permute.xlu0 %2285
      %v2287 = vrot.slane %v2276, 4
      %v2288 = vrot.slane %v2278, 4
      %v2289 = vrot.slane %v2280, 4
      %v2290 = vrot.slane %v2282, 4
      %v2291 = vrot.slane %v2284, 4
      %v2292 = vrot.slane %v2286, 4
      %v2293 = vsel %vm206, %v2287, %v2288
      %v2294 = vsel %vm383, %v2276, %v2293
      %v2295 = vsel %vm206, %v2288, %v2289
      %v2296 = vsel %vm383, %v2278, %v2295
      %v2297 = vsel %vm206, %v2290, %v2291
      %v2298 = vsel %vm383, %v2282, %v2297
      %v2299 = vsel %vm206, %v2291, %v2292
      %v2300 = vsel %vm383, %v2284, %v2299
      %2305 = vst [vmem:[#allocation2 + $0x760] sm:$0xff] %v2294
      %2306 = vst [vmem:[#allocation2 + $0x768] sm:$0xff] %v2296
      %2307 = vst [vmem:[#allocation2 + $0x770] sm:$0xff] %v2298
      %2308 = vst [vmem:[#allocation2 + $0x778] sm:$0xff] %v2300
      %2309 = vrot.lane.b32.xlu0 %v2127, 121
      %v2310 = vpop.permute.xlu0 %2309
      %2311 = vrot.lane.b32.xlu0 %v2128, 121
      %v2312 = vpop.permute.xlu0 %2311
      %2313 = vrot.lane.b32.xlu0 %v2129, 121
      %v2314 = vpop.permute.xlu0 %2313
      %2315 = vrot.lane.b32.xlu0 %v2130, 121
      %v2316 = vpop.permute.xlu0 %2315
      %2317 = vrot.lane.b32.xlu0 %v2131, 121
      %v2318 = vpop.permute.xlu0 %2317
      %2319 = vrot.lane.b32.xlu0 %v2132, 121
      %v2320 = vpop.permute.xlu0 %2319
      %v2321 = vrot.slane %v2310, 4
      %v2322 = vrot.slane %v2312, 4
      %v2323 = vrot.slane %v2314, 4
      %v2324 = vrot.slane %v2316, 4
      %v2325 = vrot.slane %v2318, 4
      %v2326 = vrot.slane %v2320, 4
      %v2327 = vsel %vm206, %v2321, %v2322
      %v2328 = vsel %vm418, %v2310, %v2327
      %v2329 = vsel %vm206, %v2322, %v2323
      %v2330 = vsel %vm418, %v2312, %v2329
      %v2331 = vsel %vm206, %v2324, %v2325
      %v2332 = vsel %vm418, %v2316, %v2331
      %v2333 = vsel %vm206, %v2325, %v2326
      %v2334 = vsel %vm418, %v2318, %v2333
      %2339 = vst [vmem:[#allocation2 + $0x780] sm:$0xff] %v2328
      %2340 = vst [vmem:[#allocation2 + $0x788] sm:$0xff] %v2330
      %2341 = vst [vmem:[#allocation2 + $0x790] sm:$0xff] %v2332
      %2342 = vst [vmem:[#allocation2 + $0x798] sm:$0xff] %v2334
      %2343 = vrot.lane.b32.xlu0 %v2127, 120
      %v2344 = vpop.permute.xlu0 %2343
      %2345 = vrot.lane.b32.xlu0 %v2128, 120
      %v2346 = vpop.permute.xlu0 %2345
      %2347 = vrot.lane.b32.xlu0 %v2129, 120
      %v2348 = vpop.permute.xlu0 %2347
      %2349 = vrot.lane.b32.xlu0 %v2130, 120
      %v2350 = vpop.permute.xlu0 %2349
      %2351 = vrot.lane.b32.xlu0 %v2131, 120
      %v2352 = vpop.permute.xlu0 %2351
      %2353 = vrot.lane.b32.xlu0 %v2132, 120
      %v2354 = vpop.permute.xlu0 %2353
      %v2355 = vrot.slane %v2344, 4
      %v2356 = vrot.slane %v2346, 4
      %v2357 = vrot.slane %v2348, 4
      %v2358 = vrot.slane %v2350, 4
      %v2359 = vrot.slane %v2352, 4
      %v2360 = vrot.slane %v2354, 4
      %v2361 = vsel %vm206, %v2355, %v2356
      %v2362 = vsel %vm453, %v2344, %v2361
      %v2363 = vsel %vm206, %v2356, %v2357
      %v2364 = vsel %vm453, %v2346, %v2363
      %v2365 = vsel %vm206, %v2358, %v2359
      %v2366 = vsel %vm453, %v2350, %v2365
      %v2367 = vsel %vm206, %v2359, %v2360
      %v2368 = vsel %vm453, %v2352, %v2367
      %2373 = vst [vmem:[#allocation2 + $0x7a0] sm:$0xff] %v2362
      %2374 = vst [vmem:[#allocation2 + $0x7a8] sm:$0xff] %v2364
      %2375 = vst [vmem:[#allocation2 + $0x7b0] sm:$0xff] %v2366
      %2376 = vst [vmem:[#allocation2 + $0x7b8] sm:$0xff] %v2368
      %2377 = vrot.lane.b32.xlu0 %v2127, 119
      %v2378 = vpop.permute.xlu0 %2377
      %2379 = vrot.lane.b32.xlu0 %v2128, 119
      %v2380 = vpop.permute.xlu0 %2379
      %2381 = vrot.lane.b32.xlu0 %v2129, 119
      %v2382 = vpop.permute.xlu0 %2381
      %2383 = vrot.lane.b32.xlu0 %v2130, 119
      %v2384 = vpop.permute.xlu0 %2383
      %2385 = vrot.lane.b32.xlu0 %v2131, 119
      %v2386 = vpop.permute.xlu0 %2385
      %2387 = vrot.lane.b32.xlu0 %v2132, 119
      %v2388 = vpop.permute.xlu0 %2387
      %v2389 = vrot.slane %v2378, 4
      %v2390 = vrot.slane %v2380, 4
      %v2391 = vrot.slane %v2382, 4
      %v2392 = vrot.slane %v2384, 4
      %v2393 = vrot.slane %v2386, 4
      %v2394 = vrot.slane %v2388, 4
      %v2395 = vsel %vm206, %v2389, %v2390
      %v2396 = vsel %vm488, %v2378, %v2395
      %v2397 = vsel %vm206, %v2390, %v2391
      %v2398 = vsel %vm488, %v2380, %v2397
      %v2399 = vsel %vm206, %v2392, %v2393
      %v2400 = vsel %vm488, %v2384, %v2399
      %v2401 = vsel %vm206, %v2393, %v2394
      %v2402 = vsel %vm488, %v2386, %v2401
      %2407 = vst [vmem:[#allocation2 + $0x7c0] sm:$0xff] %v2396
      %2408 = vst [vmem:[#allocation2 + $0x7c8] sm:$0xff] %v2398
      %2409 = vst [vmem:[#allocation2 + $0x7d0] sm:$0xff] %v2400
      %2410 = vst [vmem:[#allocation2 + $0x7d8] sm:$0xff] %v2402
      %2411 = vrot.lane.b32.xlu0 %v2127, 118
      %v2412 = vpop.permute.xlu0 %2411
      %2413 = vrot.lane.b32.xlu0 %v2128, 118
      %v2414 = vpop.permute.xlu0 %2413
      %2415 = vrot.lane.b32.xlu0 %v2129, 118
      %v2416 = vpop.permute.xlu0 %2415
      %2417 = vrot.lane.b32.xlu0 %v2130, 118
      %v2418 = vpop.permute.xlu0 %2417
      %2419 = vrot.lane.b32.xlu0 %v2131, 118
      %v2420 = vpop.permute.xlu0 %2419
      %2421 = vrot.lane.b32.xlu0 %v2132, 118
      %v2422 = vpop.permute.xlu0 %2421
      %v2423 = vrot.slane %v2412, 4
      %v2424 = vrot.slane %v2414, 4
      %v2425 = vrot.slane %v2416, 4
      %v2426 = vrot.slane %v2418, 4
      %v2427 = vrot.slane %v2420, 4
      %v2428 = vrot.slane %v2422, 4
      %v2429 = vsel %vm206, %v2423, %v2424
      %v2430 = vsel %vm523, %v2412, %v2429
      %v2431 = vsel %vm206, %v2424, %v2425
      %v2432 = vsel %vm523, %v2414, %v2431
      %v2433 = vsel %vm206, %v2426, %v2427
      %v2434 = vsel %vm523, %v2418, %v2433
      %v2435 = vsel %vm206, %v2427, %v2428
      %v2436 = vsel %vm523, %v2420, %v2435
      %2441 = vst [vmem:[#allocation2 + $0x7e0] sm:$0xff] %v2430
      %2442 = vst [vmem:[#allocation2 + $0x7e8] sm:$0xff] %v2432
      %2443 = vst [vmem:[#allocation2 + $0x7f0] sm:$0xff] %v2434
      %2444 = vst [vmem:[#allocation2 + $0x7f8] sm:$0xff] %v2436
      %2445 = vrot.lane.b32.xlu0 %v2127, 117
      %v2446 = vpop.permute.xlu0 %2445
      %2447 = vrot.lane.b32.xlu0 %v2128, 117
      %v2448 = vpop.permute.xlu0 %2447
      %2449 = vrot.lane.b32.xlu0 %v2129, 117
      %v2450 = vpop.permute.xlu0 %2449
      %2451 = vrot.lane.b32.xlu0 %v2130, 117
      %v2452 = vpop.permute.xlu0 %2451
      %2453 = vrot.lane.b32.xlu0 %v2131, 117
      %v2454 = vpop.permute.xlu0 %2453
      %2455 = vrot.lane.b32.xlu0 %v2132, 117
      %v2456 = vpop.permute.xlu0 %2455
      %v2457 = vrot.slane %v2446, 4
      %v2458 = vrot.slane %v2448, 4
      %v2459 = vrot.slane %v2450, 4
      %v2460 = vrot.slane %v2452, 4
      %v2461 = vrot.slane %v2454, 4
      %v2462 = vrot.slane %v2456, 4
      %v2463 = vsel %vm206, %v2457, %v2458
      %vm2464 = vcmask 957440
      %v2465 = vsel %vm2464, %v2446, %v2463
      %v2466 = vsel %vm206, %v2458, %v2459
      %v2467 = vsel %vm2464, %v2448, %v2466
      %v2468 = vsel %vm206, %v2460, %v2461
      %v2469 = vsel %vm2464, %v2452, %v2468
      %v2470 = vsel %vm206, %v2461, %v2462
      %v2471 = vsel %vm2464, %v2454, %v2470
      %2476 = vst [vmem:[#allocation2 + $0x800] sm:$0xff] %v2465
      %2477 = vst [vmem:[#allocation2 + $0x808] sm:$0xff] %v2467
      %2478 = vst [vmem:[#allocation2 + $0x810] sm:$0xff] %v2469
      %2479 = vst [vmem:[#allocation2 + $0x818] sm:$0xff] %v2471
      %2480 = vrot.lane.b32.xlu0 %v2127, 116
      %v2481 = vpop.permute.xlu0 %2480
      %2482 = vrot.lane.b32.xlu0 %v2128, 116
      %v2483 = vpop.permute.xlu0 %2482
      %2484 = vrot.lane.b32.xlu0 %v2129, 116
      %v2485 = vpop.permute.xlu0 %2484
      %2486 = vrot.lane.b32.xlu0 %v2130, 116
      %v2487 = vpop.permute.xlu0 %2486
      %2488 = vrot.lane.b32.xlu0 %v2131, 116
      %v2489 = vpop.permute.xlu0 %2488
      %2490 = vrot.lane.b32.xlu0 %v2132, 116
      %v2491 = vpop.permute.xlu0 %2490
      %v2492 = vrot.slane %v2481, 4
      %v2493 = vrot.slane %v2483, 4
      %v2494 = vrot.slane %v2485, 4
      %v2495 = vrot.slane %v2487, 4
      %v2496 = vrot.slane %v2489, 4
      %v2497 = vrot.slane %v2491, 4
      %v2498 = vsel %vm206, %v2492, %v2493
      %vm2499 = vcmask 949248
      %v2500 = vsel %vm2499, %v2481, %v2498
      %v2501 = vsel %vm206, %v2493, %v2494
      %v2502 = vsel %vm2499, %v2483, %v2501
      %v2503 = vsel %vm206, %v2495, %v2496
      %v2504 = vsel %vm2499, %v2487, %v2503
      %v2505 = vsel %vm206, %v2496, %v2497
      %v2506 = vsel %vm2499, %v2489, %v2505
      %2511 = vst [vmem:[#allocation2 + $0x820] sm:$0xff] %v2500
      %2512 = vst [vmem:[#allocation2 + $0x828] sm:$0xff] %v2502
      %2513 = vst [vmem:[#allocation2 + $0x830] sm:$0xff] %v2504
      %2514 = vst [vmem:[#allocation2 + $0x838] sm:$0xff] %v2506
      %v2515 = vld [vmem:[%s165 + $0x4] sm:$0xff]
      %v2516 = vld [vmem:[%s165 + $0xc] sm:$0xff]
      %v2517 = vld [vmem:[%s165 + $0x14] sm:$0xf]
      %v2518 = vld [vmem:[%s165 + $0x20] sm:$0xff]
      %v2519 = vld [vmem:[%s165 + $0x28] sm:$0xff]
      %v2520 = vld [vmem:[%s165 + $0x30] sm:$0xf]
      %2527 = vrot.lane.b32.xlu0 %v2515, 100
      %v2528 = vpop.permute.xlu0 %2527
      %2529 = vrot.lane.b32.xlu0 %v2516, 100
      %v2530 = vpop.permute.xlu0 %2529
      %2531 = vrot.lane.b32.xlu0 %v2517, 100
      %v2532 = vpop.permute.xlu0 %2531
      %2533 = vrot.lane.b32.xlu0 %v2518, 100
      %v2534 = vpop.permute.xlu0 %2533
      %2535 = vrot.lane.b32.xlu0 %v2519, 100
      %v2536 = vpop.permute.xlu0 %2535
      %2537 = vrot.lane.b32.xlu0 %v2520, 100
      %v2538 = vpop.permute.xlu0 %2537
      %v2539 = vrot.slane %v2528, 4
      %v2540 = vrot.slane %v2530, 4
      %v2541 = vrot.slane %v2532, 4
      %v2542 = vrot.slane %v2534, 4
      %v2543 = vrot.slane %v2536, 4
      %v2544 = vrot.slane %v2538, 4
      %v2545 = vsel %vm206, %v2539, %v2540
      %v2546 = vsel %vm640, %v2528, %v2545
      %v2547 = vsel %vm206, %v2540, %v2541
      %v2548 = vsel %vm640, %v2530, %v2547
      %v2549 = vsel %vm206, %v2542, %v2543
      %v2550 = vsel %vm640, %v2534, %v2549
      %v2551 = vsel %vm206, %v2543, %v2544
      %v2552 = vsel %vm640, %v2536, %v2551
      %2557 = vst [vmem:[#allocation2 + $0x840] sm:$0xff] %v2546
      %2558 = vst [vmem:[#allocation2 + $0x848] sm:$0xff] %v2548
      %2559 = vst [vmem:[#allocation2 + $0x850] sm:$0xff] %v2550
      %2560 = vst [vmem:[#allocation2 + $0x858] sm:$0xff] %v2552
      %2561 = vrot.lane.b32.xlu0 %v2515, 99
      %v2562 = vpop.permute.xlu0 %2561
      %2563 = vrot.lane.b32.xlu0 %v2516, 99
      %v2564 = vpop.permute.xlu0 %2563
      %2565 = vrot.lane.b32.xlu0 %v2517, 99
      %v2566 = vpop.permute.xlu0 %2565
      %2567 = vrot.lane.b32.xlu0 %v2518, 99
      %v2568 = vpop.permute.xlu0 %2567
      %2569 = vrot.lane.b32.xlu0 %v2519, 99
      %v2570 = vpop.permute.xlu0 %2569
      %2571 = vrot.lane.b32.xlu0 %v2520, 99
      %v2572 = vpop.permute.xlu0 %2571
      %v2573 = vrot.slane %v2562, 4
      %v2574 = vrot.slane %v2564, 4
      %v2575 = vrot.slane %v2566, 4
      %v2576 = vrot.slane %v2568, 4
      %v2577 = vrot.slane %v2570, 4
      %v2578 = vrot.slane %v2572, 4
      %v2579 = vsel %vm206, %v2573, %v2574
      %v2580 = vsel %vm675, %v2562, %v2579
      %v2581 = vsel %vm206, %v2574, %v2575
      %v2582 = vsel %vm675, %v2564, %v2581
      %v2583 = vsel %vm206, %v2576, %v2577
      %v2584 = vsel %vm675, %v2568, %v2583
      %v2585 = vsel %vm206, %v2577, %v2578
      %v2586 = vsel %vm675, %v2570, %v2585
      %2591 = vst [vmem:[#allocation2 + $0x860] sm:$0xff] %v2580
      %2592 = vst [vmem:[#allocation2 + $0x868] sm:$0xff] %v2582
      %2593 = vst [vmem:[#allocation2 + $0x870] sm:$0xff] %v2584
      %2594 = vst [vmem:[#allocation2 + $0x878] sm:$0xff] %v2586
      %2595 = vrot.lane.b32.xlu0 %v2515, 98
      %v2596 = vpop.permute.xlu0 %2595
      %2597 = vrot.lane.b32.xlu0 %v2516, 98
      %v2598 = vpop.permute.xlu0 %2597
      %2599 = vrot.lane.b32.xlu0 %v2517, 98
      %v2600 = vpop.permute.xlu0 %2599
      %2601 = vrot.lane.b32.xlu0 %v2518, 98
      %v2602 = vpop.permute.xlu0 %2601
      %2603 = vrot.lane.b32.xlu0 %v2519, 98
      %v2604 = vpop.permute.xlu0 %2603
      %2605 = vrot.lane.b32.xlu0 %v2520, 98
      %v2606 = vpop.permute.xlu0 %2605
      %v2607 = vrot.slane %v2596, 4
      %v2608 = vrot.slane %v2598, 4
      %v2609 = vrot.slane %v2600, 4
      %v2610 = vrot.slane %v2602, 4
      %v2611 = vrot.slane %v2604, 4
      %v2612 = vrot.slane %v2606, 4
      %v2613 = vsel %vm206, %v2607, %v2608
      %v2614 = vsel %vm710, %v2596, %v2613
      %v2615 = vsel %vm206, %v2608, %v2609
      %v2616 = vsel %vm710, %v2598, %v2615
      %v2617 = vsel %vm206, %v2610, %v2611
      %v2618 = vsel %vm710, %v2602, %v2617
      %v2619 = vsel %vm206, %v2611, %v2612
      %v2620 = vsel %vm710, %v2604, %v2619
      %2625 = vst [vmem:[#allocation2 + $0x880] sm:$0xff] %v2614
      %2626 = vst [vmem:[#allocation2 + $0x888] sm:$0xff] %v2616
      %2627 = vst [vmem:[#allocation2 + $0x890] sm:$0xff] %v2618
      %2628 = vst [vmem:[#allocation2 + $0x898] sm:$0xff] %v2620
      %2629 = vrot.lane.b32.xlu0 %v2515, 97
      %v2630 = vpop.permute.xlu0 %2629
      %2631 = vrot.lane.b32.xlu0 %v2516, 97
      %v2632 = vpop.permute.xlu0 %2631
      %2633 = vrot.lane.b32.xlu0 %v2517, 97
      %v2634 = vpop.permute.xlu0 %2633
      %2635 = vrot.lane.b32.xlu0 %v2518, 97
      %v2636 = vpop.permute.xlu0 %2635
      %2637 = vrot.lane.b32.xlu0 %v2519, 97
      %v2638 = vpop.permute.xlu0 %2637
      %2639 = vrot.lane.b32.xlu0 %v2520, 97
      %v2640 = vpop.permute.xlu0 %2639
      %v2641 = vrot.slane %v2630, 4
      %v2642 = vrot.slane %v2632, 4
      %v2643 = vrot.slane %v2634, 4
      %v2644 = vrot.slane %v2636, 4
      %v2645 = vrot.slane %v2638, 4
      %v2646 = vrot.slane %v2640, 4
      %v2647 = vsel %vm206, %v2641, %v2642
      %v2648 = vsel %vm745, %v2630, %v2647
      %v2649 = vsel %vm206, %v2642, %v2643
      %v2650 = vsel %vm745, %v2632, %v2649
      %v2651 = vsel %vm206, %v2644, %v2645
      %v2652 = vsel %vm745, %v2636, %v2651
      %v2653 = vsel %vm206, %v2645, %v2646
      %v2654 = vsel %vm745, %v2638, %v2653
      %2659 = vst [vmem:[#allocation2 + $0x8a0] sm:$0xff] %v2648
      %2660 = vst [vmem:[#allocation2 + $0x8a8] sm:$0xff] %v2650
      %2661 = vst [vmem:[#allocation2 + $0x8b0] sm:$0xff] %v2652
      %2662 = vst [vmem:[#allocation2 + $0x8b8] sm:$0xff] %v2654
      %2663 = vrot.lane.b32.xlu0 %v2515, 96
      %v2664 = vpop.permute.xlu0 %2663
      %2665 = vrot.lane.b32.xlu0 %v2516, 96
      %v2666 = vpop.permute.xlu0 %2665
      %2667 = vrot.lane.b32.xlu0 %v2517, 96
      %v2668 = vpop.permute.xlu0 %2667
      %2669 = vrot.lane.b32.xlu0 %v2518, 96
      %v2670 = vpop.permute.xlu0 %2669
      %2671 = vrot.lane.b32.xlu0 %v2519, 96
      %v2672 = vpop.permute.xlu0 %2671
      %2673 = vrot.lane.b32.xlu0 %v2520, 96
      %v2674 = vpop.permute.xlu0 %2673
      %v2675 = vrot.slane %v2664, 4
      %v2676 = vrot.slane %v2666, 4
      %v2677 = vrot.slane %v2668, 4
      %v2678 = vrot.slane %v2670, 4
      %v2679 = vrot.slane %v2672, 4
      %v2680 = vrot.slane %v2674, 4
      %v2681 = vsel %vm206, %v2675, %v2676
      %v2682 = vsel %vm780, %v2664, %v2681
      %v2683 = vsel %vm206, %v2676, %v2677
      %v2684 = vsel %vm780, %v2666, %v2683
      %v2685 = vsel %vm206, %v2678, %v2679
      %v2686 = vsel %vm780, %v2670, %v2685
      %v2687 = vsel %vm206, %v2679, %v2680
      %v2688 = vsel %vm780, %v2672, %v2687
      %2693 = vst [vmem:[#allocation2 + $0x8c0] sm:$0xff] %v2682
      %2694 = vst [vmem:[#allocation2 + $0x8c8] sm:$0xff] %v2684
      %2695 = vst [vmem:[#allocation2 + $0x8d0] sm:$0xff] %v2686
      %2696 = vst [vmem:[#allocation2 + $0x8d8] sm:$0xff] %v2688
      %2697 = vrot.lane.b32.xlu0 %v2515, 95
      %v2698 = vpop.permute.xlu0 %2697
      %2699 = vrot.lane.b32.xlu0 %v2516, 95
      %v2700 = vpop.permute.xlu0 %2699
      %2701 = vrot.lane.b32.xlu0 %v2517, 95
      %v2702 = vpop.permute.xlu0 %2701
      %2703 = vrot.lane.b32.xlu0 %v2518, 95
      %v2704 = vpop.permute.xlu0 %2703
      %2705 = vrot.lane.b32.xlu0 %v2519, 95
      %v2706 = vpop.permute.xlu0 %2705
      %2707 = vrot.lane.b32.xlu0 %v2520, 95
      %v2708 = vpop.permute.xlu0 %2707
      %v2709 = vrot.slane %v2698, 4
      %v2710 = vrot.slane %v2700, 4
      %v2711 = vrot.slane %v2702, 4
      %v2712 = vrot.slane %v2704, 4
      %v2713 = vrot.slane %v2706, 4
      %v2714 = vrot.slane %v2708, 4
      %v2715 = vsel %vm206, %v2709, %v2710
      %v2716 = vsel %vm815, %v2698, %v2715
      %v2717 = vsel %vm206, %v2710, %v2711
      %v2718 = vsel %vm815, %v2700, %v2717
      %v2719 = vsel %vm206, %v2712, %v2713
      %v2720 = vsel %vm815, %v2704, %v2719
      %v2721 = vsel %vm206, %v2713, %v2714
      %v2722 = vsel %vm815, %v2706, %v2721
      %2727 = vst [vmem:[#allocation2 + $0x8e0] sm:$0xff] %v2716
      %2728 = vst [vmem:[#allocation2 + $0x8e8] sm:$0xff] %v2718
      %2729 = vst [vmem:[#allocation2 + $0x8f0] sm:$0xff] %v2720
      %2730 = vst [vmem:[#allocation2 + $0x8f8] sm:$0xff] %v2722
      %2731 = vrot.lane.b32.xlu0 %v2515, 94
      %v2732 = vpop.permute.xlu0 %2731
      %2733 = vrot.lane.b32.xlu0 %v2516, 94
      %v2734 = vpop.permute.xlu0 %2733
      %2735 = vrot.lane.b32.xlu0 %v2517, 94
      %v2736 = vpop.permute.xlu0 %2735
      %2737 = vrot.lane.b32.xlu0 %v2518, 94
      %v2738 = vpop.permute.xlu0 %2737
      %2739 = vrot.lane.b32.xlu0 %v2519, 94
      %v2740 = vpop.permute.xlu0 %2739
      %2741 = vrot.lane.b32.xlu0 %v2520, 94
      %v2742 = vpop.permute.xlu0 %2741
      %v2743 = vrot.slane %v2732, 4
      %v2744 = vrot.slane %v2734, 4
      %v2745 = vrot.slane %v2736, 4
      %v2746 = vrot.slane %v2738, 4
      %v2747 = vrot.slane %v2740, 4
      %v2748 = vrot.slane %v2742, 4
      %v2749 = vsel %vm206, %v2743, %v2744
      %v2750 = vsel %vm850, %v2732, %v2749
      %v2751 = vsel %vm206, %v2744, %v2745
      %v2752 = vsel %vm850, %v2734, %v2751
      %v2753 = vsel %vm206, %v2746, %v2747
      %v2754 = vsel %vm850, %v2738, %v2753
      %v2755 = vsel %vm206, %v2747, %v2748
      %v2756 = vsel %vm850, %v2740, %v2755
      %2761 = vst [vmem:[#allocation2 + $0x900] sm:$0xff] %v2750
      %2762 = vst [vmem:[#allocation2 + $0x908] sm:$0xff] %v2752
      %2763 = vst [vmem:[#allocation2 + $0x910] sm:$0xff] %v2754
      %2764 = vst [vmem:[#allocation2 + $0x918] sm:$0xff] %v2756
      %2765 = vrot.lane.b32.xlu0 %v2515, 93
      %v2766 = vpop.permute.xlu0 %2765
      %2767 = vrot.lane.b32.xlu0 %v2516, 93
      %v2768 = vpop.permute.xlu0 %2767
      %2769 = vrot.lane.b32.xlu0 %v2517, 93
      %v2770 = vpop.permute.xlu0 %2769
      %2771 = vrot.lane.b32.xlu0 %v2518, 93
      %v2772 = vpop.permute.xlu0 %2771
      %2773 = vrot.lane.b32.xlu0 %v2519, 93
      %v2774 = vpop.permute.xlu0 %2773
      %2775 = vrot.lane.b32.xlu0 %v2520, 93
      %v2776 = vpop.permute.xlu0 %2775
      %v2777 = vrot.slane %v2766, 4
      %v2778 = vrot.slane %v2768, 4
      %v2779 = vrot.slane %v2770, 4
      %v2780 = vrot.slane %v2772, 4
      %v2781 = vrot.slane %v2774, 4
      %v2782 = vrot.slane %v2776, 4
      %v2783 = vsel %vm206, %v2777, %v2778
      %v2784 = vsel %vm885, %v2766, %v2783
      %v2785 = vsel %vm206, %v2778, %v2779
      %v2786 = vsel %vm885, %v2768, %v2785
      %v2787 = vsel %vm206, %v2780, %v2781
      %v2788 = vsel %vm885, %v2772, %v2787
      %v2789 = vsel %vm206, %v2781, %v2782
      %v2790 = vsel %vm885, %v2774, %v2789
      %2795 = vst [vmem:[#allocation2 + $0x920] sm:$0xff] %v2784
      %2796 = vst [vmem:[#allocation2 + $0x928] sm:$0xff] %v2786
      %2797 = vst [vmem:[#allocation2 + $0x930] sm:$0xff] %v2788
      %2798 = vst [vmem:[#allocation2 + $0x938] sm:$0xff] %v2790
      %2799 = vrot.lane.b32.xlu0 %v2515, 92
      %v2800 = vpop.permute.xlu0 %2799
      %2801 = vrot.lane.b32.xlu0 %v2516, 92
      %v2802 = vpop.permute.xlu0 %2801
      %2803 = vrot.lane.b32.xlu0 %v2517, 92
      %v2804 = vpop.permute.xlu0 %2803
      %2805 = vrot.lane.b32.xlu0 %v2518, 92
      %v2806 = vpop.permute.xlu0 %2805
      %2807 = vrot.lane.b32.xlu0 %v2519, 92
      %v2808 = vpop.permute.xlu0 %2807
      %2809 = vrot.lane.b32.xlu0 %v2520, 92
      %v2810 = vpop.permute.xlu0 %2809
      %v2811 = vrot.slane %v2800, 4
      %v2812 = vrot.slane %v2802, 4
      %v2813 = vrot.slane %v2804, 4
      %v2814 = vrot.slane %v2806, 4
      %v2815 = vrot.slane %v2808, 4
      %v2816 = vrot.slane %v2810, 4
      %v2817 = vsel %vm206, %v2811, %v2812
      %v2818 = vsel %vm920, %v2800, %v2817
      %v2819 = vsel %vm206, %v2812, %v2813
      %v2820 = vsel %vm920, %v2802, %v2819
      %v2821 = vsel %vm206, %v2814, %v2815
      %v2822 = vsel %vm920, %v2806, %v2821
      %v2823 = vsel %vm206, %v2815, %v2816
      %v2824 = vsel %vm920, %v2808, %v2823
      %2829 = vst [vmem:[#allocation2 + $0x940] sm:$0xff] %v2818
      %2830 = vst [vmem:[#allocation2 + $0x948] sm:$0xff] %v2820
      %2831 = vst [vmem:[#allocation2 + $0x950] sm:$0xff] %v2822
      %2832 = vst [vmem:[#allocation2 + $0x958] sm:$0xff] %v2824
      %2833 = vrot.lane.b32.xlu0 %v2515, 91
      %v2834 = vpop.permute.xlu0 %2833
      %2835 = vrot.lane.b32.xlu0 %v2516, 91
      %v2836 = vpop.permute.xlu0 %2835
      %2837 = vrot.lane.b32.xlu0 %v2517, 91
      %v2838 = vpop.permute.xlu0 %2837
      %2839 = vrot.lane.b32.xlu0 %v2518, 91
      %v2840 = vpop.permute.xlu0 %2839
      %2841 = vrot.lane.b32.xlu0 %v2519, 91
      %v2842 = vpop.permute.xlu0 %2841
      %2843 = vrot.lane.b32.xlu0 %v2520, 91
      %v2844 = vpop.permute.xlu0 %2843
      %v2845 = vrot.slane %v2834, 4
      %v2846 = vrot.slane %v2836, 4
      %v2847 = vrot.slane %v2838, 4
      %v2848 = vrot.slane %v2840, 4
      %v2849 = vrot.slane %v2842, 4
      %v2850 = vrot.slane %v2844, 4
      %v2851 = vsel %vm206, %v2845, %v2846
      %vm2852 = vcmask 744448
      %v2853 = vsel %vm2852, %v2834, %v2851
      %v2854 = vsel %vm206, %v2846, %v2847
      %v2855 = vsel %vm2852, %v2836, %v2854
      %v2856 = vsel %vm206, %v2848, %v2849
      %v2857 = vsel %vm2852, %v2840, %v2856
      %v2858 = vsel %vm206, %v2849, %v2850
      %v2859 = vsel %vm2852, %v2842, %v2858
      %2864 = vst [vmem:[#allocation2 + $0x960] sm:$0xff] %v2853
      %2865 = vst [vmem:[#allocation2 + $0x968] sm:$0xff] %v2855
      %2866 = vst [vmem:[#allocation2 + $0x970] sm:$0xff] %v2857
      %2867 = vst [vmem:[#allocation2 + $0x978] sm:$0xff] %v2859
      %2868 = vrot.lane.b32.xlu0 %v2515, 90
      %v2869 = vpop.permute.xlu0 %2868
      %2870 = vrot.lane.b32.xlu0 %v2516, 90
      %v2871 = vpop.permute.xlu0 %2870
      %2872 = vrot.lane.b32.xlu0 %v2517, 90
      %v2873 = vpop.permute.xlu0 %2872
      %2874 = vrot.lane.b32.xlu0 %v2518, 90
      %v2875 = vpop.permute.xlu0 %2874
      %2876 = vrot.lane.b32.xlu0 %v2519, 90
      %v2877 = vpop.permute.xlu0 %2876
      %2878 = vrot.lane.b32.xlu0 %v2520, 90
      %v2879 = vpop.permute.xlu0 %2878
      %v2880 = vrot.slane %v2869, 4
      %v2881 = vrot.slane %v2871, 4
      %v2882 = vrot.slane %v2873, 4
      %v2883 = vrot.slane %v2875, 4
      %v2884 = vrot.slane %v2877, 4
      %v2885 = vrot.slane %v2879, 4
      %v2886 = vsel %vm206, %v2880, %v2881
      %vm2887 = vcmask 736256
      %v2888 = vsel %vm2887, %v2869, %v2886
      %v2889 = vsel %vm206, %v2881, %v2882
      %v2890 = vsel %vm2887, %v2871, %v2889
      %v2891 = vsel %vm206, %v2883, %v2884
      %v2892 = vsel %vm2887, %v2875, %v2891
      %v2893 = vsel %vm206, %v2884, %v2885
      %v2894 = vsel %vm2887, %v2877, %v2893
      %2899 = vst [vmem:[#allocation2 + $0x980] sm:$0xff] %v2888
      %2900 = vst [vmem:[#allocation2 + $0x988] sm:$0xff] %v2890
      %2901 = vst [vmem:[#allocation2 + $0x990] sm:$0xff] %v2892
      %2902 = vst [vmem:[#allocation2 + $0x998] sm:$0xff] %v2894
      %v2903 = vld [vmem:[%s165 + $0x4] sm:$0xff]
      %v2904 = vld [vmem:[%s165 + $0xc] sm:$0xff]
      %v2905 = vld [vmem:[%s165 + $0x14] sm:$0xf]
      %v2906 = vld [vmem:[%s165 + $0x20] sm:$0xff]
      %v2907 = vld [vmem:[%s165 + $0x28] sm:$0xff]
      %v2908 = vld [vmem:[%s165 + $0x30] sm:$0xf]
      %2915 = vrot.lane.b32.xlu0 %v2903, 74
      %v2916 = vpop.permute.xlu0 %2915
      %2917 = vrot.lane.b32.xlu0 %v2904, 74
      %v2918 = vpop.permute.xlu0 %2917
      %2919 = vrot.lane.b32.xlu0 %v2905, 74
      %v2920 = vpop.permute.xlu0 %2919
      %2921 = vrot.lane.b32.xlu0 %v2906, 74
      %v2922 = vpop.permute.xlu0 %2921
      %2923 = vrot.lane.b32.xlu0 %v2907, 74
      %v2924 = vpop.permute.xlu0 %2923
      %2925 = vrot.lane.b32.xlu0 %v2908, 74
      %v2926 = vpop.permute.xlu0 %2925
      %v2927 = vrot.slane %v2916, 4
      %v2928 = vrot.slane %v2918, 4
      %v2929 = vrot.slane %v2920, 4
      %v2930 = vrot.slane %v2922, 4
      %v2931 = vrot.slane %v2924, 4
      %v2932 = vrot.slane %v2926, 4
      %v2933 = vsel %vm206, %v2927, %v2928
      %v2934 = vsel %vm1037, %v2916, %v2933
      %v2935 = vsel %vm206, %v2928, %v2929
      %v2936 = vsel %vm1037, %v2918, %v2935
      %v2937 = vsel %vm206, %v2930, %v2931
      %v2938 = vsel %vm1037, %v2922, %v2937
      %v2939 = vsel %vm206, %v2931, %v2932
      %v2940 = vsel %vm1037, %v2924, %v2939
      %2945 = vst [vmem:[#allocation2 + $0x9a0] sm:$0xff] %v2934
      %2946 = vst [vmem:[#allocation2 + $0x9a8] sm:$0xff] %v2936
      %2947 = vst [vmem:[#allocation2 + $0x9b0] sm:$0xff] %v2938
      %2948 = vst [vmem:[#allocation2 + $0x9b8] sm:$0xff] %v2940
      %2949 = vrot.lane.b32.xlu0 %v2903, 73
      %v2950 = vpop.permute.xlu0 %2949
      %2951 = vrot.lane.b32.xlu0 %v2904, 73
      %v2952 = vpop.permute.xlu0 %2951
      %2953 = vrot.lane.b32.xlu0 %v2905, 73
      %v2954 = vpop.permute.xlu0 %2953
      %2955 = vrot.lane.b32.xlu0 %v2906, 73
      %v2956 = vpop.permute.xlu0 %2955
      %2957 = vrot.lane.b32.xlu0 %v2907, 73
      %v2958 = vpop.permute.xlu0 %2957
      %2959 = vrot.lane.b32.xlu0 %v2908, 73
      %v2960 = vpop.permute.xlu0 %2959
      %v2961 = vrot.slane %v2950, 4
      %v2962 = vrot.slane %v2952, 4
      %v2963 = vrot.slane %v2954, 4
      %v2964 = vrot.slane %v2956, 4
      %v2965 = vrot.slane %v2958, 4
      %v2966 = vrot.slane %v2960, 4
      %v2967 = vsel %vm206, %v2961, %v2962
      %v2968 = vsel %vm1072, %v2950, %v2967
      %v2969 = vsel %vm206, %v2962, %v2963
      %v2970 = vsel %vm1072, %v2952, %v2969
      %v2971 = vsel %vm206, %v2964, %v2965
      %v2972 = vsel %vm1072, %v2956, %v2971
      %v2973 = vsel %vm206, %v2965, %v2966
      %v2974 = vsel %vm1072, %v2958, %v2973
      %2979 = vst [vmem:[#allocation2 + $0x9c0] sm:$0xff] %v2968
      %2980 = vst [vmem:[#allocation2 + $0x9c8] sm:$0xff] %v2970
      %2981 = vst [vmem:[#allocation2 + $0x9d0] sm:$0xff] %v2972
      %2982 = vst [vmem:[#allocation2 + $0x9d8] sm:$0xff] %v2974
      %2983 = vrot.lane.b32.xlu0 %v2903, 72
      %v2984 = vpop.permute.xlu0 %2983
      %2985 = vrot.lane.b32.xlu0 %v2904, 72
      %v2986 = vpop.permute.xlu0 %2985
      %2987 = vrot.lane.b32.xlu0 %v2905, 72
      %v2988 = vpop.permute.xlu0 %2987
      %2989 = vrot.lane.b32.xlu0 %v2906, 72
      %v2990 = vpop.permute.xlu0 %2989
      %2991 = vrot.lane.b32.xlu0 %v2907, 72
      %v2992 = vpop.permute.xlu0 %2991
      %2993 = vrot.lane.b32.xlu0 %v2908, 72
      %v2994 = vpop.permute.xlu0 %2993
      %v2995 = vrot.slane %v2984, 4
      %v2996 = vrot.slane %v2986, 4
      %v2997 = vrot.slane %v2988, 4
      %v2998 = vrot.slane %v2990, 4
      %v2999 = vrot.slane %v2992, 4
      %v3000 = vrot.slane %v2994, 4
      %v3001 = vsel %vm206, %v2995, %v2996
      %v3002 = vsel %vm1107, %v2984, %v3001
      %v3003 = vsel %vm206, %v2996, %v2997
      %v3004 = vsel %vm1107, %v2986, %v3003
      %v3005 = vsel %vm206, %v2998, %v2999
      %v3006 = vsel %vm1107, %v2990, %v3005
      %v3007 = vsel %vm206, %v2999, %v3000
      %v3008 = vsel %vm1107, %v2992, %v3007
      %3013 = vst [vmem:[#allocation2 + $0x9e0] sm:$0xff] %v3002
      %3014 = vst [vmem:[#allocation2 + $0x9e8] sm:$0xff] %v3004
      %3015 = vst [vmem:[#allocation2 + $0x9f0] sm:$0xff] %v3006
      %3016 = vst [vmem:[#allocation2 + $0x9f8] sm:$0xff] %v3008
      %3017 = vrot.lane.b32.xlu0 %v2903, 71
      %v3018 = vpop.permute.xlu0 %3017
      %3019 = vrot.lane.b32.xlu0 %v2904, 71
      %v3020 = vpop.permute.xlu0 %3019
      %3021 = vrot.lane.b32.xlu0 %v2905, 71
      %v3022 = vpop.permute.xlu0 %3021
      %3023 = vrot.lane.b32.xlu0 %v2906, 71
      %v3024 = vpop.permute.xlu0 %3023
      %3025 = vrot.lane.b32.xlu0 %v2907, 71
      %v3026 = vpop.permute.xlu0 %3025
      %3027 = vrot.lane.b32.xlu0 %v2908, 71
      %v3028 = vpop.permute.xlu0 %3027
      %v3029 = vrot.slane %v3018, 4
      %v3030 = vrot.slane %v3020, 4
      %v3031 = vrot.slane %v3022, 4
      %v3032 = vrot.slane %v3024, 4
      %v3033 = vrot.slane %v3026, 4
      %v3034 = vrot.slane %v3028, 4
      %v3035 = vsel %vm206, %v3029, %v3030
      %v3036 = vsel %vm1142, %v3018, %v3035
      %v3037 = vsel %vm206, %v3030, %v3031
      %v3038 = vsel %vm1142, %v3020, %v3037
      %v3039 = vsel %vm206, %v3032, %v3033
      %v3040 = vsel %vm1142, %v3024, %v3039
      %v3041 = vsel %vm206, %v3033, %v3034
      %v3042 = vsel %vm1142, %v3026, %v3041
      %3047 = vst [vmem:[#allocation2 + $0xa00] sm:$0xff] %v3036
      %3048 = vst [vmem:[#allocation2 + $0xa08] sm:$0xff] %v3038
      %3049 = vst [vmem:[#allocation2 + $0xa10] sm:$0xff] %v3040
      %3050 = vst [vmem:[#allocation2 + $0xa18] sm:$0xff] %v3042
      %3051 = vrot.lane.b32.xlu0 %v2903, 70
      %v3052 = vpop.permute.xlu0 %3051
      %3053 = vrot.lane.b32.xlu0 %v2904, 70
      %v3054 = vpop.permute.xlu0 %3053
      %3055 = vrot.lane.b32.xlu0 %v2905, 70
      %v3056 = vpop.permute.xlu0 %3055
      %3057 = vrot.lane.b32.xlu0 %v2906, 70
      %v3058 = vpop.permute.xlu0 %3057
      %3059 = vrot.lane.b32.xlu0 %v2907, 70
      %v3060 = vpop.permute.xlu0 %3059
      %3061 = vrot.lane.b32.xlu0 %v2908, 70
      %v3062 = vpop.permute.xlu0 %3061
      %v3063 = vrot.slane %v3052, 4
      %v3064 = vrot.slane %v3054, 4
      %v3065 = vrot.slane %v3056, 4
      %v3066 = vrot.slane %v3058, 4
      %v3067 = vrot.slane %v3060, 4
      %v3068 = vrot.slane %v3062, 4
      %v3069 = vsel %vm206, %v3063, %v3064
      %v3070 = vsel %vm1177, %v3052, %v3069
      %v3071 = vsel %vm206, %v3064, %v3065
      %v3072 = vsel %vm1177, %v3054, %v3071
      %v3073 = vsel %vm206, %v3066, %v3067
      %v3074 = vsel %vm1177, %v3058, %v3073
      %v3075 = vsel %vm206, %v3067, %v3068
      %v3076 = vsel %vm1177, %v3060, %v3075
      %3081 = vst [vmem:[#allocation2 + $0xa20] sm:$0xff] %v3070
      %3082 = vst [vmem:[#allocation2 + $0xa28] sm:$0xff] %v3072
      %3083 = vst [vmem:[#allocation2 + $0xa30] sm:$0xff] %v3074
      %3084 = vst [vmem:[#allocation2 + $0xa38] sm:$0xff] %v3076
      %3085 = vrot.lane.b32.xlu0 %v2903, 69
      %v3086 = vpop.permute.xlu0 %3085
      %3087 = vrot.lane.b32.xlu0 %v2904, 69
      %v3088 = vpop.permute.xlu0 %3087
      %3089 = vrot.lane.b32.xlu0 %v2905, 69
      %v3090 = vpop.permute.xlu0 %3089
      %3091 = vrot.lane.b32.xlu0 %v2906, 69
      %v3092 = vpop.permute.xlu0 %3091
      %3093 = vrot.lane.b32.xlu0 %v2907, 69
      %v3094 = vpop.permute.xlu0 %3093
      %3095 = vrot.lane.b32.xlu0 %v2908, 69
      %v3096 = vpop.permute.xlu0 %3095
      %v3097 = vrot.slane %v3086, 4
      %v3098 = vrot.slane %v3088, 4
      %v3099 = vrot.slane %v3090, 4
      %v3100 = vrot.slane %v3092, 4
      %v3101 = vrot.slane %v3094, 4
      %v3102 = vrot.slane %v3096, 4
      %v3103 = vsel %vm206, %v3097, %v3098
      %v3104 = vsel %vm1212, %v3086, %v3103
      %v3105 = vsel %vm206, %v3098, %v3099
      %v3106 = vsel %vm1212, %v3088, %v3105
      %v3107 = vsel %vm206, %v3100, %v3101
      %v3108 = vsel %vm1212, %v3092, %v3107
      %v3109 = vsel %vm206, %v3101, %v3102
      %v3110 = vsel %vm1212, %v3094, %v3109
      %3115 = vst [vmem:[#allocation2 + $0xa40] sm:$0xff] %v3104
      %3116 = vst [vmem:[#allocation2 + $0xa48] sm:$0xff] %v3106
      %3117 = vst [vmem:[#allocation2 + $0xa50] sm:$0xff] %v3108
      %3118 = vst [vmem:[#allocation2 + $0xa58] sm:$0xff] %v3110
      %3119 = vrot.lane.b32.xlu0 %v2903, 68
      %v3120 = vpop.permute.xlu0 %3119
      %3121 = vrot.lane.b32.xlu0 %v2904, 68
      %v3122 = vpop.permute.xlu0 %3121
      %3123 = vrot.lane.b32.xlu0 %v2905, 68
      %v3124 = vpop.permute.xlu0 %3123
      %3125 = vrot.lane.b32.xlu0 %v2906, 68
      %v3126 = vpop.permute.xlu0 %3125
      %3127 = vrot.lane.b32.xlu0 %v2907, 68
      %v3128 = vpop.permute.xlu0 %3127
      %3129 = vrot.lane.b32.xlu0 %v2908, 68
      %v3130 = vpop.permute.xlu0 %3129
      %v3131 = vrot.slane %v3120, 4
      %v3132 = vrot.slane %v3122, 4
      %v3133 = vrot.slane %v3124, 4
      %v3134 = vrot.slane %v3126, 4
      %v3135 = vrot.slane %v3128, 4
      %v3136 = vrot.slane %v3130, 4
      %v3137 = vsel %vm206, %v3131, %v3132
      %v3138 = vsel %vm1247, %v3120, %v3137
      %v3139 = vsel %vm206, %v3132, %v3133
      %v3140 = vsel %vm1247, %v3122, %v3139
      %v3141 = vsel %vm206, %v3134, %v3135
      %v3142 = vsel %vm1247, %v3126, %v3141
      %v3143 = vsel %vm206, %v3135, %v3136
      %v3144 = vsel %vm1247, %v3128, %v3143
      %3149 = vst [vmem:[#allocation2 + $0xa60] sm:$0xff] %v3138
      %3150 = vst [vmem:[#allocation2 + $0xa68] sm:$0xff] %v3140
      %3151 = vst [vmem:[#allocation2 + $0xa70] sm:$0xff] %v3142
      %3152 = vst [vmem:[#allocation2 + $0xa78] sm:$0xff] %v3144
      %3153 = vrot.lane.b32.xlu0 %v2903, 67
      %v3154 = vpop.permute.xlu0 %3153
      %3155 = vrot.lane.b32.xlu0 %v2904, 67
      %v3156 = vpop.permute.xlu0 %3155
      %3157 = vrot.lane.b32.xlu0 %v2905, 67
      %v3158 = vpop.permute.xlu0 %3157
      %3159 = vrot.lane.b32.xlu0 %v2906, 67
      %v3160 = vpop.permute.xlu0 %3159
      %3161 = vrot.lane.b32.xlu0 %v2907, 67
      %v3162 = vpop.permute.xlu0 %3161
      %3163 = vrot.lane.b32.xlu0 %v2908, 67
      %v3164 = vpop.permute.xlu0 %3163
      %v3165 = vrot.slane %v3154, 4
      %v3166 = vrot.slane %v3156, 4
      %v3167 = vrot.slane %v3158, 4
      %v3168 = vrot.slane %v3160, 4
      %v3169 = vrot.slane %v3162, 4
      %v3170 = vrot.slane %v3164, 4
      %v3171 = vsel %vm206, %v3165, %v3166
      %v3172 = vsel %vm1282, %v3154, %v3171
      %v3173 = vsel %vm206, %v3166, %v3167
      %v3174 = vsel %vm1282, %v3156, %v3173
      %v3175 = vsel %vm206, %v3168, %v3169
      %v3176 = vsel %vm1282, %v3160, %v3175
      %v3177 = vsel %vm206, %v3169, %v3170
      %v3178 = vsel %vm1282, %v3162, %v3177
      %3183 = vst [vmem:[#allocation2 + $0xa80] sm:$0xff] %v3172
      %3184 = vst [vmem:[#allocation2 + $0xa88] sm:$0xff] %v3174
      %3185 = vst [vmem:[#allocation2 + $0xa90] sm:$0xff] %v3176
      %3186 = vst [vmem:[#allocation2 + $0xa98] sm:$0xff] %v3178
      %3187 = vrot.lane.b32.xlu0 %v2903, 66
      %v3188 = vpop.permute.xlu0 %3187
      %3189 = vrot.lane.b32.xlu0 %v2904, 66
      %v3190 = vpop.permute.xlu0 %3189
      %3191 = vrot.lane.b32.xlu0 %v2905, 66
      %v3192 = vpop.permute.xlu0 %3191
      %3193 = vrot.lane.b32.xlu0 %v2906, 66
      %v3194 = vpop.permute.xlu0 %3193
      %3195 = vrot.lane.b32.xlu0 %v2907, 66
      %v3196 = vpop.permute.xlu0 %3195
      %3197 = vrot.lane.b32.xlu0 %v2908, 66
      %v3198 = vpop.permute.xlu0 %3197
      %v3199 = vrot.slane %v3188, 4
      %v3200 = vrot.slane %v3190, 4
      %v3201 = vrot.slane %v3192, 4
      %v3202 = vrot.slane %v3194, 4
      %v3203 = vrot.slane %v3196, 4
      %v3204 = vrot.slane %v3198, 4
      %v3205 = vsel %vm206, %v3199, %v3200
      %v3206 = vsel %vm1317, %v3188, %v3205
      %v3207 = vsel %vm206, %v3200, %v3201
      %v3208 = vsel %vm1317, %v3190, %v3207
      %v3209 = vsel %vm206, %v3202, %v3203
      %v3210 = vsel %vm1317, %v3194, %v3209
      %v3211 = vsel %vm206, %v3203, %v3204
      %v3212 = vsel %vm1317, %v3196, %v3211
      %3217 = vst [vmem:[#allocation2 + $0xaa0] sm:$0xff] %v3206
      %3218 = vst [vmem:[#allocation2 + $0xaa8] sm:$0xff] %v3208
      %3219 = vst [vmem:[#allocation2 + $0xab0] sm:$0xff] %v3210
      %3220 = vst [vmem:[#allocation2 + $0xab8] sm:$0xff] %v3212
      %3221 = vrot.lane.b32.xlu0 %v2903, 65
      %v3222 = vpop.permute.xlu0 %3221
      %3223 = vrot.lane.b32.xlu0 %v2904, 65
      %v3224 = vpop.permute.xlu0 %3223
      %3225 = vrot.lane.b32.xlu0 %v2905, 65
      %v3226 = vpop.permute.xlu0 %3225
      %3227 = vrot.lane.b32.xlu0 %v2906, 65
      %v3228 = vpop.permute.xlu0 %3227
      %3229 = vrot.lane.b32.xlu0 %v2907, 65
      %v3230 = vpop.permute.xlu0 %3229
      %3231 = vrot.lane.b32.xlu0 %v2908, 65
      %v3232 = vpop.permute.xlu0 %3231
      %v3233 = vrot.slane %v3222, 4
      %v3234 = vrot.slane %v3224, 4
      %v3235 = vrot.slane %v3226, 4
      %v3236 = vrot.slane %v3228, 4
      %v3237 = vrot.slane %v3230, 4
      %v3238 = vrot.slane %v3232, 4
      %v3239 = vsel %vm206, %v3233, %v3234
      %vm3240 = vcmask 531456
      %v3241 = vsel %vm3240, %v3222, %v3239
      %v3242 = vsel %vm206, %v3234, %v3235
      %v3243 = vsel %vm3240, %v3224, %v3242
      %v3244 = vsel %vm206, %v3236, %v3237
      %v3245 = vsel %vm3240, %v3228, %v3244
      %v3246 = vsel %vm206, %v3237, %v3238
      %v3247 = vsel %vm3240, %v3230, %v3246
      %3252 = vst [vmem:[#allocation2 + $0xac0] sm:$0xff] %v3241
      %3253 = vst [vmem:[#allocation2 + $0xac8] sm:$0xff] %v3243
      %3254 = vst [vmem:[#allocation2 + $0xad0] sm:$0xff] %v3245
      %3255 = vst [vmem:[#allocation2 + $0xad8] sm:$0xff] %v3247
      %3256 = vrot.lane.b32.xlu0 %v2903, 64
      %v3257 = vpop.permute.xlu0 %3256
      %3258 = vrot.lane.b32.xlu0 %v2904, 64
      %v3259 = vpop.permute.xlu0 %3258
      %3260 = vrot.lane.b32.xlu0 %v2905, 64
      %v3261 = vpop.permute.xlu0 %3260
      %3262 = vrot.lane.b32.xlu0 %v2906, 64
      %v3263 = vpop.permute.xlu0 %3262
      %3264 = vrot.lane.b32.xlu0 %v2907, 64
      %v3265 = vpop.permute.xlu0 %3264
      %3266 = vrot.lane.b32.xlu0 %v2908, 64
      %v3267 = vpop.permute.xlu0 %3266
      %v3268 = vrot.slane %v3257, 4
      %v3269 = vrot.slane %v3259, 4
      %v3270 = vrot.slane %v3261, 4
      %v3271 = vrot.slane %v3263, 4
      %v3272 = vrot.slane %v3265, 4
      %v3273 = vrot.slane %v3267, 4
      %v3274 = vsel %vm206, %v3268, %v3269
      %vm3275 = vcmask 523264
      %v3276 = vsel %vm3275, %v3257, %v3274
      %v3277 = vsel %vm206, %v3269, %v3270
      %v3278 = vsel %vm3275, %v3259, %v3277
      %v3279 = vsel %vm206, %v3271, %v3272
      %v3280 = vsel %vm3275, %v3263, %v3279
      %v3281 = vsel %vm206, %v3272, %v3273
      %v3282 = vsel %vm3275, %v3265, %v3281
      %3287 = vst [vmem:[#allocation2 + $0xae0] sm:$0xff] %v3276
      %3288 = vst [vmem:[#allocation2 + $0xae8] sm:$0xff] %v3278
      %3289 = vst [vmem:[#allocation2 + $0xaf0] sm:$0xff] %v3280
      %3290 = vst [vmem:[#allocation2 + $0xaf8] sm:$0xff] %v3282
      %v3291 = vld [vmem:[%s165 + $0x4] sm:$0xff]
      %v3292 = vld [vmem:[%s165 + $0xc] sm:$0xff]
      %v3293 = vld [vmem:[%s165 + $0x14] sm:$0xf]
      %v3294 = vld [vmem:[%s165 + $0x20] sm:$0xff]
      %v3295 = vld [vmem:[%s165 + $0x28] sm:$0xff]
      %v3296 = vld [vmem:[%s165 + $0x30] sm:$0xf]
      %3303 = vrot.lane.b32.xlu0 %v3291, 48
      %v3304 = vpop.permute.xlu0 %3303
      %3305 = vrot.lane.b32.xlu0 %v3292, 48
      %v3306 = vpop.permute.xlu0 %3305
      %3307 = vrot.lane.b32.xlu0 %v3293, 48
      %v3308 = vpop.permute.xlu0 %3307
      %3309 = vrot.lane.b32.xlu0 %v3294, 48
      %v3310 = vpop.permute.xlu0 %3309
      %3311 = vrot.lane.b32.xlu0 %v3295, 48
      %v3312 = vpop.permute.xlu0 %3311
      %3313 = vrot.lane.b32.xlu0 %v3296, 48
      %v3314 = vpop.permute.xlu0 %3313
      %v3315 = vrot.slane %v3304, 4
      %v3316 = vrot.slane %v3306, 4
      %v3317 = vrot.slane %v3308, 4
      %v3318 = vrot.slane %v3310, 4
      %v3319 = vrot.slane %v3312, 4
      %v3320 = vrot.slane %v3314, 4
      %v3321 = vsel %vm206, %v3315, %v3316
      %v3322 = vsel %vm1434, %v3304, %v3321
      %v3323 = vsel %vm206, %v3316, %v3317
      %v3324 = vsel %vm1434, %v3306, %v3323
      %v3325 = vsel %vm206, %v3318, %v3319
      %v3326 = vsel %vm1434, %v3310, %v3325
      %v3327 = vsel %vm206, %v3319, %v3320
      %v3328 = vsel %vm1434, %v3312, %v3327
      %3333 = vst [vmem:[#allocation2 + $0xb00] sm:$0xff] %v3322
      %3334 = vst [vmem:[#allocation2 + $0xb08] sm:$0xff] %v3324
      %3335 = vst [vmem:[#allocation2 + $0xb10] sm:$0xff] %v3326
      %3336 = vst [vmem:[#allocation2 + $0xb18] sm:$0xff] %v3328
      %3337 = vrot.lane.b32.xlu0 %v3291, 47
      %v3338 = vpop.permute.xlu0 %3337
      %3339 = vrot.lane.b32.xlu0 %v3292, 47
      %v3340 = vpop.permute.xlu0 %3339
      %3341 = vrot.lane.b32.xlu0 %v3293, 47
      %v3342 = vpop.permute.xlu0 %3341
      %3343 = vrot.lane.b32.xlu0 %v3294, 47
      %v3344 = vpop.permute.xlu0 %3343
      %3345 = vrot.lane.b32.xlu0 %v3295, 47
      %v3346 = vpop.permute.xlu0 %3345
      %3347 = vrot.lane.b32.xlu0 %v3296, 47
      %v3348 = vpop.permute.xlu0 %3347
      %v3349 = vrot.slane %v3338, 4
      %v3350 = vrot.slane %v3340, 4
      %v3351 = vrot.slane %v3342, 4
      %v3352 = vrot.slane %v3344, 4
      %v3353 = vrot.slane %v3346, 4
      %v3354 = vrot.slane %v3348, 4
      %v3355 = vsel %vm206, %v3349, %v3350
      %v3356 = vsel %vm1469, %v3338, %v3355
      %v3357 = vsel %vm206, %v3350, %v3351
      %v3358 = vsel %vm1469, %v3340, %v3357
      %v3359 = vsel %vm206, %v3352, %v3353
      %v3360 = vsel %vm1469, %v3344, %v3359
      %v3361 = vsel %vm206, %v3353, %v3354
      %v3362 = vsel %vm1469, %v3346, %v3361
      %3367 = vst [vmem:[#allocation2 + $0xb20] sm:$0xff] %v3356
      %3368 = vst [vmem:[#allocation2 + $0xb28] sm:$0xff] %v3358
      %3369 = vst [vmem:[#allocation2 + $0xb30] sm:$0xff] %v3360
      %3370 = vst [vmem:[#allocation2 + $0xb38] sm:$0xff] %v3362
      %3371 = vrot.lane.b32.xlu0 %v3291, 46
      %v3372 = vpop.permute.xlu0 %3371
      %3373 = vrot.lane.b32.xlu0 %v3292, 46
      %v3374 = vpop.permute.xlu0 %3373
      %3375 = vrot.lane.b32.xlu0 %v3293, 46
      %v3376 = vpop.permute.xlu0 %3375
      %3377 = vrot.lane.b32.xlu0 %v3294, 46
      %v3378 = vpop.permute.xlu0 %3377
      %3379 = vrot.lane.b32.xlu0 %v3295, 46
      %v3380 = vpop.permute.xlu0 %3379
      %3381 = vrot.lane.b32.xlu0 %v3296, 46
      %v3382 = vpop.permute.xlu0 %3381
      %v3383 = vrot.slane %v3372, 4
      %v3384 = vrot.slane %v3374, 4
      %v3385 = vrot.slane %v3376, 4
      %v3386 = vrot.slane %v3378, 4
      %v3387 = vrot.slane %v3380, 4
      %v3388 = vrot.slane %v3382, 4
      %v3389 = vsel %vm206, %v3383, %v3384
      %v3390 = vsel %vm1504, %v3372, %v3389
      %v3391 = vsel %vm206, %v3384, %v3385
      %v3392 = vsel %vm1504, %v3374, %v3391
      %v3393 = vsel %vm206, %v3386, %v3387
      %v3394 = vsel %vm1504, %v3378, %v3393
      %v3395 = vsel %vm206, %v3387, %v3388
      %v3396 = vsel %vm1504, %v3380, %v3395
      %3401 = vst [vmem:[#allocation2 + $0xb40] sm:$0xff] %v3390
      %3402 = vst [vmem:[#allocation2 + $0xb48] sm:$0xff] %v3392
      %3403 = vst [vmem:[#allocation2 + $0xb50] sm:$0xff] %v3394
      %3404 = vst [vmem:[#allocation2 + $0xb58] sm:$0xff] %v3396
      %3405 = vrot.lane.b32.xlu0 %v3291, 45
      %v3406 = vpop.permute.xlu0 %3405
      %3407 = vrot.lane.b32.xlu0 %v3292, 45
      %v3408 = vpop.permute.xlu0 %3407
      %3409 = vrot.lane.b32.xlu0 %v3293, 45
      %v3410 = vpop.permute.xlu0 %3409
      %3411 = vrot.lane.b32.xlu0 %v3294, 45
      %v3412 = vpop.permute.xlu0 %3411
      %3413 = vrot.lane.b32.xlu0 %v3295, 45
      %v3414 = vpop.permute.xlu0 %3413
      %3415 = vrot.lane.b32.xlu0 %v3296, 45
      %v3416 = vpop.permute.xlu0 %3415
      %v3417 = vrot.slane %v3406, 4
      %v3418 = vrot.slane %v3408, 4
      %v3419 = vrot.slane %v3410, 4
      %v3420 = vrot.slane %v3412, 4
      %v3421 = vrot.slane %v3414, 4
      %v3422 = vrot.slane %v3416, 4
      %v3423 = vsel %vm206, %v3417, %v3418
      %v3424 = vsel %vm1539, %v3406, %v3423
      %v3425 = vsel %vm206, %v3418, %v3419
      %v3426 = vsel %vm1539, %v3408, %v3425
      %v3427 = vsel %vm206, %v3420, %v3421
      %v3428 = vsel %vm1539, %v3412, %v3427
      %v3429 = vsel %vm206, %v3421, %v3422
      %v3430 = vsel %vm1539, %v3414, %v3429
      %3435 = vst [vmem:[#allocation2 + $0xb60] sm:$0xff] %v3424
      %3436 = vst [vmem:[#allocation2 + $0xb68] sm:$0xff] %v3426
      %3437 = vst [vmem:[#allocation2 + $0xb70] sm:$0xff] %v3428
      %3438 = vst [vmem:[#allocation2 + $0xb78] sm:$0xff] %v3430
      %3439 = vrot.lane.b32.xlu0 %v3291, 44
      %v3440 = vpop.permute.xlu0 %3439
      %3441 = vrot.lane.b32.xlu0 %v3292, 44
      %v3442 = vpop.permute.xlu0 %3441
      %3443 = vrot.lane.b32.xlu0 %v3293, 44
      %v3444 = vpop.permute.xlu0 %3443
      %3445 = vrot.lane.b32.xlu0 %v3294, 44
      %v3446 = vpop.permute.xlu0 %3445
      %3447 = vrot.lane.b32.xlu0 %v3295, 44
      %v3448 = vpop.permute.xlu0 %3447
      %3449 = vrot.lane.b32.xlu0 %v3296, 44
      %v3450 = vpop.permute.xlu0 %3449
      %v3451 = vrot.slane %v3440, 4
      %v3452 = vrot.slane %v3442, 4
      %v3453 = vrot.slane %v3444, 4
      %v3454 = vrot.slane %v3446, 4
      %v3455 = vrot.slane %v3448, 4
      %v3456 = vrot.slane %v3450, 4
      %v3457 = vsel %vm206, %v3451, %v3452
      %v3458 = vsel %vm1574, %v3440, %v3457
      %v3459 = vsel %vm206, %v3452, %v3453
      %v3460 = vsel %vm1574, %v3442, %v3459
      %v3461 = vsel %vm206, %v3454, %v3455
      %v3462 = vsel %vm1574, %v3446, %v3461
      %v3463 = vsel %vm206, %v3455, %v3456
      %v3464 = vsel %vm1574, %v3448, %v3463
      %3469 = vst [vmem:[#allocation2 + $0xb80] sm:$0xff] %v3458
      %3470 = vst [vmem:[#allocation2 + $0xb88] sm:$0xff] %v3460
      %3471 = vst [vmem:[#allocation2 + $0xb90] sm:$0xff] %v3462
      %3472 = vst [vmem:[#allocation2 + $0xb98] sm:$0xff] %v3464
      %3473 = vrot.lane.b32.xlu0 %v3291, 43
      %v3474 = vpop.permute.xlu0 %3473
      %3475 = vrot.lane.b32.xlu0 %v3292, 43
      %v3476 = vpop.permute.xlu0 %3475
      %3477 = vrot.lane.b32.xlu0 %v3293, 43
      %v3478 = vpop.permute.xlu0 %3477
      %3479 = vrot.lane.b32.xlu0 %v3294, 43
      %v3480 = vpop.permute.xlu0 %3479
      %3481 = vrot.lane.b32.xlu0 %v3295, 43
      %v3482 = vpop.permute.xlu0 %3481
      %3483 = vrot.lane.b32.xlu0 %v3296, 43
      %v3484 = vpop.permute.xlu0 %3483
      %v3485 = vrot.slane %v3474, 4
      %v3486 = vrot.slane %v3476, 4
      %v3487 = vrot.slane %v3478, 4
      %v3488 = vrot.slane %v3480, 4
      %v3489 = vrot.slane %v3482, 4
      %v3490 = vrot.slane %v3484, 4
      %v3491 = vsel %vm206, %v3485, %v3486
      %v3492 = vsel %vm1609, %v3474, %v3491
      %v3493 = vsel %vm206, %v3486, %v3487
      %v3494 = vsel %vm1609, %v3476, %v3493
      %v3495 = vsel %vm206, %v3488, %v3489
      %v3496 = vsel %vm1609, %v3480, %v3495
      %v3497 = vsel %vm206, %v3489, %v3490
      %v3498 = vsel %vm1609, %v3482, %v3497
      %3503 = vst [vmem:[#allocation2 + $0xba0] sm:$0xff] %v3492
      %3504 = vst [vmem:[#allocation2 + $0xba8] sm:$0xff] %v3494
      %3505 = vst [vmem:[#allocation2 + $0xbb0] sm:$0xff] %v3496
      %3506 = vst [vmem:[#allocation2 + $0xbb8] sm:$0xff] %v3498
      %3507 = vrot.lane.b32.xlu0 %v3291, 42
      %v3508 = vpop.permute.xlu0 %3507
      %3509 = vrot.lane.b32.xlu0 %v3292, 42
      %v3510 = vpop.permute.xlu0 %3509
      %3511 = vrot.lane.b32.xlu0 %v3293, 42
      %v3512 = vpop.permute.xlu0 %3511
      %3513 = vrot.lane.b32.xlu0 %v3294, 42
      %v3514 = vpop.permute.xlu0 %3513
      %3515 = vrot.lane.b32.xlu0 %v3295, 42
      %v3516 = vpop.permute.xlu0 %3515
      %3517 = vrot.lane.b32.xlu0 %v3296, 42
      %v3518 = vpop.permute.xlu0 %3517
      %v3519 = vrot.slane %v3508, 4
      %v3520 = vrot.slane %v3510, 4
      %v3521 = vrot.slane %v3512, 4
      %v3522 = vrot.slane %v3514, 4
      %v3523 = vrot.slane %v3516, 4
      %v3524 = vrot.slane %v3518, 4
      %v3525 = vsel %vm206, %v3519, %v3520
      %v3526 = vsel %vm1644, %v3508, %v3525
      %v3527 = vsel %vm206, %v3520, %v3521
      %v3528 = vsel %vm1644, %v3510, %v3527
      %v3529 = vsel %vm206, %v3522, %v3523
      %v3530 = vsel %vm1644, %v3514, %v3529
      %v3531 = vsel %vm206, %v3523, %v3524
      %v3532 = vsel %vm1644, %v3516, %v3531
      %3537 = vst [vmem:[#allocation2 + $0xbc0] sm:$0xff] %v3526
      %3538 = vst [vmem:[#allocation2 + $0xbc8] sm:$0xff] %v3528
      %3539 = vst [vmem:[#allocation2 + $0xbd0] sm:$0xff] %v3530
      %3540 = vst [vmem:[#allocation2 + $0xbd8] sm:$0xff] %v3532
      %3541 = vrot.lane.b32.xlu0 %v3291, 41
      %v3542 = vpop.permute.xlu0 %3541
      %3543 = vrot.lane.b32.xlu0 %v3292, 41
      %v3544 = vpop.permute.xlu0 %3543
      %3545 = vrot.lane.b32.xlu0 %v3293, 41
      %v3546 = vpop.permute.xlu0 %3545
      %3547 = vrot.lane.b32.xlu0 %v3294, 41
      %v3548 = vpop.permute.xlu0 %3547
      %3549 = vrot.lane.b32.xlu0 %v3295, 41
      %v3550 = vpop.permute.xlu0 %3549
      %3551 = vrot.lane.b32.xlu0 %v3296, 41
      %v3552 = vpop.permute.xlu0 %3551
      %v3553 = vrot.slane %v3542, 4
      %v3554 = vrot.slane %v3544, 4
      %v3555 = vrot.slane %v3546, 4
      %v3556 = vrot.slane %v3548, 4
      %v3557 = vrot.slane %v3550, 4
      %v3558 = vrot.slane %v3552, 4
      %v3559 = vsel %vm206, %v3553, %v3554
      %v3560 = vsel %vm1679, %v3542, %v3559
      %v3561 = vsel %vm206, %v3554, %v3555
      %v3562 = vsel %vm1679, %v3544, %v3561
      %v3563 = vsel %vm206, %v3556, %v3557
      %v3564 = vsel %vm1679, %v3548, %v3563
      %v3565 = vsel %vm206, %v3557, %v3558
      %v3566 = vsel %vm1679, %v3550, %v3565
      %3571 = vst [vmem:[#allocation2 + $0xbe0] sm:$0xff] %v3560
      %3572 = vst [vmem:[#allocation2 + $0xbe8] sm:$0xff] %v3562
      %3573 = vst [vmem:[#allocation2 + $0xbf0] sm:$0xff] %v3564
      %3574 = vst [vmem:[#allocation2 + $0xbf8] sm:$0xff] %v3566
      %3575 = vrot.lane.b32.xlu0 %v3291, 40
      %v3576 = vpop.permute.xlu0 %3575
      %3577 = vrot.lane.b32.xlu0 %v3292, 40
      %v3578 = vpop.permute.xlu0 %3577
      %3579 = vrot.lane.b32.xlu0 %v3293, 40
      %v3580 = vpop.permute.xlu0 %3579
      %3581 = vrot.lane.b32.xlu0 %v3294, 40
      %v3582 = vpop.permute.xlu0 %3581
      %3583 = vrot.lane.b32.xlu0 %v3295, 40
      %v3584 = vpop.permute.xlu0 %3583
      %3585 = vrot.lane.b32.xlu0 %v3296, 40
      %v3586 = vpop.permute.xlu0 %3585
      %v3587 = vrot.slane %v3576, 4
      %v3588 = vrot.slane %v3578, 4
      %v3589 = vrot.slane %v3580, 4
      %v3590 = vrot.slane %v3582, 4
      %v3591 = vrot.slane %v3584, 4
      %v3592 = vrot.slane %v3586, 4
      %v3593 = vsel %vm206, %v3587, %v3588
      %v3594 = vsel %vm1714, %v3576, %v3593
      %v3595 = vsel %vm206, %v3588, %v3589
      %v3596 = vsel %vm1714, %v3578, %v3595
      %v3597 = vsel %vm206, %v3590, %v3591
      %v3598 = vsel %vm1714, %v3582, %v3597
      %v3599 = vsel %vm206, %v3591, %v3592
      %v3600 = vsel %vm1714, %v3584, %v3599
      %3605 = vst [vmem:[#allocation2 + $0xc00] sm:$0xff] %v3594
      %3606 = vst [vmem:[#allocation2 + $0xc08] sm:$0xff] %v3596
      %3607 = vst [vmem:[#allocation2 + $0xc10] sm:$0xff] %v3598
      %3608 = vst [vmem:[#allocation2 + $0xc18] sm:$0xff] %v3600
      %3609 = vrot.lane.b32.xlu0 %v3291, 39
      %v3610 = vpop.permute.xlu0 %3609
      %3611 = vrot.lane.b32.xlu0 %v3292, 39
      %v3612 = vpop.permute.xlu0 %3611
      %3613 = vrot.lane.b32.xlu0 %v3293, 39
      %v3614 = vpop.permute.xlu0 %3613
      %3615 = vrot.lane.b32.xlu0 %v3294, 39
      %v3616 = vpop.permute.xlu0 %3615
      %3617 = vrot.lane.b32.xlu0 %v3295, 39
      %v3618 = vpop.permute.xlu0 %3617
      %3619 = vrot.lane.b32.xlu0 %v3296, 39
      %v3620 = vpop.permute.xlu0 %3619
      %v3621 = vrot.slane %v3610, 4
      %v3622 = vrot.slane %v3612, 4
      %v3623 = vrot.slane %v3614, 4
      %v3624 = vrot.slane %v3616, 4
      %v3625 = vrot.slane %v3618, 4
      %v3626 = vrot.slane %v3620, 4
      %v3627 = vsel %vm206, %v3621, %v3622
      %vm3628 = vcmask 318464
      %v3629 = vsel %vm3628, %v3610, %v3627
      %v3630 = vsel %vm206, %v3622, %v3623
      %v3631 = vsel %vm3628, %v3612, %v3630
      %v3632 = vsel %vm206, %v3624, %v3625
      %v3633 = vsel %vm3628, %v3616, %v3632
      %v3634 = vsel %vm206, %v3625, %v3626
      %v3635 = vsel %vm3628, %v3618, %v3634
      %3640 = vst [vmem:[#allocation2 + $0xc20] sm:$0xff] %v3629
      %3641 = vst [vmem:[#allocation2 + $0xc28] sm:$0xff] %v3631
      %3642 = vst [vmem:[#allocation2 + $0xc30] sm:$0xff] %v3633
      %3643 = vst [vmem:[#allocation2 + $0xc38] sm:$0xff] %v3635
      %3644 = vrot.lane.b32.xlu0 %v3291, 38
      %v3645 = vpop.permute.xlu0 %3644
      %3646 = vrot.lane.b32.xlu0 %v3292, 38
      %v3647 = vpop.permute.xlu0 %3646
      %3648 = vrot.lane.b32.xlu0 %v3293, 38
      %v3649 = vpop.permute.xlu0 %3648
      %3650 = vrot.lane.b32.xlu0 %v3294, 38
      %v3651 = vpop.permute.xlu0 %3650
      %3652 = vrot.lane.b32.xlu0 %v3295, 38
      %v3653 = vpop.permute.xlu0 %3652
      %3654 = vrot.lane.b32.xlu0 %v3296, 38
      %v3655 = vpop.permute.xlu0 %3654
      %v3656 = vrot.slane %v3645, 4
      %v3657 = vrot.slane %v3647, 4
      %v3658 = vrot.slane %v3649, 4
      %v3659 = vrot.slane %v3651, 4
      %v3660 = vrot.slane %v3653, 4
      %v3661 = vrot.slane %v3655, 4
      %v3662 = vsel %vm206, %v3656, %v3657
      %vm3663 = vcmask 310272
      %v3664 = vsel %vm3663, %v3645, %v3662
      %v3665 = vsel %vm206, %v3657, %v3658
      %v3666 = vsel %vm3663, %v3647, %v3665
      %v3667 = vsel %vm206, %v3659, %v3660
      %v3668 = vsel %vm3663, %v3651, %v3667
      %v3669 = vsel %vm206, %v3660, %v3661
      %v3670 = vsel %vm3663, %v3653, %v3669
      %3675 = vst [vmem:[#allocation2 + $0xc40] sm:$0xff] %v3664
      %3676 = vst [vmem:[#allocation2 + $0xc48] sm:$0xff] %v3666
      %3677 = vst [vmem:[#allocation2 + $0xc50] sm:$0xff] %v3668
      %3678 = vst [vmem:[#allocation2 + $0xc58] sm:$0xff] %v3670
      %v3679 = vld [vmem:[%s165 + $0x4] sm:$0xff]
      %v3680 = vld [vmem:[%s165 + $0xc] sm:$0xff]
      %v3681 = vld [vmem:[%s165 + $0x14] sm:$0xf]
      %v3682 = vld [vmem:[%s165 + $0x20] sm:$0xff]
      %v3683 = vld [vmem:[%s165 + $0x28] sm:$0xff]
      %v3684 = vld [vmem:[%s165 + $0x30] sm:$0xf]
      %3691 = vrot.lane.b32.xlu0 %v3679, 22
      %v3692 = vpop.permute.xlu0 %3691
      %3693 = vrot.lane.b32.xlu0 %v3680, 22
      %v3694 = vpop.permute.xlu0 %3693
      %3695 = vrot.lane.b32.xlu0 %v3681, 22
      %v3696 = vpop.permute.xlu0 %3695
      %3697 = vrot.lane.b32.xlu0 %v3682, 22
      %v3698 = vpop.permute.xlu0 %3697
      %3699 = vrot.lane.b32.xlu0 %v3683, 22
      %v3700 = vpop.permute.xlu0 %3699
      %3701 = vrot.lane.b32.xlu0 %v3684, 22
      %v3702 = vpop.permute.xlu0 %3701
      %v3703 = vrot.slane %v3692, 4
      %v3704 = vrot.slane %v3694, 4
      %v3705 = vrot.slane %v3696, 4
      %v3706 = vrot.slane %v3698, 4
      %v3707 = vrot.slane %v3700, 4
      %v3708 = vrot.slane %v3702, 4
      %v3709 = vsel %vm206, %v3703, %v3704
      %v3710 = vsel %vm1831, %v3692, %v3709
      %v3711 = vsel %vm206, %v3704, %v3705
      %v3712 = vsel %vm1831, %v3694, %v3711
      %v3713 = vsel %vm206, %v3706, %v3707
      %v3714 = vsel %vm1831, %v3698, %v3713
      %v3715 = vsel %vm206, %v3707, %v3708
      %v3716 = vsel %vm1831, %v3700, %v3715
      %3721 = vst [vmem:[#allocation2 + $0xc60] sm:$0xff] %v3710
      %3722 = vst [vmem:[#allocation2 + $0xc68] sm:$0xff] %v3712
      %3723 = vst [vmem:[#allocation2 + $0xc70] sm:$0xff] %v3714
      %3724 = vst [vmem:[#allocation2 + $0xc78] sm:$0xff] %v3716
      %3725 = vrot.lane.b32.xlu0 %v3679, 21
      %v3726 = vpop.permute.xlu0 %3725
      %3727 = vrot.lane.b32.xlu0 %v3680, 21
      %v3728 = vpop.permute.xlu0 %3727
      %3729 = vrot.lane.b32.xlu0 %v3681, 21
      %v3730 = vpop.permute.xlu0 %3729
      %3731 = vrot.lane.b32.xlu0 %v3682, 21
      %v3732 = vpop.permute.xlu0 %3731
      %3733 = vrot.lane.b32.xlu0 %v3683, 21
      %v3734 = vpop.permute.xlu0 %3733
      %3735 = vrot.lane.b32.xlu0 %v3684, 21
      %v3736 = vpop.permute.xlu0 %3735
      %v3737 = vrot.slane %v3726, 4
      %v3738 = vrot.slane %v3728, 4
      %v3739 = vrot.slane %v3730, 4
      %v3740 = vrot.slane %v3732, 4
      %v3741 = vrot.slane %v3734, 4
      %v3742 = vrot.slane %v3736, 4
      %v3743 = vsel %vm206, %v3737, %v3738
      %v3744 = vsel %vm1866, %v3726, %v3743
      %v3745 = vsel %vm206, %v3738, %v3739
      %v3746 = vsel %vm1866, %v3728, %v3745
      %v3747 = vsel %vm206, %v3740, %v3741
      %v3748 = vsel %vm1866, %v3732, %v3747
      %v3749 = vsel %vm206, %v3741, %v3742
      %v3750 = vsel %vm1866, %v3734, %v3749
      %3755 = vst [vmem:[#allocation2 + $0xc80] sm:$0xff] %v3744
      %3756 = vst [vmem:[#allocation2 + $0xc88] sm:$0xff] %v3746
      %3757 = vst [vmem:[#allocation2 + $0xc90] sm:$0xff] %v3748
      %3758 = vst [vmem:[#allocation2 + $0xc98] sm:$0xff] %v3750
      %3759 = vrot.lane.b32.xlu0 %v3679, 20
      %v3760 = vpop.permute.xlu0 %3759
      %3761 = vrot.lane.b32.xlu0 %v3680, 20
      %v3762 = vpop.permute.xlu0 %3761
      %3763 = vrot.lane.b32.xlu0 %v3681, 20
      %v3764 = vpop.permute.xlu0 %3763
      %3765 = vrot.lane.b32.xlu0 %v3682, 20
      %v3766 = vpop.permute.xlu0 %3765
      %3767 = vrot.lane.b32.xlu0 %v3683, 20
      %v3768 = vpop.permute.xlu0 %3767
      %3769 = vrot.lane.b32.xlu0 %v3684, 20
      %v3770 = vpop.permute.xlu0 %3769
      %v3771 = vrot.slane %v3760, 4
      %v3772 = vrot.slane %v3762, 4
      %v3773 = vrot.slane %v3764, 4
      %v3774 = vrot.slane %v3766, 4
      %v3775 = vrot.slane %v3768, 4
      %v3776 = vrot.slane %v3770, 4
      %v3777 = vsel %vm206, %v3771, %v3772
      %v3778 = vsel %vm1901, %v3760, %v3777
      %v3779 = vsel %vm206, %v3772, %v3773
      %v3780 = vsel %vm1901, %v3762, %v3779
      %v3781 = vsel %vm206, %v3774, %v3775
      %v3782 = vsel %vm1901, %v3766, %v3781
      %v3783 = vsel %vm206, %v3775, %v3776
      %v3784 = vsel %vm1901, %v3768, %v3783
      %3789 = vst [vmem:[#allocation2 + $0xca0] sm:$0xff] %v3778
      %3790 = vst [vmem:[#allocation2 + $0xca8] sm:$0xff] %v3780
      %3791 = vst [vmem:[#allocation2 + $0xcb0] sm:$0xff] %v3782
      %3792 = vst [vmem:[#allocation2 + $0xcb8] sm:$0xff] %v3784
      %3793 = vrot.lane.b32.xlu0 %v3679, 19
      %v3794 = vpop.permute.xlu0 %3793
      %3795 = vrot.lane.b32.xlu0 %v3680, 19
      %v3796 = vpop.permute.xlu0 %3795
      %3797 = vrot.lane.b32.xlu0 %v3681, 19
      %v3798 = vpop.permute.xlu0 %3797
      %3799 = vrot.lane.b32.xlu0 %v3682, 19
      %v3800 = vpop.permute.xlu0 %3799
      %3801 = vrot.lane.b32.xlu0 %v3683, 19
      %v3802 = vpop.permute.xlu0 %3801
      %3803 = vrot.lane.b32.xlu0 %v3684, 19
      %v3804 = vpop.permute.xlu0 %3803
      %v3805 = vrot.slane %v3794, 4
      %v3806 = vrot.slane %v3796, 4
      %v3807 = vrot.slane %v3798, 4
      %v3808 = vrot.slane %v3800, 4
      %v3809 = vrot.slane %v3802, 4
      %v3810 = vrot.slane %v3804, 4
      %v3811 = vsel %vm206, %v3805, %v3806
      %v3812 = vsel %vm1936, %v3794, %v3811
      %v3813 = vsel %vm206, %v3806, %v3807
      %v3814 = vsel %vm1936, %v3796, %v3813
      %v3815 = vsel %vm206, %v3808, %v3809
      %v3816 = vsel %vm1936, %v3800, %v3815
      %v3817 = vsel %vm206, %v3809, %v3810
      %v3818 = vsel %vm1936, %v3802, %v3817
      %3823 = vst [vmem:[#allocation2 + $0xcc0] sm:$0xff] %v3812
      %3824 = vst [vmem:[#allocation2 + $0xcc8] sm:$0xff] %v3814
      %3825 = vst [vmem:[#allocation2 + $0xcd0] sm:$0xff] %v3816
      %3826 = vst [vmem:[#allocation2 + $0xcd8] sm:$0xff] %v3818
      %3827 = vrot.lane.b32.xlu0 %v3679, 18
      %v3828 = vpop.permute.xlu0 %3827
      %3829 = vrot.lane.b32.xlu0 %v3680, 18
      %v3830 = vpop.permute.xlu0 %3829
      %3831 = vrot.lane.b32.xlu0 %v3681, 18
      %v3832 = vpop.permute.xlu0 %3831
      %3833 = vrot.lane.b32.xlu0 %v3682, 18
      %v3834 = vpop.permute.xlu0 %3833
      %3835 = vrot.lane.b32.xlu0 %v3683, 18
      %v3836 = vpop.permute.xlu0 %3835
      %3837 = vrot.lane.b32.xlu0 %v3684, 18
      %v3838 = vpop.permute.xlu0 %3837
      %v3839 = vrot.slane %v3828, 4
      %v3840 = vrot.slane %v3830, 4
      %v3841 = vrot.slane %v3832, 4
      %v3842 = vrot.slane %v3834, 4
      %v3843 = vrot.slane %v3836, 4
      %v3844 = vrot.slane %v3838, 4
      %v3845 = vsel %vm206, %v3839, %v3840
      %v3846 = vsel %vm1971, %v3828, %v3845
      %v3847 = vsel %vm206, %v3840, %v3841
      %v3848 = vsel %vm1971, %v3830, %v3847
      %v3849 = vsel %vm206, %v3842, %v3843
      %v3850 = vsel %vm1971, %v3834, %v3849
      %v3851 = vsel %vm206, %v3843, %v3844
      %v3852 = vsel %vm1971, %v3836, %v3851
      %3857 = vst [vmem:[#allocation2 + $0xce0] sm:$0xff] %v3846
      %3858 = vst [vmem:[#allocation2 + $0xce8] sm:$0xff] %v3848
      %3859 = vst [vmem:[#allocation2 + $0xcf0] sm:$0xff] %v3850
      %3860 = vst [vmem:[#allocation2 + $0xcf8] sm:$0xff] %v3852
      %3861 = vrot.lane.b32.xlu0 %v3679, 17
      %v3862 = vpop.permute.xlu0 %3861
      %3863 = vrot.lane.b32.xlu0 %v3680, 17
      %v3864 = vpop.permute.xlu0 %3863
      %3865 = vrot.lane.b32.xlu0 %v3681, 17
      %v3866 = vpop.permute.xlu0 %3865
      %3867 = vrot.lane.b32.xlu0 %v3682, 17
      %v3868 = vpop.permute.xlu0 %3867
      %3869 = vrot.lane.b32.xlu0 %v3683, 17
      %v3870 = vpop.permute.xlu0 %3869
      %3871 = vrot.lane.b32.xlu0 %v3684, 17
      %v3872 = vpop.permute.xlu0 %3871
      %v3873 = vrot.slane %v3862, 4
      %v3874 = vrot.slane %v3864, 4
      %v3875 = vrot.slane %v3866, 4
      %v3876 = vrot.slane %v3868, 4
      %v3877 = vrot.slane %v3870, 4
      %v3878 = vrot.slane %v3872, 4
      %v3879 = vsel %vm206, %v3873, %v3874
      %v3880 = vsel %vm2006, %v3862, %v3879
      %v3881 = vsel %vm206, %v3874, %v3875
      %v3882 = vsel %vm2006, %v3864, %v3881
      %v3883 = vsel %vm206, %v3876, %v3877
      %v3884 = vsel %vm2006, %v3868, %v3883
      %v3885 = vsel %vm206, %v3877, %v3878
      %v3886 = vsel %vm2006, %v3870, %v3885
      %3891 = vst [vmem:[#allocation2 + $0xd00] sm:$0xff] %v3880
      %3892 = vst [vmem:[#allocation2 + $0xd08] sm:$0xff] %v3882
      %3893 = vst [vmem:[#allocation2 + $0xd10] sm:$0xff] %v3884
      %3894 = vst [vmem:[#allocation2 + $0xd18] sm:$0xff] %v3886
      %3895 = vrot.lane.b32.xlu0 %v3679, 16
      %v3896 = vpop.permute.xlu0 %3895
      %3897 = vrot.lane.b32.xlu0 %v3680, 16
      %v3898 = vpop.permute.xlu0 %3897
      %3899 = vrot.lane.b32.xlu0 %v3681, 16
      %v3900 = vpop.permute.xlu0 %3899
      %3901 = vrot.lane.b32.xlu0 %v3682, 16
      %v3902 = vpop.permute.xlu0 %3901
      %3903 = vrot.lane.b32.xlu0 %v3683, 16
      %v3904 = vpop.permute.xlu0 %3903
      %3905 = vrot.lane.b32.xlu0 %v3684, 16
      %v3906 = vpop.permute.xlu0 %3905
      %v3907 = vrot.slane %v3896, 4
      %v3908 = vrot.slane %v3898, 4
      %v3909 = vrot.slane %v3900, 4
      %v3910 = vrot.slane %v3902, 4
      %v3911 = vrot.slane %v3904, 4
      %v3912 = vrot.slane %v3906, 4
      %v3913 = vsel %vm206, %v3907, %v3908
      %v3914 = vsel %vm2041, %v3896, %v3913
      %v3915 = vsel %vm206, %v3908, %v3909
      %v3916 = vsel %vm2041, %v3898, %v3915
      %v3917 = vsel %vm206, %v3910, %v3911
      %v3918 = vsel %vm2041, %v3902, %v3917
      %v3919 = vsel %vm206, %v3911, %v3912
      %v3920 = vsel %vm2041, %v3904, %v3919
      %3925 = vst [vmem:[#allocation2 + $0xd20] sm:$0xff] %v3914
      %3926 = vst [vmem:[#allocation2 + $0xd28] sm:$0xff] %v3916
      %3927 = vst [vmem:[#allocation2 + $0xd30] sm:$0xff] %v3918
      %3928 = vst [vmem:[#allocation2 + $0xd38] sm:$0xff] %v3920
      %3929 = vrot.lane.b32.xlu0 %v3679, 15
      %v3930 = vpop.permute.xlu0 %3929
      %3931 = vrot.lane.b32.xlu0 %v3680, 15
      %v3932 = vpop.permute.xlu0 %3931
      %3933 = vrot.lane.b32.xlu0 %v3681, 15
      %v3934 = vpop.permute.xlu0 %3933
      %3935 = vrot.lane.b32.xlu0 %v3682, 15
      %v3936 = vpop.permute.xlu0 %3935
      %3937 = vrot.lane.b32.xlu0 %v3683, 15
      %v3938 = vpop.permute.xlu0 %3937
      %3939 = vrot.lane.b32.xlu0 %v3684, 15
      %v3940 = vpop.permute.xlu0 %3939
      %v3941 = vrot.slane %v3930, 4
      %v3942 = vrot.slane %v3932, 4
      %v3943 = vrot.slane %v3934, 4
      %v3944 = vrot.slane %v3936, 4
      %v3945 = vrot.slane %v3938, 4
      %v3946 = vrot.slane %v3940, 4
      %v3947 = vsel %vm206, %v3941, %v3942
      %v3948 = vsel %vm2076, %v3930, %v3947
      %v3949 = vsel %vm206, %v3942, %v3943
      %v3950 = vsel %vm2076, %v3932, %v3949
      %v3951 = vsel %vm206, %v3944, %v3945
      %v3952 = vsel %vm2076, %v3936, %v3951
      %v3953 = vsel %vm206, %v3945, %v3946
      %v3954 = vsel %vm2076, %v3938, %v3953
      %3959 = vst [vmem:[#allocation2 + $0xd40] sm:$0xff] %v3948
      %3960 = vst [vmem:[#allocation2 + $0xd48] sm:$0xff] %v3950
      %3961 = vst [vmem:[#allocation2 + $0xd50] sm:$0xff] %v3952
      %3962 = vst [vmem:[#allocation2 + $0xd58] sm:$0xff] %v3954
      %3963 = vrot.lane.b32.xlu0 %v3679, 14
      %v3964 = vpop.permute.xlu0 %3963
      %3965 = vrot.lane.b32.xlu0 %v3680, 14
      %v3966 = vpop.permute.xlu0 %3965
      %3967 = vrot.lane.b32.xlu0 %v3681, 14
      %v3968 = vpop.permute.xlu0 %3967
      %3969 = vrot.lane.b32.xlu0 %v3682, 14
      %v3970 = vpop.permute.xlu0 %3969
      %3971 = vrot.lane.b32.xlu0 %v3683, 14
      %v3972 = vpop.permute.xlu0 %3971
      %3973 = vrot.lane.b32.xlu0 %v3684, 14
      %v3974 = vpop.permute.xlu0 %3973
      %v3975 = vrot.slane %v3964, 4
      %v3976 = vrot.slane %v3966, 4
      %v3977 = vrot.slane %v3968, 4
      %v3978 = vrot.slane %v3970, 4
      %v3979 = vrot.slane %v3972, 4
      %v3980 = vrot.slane %v3974, 4
      %v3981 = vsel %vm206, %v3975, %v3976
      %v3982 = vsel %vm2111, %v3964, %v3981
      %v3983 = vsel %vm206, %v3976, %v3977
      %v3984 = vsel %vm2111, %v3966, %v3983
      %v3985 = vsel %vm206, %v3978, %v3979
      %v3986 = vsel %vm2111, %v3970, %v3985
      %v3987 = vsel %vm206, %v3979, %v3980
      %v3988 = vsel %vm2111, %v3972, %v3987
      %3993 = vst [vmem:[#allocation2 + $0xd60] sm:$0xff] %v3982
      %3994 = vst [vmem:[#allocation2 + $0xd68] sm:$0xff] %v3984
      %3995 = vst [vmem:[#allocation2 + $0xd70] sm:$0xff] %v3986
      %3996 = vst [vmem:[#allocation2 + $0xd78] sm:$0xff] %v3988
      %3997 = vrot.lane.b32.xlu0 %v3679, 13
      %v3998 = vpop.permute.xlu0 %3997
      %3999 = vrot.lane.b32.xlu0 %v3680, 13
      %v4000 = vpop.permute.xlu0 %3999
      %4001 = vrot.lane.b32.xlu0 %v3681, 13
      %v4002 = vpop.permute.xlu0 %4001
      %4003 = vrot.lane.b32.xlu0 %v3682, 13
      %v4004 = vpop.permute.xlu0 %4003
      %4005 = vrot.lane.b32.xlu0 %v3683, 13
      %v4006 = vpop.permute.xlu0 %4005
      %4007 = vrot.lane.b32.xlu0 %v3684, 13
      %v4008 = vpop.permute.xlu0 %4007
      %v4009 = vrot.slane %v3998, 4
      %v4010 = vrot.slane %v4000, 4
      %v4011 = vrot.slane %v4002, 4
      %v4012 = vrot.slane %v4004, 4
      %v4013 = vrot.slane %v4006, 4
      %v4014 = vrot.slane %v4008, 4
      %v4015 = vsel %vm206, %v4009, %v4010
      %vm4016 = vcmask 105472
      %v4017 = vsel %vm4016, %v3998, %v4015
      %v4018 = vsel %vm206, %v4010, %v4011
      %v4019 = vsel %vm4016, %v4000, %v4018
      %v4020 = vsel %vm206, %v4012, %v4013
      %v4021 = vsel %vm4016, %v4004, %v4020
      %v4022 = vsel %vm206, %v4013, %v4014
      %v4023 = vsel %vm4016, %v4006, %v4022
      %4028 = vst [vmem:[#allocation2 + $0xd80] sm:$0xff] %v4017
      %4029 = vst [vmem:[#allocation2 + $0xd88] sm:$0xff] %v4019
      %4030 = vst [vmem:[#allocation2 + $0xd90] sm:$0xff] %v4021
      %4031 = vst [vmem:[#allocation2 + $0xd98] sm:$0xff] %v4023
      %4032 = vrot.lane.b32.xlu0 %v3679, 12
      %v4033 = vpop.permute.xlu0 %4032
      %4034 = vrot.lane.b32.xlu0 %v3680, 12
      %v4035 = vpop.permute.xlu0 %4034
      %4036 = vrot.lane.b32.xlu0 %v3681, 12
      %v4037 = vpop.permute.xlu0 %4036
      %4038 = vrot.lane.b32.xlu0 %v3682, 12
      %v4039 = vpop.permute.xlu0 %4038
      %4040 = vrot.lane.b32.xlu0 %v3683, 12
      %v4041 = vpop.permute.xlu0 %4040
      %4042 = vrot.lane.b32.xlu0 %v3684, 12
      %v4043 = vpop.permute.xlu0 %4042
      %v4044 = vrot.slane %v4033, 4
      %v4045 = vrot.slane %v4035, 4
      %v4046 = vrot.slane %v4037, 4
      %v4047 = vrot.slane %v4039, 4
      %v4048 = vrot.slane %v4041, 4
      %v4049 = vrot.slane %v4043, 4
      %v4050 = vsel %vm206, %v4044, %v4045
      %vm4051 = vcmask 97280
      %v4052 = vsel %vm4051, %v4033, %v4050
      %v4053 = vsel %vm206, %v4045, %v4046
      %v4054 = vsel %vm4051, %v4035, %v4053
      %v4055 = vsel %vm206, %v4047, %v4048
      %v4056 = vsel %vm4051, %v4039, %v4055
      %v4057 = vsel %vm206, %v4048, %v4049
      %v4058 = vsel %vm4051, %v4041, %v4057
      %4063 = vst [vmem:[#allocation2 + $0xda0] sm:$0xff] %v4052
      %4064 = vst [vmem:[#allocation2 + $0xda8] sm:$0xff] %v4054
      %4065 = vst [vmem:[#allocation2 + $0xdb0] sm:$0xff] %v4056
      %4066 = vst [vmem:[#allocation2 + $0xdb8] sm:$0xff] %v4058
      %v4067 = vld [vmem:[%s165 + $0x8] sm:$0xff]
      %v4068 = vld [vmem:[%s165 + $0x10] sm:$0xff]
      %v4069 = vld [vmem:[%s165 + $0x18] sm:$0xf]
      %v4070 = vld [vmem:[%s165 + $0x24] sm:$0xff]
      %v4071 = vld [vmem:[%s165 + $0x2c] sm:$0xff]
      %v4072 = vld [vmem:[%s165 + $0x34] sm:$0xf]
      %4079 = vrot.lane.b32.xlu0 %v4067, 124
      %v4080 = vpop.permute.xlu0 %4079
      %4081 = vrot.lane.b32.xlu0 %v4068, 124
      %v4082 = vpop.permute.xlu0 %4081
      %4083 = vrot.lane.b32.xlu0 %v4069, 124
      %v4084 = vpop.permute.xlu0 %4083
      %4085 = vrot.lane.b32.xlu0 %v4070, 124
      %v4086 = vpop.permute.xlu0 %4085
      %4087 = vrot.lane.b32.xlu0 %v4071, 124
      %v4088 = vpop.permute.xlu0 %4087
      %4089 = vrot.lane.b32.xlu0 %v4072, 124
      %v4090 = vpop.permute.xlu0 %4089
      %v4091 = vrot.slane %v4080, 4
      %v4092 = vrot.slane %v4082, 4
      %v4093 = vrot.slane %v4084, 4
      %v4094 = vrot.slane %v4086, 4
      %v4095 = vrot.slane %v4088, 4
      %v4096 = vrot.slane %v4090, 4
      %v4097 = vsel %vm206, %v4091, %v4092
      %v4098 = vsel %vm313, %v4080, %v4097
      %v4099 = vsel %vm206, %v4092, %v4093
      %v4100 = vsel %vm313, %v4082, %v4099
      %v4101 = vsel %vm206, %v4094, %v4095
      %v4102 = vsel %vm313, %v4086, %v4101
      %v4103 = vsel %vm206, %v4095, %v4096
      %v4104 = vsel %vm313, %v4088, %v4103
      %4109 = vst [vmem:[#allocation2 + $0xdc0] sm:$0xff] %v4098
      %4110 = vst [vmem:[#allocation2 + $0xdc8] sm:$0xff] %v4100
      %4111 = vst [vmem:[#allocation2 + $0xdd0] sm:$0xff] %v4102
      %4112 = vst [vmem:[#allocation2 + $0xdd8] sm:$0xff] %v4104
      %4113 = vrot.lane.b32.xlu0 %v4067, 123
      %v4114 = vpop.permute.xlu0 %4113
      %4115 = vrot.lane.b32.xlu0 %v4068, 123
      %v4116 = vpop.permute.xlu0 %4115
      %4117 = vrot.lane.b32.xlu0 %v4069, 123
      %v4118 = vpop.permute.xlu0 %4117
      %4119 = vrot.lane.b32.xlu0 %v4070, 123
      %v4120 = vpop.permute.xlu0 %4119
      %4121 = vrot.lane.b32.xlu0 %v4071, 123
      %v4122 = vpop.permute.xlu0 %4121
      %4123 = vrot.lane.b32.xlu0 %v4072, 123
      %v4124 = vpop.permute.xlu0 %4123
      %v4125 = vrot.slane %v4114, 4
      %v4126 = vrot.slane %v4116, 4
      %v4127 = vrot.slane %v4118, 4
      %v4128 = vrot.slane %v4120, 4
      %v4129 = vrot.slane %v4122, 4
      %v4130 = vrot.slane %v4124, 4
      %v4131 = vsel %vm206, %v4125, %v4126
      %v4132 = vsel %vm348, %v4114, %v4131
      %v4133 = vsel %vm206, %v4126, %v4127
      %v4134 = vsel %vm348, %v4116, %v4133
      %v4135 = vsel %vm206, %v4128, %v4129
      %v4136 = vsel %vm348, %v4120, %v4135
      %v4137 = vsel %vm206, %v4129, %v4130
      %v4138 = vsel %vm348, %v4122, %v4137
      %4143 = vst [vmem:[#allocation2 + $0xde0] sm:$0xff] %v4132
      %4144 = vst [vmem:[#allocation2 + $0xde8] sm:$0xff] %v4134
      %4145 = vst [vmem:[#allocation2 + $0xdf0] sm:$0xff] %v4136
      %4146 = vst [vmem:[#allocation2 + $0xdf8] sm:$0xff] %v4138
      %4147 = vrot.lane.b32.xlu0 %v4067, 122
      %v4148 = vpop.permute.xlu0 %4147
      %4149 = vrot.lane.b32.xlu0 %v4068, 122
      %v4150 = vpop.permute.xlu0 %4149
      %4151 = vrot.lane.b32.xlu0 %v4069, 122
      %v4152 = vpop.permute.xlu0 %4151
      %4153 = vrot.lane.b32.xlu0 %v4070, 122
      %v4154 = vpop.permute.xlu0 %4153
      %4155 = vrot.lane.b32.xlu0 %v4071, 122
      %v4156 = vpop.permute.xlu0 %4155
      %4157 = vrot.lane.b32.xlu0 %v4072, 122
      %v4158 = vpop.permute.xlu0 %4157
      %v4159 = vrot.slane %v4148, 4
      %v4160 = vrot.slane %v4150, 4
      %v4161 = vrot.slane %v4152, 4
      %v4162 = vrot.slane %v4154, 4
      %v4163 = vrot.slane %v4156, 4
      %v4164 = vrot.slane %v4158, 4
      %v4165 = vsel %vm206, %v4159, %v4160
      %v4166 = vsel %vm383, %v4148, %v4165
      %v4167 = vsel %vm206, %v4160, %v4161
      %v4168 = vsel %vm383, %v4150, %v4167
      %v4169 = vsel %vm206, %v4162, %v4163
      %v4170 = vsel %vm383, %v4154, %v4169
      %v4171 = vsel %vm206, %v4163, %v4164
      %v4172 = vsel %vm383, %v4156, %v4171
      %4177 = vst [vmem:[#allocation2 + $0xe00] sm:$0xff] %v4166
      %4178 = vst [vmem:[#allocation2 + $0xe08] sm:$0xff] %v4168
      %4179 = vst [vmem:[#allocation2 + $0xe10] sm:$0xff] %v4170
      %4180 = vst [vmem:[#allocation2 + $0xe18] sm:$0xff] %v4172
      %4181 = vrot.lane.b32.xlu0 %v4067, 121
      %v4182 = vpop.permute.xlu0 %4181
      %4183 = vrot.lane.b32.xlu0 %v4068, 121
      %v4184 = vpop.permute.xlu0 %4183
      %4185 = vrot.lane.b32.xlu0 %v4069, 121
      %v4186 = vpop.permute.xlu0 %4185
      %4187 = vrot.lane.b32.xlu0 %v4070, 121
      %v4188 = vpop.permute.xlu0 %4187
      %4189 = vrot.lane.b32.xlu0 %v4071, 121
      %v4190 = vpop.permute.xlu0 %4189
      %4191 = vrot.lane.b32.xlu0 %v4072, 121
      %v4192 = vpop.permute.xlu0 %4191
      %v4193 = vrot.slane %v4182, 4
      %v4194 = vrot.slane %v4184, 4
      %v4195 = vrot.slane %v4186, 4
      %v4196 = vrot.slane %v4188, 4
      %v4197 = vrot.slane %v4190, 4
      %v4198 = vrot.slane %v4192, 4
      %v4199 = vsel %vm206, %v4193, %v4194
      %v4200 = vsel %vm418, %v4182, %v4199
      %v4201 = vsel %vm206, %v4194, %v4195
      %v4202 = vsel %vm418, %v4184, %v4201
      %v4203 = vsel %vm206, %v4196, %v4197
      %v4204 = vsel %vm418, %v4188, %v4203
      %v4205 = vsel %vm206, %v4197, %v4198
      %v4206 = vsel %vm418, %v4190, %v4205
      %4211 = vst [vmem:[#allocation2 + $0xe20] sm:$0xff] %v4200
      %4212 = vst [vmem:[#allocation2 + $0xe28] sm:$0xff] %v4202
      %4213 = vst [vmem:[#allocation2 + $0xe30] sm:$0xff] %v4204
      %4214 = vst [vmem:[#allocation2 + $0xe38] sm:$0xff] %v4206
      %4215 = vrot.lane.b32.xlu0 %v4067, 120
      %v4216 = vpop.permute.xlu0 %4215
      %4217 = vrot.lane.b32.xlu0 %v4068, 120
      %v4218 = vpop.permute.xlu0 %4217
      %4219 = vrot.lane.b32.xlu0 %v4069, 120
      %v4220 = vpop.permute.xlu0 %4219
      %4221 = vrot.lane.b32.xlu0 %v4070, 120
      %v4222 = vpop.permute.xlu0 %4221
      %4223 = vrot.lane.b32.xlu0 %v4071, 120
      %v4224 = vpop.permute.xlu0 %4223
      %4225 = vrot.lane.b32.xlu0 %v4072, 120
      %v4226 = vpop.permute.xlu0 %4225
      %v4227 = vrot.slane %v4216, 4
      %v4228 = vrot.slane %v4218, 4
      %v4229 = vrot.slane %v4220, 4
      %v4230 = vrot.slane %v4222, 4
      %v4231 = vrot.slane %v4224, 4
      %v4232 = vrot.slane %v4226, 4
      %v4233 = vsel %vm206, %v4227, %v4228
      %v4234 = vsel %vm453, %v4216, %v4233
      %v4235 = vsel %vm206, %v4228, %v4229
      %v4236 = vsel %vm453, %v4218, %v4235
      %v4237 = vsel %vm206, %v4230, %v4231
      %v4238 = vsel %vm453, %v4222, %v4237
      %v4239 = vsel %vm206, %v4231, %v4232
      %v4240 = vsel %vm453, %v4224, %v4239
      %4245 = vst [vmem:[#allocation2 + $0xe40] sm:$0xff] %v4234
      %4246 = vst [vmem:[#allocation2 + $0xe48] sm:$0xff] %v4236
      %4247 = vst [vmem:[#allocation2 + $0xe50] sm:$0xff] %v4238
      %4248 = vst [vmem:[#allocation2 + $0xe58] sm:$0xff] %v4240
      %4249 = vrot.lane.b32.xlu0 %v4067, 119
      %v4250 = vpop.permute.xlu0 %4249
      %4251 = vrot.lane.b32.xlu0 %v4068, 119
      %v4252 = vpop.permute.xlu0 %4251
      %4253 = vrot.lane.b32.xlu0 %v4069, 119
      %v4254 = vpop.permute.xlu0 %4253
      %4255 = vrot.lane.b32.xlu0 %v4070, 119
      %v4256 = vpop.permute.xlu0 %4255
      %4257 = vrot.lane.b32.xlu0 %v4071, 119
      %v4258 = vpop.permute.xlu0 %4257
      %4259 = vrot.lane.b32.xlu0 %v4072, 119
      %v4260 = vpop.permute.xlu0 %4259
      %v4261 = vrot.slane %v4250, 4
      %v4262 = vrot.slane %v4252, 4
      %v4263 = vrot.slane %v4254, 4
      %v4264 = vrot.slane %v4256, 4
      %v4265 = vrot.slane %v4258, 4
      %v4266 = vrot.slane %v4260, 4
      %v4267 = vsel %vm206, %v4261, %v4262
      %v4268 = vsel %vm488, %v4250, %v4267
      %v4269 = vsel %vm206, %v4262, %v4263
      %v4270 = vsel %vm488, %v4252, %v4269
      %v4271 = vsel %vm206, %v4264, %v4265
      %v4272 = vsel %vm488, %v4256, %v4271
      %v4273 = vsel %vm206, %v4265, %v4266
      %v4274 = vsel %vm488, %v4258, %v4273
      %4279 = vst [vmem:[#allocation2 + $0xe60] sm:$0xff] %v4268
      %4280 = vst [vmem:[#allocation2 + $0xe68] sm:$0xff] %v4270
      %4281 = vst [vmem:[#allocation2 + $0xe70] sm:$0xff] %v4272
      %4282 = vst [vmem:[#allocation2 + $0xe78] sm:$0xff] %v4274
      %4283 = vrot.lane.b32.xlu0 %v4067, 118
      %v4284 = vpop.permute.xlu0 %4283
      %4285 = vrot.lane.b32.xlu0 %v4068, 118
      %v4286 = vpop.permute.xlu0 %4285
      %4287 = vrot.lane.b32.xlu0 %v4069, 118
      %v4288 = vpop.permute.xlu0 %4287
      %4289 = vrot.lane.b32.xlu0 %v4070, 118
      %v4290 = vpop.permute.xlu0 %4289
      %4291 = vrot.lane.b32.xlu0 %v4071, 118
      %v4292 = vpop.permute.xlu0 %4291
      %4293 = vrot.lane.b32.xlu0 %v4072, 118
      %v4294 = vpop.permute.xlu0 %4293
      %v4295 = vrot.slane %v4284, 4
      %v4296 = vrot.slane %v4286, 4
      %v4297 = vrot.slane %v4288, 4
      %v4298 = vrot.slane %v4290, 4
      %v4299 = vrot.slane %v4292, 4
      %v4300 = vrot.slane %v4294, 4
      %v4301 = vsel %vm206, %v4295, %v4296
      %v4302 = vsel %vm523, %v4284, %v4301
      %v4303 = vsel %vm206, %v4296, %v4297
      %v4304 = vsel %vm523, %v4286, %v4303
      %v4305 = vsel %vm206, %v4298, %v4299
      %v4306 = vsel %vm523, %v4290, %v4305
      %v4307 = vsel %vm206, %v4299, %v4300
      %v4308 = vsel %vm523, %v4292, %v4307
      %4313 = vst [vmem:[#allocation2 + $0xe80] sm:$0xff] %v4302
      %4314 = vst [vmem:[#allocation2 + $0xe88] sm:$0xff] %v4304
      %4315 = vst [vmem:[#allocation2 + $0xe90] sm:$0xff] %v4306
      %4316 = vst [vmem:[#allocation2 + $0xe98] sm:$0xff] %v4308
      %4317 = vrot.lane.b32.xlu0 %v4067, 117
      %v4318 = vpop.permute.xlu0 %4317
      %4319 = vrot.lane.b32.xlu0 %v4068, 117
      %v4320 = vpop.permute.xlu0 %4319
      %4321 = vrot.lane.b32.xlu0 %v4069, 117
      %v4322 = vpop.permute.xlu0 %4321
      %4323 = vrot.lane.b32.xlu0 %v4070, 117
      %v4324 = vpop.permute.xlu0 %4323
      %4325 = vrot.lane.b32.xlu0 %v4071, 117
      %v4326 = vpop.permute.xlu0 %4325
      %4327 = vrot.lane.b32.xlu0 %v4072, 117
      %v4328 = vpop.permute.xlu0 %4327
      %v4329 = vrot.slane %v4318, 4
      %v4330 = vrot.slane %v4320, 4
      %v4331 = vrot.slane %v4322, 4
      %v4332 = vrot.slane %v4324, 4
      %v4333 = vrot.slane %v4326, 4
      %v4334 = vrot.slane %v4328, 4
      %v4335 = vsel %vm206, %v4329, %v4330
      %v4336 = vsel %vm2464, %v4318, %v4335
      %v4337 = vsel %vm206, %v4330, %v4331
      %v4338 = vsel %vm2464, %v4320, %v4337
      %v4339 = vsel %vm206, %v4332, %v4333
      %v4340 = vsel %vm2464, %v4324, %v4339
      %v4341 = vsel %vm206, %v4333, %v4334
      %v4342 = vsel %vm2464, %v4326, %v4341
      %4347 = vst [vmem:[#allocation2 + $0xea0] sm:$0xff] %v4336
      %4348 = vst [vmem:[#allocation2 + $0xea8] sm:$0xff] %v4338
      %4349 = vst [vmem:[#allocation2 + $0xeb0] sm:$0xff] %v4340
      %4350 = vst [vmem:[#allocation2 + $0xeb8] sm:$0xff] %v4342
      %4351 = vrot.lane.b32.xlu0 %v4067, 116
      %v4352 = vpop.permute.xlu0 %4351
      %4353 = vrot.lane.b32.xlu0 %v4068, 116
      %v4354 = vpop.permute.xlu0 %4353
      %4355 = vrot.lane.b32.xlu0 %v4069, 116
      %v4356 = vpop.permute.xlu0 %4355
      %4357 = vrot.lane.b32.xlu0 %v4070, 116
      %v4358 = vpop.permute.xlu0 %4357
      %4359 = vrot.lane.b32.xlu0 %v4071, 116
      %v4360 = vpop.permute.xlu0 %4359
      %4361 = vrot.lane.b32.xlu0 %v4072, 116
      %v4362 = vpop.permute.xlu0 %4361
      %v4363 = vrot.slane %v4352, 4
      %v4364 = vrot.slane %v4354, 4
      %v4365 = vrot.slane %v4356, 4
      %v4366 = vrot.slane %v4358, 4
      %v4367 = vrot.slane %v4360, 4
      %v4368 = vrot.slane %v4362, 4
      %v4369 = vsel %vm206, %v4363, %v4364
      %v4370 = vsel %vm2499, %v4352, %v4369
      %v4371 = vsel %vm206, %v4364, %v4365
      %v4372 = vsel %vm2499, %v4354, %v4371
      %v4373 = vsel %vm206, %v4366, %v4367
      %v4374 = vsel %vm2499, %v4358, %v4373
      %v4375 = vsel %vm206, %v4367, %v4368
      %v4376 = vsel %vm2499, %v4360, %v4375
      %4381 = vst [vmem:[#allocation2 + $0xec0] sm:$0xff] %v4370
      %4382 = vst [vmem:[#allocation2 + $0xec8] sm:$0xff] %v4372
      %4383 = vst [vmem:[#allocation2 + $0xed0] sm:$0xff] %v4374
      %4384 = vst [vmem:[#allocation2 + $0xed8] sm:$0xff] %v4376
      %4385 = vrot.lane.b32.xlu0 %v4067, 115
      %v4386 = vpop.permute.xlu0 %4385
      %4387 = vrot.lane.b32.xlu0 %v4068, 115
      %v4388 = vpop.permute.xlu0 %4387
      %4389 = vrot.lane.b32.xlu0 %v4069, 115
      %v4390 = vpop.permute.xlu0 %4389
      %4391 = vrot.lane.b32.xlu0 %v4070, 115
      %v4392 = vpop.permute.xlu0 %4391
      %4393 = vrot.lane.b32.xlu0 %v4071, 115
      %v4394 = vpop.permute.xlu0 %4393
      %4395 = vrot.lane.b32.xlu0 %v4072, 115
      %v4396 = vpop.permute.xlu0 %4395
      %v4397 = vrot.slane %v4386, 4
      %v4398 = vrot.slane %v4388, 4
      %v4399 = vrot.slane %v4390, 4
      %v4400 = vrot.slane %v4392, 4
      %v4401 = vrot.slane %v4394, 4
      %v4402 = vrot.slane %v4396, 4
      %v4403 = vsel %vm206, %v4397, %v4398
      %vm4404 = vcmask 941056
      %v4405 = vsel %vm4404, %v4386, %v4403
      %v4406 = vsel %vm206, %v4398, %v4399
      %v4407 = vsel %vm4404, %v4388, %v4406
      %v4408 = vsel %vm206, %v4400, %v4401
      %v4409 = vsel %vm4404, %v4392, %v4408
      %v4410 = vsel %vm206, %v4401, %v4402
      %v4411 = vsel %vm4404, %v4394, %v4410
      %4416 = vst [vmem:[#allocation2 + $0xee0] sm:$0xff] %v4405
      %4417 = vst [vmem:[#allocation2 + $0xee8] sm:$0xff] %v4407
      %4418 = vst [vmem:[#allocation2 + $0xef0] sm:$0xff] %v4409
      %4419 = vst [vmem:[#allocation2 + $0xef8] sm:$0xff] %v4411
      %4420 = vrot.lane.b32.xlu0 %v4067, 114
      %v4421 = vpop.permute.xlu0 %4420
      %4422 = vrot.lane.b32.xlu0 %v4068, 114
      %v4423 = vpop.permute.xlu0 %4422
      %4424 = vrot.lane.b32.xlu0 %v4069, 114
      %v4425 = vpop.permute.xlu0 %4424
      %4426 = vrot.lane.b32.xlu0 %v4070, 114
      %v4427 = vpop.permute.xlu0 %4426
      %4428 = vrot.lane.b32.xlu0 %v4071, 114
      %v4429 = vpop.permute.xlu0 %4428
      %4430 = vrot.lane.b32.xlu0 %v4072, 114
      %v4431 = vpop.permute.xlu0 %4430
      %v4432 = vrot.slane %v4421, 4
      %v4433 = vrot.slane %v4423, 4
      %v4434 = vrot.slane %v4425, 4
      %v4435 = vrot.slane %v4427, 4
      %v4436 = vrot.slane %v4429, 4
      %v4437 = vrot.slane %v4431, 4
      %v4438 = vsel %vm206, %v4432, %v4433
      %vm4439 = vcmask 932864
      %v4440 = vsel %vm4439, %v4421, %v4438
      %v4441 = vsel %vm206, %v4433, %v4434
      %v4442 = vsel %vm4439, %v4423, %v4441
      %v4443 = vsel %vm206, %v4435, %v4436
      %v4444 = vsel %vm4439, %v4427, %v4443
      %v4445 = vsel %vm206, %v4436, %v4437
      %v4446 = vsel %vm4439, %v4429, %v4445
      %4451 = vst [vmem:[#allocation2 + $0xf00] sm:$0xff] %v4440
      %4452 = vst [vmem:[#allocation2 + $0xf08] sm:$0xff] %v4442
      %4453 = vst [vmem:[#allocation2 + $0xf10] sm:$0xff] %v4444
      %4454 = vst [vmem:[#allocation2 + $0xf18] sm:$0xff] %v4446
      %v4455 = vld [vmem:[%s1] sm:$0xff]
      %v4456 = vld [vmem:[%s1 + $0x8] sm:$0xff]
      %v4457 = vld [vmem:[%s1 + $0x10] sm:$0xff]
      %v4458 = vld [vmem:[%s1 + $0x18] sm:$0xff]
      %v4459 = vld [vmem:[%s1 + $0x20] sm:$0xff]
      %v4460 = vld [vmem:[%s1 + $0x28] sm:$0xff]
      %v4461 = vld [vmem:[%s1 + $0x30] sm:$0xff]
      %v4462 = vld [vmem:[%s1 + $0x38] sm:$0xff]
      %v4463 = vld [vmem:[#allocation2] sm:$0xff]
      %v4464 = vld [vmem:[#allocation2 + $0x8] sm:$0xff]
      %v4465 = vld [vmem:[#allocation2 + $0x10] sm:$0xff]
      %v4466 = vld [vmem:[#allocation2 + $0x18] sm:$0xff]
      %v4467 = vld [vmem:[#allocation2 + $0x20] sm:$0xff]
      %v4468 = vld [vmem:[#allocation2 + $0x28] sm:$0xff]
      %v4469 = vld [vmem:[#allocation2 + $0x30] sm:$0xff]
      %v4470 = vld [vmem:[#allocation2 + $0x38] sm:$0xff]
      %v4471 = vld [vmem:[#allocation2 + $0x40] sm:$0xff]
      %v4472 = vld [vmem:[#allocation2 + $0x48] sm:$0xff]
      %v4473 = vld [vmem:[#allocation2 + $0x50] sm:$0xff]
      %v4474 = vld [vmem:[#allocation2 + $0x58] sm:$0xff]
      %v4475 = vld [vmem:[#allocation2 + $0x60] sm:$0xff]
      %v4476 = vld [vmem:[#allocation2 + $0x68] sm:$0xff]
      %v4477 = vld [vmem:[#allocation2 + $0x70] sm:$0xff]
      %v4478 = vld [vmem:[#allocation2 + $0x78] sm:$0xff]
      %v4479 = vld [vmem:[#allocation2 + $0x80] sm:$0xff]
      %v4480 = vld [vmem:[#allocation2 + $0x88] sm:$0xff]
      %v4481 = vld [vmem:[#allocation2 + $0x90] sm:$0xff]
      %v4482 = vld [vmem:[#allocation2 + $0x98] sm:$0xff]
      %v4483 = vld [vmem:[#allocation2 + $0xa0] sm:$0xff]
      %v4484 = vld [vmem:[#allocation2 + $0xa8] sm:$0xff]
      %v4485 = vld [vmem:[#allocation2 + $0xb0] sm:$0xff]
      %v4486 = vld [vmem:[#allocation2 + $0xb8] sm:$0xff]
      %v4487 = vld [vmem:[#allocation2 + $0xc0] sm:$0xff]
      %v4488 = vld [vmem:[#allocation2 + $0xc8] sm:$0xff]
      %v4489 = vld [vmem:[#allocation2 + $0xd0] sm:$0xff]
      %v4490 = vld [vmem:[#allocation2 + $0xd8] sm:$0xff]
      %v4491 = vld [vmem:[#allocation2 + $0xe0] sm:$0xff]
      %v4492 = vld [vmem:[#allocation2 + $0xe8] sm:$0xff]
      %v4493 = vld [vmem:[#allocation2 + $0xf0] sm:$0xff]
      %v4494 = vld [vmem:[#allocation2 + $0xf8] sm:$0xff]
      %v4495 = vld [vmem:[#allocation2 + $0x100] sm:$0xff]
      %v4496 = vld [vmem:[#allocation2 + $0x108] sm:$0xff]
      %v4497 = vld [vmem:[#allocation2 + $0x110] sm:$0xff]
      %v4498 = vld [vmem:[#allocation2 + $0x118] sm:$0xff]
      %v4499 = vld [vmem:[#allocation2 + $0x120] sm:$0xff]
      %v4500 = vld [vmem:[#allocation2 + $0x128] sm:$0xff]
      %v4501 = vld [vmem:[#allocation2 + $0x130] sm:$0xff]
      %v4502 = vld [vmem:[#allocation2 + $0x138] sm:$0xff]
      %v4503 = vld [vmem:[#allocation2 + $0x140] sm:$0xff]
      %v4504 = vld [vmem:[#allocation2 + $0x148] sm:$0xff]
      %v4505 = vld [vmem:[#allocation2 + $0x150] sm:$0xff]
      %v4506 = vld [vmem:[#allocation2 + $0x158] sm:$0xff]
      %v4507 = vld [vmem:[#allocation2 + $0x160] sm:$0xff]
      %v4508 = vld [vmem:[#allocation2 + $0x168] sm:$0xff]
      %v4509 = vld [vmem:[#allocation2 + $0x170] sm:$0xff]
      %v4510 = vld [vmem:[#allocation2 + $0x178] sm:$0xff]
      %v4511 = vld [vmem:[#allocation2 + $0x180] sm:$0xff]
      %v4512 = vld [vmem:[#allocation2 + $0x188] sm:$0xff]
      %v4513 = vld [vmem:[#allocation2 + $0x190] sm:$0xff]
      %v4514 = vld [vmem:[#allocation2 + $0x198] sm:$0xff]
      %v4515 = vld [vmem:[#allocation2 + $0x1a0] sm:$0xff]
      %v4516 = vld [vmem:[#allocation2 + $0x1a8] sm:$0xff]
      %v4517 = vld [vmem:[#allocation2 + $0x1b0] sm:$0xff]
      %v4518 = vld [vmem:[#allocation2 + $0x1b8] sm:$0xff]
      %v4519 = vld [vmem:[#allocation2 + $0x1c0] sm:$0xff]
      %v4520 = vld [vmem:[#allocation2 + $0x1c8] sm:$0xff]
      %v4521 = vld [vmem:[#allocation2 + $0x1d0] sm:$0xff]
      %v4522 = vld [vmem:[#allocation2 + $0x1d8] sm:$0xff]
      %v4523 = vld [vmem:[#allocation2 + $0x1e0] sm:$0xff]
      %v4524 = vld [vmem:[#allocation2 + $0x1e8] sm:$0xff]
      %v4525 = vld [vmem:[#allocation2 + $0x1f0] sm:$0xff]
      %v4526 = vld [vmem:[#allocation2 + $0x1f8] sm:$0xff]
      %v4527 = vld [vmem:[#allocation2 + $0x200] sm:$0xff]
      %v4528 = vld [vmem:[#allocation2 + $0x208] sm:$0xff]
      %v4529 = vld [vmem:[#allocation2 + $0x210] sm:$0xff]
      %v4530 = vld [vmem:[#allocation2 + $0x218] sm:$0xff]
      %v4531 = vld [vmem:[#allocation2 + $0x220] sm:$0xff]
      %v4532 = vld [vmem:[#allocation2 + $0x228] sm:$0xff]
      %v4533 = vld [vmem:[#allocation2 + $0x230] sm:$0xff]
      %v4534 = vld [vmem:[#allocation2 + $0x238] sm:$0xff]
      %v4535 = vld [vmem:[#allocation2 + $0x240] sm:$0xff]
      %v4536 = vld [vmem:[#allocation2 + $0x248] sm:$0xff]
      %v4537 = vld [vmem:[#allocation2 + $0x250] sm:$0xff]
      %v4538 = vld [vmem:[#allocation2 + $0x258] sm:$0xff]
      %v4539 = vld [vmem:[#allocation2 + $0x260] sm:$0xff]
      %v4540 = vld [vmem:[#allocation2 + $0x268] sm:$0xff]
      %v4541 = vld [vmem:[#allocation2 + $0x270] sm:$0xff]
      %v4542 = vld [vmem:[#allocation2 + $0x278] sm:$0xff]
      %v4543 = vld [vmem:[#allocation2 + $0x280] sm:$0xff]
      %v4544 = vld [vmem:[#allocation2 + $0x288] sm:$0xff]
      %v4545 = vld [vmem:[#allocation2 + $0x290] sm:$0xff]
      %v4546 = vld [vmem:[#allocation2 + $0x298] sm:$0xff]
      %v4547 = vld [vmem:[#allocation2 + $0x2a0] sm:$0xff]
      %v4548 = vld [vmem:[#allocation2 + $0x2a8] sm:$0xff]
      %v4549 = vld [vmem:[#allocation2 + $0x2b0] sm:$0xff]
      %v4550 = vld [vmem:[#allocation2 + $0x2b8] sm:$0xff]
      %v4551 = vld [vmem:[#allocation2 + $0x2c0] sm:$0xff]
      %v4552 = vld [vmem:[#allocation2 + $0x2c8] sm:$0xff]
      %v4553 = vld [vmem:[#allocation2 + $0x2d0] sm:$0xff]
      %v4554 = vld [vmem:[#allocation2 + $0x2d8] sm:$0xff]
      %v4555 = vld [vmem:[#allocation2 + $0x2e0] sm:$0xff]
      %v4556 = vld [vmem:[#allocation2 + $0x2e8] sm:$0xff]
      %v4557 = vld [vmem:[#allocation2 + $0x2f0] sm:$0xff]
      %v4558 = vld [vmem:[#allocation2 + $0x2f8] sm:$0xff]
      %v4559 = vld [vmem:[#allocation2 + $0x300] sm:$0xff]
      %v4560 = vld [vmem:[#allocation2 + $0x308] sm:$0xff]
      %v4561 = vld [vmem:[#allocation2 + $0x310] sm:$0xff]
      %v4562 = vld [vmem:[#allocation2 + $0x318] sm:$0xff]
      %v4563 = vld [vmem:[#allocation2 + $0x320] sm:$0xff]
      %v4564 = vld [vmem:[#allocation2 + $0x328] sm:$0xff]
      %v4565 = vld [vmem:[#allocation2 + $0x330] sm:$0xff]
      %v4566 = vld [vmem:[#allocation2 + $0x338] sm:$0xff]
      %v4567 = vld [vmem:[#allocation2 + $0x340] sm:$0xff]
      %v4568 = vld [vmem:[#allocation2 + $0x348] sm:$0xff]
      %v4569 = vld [vmem:[#allocation2 + $0x350] sm:$0xff]
      %v4570 = vld [vmem:[#allocation2 + $0x358] sm:$0xff]
      %v4571 = vld [vmem:[#allocation2 + $0x360] sm:$0xff]
      %v4572 = vld [vmem:[#allocation2 + $0x368] sm:$0xff]
      %v4573 = vld [vmem:[#allocation2 + $0x370] sm:$0xff]
      %v4574 = vld [vmem:[#allocation2 + $0x378] sm:$0xff]
      %v4575 = vld [vmem:[#allocation2 + $0x380] sm:$0xff]
      %v4576 = vld [vmem:[#allocation2 + $0x388] sm:$0xff]
      %v4577 = vld [vmem:[#allocation2 + $0x390] sm:$0xff]
      %v4578 = vld [vmem:[#allocation2 + $0x398] sm:$0xff]
      %v4579 = vld [vmem:[#allocation2 + $0x3a0] sm:$0xff]
      %v4580 = vld [vmem:[#allocation2 + $0x3a8] sm:$0xff]
      %v4581 = vld [vmem:[#allocation2 + $0x3b0] sm:$0xff]
      %v4582 = vld [vmem:[#allocation2 + $0x3b8] sm:$0xff]
      %v4583 = vld [vmem:[#allocation2 + $0x3c0] sm:$0xff]
      %v4584 = vld [vmem:[#allocation2 + $0x3c8] sm:$0xff]
      %v4585 = vld [vmem:[#allocation2 + $0x3d0] sm:$0xff]
      %v4586 = vld [vmem:[#allocation2 + $0x3d8] sm:$0xff]
      %v4587 = vld [vmem:[#allocation2 + $0x3e0] sm:$0xff]
      %v4588 = vld [vmem:[#allocation2 + $0x3e8] sm:$0xff]
      %v4589 = vld [vmem:[#allocation2 + $0x3f0] sm:$0xff]
      %v4590 = vld [vmem:[#allocation2 + $0x3f8] sm:$0xff]
      %v4591 = vld [vmem:[#allocation2 + $0x400] sm:$0xff]
      %v4592 = vld [vmem:[#allocation2 + $0x408] sm:$0xff]
      %v4593 = vld [vmem:[#allocation2 + $0x410] sm:$0xff]
      %v4594 = vld [vmem:[#allocation2 + $0x418] sm:$0xff]
      %v4595 = vld [vmem:[#allocation2 + $0x420] sm:$0xff]
      %v4596 = vld [vmem:[#allocation2 + $0x428] sm:$0xff]
      %v4597 = vld [vmem:[#allocation2 + $0x430] sm:$0xff]
      %v4598 = vld [vmem:[#allocation2 + $0x438] sm:$0xff]
      %v4599 = vld [vmem:[#allocation2 + $0x440] sm:$0xff]
      %v4600 = vld [vmem:[#allocation2 + $0x448] sm:$0xff]
      %v4601 = vld [vmem:[#allocation2 + $0x450] sm:$0xff]
      %v4602 = vld [vmem:[#allocation2 + $0x458] sm:$0xff]
      %v4603 = vld [vmem:[#allocation2 + $0x460] sm:$0xff]
      %v4604 = vld [vmem:[#allocation2 + $0x468] sm:$0xff]
      %v4605 = vld [vmem:[#allocation2 + $0x470] sm:$0xff]
      %v4606 = vld [vmem:[#allocation2 + $0x478] sm:$0xff]
      %v4607 = vld [vmem:[#allocation2 + $0x480] sm:$0xff]
      %v4608 = vld [vmem:[#allocation2 + $0x488] sm:$0xff]
      %v4609 = vld [vmem:[#allocation2 + $0x490] sm:$0xff]
      %v4610 = vld [vmem:[#allocation2 + $0x498] sm:$0xff]
      %v4611 = vld [vmem:[#allocation2 + $0x4a0] sm:$0xff]
      %v4612 = vld [vmem:[#allocation2 + $0x4a8] sm:$0xff]
      %v4613 = vld [vmem:[#allocation2 + $0x4b0] sm:$0xff]
      %v4614 = vld [vmem:[#allocation2 + $0x4b8] sm:$0xff]
      %v4615 = vld [vmem:[#allocation2 + $0x4c0] sm:$0xff]
      %v4616 = vld [vmem:[#allocation2 + $0x4c8] sm:$0xff]
      %v4617 = vld [vmem:[#allocation2 + $0x4d0] sm:$0xff]
      %v4618 = vld [vmem:[#allocation2 + $0x4d8] sm:$0xff]
      %v4619 = vld [vmem:[#allocation2 + $0x4e0] sm:$0xff]
      %v4620 = vld [vmem:[#allocation2 + $0x4e8] sm:$0xff]
      %v4621 = vld [vmem:[#allocation2 + $0x4f0] sm:$0xff]
      %v4622 = vld [vmem:[#allocation2 + $0x4f8] sm:$0xff]
      %v4623 = vld [vmem:[#allocation2 + $0x500] sm:$0xff]
      %v4624 = vld [vmem:[#allocation2 + $0x508] sm:$0xff]
      %v4625 = vld [vmem:[#allocation2 + $0x510] sm:$0xff]
      %v4626 = vld [vmem:[#allocation2 + $0x518] sm:$0xff]
      %v4627 = vld [vmem:[#allocation2 + $0x520] sm:$0xff]
      %v4628 = vld [vmem:[#allocation2 + $0x528] sm:$0xff]
      %v4629 = vld [vmem:[#allocation2 + $0x530] sm:$0xff]
      %v4630 = vld [vmem:[#allocation2 + $0x538] sm:$0xff]
      %v4631 = vld [vmem:[#allocation2 + $0x540] sm:$0xff]
      %v4632 = vld [vmem:[#allocation2 + $0x548] sm:$0xff]
      %v4633 = vld [vmem:[#allocation2 + $0x550] sm:$0xff]
      %v4634 = vld [vmem:[#allocation2 + $0x558] sm:$0xff]
      %v4635 = vld [vmem:[#allocation2 + $0x560] sm:$0xff]
      %v4636 = vld [vmem:[#allocation2 + $0x568] sm:$0xff]
      %v4637 = vld [vmem:[#allocation2 + $0x570] sm:$0xff]
      %v4638 = vld [vmem:[#allocation2 + $0x578] sm:$0xff]
      %v4639 = vld [vmem:[#allocation2 + $0x580] sm:$0xff]
      %v4640 = vld [vmem:[#allocation2 + $0x588] sm:$0xff]
      %v4641 = vld [vmem:[#allocation2 + $0x590] sm:$0xff]
      %v4642 = vld [vmem:[#allocation2 + $0x598] sm:$0xff]
      %v4643 = vld [vmem:[#allocation2 + $0x5a0] sm:$0xff]
      %v4644 = vld [vmem:[#allocation2 + $0x5a8] sm:$0xff]
      %v4645 = vld [vmem:[#allocation2 + $0x5b0] sm:$0xff]
      %v4646 = vld [vmem:[#allocation2 + $0x5b8] sm:$0xff]
      %v4647 = vld [vmem:[#allocation2 + $0x5c0] sm:$0xff]
      %v4648 = vld [vmem:[#allocation2 + $0x5c8] sm:$0xff]
      %v4649 = vld [vmem:[#allocation2 + $0x5d0] sm:$0xff]
      %v4650 = vld [vmem:[#allocation2 + $0x5d8] sm:$0xff]
      %v4651 = vld [vmem:[#allocation2 + $0x5e0] sm:$0xff]
      %v4652 = vld [vmem:[#allocation2 + $0x5e8] sm:$0xff]
      %v4653 = vld [vmem:[#allocation2 + $0x5f0] sm:$0xff]
      %v4654 = vld [vmem:[#allocation2 + $0x5f8] sm:$0xff]
      %v4655 = vld [vmem:[#allocation2 + $0x600] sm:$0xff]
      %v4656 = vld [vmem:[#allocation2 + $0x608] sm:$0xff]
      %v4657 = vld [vmem:[#allocation2 + $0x610] sm:$0xff]
      %v4658 = vld [vmem:[#allocation2 + $0x618] sm:$0xff]
      %v4659 = vld [vmem:[#allocation2 + $0x620] sm:$0xff]
      %v4660 = vld [vmem:[#allocation2 + $0x628] sm:$0xff]
      %v4661 = vld [vmem:[#allocation2 + $0x630] sm:$0xff]
      %v4662 = vld [vmem:[#allocation2 + $0x638] sm:$0xff]
      %v4663 = vld [vmem:[#allocation2 + $0x640] sm:$0xff]
      %v4664 = vld [vmem:[#allocation2 + $0x648] sm:$0xff]
      %v4665 = vld [vmem:[#allocation2 + $0x650] sm:$0xff]
      %v4666 = vld [vmem:[#allocation2 + $0x658] sm:$0xff]
      %v4667 = vld [vmem:[#allocation2 + $0x660] sm:$0xff]
      %v4668 = vld [vmem:[#allocation2 + $0x668] sm:$0xff]
      %v4669 = vld [vmem:[#allocation2 + $0x670] sm:$0xff]
      %v4670 = vld [vmem:[#allocation2 + $0x678] sm:$0xff]
      %v4671 = vld [vmem:[#allocation2 + $0x680] sm:$0xff]
      %v4672 = vld [vmem:[#allocation2 + $0x688] sm:$0xff]
      %v4673 = vld [vmem:[#allocation2 + $0x690] sm:$0xff]
      %v4674 = vld [vmem:[#allocation2 + $0x698] sm:$0xff]
      %v4675 = vld [vmem:[#allocation2 + $0x6a0] sm:$0xff]
      %v4676 = vld [vmem:[#allocation2 + $0x6a8] sm:$0xff]
      %v4677 = vld [vmem:[#allocation2 + $0x6b0] sm:$0xff]
      %v4678 = vld [vmem:[#allocation2 + $0x6b8] sm:$0xff]
      %v4679 = vld [vmem:[#allocation2 + $0x6c0] sm:$0xff]
      %v4680 = vld [vmem:[#allocation2 + $0x6c8] sm:$0xff]
      %v4681 = vld [vmem:[#allocation2 + $0x6d0] sm:$0xff]
      %v4682 = vld [vmem:[#allocation2 + $0x6d8] sm:$0xff]
      %v4683 = vld [vmem:[#allocation2 + $0x6e0] sm:$0xff]
      %v4684 = vld [vmem:[#allocation2 + $0x6e8] sm:$0xff]
      %v4685 = vld [vmem:[#allocation2 + $0x6f0] sm:$0xff]
      %v4686 = vld [vmem:[#allocation2 + $0x6f8] sm:$0xff]
      %v4687 = vld [vmem:[#allocation2 + $0x700] sm:$0xff]
      %v4688 = vld [vmem:[#allocation2 + $0x708] sm:$0xff]
      %v4689 = vld [vmem:[#allocation2 + $0x710] sm:$0xff]
      %v4690 = vld [vmem:[#allocation2 + $0x718] sm:$0xff]
      %v4691 = vld [vmem:[#allocation2 + $0x720] sm:$0xff]
      %v4692 = vld [vmem:[#allocation2 + $0x728] sm:$0xff]
      %v4693 = vld [vmem:[#allocation2 + $0x730] sm:$0xff]
      %v4694 = vld [vmem:[#allocation2 + $0x738] sm:$0xff]
      %v4695 = vld [vmem:[#allocation2 + $0x740] sm:$0xff]
      %v4696 = vld [vmem:[#allocation2 + $0x748] sm:$0xff]
      %v4697 = vld [vmem:[#allocation2 + $0x750] sm:$0xff]
      %v4698 = vld [vmem:[#allocation2 + $0x758] sm:$0xff]
      %v4699 = vld [vmem:[#allocation2 + $0x760] sm:$0xff]
      %v4700 = vld [vmem:[#allocation2 + $0x768] sm:$0xff]
      %v4701 = vld [vmem:[#allocation2 + $0x770] sm:$0xff]
      %v4702 = vld [vmem:[#allocation2 + $0x778] sm:$0xff]
      %v4703 = vld [vmem:[#allocation2 + $0x780] sm:$0xff]
      %v4704 = vld [vmem:[#allocation2 + $0x788] sm:$0xff]
      %v4705 = vld [vmem:[#allocation2 + $0x790] sm:$0xff]
      %v4706 = vld [vmem:[#allocation2 + $0x798] sm:$0xff]
      %v4707 = vld [vmem:[#allocation2 + $0x7a0] sm:$0xff]
      %v4708 = vld [vmem:[#allocation2 + $0x7a8] sm:$0xff]
      %v4709 = vld [vmem:[#allocation2 + $0x7b0] sm:$0xff]
      %v4710 = vld [vmem:[#allocation2 + $0x7b8] sm:$0xff]
      %v4711 = vld [vmem:[#allocation2 + $0x7c0] sm:$0xff]
      %v4712 = vld [vmem:[#allocation2 + $0x7c8] sm:$0xff]
      %v4713 = vld [vmem:[#allocation2 + $0x7d0] sm:$0xff]
      %v4714 = vld [vmem:[#allocation2 + $0x7d8] sm:$0xff]
      %v4715 = vld [vmem:[#allocation2 + $0x7e0] sm:$0xff]
      %v4716 = vld [vmem:[#allocation2 + $0x7e8] sm:$0xff]
      %v4717 = vld [vmem:[#allocation2 + $0x7f0] sm:$0xff]
      %v4718 = vld [vmem:[#allocation2 + $0x7f8] sm:$0xff]
      %v4719 = vld [vmem:[#allocation2 + $0x800] sm:$0xff]
      %v4720 = vld [vmem:[#allocation2 + $0x808] sm:$0xff]
      %v4721 = vld [vmem:[#allocation2 + $0x810] sm:$0xff]
      %v4722 = vld [vmem:[#allocation2 + $0x818] sm:$0xff]
      %v4723 = vld [vmem:[#allocation2 + $0x820] sm:$0xff]
      %v4724 = vld [vmem:[#allocation2 + $0x828] sm:$0xff]
      %v4725 = vld [vmem:[#allocation2 + $0x830] sm:$0xff]
      %v4726 = vld [vmem:[#allocation2 + $0x838] sm:$0xff]
      %v4727 = vld [vmem:[#allocation2 + $0x840] sm:$0xff]
      %v4728 = vld [vmem:[#allocation2 + $0x848] sm:$0xff]
      %v4729 = vld [vmem:[#allocation2 + $0x850] sm:$0xff]
      %v4730 = vld [vmem:[#allocation2 + $0x858] sm:$0xff]
      %v4731 = vld [vmem:[#allocation2 + $0x860] sm:$0xff]
      %v4732 = vld [vmem:[#allocation2 + $0x868] sm:$0xff]
      %v4733 = vld [vmem:[#allocation2 + $0x870] sm:$0xff]
      %v4734 = vld [vmem:[#allocation2 + $0x878] sm:$0xff]
      %v4735 = vld [vmem:[#allocation2 + $0x880] sm:$0xff]
      %v4736 = vld [vmem:[#allocation2 + $0x888] sm:$0xff]
      %v4737 = vld [vmem:[#allocation2 + $0x890] sm:$0xff]
      %v4738 = vld [vmem:[#allocation2 + $0x898] sm:$0xff]
      %v4739 = vld [vmem:[#allocation2 + $0x8a0] sm:$0xff]
      %v4740 = vld [vmem:[#allocation2 + $0x8a8] sm:$0xff]
      %v4741 = vld [vmem:[#allocation2 + $0x8b0] sm:$0xff]
      %v4742 = vld [vmem:[#allocation2 + $0x8b8] sm:$0xff]
      %v4743 = vld [vmem:[#allocation2 + $0x8c0] sm:$0xff]
      %v4744 = vld [vmem:[#allocation2 + $0x8c8] sm:$0xff]
      %v4745 = vld [vmem:[#allocation2 + $0x8d0] sm:$0xff]
      %v4746 = vld [vmem:[#allocation2 + $0x8d8] sm:$0xff]
      %v4747 = vld [vmem:[#allocation2 + $0x8e0] sm:$0xff]
      %v4748 = vld [vmem:[#allocation2 + $0x8e8] sm:$0xff]
      %v4749 = vld [vmem:[#allocation2 + $0x8f0] sm:$0xff]
      %v4750 = vld [vmem:[#allocation2 + $0x8f8] sm:$0xff]
      %v4751 = vld [vmem:[#allocation2 + $0x900] sm:$0xff]
      %v4752 = vld [vmem:[#allocation2 + $0x908] sm:$0xff]
      %v4753 = vld [vmem:[#allocation2 + $0x910] sm:$0xff]
      %v4754 = vld [vmem:[#allocation2 + $0x918] sm:$0xff]
      %v4755 = vld [vmem:[#allocation2 + $0x920] sm:$0xff]
      %v4756 = vld [vmem:[#allocation2 + $0x928] sm:$0xff]
      %v4757 = vld [vmem:[#allocation2 + $0x930] sm:$0xff]
      %v4758 = vld [vmem:[#allocation2 + $0x938] sm:$0xff]
      %v4759 = vld [vmem:[#allocation2 + $0x940] sm:$0xff]
      %v4760 = vld [vmem:[#allocation2 + $0x948] sm:$0xff]
      %v4761 = vld [vmem:[#allocation2 + $0x950] sm:$0xff]
      %v4762 = vld [vmem:[#allocation2 + $0x958] sm:$0xff]
      %v4763 = vld [vmem:[#allocation2 + $0x960] sm:$0xff]
      %v4764 = vld [vmem:[#allocation2 + $0x968] sm:$0xff]
      %v4765 = vld [vmem:[#allocation2 + $0x970] sm:$0xff]
      %v4766 = vld [vmem:[#allocation2 + $0x978] sm:$0xff]
      %v4767 = vld [vmem:[#allocation2 + $0x980] sm:$0xff]
      %v4768 = vld [vmem:[#allocation2 + $0x988] sm:$0xff]
      %v4769 = vld [vmem:[#allocation2 + $0x990] sm:$0xff]
      %v4770 = vld [vmem:[#allocation2 + $0x998] sm:$0xff]
      %v4771 = vld [vmem:[#allocation2 + $0x9a0] sm:$0xff]
      %v4772 = vld [vmem:[#allocation2 + $0x9a8] sm:$0xff]
      %v4773 = vld [vmem:[#allocation2 + $0x9b0] sm:$0xff]
      %v4774 = vld [vmem:[#allocation2 + $0x9b8] sm:$0xff]
      %v4775 = vld [vmem:[#allocation2 + $0x9c0] sm:$0xff]
      %v4776 = vld [vmem:[#allocation2 + $0x9c8] sm:$0xff]
      %v4777 = vld [vmem:[#allocation2 + $0x9d0] sm:$0xff]
      %v4778 = vld [vmem:[#allocation2 + $0x9d8] sm:$0xff]
      %v4779 = vld [vmem:[#allocation2 + $0x9e0] sm:$0xff]
      %v4780 = vld [vmem:[#allocation2 + $0x9e8] sm:$0xff]
      %v4781 = vld [vmem:[#allocation2 + $0x9f0] sm:$0xff]
      %v4782 = vld [vmem:[#allocation2 + $0x9f8] sm:$0xff]
      %v4783 = vld [vmem:[#allocation2 + $0xa00] sm:$0xff]
      %v4784 = vld [vmem:[#allocation2 + $0xa08] sm:$0xff]
      %v4785 = vld [vmem:[#allocation2 + $0xa10] sm:$0xff]
      %v4786 = vld [vmem:[#allocation2 + $0xa18] sm:$0xff]
      %v4787 = vld [vmem:[#allocation2 + $0xa20] sm:$0xff]
      %v4788 = vld [vmem:[#allocation2 + $0xa28] sm:$0xff]
      %v4789 = vld [vmem:[#allocation2 + $0xa30] sm:$0xff]
      %v4790 = vld [vmem:[#allocation2 + $0xa38] sm:$0xff]
      %v4791 = vld [vmem:[#allocation2 + $0xa40] sm:$0xff]
      %v4792 = vld [vmem:[#allocation2 + $0xa48] sm:$0xff]
      %v4793 = vld [vmem:[#allocation2 + $0xa50] sm:$0xff]
      %v4794 = vld [vmem:[#allocation2 + $0xa58] sm:$0xff]
      %v4795 = vld [vmem:[#allocation2 + $0xa60] sm:$0xff]
      %v4796 = vld [vmem:[#allocation2 + $0xa68] sm:$0xff]
      %v4797 = vld [vmem:[#allocation2 + $0xa70] sm:$0xff]
      %v4798 = vld [vmem:[#allocation2 + $0xa78] sm:$0xff]
      %v4799 = vld [vmem:[#allocation2 + $0xa80] sm:$0xff]
      %v4800 = vld [vmem:[#allocation2 + $0xa88] sm:$0xff]
      %v4801 = vld [vmem:[#allocation2 + $0xa90] sm:$0xff]
      %v4802 = vld [vmem:[#allocation2 + $0xa98] sm:$0xff]
      %v4803 = vld [vmem:[#allocation2 + $0xaa0] sm:$0xff]
      %v4804 = vld [vmem:[#allocation2 + $0xaa8] sm:$0xff]
      %v4805 = vld [vmem:[#allocation2 + $0xab0] sm:$0xff]
      %v4806 = vld [vmem:[#allocation2 + $0xab8] sm:$0xff]
      %v4807 = vld [vmem:[#allocation2 + $0xac0] sm:$0xff]
      %v4808 = vld [vmem:[#allocation2 + $0xac8] sm:$0xff]
      %v4809 = vld [vmem:[#allocation2 + $0xad0] sm:$0xff]
      %v4810 = vld [vmem:[#allocation2 + $0xad8] sm:$0xff]
      %v4811 = vld [vmem:[#allocation2 + $0xae0] sm:$0xff]
      %v4812 = vld [vmem:[#allocation2 + $0xae8] sm:$0xff]
      %v4813 = vld [vmem:[#allocation2 + $0xaf0] sm:$0xff]
      %v4814 = vld [vmem:[#allocation2 + $0xaf8] sm:$0xff]
      %v4815 = vld [vmem:[#allocation2 + $0xb00] sm:$0xff]
      %v4816 = vld [vmem:[#allocation2 + $0xb08] sm:$0xff]
      %v4817 = vld [vmem:[#allocation2 + $0xb10] sm:$0xff]
      %v4818 = vld [vmem:[#allocation2 + $0xb18] sm:$0xff]
      %v4819 = vld [vmem:[#allocation2 + $0xb20] sm:$0xff]
      %v4820 = vld [vmem:[#allocation2 + $0xb28] sm:$0xff]
      %v4821 = vld [vmem:[#allocation2 + $0xb30] sm:$0xff]
      %v4822 = vld [vmem:[#allocation2 + $0xb38] sm:$0xff]
      %v4823 = vld [vmem:[#allocation2 + $0xb40] sm:$0xff]
      %v4824 = vld [vmem:[#allocation2 + $0xb48] sm:$0xff]
      %v4825 = vld [vmem:[#allocation2 + $0xb50] sm:$0xff]
      %v4826 = vld [vmem:[#allocation2 + $0xb58] sm:$0xff]
      %v4827 = vld [vmem:[#allocation2 + $0xb60] sm:$0xff]
      %v4828 = vld [vmem:[#allocation2 + $0xb68] sm:$0xff]
      %v4829 = vld [vmem:[#allocation2 + $0xb70] sm:$0xff]
      %v4830 = vld [vmem:[#allocation2 + $0xb78] sm:$0xff]
      %v4831 = vld [vmem:[#allocation2 + $0xb80] sm:$0xff]
      %v4832 = vld [vmem:[#allocation2 + $0xb88] sm:$0xff]
      %v4833 = vld [vmem:[#allocation2 + $0xb90] sm:$0xff]
      %v4834 = vld [vmem:[#allocation2 + $0xb98] sm:$0xff]
      %v4835 = vld [vmem:[#allocation2 + $0xba0] sm:$0xff]
      %v4836 = vld [vmem:[#allocation2 + $0xba8] sm:$0xff]
      %v4837 = vld [vmem:[#allocation2 + $0xbb0] sm:$0xff]
      %v4838 = vld [vmem:[#allocation2 + $0xbb8] sm:$0xff]
      %v4839 = vld [vmem:[#allocation2 + $0xbc0] sm:$0xff]
      %v4840 = vld [vmem:[#allocation2 + $0xbc8] sm:$0xff]
      %v4841 = vld [vmem:[#allocation2 + $0xbd0] sm:$0xff]
      %v4842 = vld [vmem:[#allocation2 + $0xbd8] sm:$0xff]
      %v4843 = vld [vmem:[#allocation2 + $0xbe0] sm:$0xff]
      %v4844 = vld [vmem:[#allocation2 + $0xbe8] sm:$0xff]
      %v4845 = vld [vmem:[#allocation2 + $0xbf0] sm:$0xff]
      %v4846 = vld [vmem:[#allocation2 + $0xbf8] sm:$0xff]
      %v4847 = vld [vmem:[#allocation2 + $0xc00] sm:$0xff]
      %v4848 = vld [vmem:[#allocation2 + $0xc08] sm:$0xff]
      %v4849 = vld [vmem:[#allocation2 + $0xc10] sm:$0xff]
      %v4850 = vld [vmem:[#allocation2 + $0xc18] sm:$0xff]
      %v4851 = vld [vmem:[#allocation2 + $0xc20] sm:$0xff]
      %v4852 = vld [vmem:[#allocation2 + $0xc28] sm:$0xff]
      %v4853 = vld [vmem:[#allocation2 + $0xc30] sm:$0xff]
      %v4854 = vld [vmem:[#allocation2 + $0xc38] sm:$0xff]
      %v4855 = vld [vmem:[#allocation2 + $0xc40] sm:$0xff]
      %v4856 = vld [vmem:[#allocation2 + $0xc48] sm:$0xff]
      %v4857 = vld [vmem:[#allocation2 + $0xc50] sm:$0xff]
      %v4858 = vld [vmem:[#allocation2 + $0xc58] sm:$0xff]
      %v4859 = vld [vmem:[#allocation2 + $0xc60] sm:$0xff]
      %v4860 = vld [vmem:[#allocation2 + $0xc68] sm:$0xff]
      %v4861 = vld [vmem:[#allocation2 + $0xc70] sm:$0xff]
      %v4862 = vld [vmem:[#allocation2 + $0xc78] sm:$0xff]
      %v4863 = vld [vmem:[#allocation2 + $0xc80] sm:$0xff]
      %v4864 = vld [vmem:[#allocation2 + $0xc88] sm:$0xff]
      %v4865 = vld [vmem:[#allocation2 + $0xc90] sm:$0xff]
      %v4866 = vld [vmem:[#allocation2 + $0xc98] sm:$0xff]
      %v4867 = vld [vmem:[#allocation2 + $0xca0] sm:$0xff]
      %v4868 = vld [vmem:[#allocation2 + $0xca8] sm:$0xff]
      %v4869 = vld [vmem:[#allocation2 + $0xcb0] sm:$0xff]
      %v4870 = vld [vmem:[#allocation2 + $0xcb8] sm:$0xff]
      %v4871 = vld [vmem:[#allocation2 + $0xcc0] sm:$0xff]
      %v4872 = vld [vmem:[#allocation2 + $0xcc8] sm:$0xff]
      %v4873 = vld [vmem:[#allocation2 + $0xcd0] sm:$0xff]
      %v4874 = vld [vmem:[#allocation2 + $0xcd8] sm:$0xff]
      %v4875 = vld [vmem:[#allocation2 + $0xce0] sm:$0xff]
      %v4876 = vld [vmem:[#allocation2 + $0xce8] sm:$0xff]
      %v4877 = vld [vmem:[#allocation2 + $0xcf0] sm:$0xff]
      %v4878 = vld [vmem:[#allocation2 + $0xcf8] sm:$0xff]
      %v4879 = vld [vmem:[#allocation2 + $0xd00] sm:$0xff]
      %v4880 = vld [vmem:[#allocation2 + $0xd08] sm:$0xff]
      %v4881 = vld [vmem:[#allocation2 + $0xd10] sm:$0xff]
      %v4882 = vld [vmem:[#allocation2 + $0xd18] sm:$0xff]
      %v4883 = vld [vmem:[#allocation2 + $0xd20] sm:$0xff]
      %v4884 = vld [vmem:[#allocation2 + $0xd28] sm:$0xff]
      %v4885 = vld [vmem:[#allocation2 + $0xd30] sm:$0xff]
      %v4886 = vld [vmem:[#allocation2 + $0xd38] sm:$0xff]
      %v4887 = vld [vmem:[#allocation2 + $0xd40] sm:$0xff]
      %v4888 = vld [vmem:[#allocation2 + $0xd48] sm:$0xff]
      %v4889 = vld [vmem:[#allocation2 + $0xd50] sm:$0xff]
      %v4890 = vld [vmem:[#allocation2 + $0xd58] sm:$0xff]
      %v4891 = vld [vmem:[#allocation2 + $0xd60] sm:$0xff]
      %v4892 = vld [vmem:[#allocation2 + $0xd68] sm:$0xff]
      %v4893 = vld [vmem:[#allocation2 + $0xd70] sm:$0xff]
      %v4894 = vld [vmem:[#allocation2 + $0xd78] sm:$0xff]
      %v4895 = vld [vmem:[#allocation2 + $0xd80] sm:$0xff]
      %v4896 = vld [vmem:[#allocation2 + $0xd88] sm:$0xff]
      %v4897 = vld [vmem:[#allocation2 + $0xd90] sm:$0xff]
      %v4898 = vld [vmem:[#allocation2 + $0xd98] sm:$0xff]
      %v4899 = vld [vmem:[#allocation2 + $0xda0] sm:$0xff]
      %v4900 = vld [vmem:[#allocation2 + $0xda8] sm:$0xff]
      %v4901 = vld [vmem:[#allocation2 + $0xdb0] sm:$0xff]
      %v4902 = vld [vmem:[#allocation2 + $0xdb8] sm:$0xff]
      %v4903 = vld [vmem:[#allocation2 + $0xdc0] sm:$0xff]
      %v4904 = vld [vmem:[#allocation2 + $0xdc8] sm:$0xff]
      %v4905 = vld [vmem:[#allocation2 + $0xdd0] sm:$0xff]
      %v4906 = vld [vmem:[#allocation2 + $0xdd8] sm:$0xff]
      %v4907 = vld [vmem:[#allocation2 + $0xde0] sm:$0xff]
      %v4908 = vld [vmem:[#allocation2 + $0xde8] sm:$0xff]
      %v4909 = vld [vmem:[#allocation2 + $0xdf0] sm:$0xff]
      %v4910 = vld [vmem:[#allocation2 + $0xdf8] sm:$0xff]
      %v4911 = vld [vmem:[#allocation2 + $0xe00] sm:$0xff]
      %v4912 = vld [vmem:[#allocation2 + $0xe08] sm:$0xff]
      %v4913 = vld [vmem:[#allocation2 + $0xe10] sm:$0xff]
      %v4914 = vld [vmem:[#allocation2 + $0xe18] sm:$0xff]
      %v4915 = vld [vmem:[#allocation2 + $0xe20] sm:$0xff]
      %v4916 = vld [vmem:[#allocation2 + $0xe28] sm:$0xff]
      %v4917 = vld [vmem:[#allocation2 + $0xe30] sm:$0xff]
      %v4918 = vld [vmem:[#allocation2 + $0xe38] sm:$0xff]
      %v4919 = vld [vmem:[#allocation2 + $0xe40] sm:$0xff]
      %v4920 = vld [vmem:[#allocation2 + $0xe48] sm:$0xff]
      %v4921 = vld [vmem:[#allocation2 + $0xe50] sm:$0xff]
      %v4922 = vld [vmem:[#allocation2 + $0xe58] sm:$0xff]
      %v4923 = vld [vmem:[#allocation2 + $0xe60] sm:$0xff]
      %v4924 = vld [vmem:[#allocation2 + $0xe68] sm:$0xff]
      %v4925 = vld [vmem:[#allocation2 + $0xe70] sm:$0xff]
      %v4926 = vld [vmem:[#allocation2 + $0xe78] sm:$0xff]
      %v4927 = vld [vmem:[#allocation2 + $0xe80] sm:$0xff]
      %v4928 = vld [vmem:[#allocation2 + $0xe88] sm:$0xff]
      %v4929 = vld [vmem:[#allocation2 + $0xe90] sm:$0xff]
      %v4930 = vld [vmem:[#allocation2 + $0xe98] sm:$0xff]
      %v4931 = vld [vmem:[#allocation2 + $0xea0] sm:$0xff]
      %v4932 = vld [vmem:[#allocation2 + $0xea8] sm:$0xff]
      %v4933 = vld [vmem:[#allocation2 + $0xeb0] sm:$0xff]
      %v4934 = vld [vmem:[#allocation2 + $0xeb8] sm:$0xff]
      %v4935 = vld [vmem:[#allocation2 + $0xec0] sm:$0xff]
      %v4936 = vld [vmem:[#allocation2 + $0xec8] sm:$0xff]
      %v4937 = vld [vmem:[#allocation2 + $0xed0] sm:$0xff]
      %v4938 = vld [vmem:[#allocation2 + $0xed8] sm:$0xff]
      %v4939 = vld [vmem:[#allocation2 + $0xee0] sm:$0xff]
      %v4940 = vld [vmem:[#allocation2 + $0xee8] sm:$0xff]
      %v4941 = vld [vmem:[#allocation2 + $0xef0] sm:$0xff]
      %v4942 = vld [vmem:[#allocation2 + $0xef8] sm:$0xff]
      %v4943 = vld [vmem:[#allocation2 + $0xf00] sm:$0xff]
      %v4944 = vld [vmem:[#allocation2 + $0xf08] sm:$0xff]
      %v4945 = vld [vmem:[#allocation2 + $0xf10] sm:$0xff]
      %v4946 = vld [vmem:[#allocation2 + $0xf18] sm:$0xff]
      %v4947 = vld [vmem:[%s2] sm:$0xff]
      %4949 = vset.pattern.permute.xlu0 0
      %4950 = vperm.xlu0 %4949, %v4947
      %v4951 = vpop.permute.xlu0 %4950
      %v4961 = vunpack.c.l.b16 %v4455
      %v4962 = vunpack.c.h.b16 %v4455
      %v4963 = vunpack.c.l.b16 %v4456
      %v4964 = vunpack.c.h.b16 %v4456
      %v4965 = vunpack.c.l.b16 %v4457
      %v4966 = vunpack.c.h.b16 %v4457
      %v4967 = vunpack.c.l.b16 %v4458
      %v4968 = vunpack.c.h.b16 %v4458
      %v4969 = vunpack.c.l.b16 %v4459
      %v4970 = vunpack.c.h.b16 %v4459
      %v4971 = vunpack.c.l.b16 %v4460
      %v4972 = vunpack.c.h.b16 %v4460
      %v4973 = vunpack.c.l.b16 %v4461
      %v4974 = vunpack.c.h.b16 %v4461
      %v4975 = vunpack.c.l.b16 %v4462
      %v4976 = vunpack.c.h.b16 %v4462
      %v4977 = vpack.c.b16 %v4961, %v4961
      %v4978 = vpack.c.b16 %v4962, %v4962
      %v4979 = vpack.c.b16 %v4963, %v4963
      %v4980 = vpack.c.b16 %v4964, %v4964
      %v4981 = vpack.c.b16 %v4965, %v4965
      %v4982 = vpack.c.b16 %v4966, %v4966
      %v4983 = vpack.c.b16 %v4967, %v4967
      %v4984 = vpack.c.b16 %v4968, %v4968
      %v4985 = vpack.c.b16 %v4969, %v4969
      %v4986 = vpack.c.b16 %v4970, %v4970
      %v4987 = vpack.c.b16 %v4971, %v4971
      %v4988 = vpack.c.b16 %v4972, %v4972
      %v4989 = vpack.c.b16 %v4973, %v4973
      %v4990 = vpack.c.b16 %v4974, %v4974
      %v4991 = vpack.c.b16 %v4975, %v4975
      %v4992 = vpack.c.b16 %v4976, %v4976
      %v5492 = vunpack.c.l.b16 %v4463
      %v5493 = vunpack.c.h.b16 %v4463
      %v5494 = vunpack.c.l.b16 %v4464
      %v5495 = vunpack.c.h.b16 %v4464
      %v5496 = vunpack.c.l.b16 %v4465
      %v5497 = vunpack.c.h.b16 %v4465
      %v5498 = vunpack.c.l.b16 %v4466
      %v5499 = vunpack.c.h.b16 %v4466
      %v5500 = vunpack.c.l.b16 %v4467
      %v5501 = vunpack.c.h.b16 %v4467
      %v5502 = vunpack.c.l.b16 %v4468
      %v5503 = vunpack.c.h.b16 %v4468
      %v5504 = vunpack.c.l.b16 %v4469
      %v5505 = vunpack.c.h.b16 %v4469
      %v5506 = vunpack.c.l.b16 %v4470
      %v5507 = vunpack.c.h.b16 %v4470
      %v5508 = vunpack.c.l.b16 %v4471
      %v5509 = vunpack.c.h.b16 %v4471
      %v5510 = vunpack.c.l.b16 %v4472
      %v5511 = vunpack.c.h.b16 %v4472
      %v5512 = vunpack.c.l.b16 %v4473
      %v5513 = vunpack.c.h.b16 %v4473
      %v5514 = vunpack.c.l.b16 %v4474
      %v5515 = vunpack.c.h.b16 %v4474
      %v5516 = vunpack.c.l.b16 %v4475
      %v5517 = vunpack.c.h.b16 %v4475
      %v5518 = vunpack.c.l.b16 %v4476
      %v5519 = vunpack.c.h.b16 %v4476
      %v5520 = vunpack.c.l.b16 %v4477
      %v5521 = vunpack.c.h.b16 %v4477
      %v5522 = vunpack.c.l.b16 %v4478
      %v5523 = vunpack.c.h.b16 %v4478
      %v5524 = vunpack.c.l.b16 %v4479
      %v5525 = vunpack.c.h.b16 %v4479
      %v5526 = vunpack.c.l.b16 %v4480
      %v5527 = vunpack.c.h.b16 %v4480
      %v5528 = vunpack.c.l.b16 %v4481
      %v5529 = vunpack.c.h.b16 %v4481
      %v5530 = vunpack.c.l.b16 %v4482
      %v5531 = vunpack.c.h.b16 %v4482
      %v5532 = vunpack.c.l.b16 %v4483
      %v5533 = vunpack.c.h.b16 %v4483
      %v5534 = vunpack.c.l.b16 %v4484
      %v5535 = vunpack.c.h.b16 %v4484
      %v5536 = vunpack.c.l.b16 %v4485
      %v5537 = vunpack.c.h.b16 %v4485
      %v5538 = vunpack.c.l.b16 %v4486
      %v5539 = vunpack.c.h.b16 %v4486
      %v5540 = vunpack.c.l.b16 %v4487
      %v5541 = vunpack.c.h.b16 %v4487
      %v5542 = vunpack.c.l.b16 %v4488
      %v5543 = vunpack.c.h.b16 %v4488
      %v5544 = vunpack.c.l.b16 %v4489
      %v5545 = vunpack.c.h.b16 %v4489
      %v5546 = vunpack.c.l.b16 %v4490
      %v5547 = vunpack.c.h.b16 %v4490
      %v5548 = vunpack.c.l.b16 %v4491
      %v5549 = vunpack.c.h.b16 %v4491
      %v5550 = vunpack.c.l.b16 %v4492
      %v5551 = vunpack.c.h.b16 %v4492
      %v5552 = vunpack.c.l.b16 %v4493
      %v5553 = vunpack.c.h.b16 %v4493
      %v5554 = vunpack.c.l.b16 %v4494
      %v5555 = vunpack.c.h.b16 %v4494
      %v5556 = vunpack.c.l.b16 %v4495
      %v5557 = vunpack.c.h.b16 %v4495
      %v5558 = vunpack.c.l.b16 %v4496
      %v5559 = vunpack.c.h.b16 %v4496
      %v5560 = vunpack.c.l.b16 %v4497
      %v5561 = vunpack.c.h.b16 %v4497
      %v5562 = vunpack.c.l.b16 %v4498
      %v5563 = vunpack.c.h.b16 %v4498
      %v5564 = vunpack.c.l.b16 %v4499
      %v5565 = vunpack.c.h.b16 %v4499
      %v5566 = vunpack.c.l.b16 %v4500
      %v5567 = vunpack.c.h.b16 %v4500
      %v5568 = vunpack.c.l.b16 %v4501
      %v5569 = vunpack.c.h.b16 %v4501
      %v5570 = vunpack.c.l.b16 %v4502
      %v5571 = vunpack.c.h.b16 %v4502
      %v5572 = vunpack.c.l.b16 %v4503
      %v5573 = vunpack.c.h.b16 %v4503
      %v5574 = vunpack.c.l.b16 %v4504
      %v5575 = vunpack.c.h.b16 %v4504
      %v5576 = vunpack.c.l.b16 %v4505
      %v5577 = vunpack.c.h.b16 %v4505
      %v5578 = vunpack.c.l.b16 %v4506
      %v5579 = vunpack.c.h.b16 %v4506
      %v5580 = vunpack.c.l.b16 %v4507
      %v5581 = vunpack.c.h.b16 %v4507
      %v5582 = vunpack.c.l.b16 %v4508
      %v5583 = vunpack.c.h.b16 %v4508
      %v5584 = vunpack.c.l.b16 %v4509
      %v5585 = vunpack.c.h.b16 %v4509
      %v5586 = vunpack.c.l.b16 %v4510
      %v5587 = vunpack.c.h.b16 %v4510
      %v5588 = vunpack.c.l.b16 %v4511
      %v5589 = vunpack.c.h.b16 %v4511
      %v5590 = vunpack.c.l.b16 %v4512
      %v5591 = vunpack.c.h.b16 %v4512
      %v5592 = vunpack.c.l.b16 %v4513
      %v5593 = vunpack.c.h.b16 %v4513
      %v5594 = vunpack.c.l.b16 %v4514
      %v5595 = vunpack.c.h.b16 %v4514
      %v5596 = vunpack.c.l.b16 %v4515
      %v5597 = vunpack.c.h.b16 %v4515
      %v5598 = vunpack.c.l.b16 %v4516
      %v5599 = vunpack.c.h.b16 %v4516
      %v5600 = vunpack.c.l.b16 %v4517
      %v5601 = vunpack.c.h.b16 %v4517
      %v5602 = vunpack.c.l.b16 %v4518
      %v5603 = vunpack.c.h.b16 %v4518
      %v5604 = vunpack.c.l.b16 %v4519
      %v5605 = vunpack.c.h.b16 %v4519
      %v5606 = vunpack.c.l.b16 %v4520
      %v5607 = vunpack.c.h.b16 %v4520
      %v5608 = vunpack.c.l.b16 %v4521
      %v5609 = vunpack.c.h.b16 %v4521
      %v5610 = vunpack.c.l.b16 %v4522
      %v5611 = vunpack.c.h.b16 %v4522
      %v5612 = vunpack.c.l.b16 %v4523
      %v5613 = vunpack.c.h.b16 %v4523
      %v5614 = vunpack.c.l.b16 %v4524
      %v5615 = vunpack.c.h.b16 %v4524
      %v5616 = vunpack.c.l.b16 %v4525
      %v5617 = vunpack.c.h.b16 %v4525
      %v5618 = vunpack.c.l.b16 %v4526
      %v5619 = vunpack.c.h.b16 %v4526
      %v5620 = vunpack.c.l.b16 %v4527
      %v5621 = vunpack.c.h.b16 %v4527
      %v5622 = vunpack.c.l.b16 %v4528
      %v5623 = vunpack.c.h.b16 %v4528
      %v5624 = vunpack.c.l.b16 %v4529
      %v5625 = vunpack.c.h.b16 %v4529
      %v5626 = vunpack.c.l.b16 %v4530
      %v5627 = vunpack.c.h.b16 %v4530
      %v5628 = vunpack.c.l.b16 %v4531
      %v5629 = vunpack.c.h.b16 %v4531
      %v5630 = vunpack.c.l.b16 %v4532
      %v5631 = vunpack.c.h.b16 %v4532
      %v5632 = vunpack.c.l.b16 %v4533
      %v5633 = vunpack.c.h.b16 %v4533
      %v5634 = vunpack.c.l.b16 %v4534
      %v5635 = vunpack.c.h.b16 %v4534
      %v5636 = vunpack.c.l.b16 %v4535
      %v5637 = vunpack.c.h.b16 %v4535
      %v5638 = vunpack.c.l.b16 %v4536
      %v5639 = vunpack.c.h.b16 %v4536
      %v5640 = vunpack.c.l.b16 %v4537
      %v5641 = vunpack.c.h.b16 %v4537
      %v5642 = vunpack.c.l.b16 %v4538
      %v5643 = vunpack.c.h.b16 %v4538
      %v5644 = vunpack.c.l.b16 %v4539
      %v5645 = vunpack.c.h.b16 %v4539
      %v5646 = vunpack.c.l.b16 %v4540
      %v5647 = vunpack.c.h.b16 %v4540
      %v5648 = vunpack.c.l.b16 %v4541
      %v5649 = vunpack.c.h.b16 %v4541
      %v5650 = vunpack.c.l.b16 %v4542
      %v5651 = vunpack.c.h.b16 %v4542
      %v5652 = vunpack.c.l.b16 %v4543
      %v5653 = vunpack.c.h.b16 %v4543
      %v5654 = vunpack.c.l.b16 %v4544
      %v5655 = vunpack.c.h.b16 %v4544
      %v5656 = vunpack.c.l.b16 %v4545
      %v5657 = vunpack.c.h.b16 %v4545
      %v5658 = vunpack.c.l.b16 %v4546
      %v5659 = vunpack.c.h.b16 %v4546
      %v5660 = vunpack.c.l.b16 %v4547
      %v5661 = vunpack.c.h.b16 %v4547
      %v5662 = vunpack.c.l.b16 %v4548
      %v5663 = vunpack.c.h.b16 %v4548
      %v5664 = vunpack.c.l.b16 %v4549
      %v5665 = vunpack.c.h.b16 %v4549
      %v5666 = vunpack.c.l.b16 %v4550
      %v5667 = vunpack.c.h.b16 %v4550
      %v5668 = vunpack.c.l.b16 %v4551
      %v5669 = vunpack.c.h.b16 %v4551
      %v5670 = vunpack.c.l.b16 %v4552
      %v5671 = vunpack.c.h.b16 %v4552
      %v5672 = vunpack.c.l.b16 %v4553
      %v5673 = vunpack.c.h.b16 %v4553
      %v5674 = vunpack.c.l.b16 %v4554
      %v5675 = vunpack.c.h.b16 %v4554
      %v5676 = vunpack.c.l.b16 %v4555
      %v5677 = vunpack.c.h.b16 %v4555
      %v5678 = vunpack.c.l.b16 %v4556
      %v5679 = vunpack.c.h.b16 %v4556
      %v5680 = vunpack.c.l.b16 %v4557
      %v5681 = vunpack.c.h.b16 %v4557
      %v5682 = vunpack.c.l.b16 %v4558
      %v5683 = vunpack.c.h.b16 %v4558
      %v5684 = vunpack.c.l.b16 %v4559
      %v5685 = vunpack.c.h.b16 %v4559
      %v5686 = vunpack.c.l.b16 %v4560
      %v5687 = vunpack.c.h.b16 %v4560
      %v5688 = vunpack.c.l.b16 %v4561
      %v5689 = vunpack.c.h.b16 %v4561
      %v5690 = vunpack.c.l.b16 %v4562
      %v5691 = vunpack.c.h.b16 %v4562
      %v5692 = vunpack.c.l.b16 %v4563
      %v5693 = vunpack.c.h.b16 %v4563
      %v5694 = vunpack.c.l.b16 %v4564
      %v5695 = vunpack.c.h.b16 %v4564
      %v5696 = vunpack.c.l.b16 %v4565
      %v5697 = vunpack.c.h.b16 %v4565
      %v5698 = vunpack.c.l.b16 %v4566
      %v5699 = vunpack.c.h.b16 %v4566
      %v5700 = vunpack.c.l.b16 %v4567
      %v5701 = vunpack.c.h.b16 %v4567
      %v5702 = vunpack.c.l.b16 %v4568
      %v5703 = vunpack.c.h.b16 %v4568
      %v5704 = vunpack.c.l.b16 %v4569
      %v5705 = vunpack.c.h.b16 %v4569
      %v5706 = vunpack.c.l.b16 %v4570
      %v5707 = vunpack.c.h.b16 %v4570
      %v5708 = vunpack.c.l.b16 %v4571
      %v5709 = vunpack.c.h.b16 %v4571
      %v5710 = vunpack.c.l.b16 %v4572
      %v5711 = vunpack.c.h.b16 %v4572
      %v5712 = vunpack.c.l.b16 %v4573
      %v5713 = vunpack.c.h.b16 %v4573
      %v5714 = vunpack.c.l.b16 %v4574
      %v5715 = vunpack.c.h.b16 %v4574
      %v5716 = vunpack.c.l.b16 %v4575
      %v5717 = vunpack.c.h.b16 %v4575
      %v5718 = vunpack.c.l.b16 %v4576
      %v5719 = vunpack.c.h.b16 %v4576
      %v5720 = vunpack.c.l.b16 %v4577
      %v5721 = vunpack.c.h.b16 %v4577
      %v5722 = vunpack.c.l.b16 %v4578
      %v5723 = vunpack.c.h.b16 %v4578
      %v5724 = vunpack.c.l.b16 %v4579
      %v5725 = vunpack.c.h.b16 %v4579
      %v5726 = vunpack.c.l.b16 %v4580
      %v5727 = vunpack.c.h.b16 %v4580
      %v5728 = vunpack.c.l.b16 %v4581
      %v5729 = vunpack.c.h.b16 %v4581
      %v5730 = vunpack.c.l.b16 %v4582
      %v5731 = vunpack.c.h.b16 %v4582
      %v5732 = vunpack.c.l.b16 %v4583
      %v5733 = vunpack.c.h.b16 %v4583
      %v5734 = vunpack.c.l.b16 %v4584
      %v5735 = vunpack.c.h.b16 %v4584
      %v5736 = vunpack.c.l.b16 %v4585
      %v5737 = vunpack.c.h.b16 %v4585
      %v5738 = vunpack.c.l.b16 %v4586
      %v5739 = vunpack.c.h.b16 %v4586
      %v5740 = vunpack.c.l.b16 %v4587
      %v5741 = vunpack.c.h.b16 %v4587
      %v5742 = vunpack.c.l.b16 %v4588
      %v5743 = vunpack.c.h.b16 %v4588
      %v5744 = vunpack.c.l.b16 %v4589
      %v5745 = vunpack.c.h.b16 %v4589
      %v5746 = vunpack.c.l.b16 %v4590
      %v5747 = vunpack.c.h.b16 %v4590
      %v5748 = vunpack.c.l.b16 %v4591
      %v5749 = vunpack.c.h.b16 %v4591
      %v5750 = vunpack.c.l.b16 %v4592
      %v5751 = vunpack.c.h.b16 %v4592
      %v5752 = vunpack.c.l.b16 %v4593
      %v5753 = vunpack.c.h.b16 %v4593
      %v5754 = vunpack.c.l.b16 %v4594
      %v5755 = vunpack.c.h.b16 %v4594
      %v5756 = vunpack.c.l.b16 %v4595
      %v5757 = vunpack.c.h.b16 %v4595
      %v5758 = vunpack.c.l.b16 %v4596
      %v5759 = vunpack.c.h.b16 %v4596
      %v5760 = vunpack.c.l.b16 %v4597
      %v5761 = vunpack.c.h.b16 %v4597
      %v5762 = vunpack.c.l.b16 %v4598
      %v5763 = vunpack.c.h.b16 %v4598
      %v5764 = vunpack.c.l.b16 %v4599
      %v5765 = vunpack.c.h.b16 %v4599
      %v5766 = vunpack.c.l.b16 %v4600
      %v5767 = vunpack.c.h.b16 %v4600
      %v5768 = vunpack.c.l.b16 %v4601
      %v5769 = vunpack.c.h.b16 %v4601
      %v5770 = vunpack.c.l.b16 %v4602
      %v5771 = vunpack.c.h.b16 %v4602
      %v5772 = vunpack.c.l.b16 %v4603
      %v5773 = vunpack.c.h.b16 %v4603
      %v5774 = vunpack.c.l.b16 %v4604
      %v5775 = vunpack.c.h.b16 %v4604
      %v5776 = vunpack.c.l.b16 %v4605
      %v5777 = vunpack.c.h.b16 %v4605
      %v5778 = vunpack.c.l.b16 %v4606
      %v5779 = vunpack.c.h.b16 %v4606
      %v5780 = vunpack.c.l.b16 %v4607
      %v5781 = vunpack.c.h.b16 %v4607
      %v5782 = vunpack.c.l.b16 %v4608
      %v5783 = vunpack.c.h.b16 %v4608
      %v5784 = vunpack.c.l.b16 %v4609
      %v5785 = vunpack.c.h.b16 %v4609
      %v5786 = vunpack.c.l.b16 %v4610
      %v5787 = vunpack.c.h.b16 %v4610
      %v5788 = vunpack.c.l.b16 %v4611
      %v5789 = vunpack.c.h.b16 %v4611
      %v5790 = vunpack.c.l.b16 %v4612
      %v5791 = vunpack.c.h.b16 %v4612
      %v5792 = vunpack.c.l.b16 %v4613
      %v5793 = vunpack.c.h.b16 %v4613
      %v5794 = vunpack.c.l.b16 %v4614
      %v5795 = vunpack.c.h.b16 %v4614
      %v5796 = vunpack.c.l.b16 %v4615
      %v5797 = vunpack.c.h.b16 %v4615
      %v5798 = vunpack.c.l.b16 %v4616
      %v5799 = vunpack.c.h.b16 %v4616
      %v5800 = vunpack.c.l.b16 %v4617
      %v5801 = vunpack.c.h.b16 %v4617
      %v5802 = vunpack.c.l.b16 %v4618
      %v5803 = vunpack.c.h.b16 %v4618
      %v5804 = vunpack.c.l.b16 %v4619
      %v5805 = vunpack.c.h.b16 %v4619
      %v5806 = vunpack.c.l.b16 %v4620
      %v5807 = vunpack.c.h.b16 %v4620
      %v5808 = vunpack.c.l.b16 %v4621
      %v5809 = vunpack.c.h.b16 %v4621
      %v5810 = vunpack.c.l.b16 %v4622
      %v5811 = vunpack.c.h.b16 %v4622
      %v5812 = vunpack.c.l.b16 %v4623
      %v5813 = vunpack.c.h.b16 %v4623
      %v5814 = vunpack.c.l.b16 %v4624
      %v5815 = vunpack.c.h.b16 %v4624
      %v5816 = vunpack.c.l.b16 %v4625
      %v5817 = vunpack.c.h.b16 %v4625
      %v5818 = vunpack.c.l.b16 %v4626
      %v5819 = vunpack.c.h.b16 %v4626
      %v5820 = vunpack.c.l.b16 %v4627
      %v5821 = vunpack.c.h.b16 %v4627
      %v5822 = vunpack.c.l.b16 %v4628
      %v5823 = vunpack.c.h.b16 %v4628
      %v5824 = vunpack.c.l.b16 %v4629
      %v5825 = vunpack.c.h.b16 %v4629
      %v5826 = vunpack.c.l.b16 %v4630
      %v5827 = vunpack.c.h.b16 %v4630
      %v5828 = vunpack.c.l.b16 %v4631
      %v5829 = vunpack.c.h.b16 %v4631
      %v5830 = vunpack.c.l.b16 %v4632
      %v5831 = vunpack.c.h.b16 %v4632
      %v5832 = vunpack.c.l.b16 %v4633
      %v5833 = vunpack.c.h.b16 %v4633
      %v5834 = vunpack.c.l.b16 %v4634
      %v5835 = vunpack.c.h.b16 %v4634
      %v5836 = vunpack.c.l.b16 %v4635
      %v5837 = vunpack.c.h.b16 %v4635
      %v5838 = vunpack.c.l.b16 %v4636
      %v5839 = vunpack.c.h.b16 %v4636
      %v5840 = vunpack.c.l.b16 %v4637
      %v5841 = vunpack.c.h.b16 %v4637
      %v5842 = vunpack.c.l.b16 %v4638
      %v5843 = vunpack.c.h.b16 %v4638
      %v5844 = vunpack.c.l.b16 %v4639
      %v5845 = vunpack.c.h.b16 %v4639
      %v5846 = vunpack.c.l.b16 %v4640
      %v5847 = vunpack.c.h.b16 %v4640
      %v5848 = vunpack.c.l.b16 %v4641
      %v5849 = vunpack.c.h.b16 %v4641
      %v5850 = vunpack.c.l.b16 %v4642
      %v5851 = vunpack.c.h.b16 %v4642
      %v5852 = vunpack.c.l.b16 %v4643
      %v5853 = vunpack.c.h.b16 %v4643
      %v5854 = vunpack.c.l.b16 %v4644
      %v5855 = vunpack.c.h.b16 %v4644
      %v5856 = vunpack.c.l.b16 %v4645
      %v5857 = vunpack.c.h.b16 %v4645
      %v5858 = vunpack.c.l.b16 %v4646
      %v5859 = vunpack.c.h.b16 %v4646
      %v5860 = vunpack.c.l.b16 %v4647
      %v5861 = vunpack.c.h.b16 %v4647
      %v5862 = vunpack.c.l.b16 %v4648
      %v5863 = vunpack.c.h.b16 %v4648
      %v5864 = vunpack.c.l.b16 %v4649
      %v5865 = vunpack.c.h.b16 %v4649
      %v5866 = vunpack.c.l.b16 %v4650
      %v5867 = vunpack.c.h.b16 %v4650
      %v5868 = vunpack.c.l.b16 %v4651
      %v5869 = vunpack.c.h.b16 %v4651
      %v5870 = vunpack.c.l.b16 %v4652
      %v5871 = vunpack.c.h.b16 %v4652
      %v5872 = vunpack.c.l.b16 %v4653
      %v5873 = vunpack.c.h.b16 %v4653
      %v5874 = vunpack.c.l.b16 %v4654
      %v5875 = vunpack.c.h.b16 %v4654
      %v5876 = vunpack.c.l.b16 %v4655
      %v5877 = vunpack.c.h.b16 %v4655
      %v5878 = vunpack.c.l.b16 %v4656
      %v5879 = vunpack.c.h.b16 %v4656
      %v5880 = vunpack.c.l.b16 %v4657
      %v5881 = vunpack.c.h.b16 %v4657
      %v5882 = vunpack.c.l.b16 %v4658
      %v5883 = vunpack.c.h.b16 %v4658
      %v5884 = vunpack.c.l.b16 %v4659
      %v5885 = vunpack.c.h.b16 %v4659
      %v5886 = vunpack.c.l.b16 %v4660
      %v5887 = vunpack.c.h.b16 %v4660
      %v5888 = vunpack.c.l.b16 %v4661
      %v5889 = vunpack.c.h.b16 %v4661
      %v5890 = vunpack.c.l.b16 %v4662
      %v5891 = vunpack.c.h.b16 %v4662
      %v5892 = vunpack.c.l.b16 %v4663
      %v5893 = vunpack.c.h.b16 %v4663
      %v5894 = vunpack.c.l.b16 %v4664
      %v5895 = vunpack.c.h.b16 %v4664
      %v5896 = vunpack.c.l.b16 %v4665
      %v5897 = vunpack.c.h.b16 %v4665
      %v5898 = vunpack.c.l.b16 %v4666
      %v5899 = vunpack.c.h.b16 %v4666
      %v5900 = vunpack.c.l.b16 %v4667
      %v5901 = vunpack.c.h.b16 %v4667
      %v5902 = vunpack.c.l.b16 %v4668
      %v5903 = vunpack.c.h.b16 %v4668
      %v5904 = vunpack.c.l.b16 %v4669
      %v5905 = vunpack.c.h.b16 %v4669
      %v5906 = vunpack.c.l.b16 %v4670
      %v5907 = vunpack.c.h.b16 %v4670
      %v5908 = vunpack.c.l.b16 %v4671
      %v5909 = vunpack.c.h.b16 %v4671
      %v5910 = vunpack.c.l.b16 %v4672
      %v5911 = vunpack.c.h.b16 %v4672
      %v5912 = vunpack.c.l.b16 %v4673
      %v5913 = vunpack.c.h.b16 %v4673
      %v5914 = vunpack.c.l.b16 %v4674
      %v5915 = vunpack.c.h.b16 %v4674
      %v5916 = vunpack.c.l.b16 %v4675
      %v5917 = vunpack.c.h.b16 %v4675
      %v5918 = vunpack.c.l.b16 %v4676
      %v5919 = vunpack.c.h.b16 %v4676
      %v5920 = vunpack.c.l.b16 %v4677
      %v5921 = vunpack.c.h.b16 %v4677
      %v5922 = vunpack.c.l.b16 %v4678
      %v5923 = vunpack.c.h.b16 %v4678
      %v5924 = vunpack.c.l.b16 %v4679
      %v5925 = vunpack.c.h.b16 %v4679
      %v5926 = vunpack.c.l.b16 %v4680
      %v5927 = vunpack.c.h.b16 %v4680
      %v5928 = vunpack.c.l.b16 %v4681
      %v5929 = vunpack.c.h.b16 %v4681
      %v5930 = vunpack.c.l.b16 %v4682
      %v5931 = vunpack.c.h.b16 %v4682
      %v5932 = vunpack.c.l.b16 %v4683
      %v5933 = vunpack.c.h.b16 %v4683
      %v5934 = vunpack.c.l.b16 %v4684
      %v5935 = vunpack.c.h.b16 %v4684
      %v5936 = vunpack.c.l.b16 %v4685
      %v5937 = vunpack.c.h.b16 %v4685
      %v5938 = vunpack.c.l.b16 %v4686
      %v5939 = vunpack.c.h.b16 %v4686
      %v5940 = vunpack.c.l.b16 %v4687
      %v5941 = vunpack.c.h.b16 %v4687
      %v5942 = vunpack.c.l.b16 %v4688
      %v5943 = vunpack.c.h.b16 %v4688
      %v5944 = vunpack.c.l.b16 %v4689
      %v5945 = vunpack.c.h.b16 %v4689
      %v5946 = vunpack.c.l.b16 %v4690
      %v5947 = vunpack.c.h.b16 %v4690
      %v5948 = vunpack.c.l.b16 %v4691
      %v5949 = vunpack.c.h.b16 %v4691
      %v5950 = vunpack.c.l.b16 %v4692
      %v5951 = vunpack.c.h.b16 %v4692
      %v5952 = vunpack.c.l.b16 %v4693
      %v5953 = vunpack.c.h.b16 %v4693
      %v5954 = vunpack.c.l.b16 %v4694
      %v5955 = vunpack.c.h.b16 %v4694
      %v5956 = vunpack.c.l.b16 %v4695
      %v5957 = vunpack.c.h.b16 %v4695
      %v5958 = vunpack.c.l.b16 %v4696
      %v5959 = vunpack.c.h.b16 %v4696
      %v5960 = vunpack.c.l.b16 %v4697
      %v5961 = vunpack.c.h.b16 %v4697
      %v5962 = vunpack.c.l.b16 %v4698
      %v5963 = vunpack.c.h.b16 %v4698
      %v5964 = vunpack.c.l.b16 %v4699
      %v5965 = vunpack.c.h.b16 %v4699
      %v5966 = vunpack.c.l.b16 %v4700
      %v5967 = vunpack.c.h.b16 %v4700
      %v5968 = vunpack.c.l.b16 %v4701
      %v5969 = vunpack.c.h.b16 %v4701
      %v5970 = vunpack.c.l.b16 %v4702
      %v5971 = vunpack.c.h.b16 %v4702
      %v5972 = vunpack.c.l.b16 %v4703
      %v5973 = vunpack.c.h.b16 %v4703
      %v5974 = vunpack.c.l.b16 %v4704
      %v5975 = vunpack.c.h.b16 %v4704
      %v5976 = vunpack.c.l.b16 %v4705
      %v5977 = vunpack.c.h.b16 %v4705
      %v5978 = vunpack.c.l.b16 %v4706
      %v5979 = vunpack.c.h.b16 %v4706
      %v5980 = vunpack.c.l.b16 %v4707
      %v5981 = vunpack.c.h.b16 %v4707
      %v5982 = vunpack.c.l.b16 %v4708
      %v5983 = vunpack.c.h.b16 %v4708
      %v5984 = vunpack.c.l.b16 %v4709
      %v5985 = vunpack.c.h.b16 %v4709
      %v5986 = vunpack.c.l.b16 %v4710
      %v5987 = vunpack.c.h.b16 %v4710
      %v5988 = vunpack.c.l.b16 %v4711
      %v5989 = vunpack.c.h.b16 %v4711
      %v5990 = vunpack.c.l.b16 %v4712
      %v5991 = vunpack.c.h.b16 %v4712
      %v5992 = vunpack.c.l.b16 %v4713
      %v5993 = vunpack.c.h.b16 %v4713
      %v5994 = vunpack.c.l.b16 %v4714
      %v5995 = vunpack.c.h.b16 %v4714
      %v5996 = vunpack.c.l.b16 %v4715
      %v5997 = vunpack.c.h.b16 %v4715
      %v5998 = vunpack.c.l.b16 %v4716
      %v5999 = vunpack.c.h.b16 %v4716
      %v6000 = vunpack.c.l.b16 %v4717
      %v6001 = vunpack.c.h.b16 %v4717
      %v6002 = vunpack.c.l.b16 %v4718
      %v6003 = vunpack.c.h.b16 %v4718
      %v6004 = vunpack.c.l.b16 %v4719
      %v6005 = vunpack.c.h.b16 %v4719
      %v6006 = vunpack.c.l.b16 %v4720
      %v6007 = vunpack.c.h.b16 %v4720
      %v6008 = vunpack.c.l.b16 %v4721
      %v6009 = vunpack.c.h.b16 %v4721
      %v6010 = vunpack.c.l.b16 %v4722
      %v6011 = vunpack.c.h.b16 %v4722
      %v6012 = vunpack.c.l.b16 %v4723
      %v6013 = vunpack.c.h.b16 %v4723
      %v6014 = vunpack.c.l.b16 %v4724
      %v6015 = vunpack.c.h.b16 %v4724
      %v6016 = vunpack.c.l.b16 %v4725
      %v6017 = vunpack.c.h.b16 %v4725
      %v6018 = vunpack.c.l.b16 %v4726
      %v6019 = vunpack.c.h.b16 %v4726
      %v6020 = vunpack.c.l.b16 %v4727
      %v6021 = vunpack.c.h.b16 %v4727
      %v6022 = vunpack.c.l.b16 %v4728
      %v6023 = vunpack.c.h.b16 %v4728
      %v6024 = vunpack.c.l.b16 %v4729
      %v6025 = vunpack.c.h.b16 %v4729
      %v6026 = vunpack.c.l.b16 %v4730
      %v6027 = vunpack.c.h.b16 %v4730
      %v6028 = vunpack.c.l.b16 %v4731
      %v6029 = vunpack.c.h.b16 %v4731
      %v6030 = vunpack.c.l.b16 %v4732
      %v6031 = vunpack.c.h.b16 %v4732
      %v6032 = vunpack.c.l.b16 %v4733
      %v6033 = vunpack.c.h.b16 %v4733
      %v6034 = vunpack.c.l.b16 %v4734
      %v6035 = vunpack.c.h.b16 %v4734
      %v6036 = vunpack.c.l.b16 %v4735
      %v6037 = vunpack.c.h.b16 %v4735
      %v6038 = vunpack.c.l.b16 %v4736
      %v6039 = vunpack.c.h.b16 %v4736
      %v6040 = vunpack.c.l.b16 %v4737
      %v6041 = vunpack.c.h.b16 %v4737
      %v6042 = vunpack.c.l.b16 %v4738
      %v6043 = vunpack.c.h.b16 %v4738
      %v6044 = vunpack.c.l.b16 %v4739
      %v6045 = vunpack.c.h.b16 %v4739
      %v6046 = vunpack.c.l.b16 %v4740
      %v6047 = vunpack.c.h.b16 %v4740
      %v6048 = vunpack.c.l.b16 %v4741
      %v6049 = vunpack.c.h.b16 %v4741
      %v6050 = vunpack.c.l.b16 %v4742
      %v6051 = vunpack.c.h.b16 %v4742
      %v6052 = vunpack.c.l.b16 %v4743
      %v6053 = vunpack.c.h.b16 %v4743
      %v6054 = vunpack.c.l.b16 %v4744
      %v6055 = vunpack.c.h.b16 %v4744
      %v6056 = vunpack.c.l.b16 %v4745
      %v6057 = vunpack.c.h.b16 %v4745
      %v6058 = vunpack.c.l.b16 %v4746
      %v6059 = vunpack.c.h.b16 %v4746
      %v6060 = vunpack.c.l.b16 %v4747
      %v6061 = vunpack.c.h.b16 %v4747
      %v6062 = vunpack.c.l.b16 %v4748
      %v6063 = vunpack.c.h.b16 %v4748
      %v6064 = vunpack.c.l.b16 %v4749
      %v6065 = vunpack.c.h.b16 %v4749
      %v6066 = vunpack.c.l.b16 %v4750
      %v6067 = vunpack.c.h.b16 %v4750
      %v6068 = vunpack.c.l.b16 %v4751
      %v6069 = vunpack.c.h.b16 %v4751
      %v6070 = vunpack.c.l.b16 %v4752
      %v6071 = vunpack.c.h.b16 %v4752
      %v6072 = vunpack.c.l.b16 %v4753
      %v6073 = vunpack.c.h.b16 %v4753
      %v6074 = vunpack.c.l.b16 %v4754
      %v6075 = vunpack.c.h.b16 %v4754
      %v6076 = vunpack.c.l.b16 %v4755
      %v6077 = vunpack.c.h.b16 %v4755
      %v6078 = vunpack.c.l.b16 %v4756
      %v6079 = vunpack.c.h.b16 %v4756
      %v6080 = vunpack.c.l.b16 %v4757
      %v6081 = vunpack.c.h.b16 %v4757
      %v6082 = vunpack.c.l.b16 %v4758
      %v6083 = vunpack.c.h.b16 %v4758
      %v6084 = vunpack.c.l.b16 %v4759
      %v6085 = vunpack.c.h.b16 %v4759
      %v6086 = vunpack.c.l.b16 %v4760
      %v6087 = vunpack.c.h.b16 %v4760
      %v6088 = vunpack.c.l.b16 %v4761
      %v6089 = vunpack.c.h.b16 %v4761
      %v6090 = vunpack.c.l.b16 %v4762
      %v6091 = vunpack.c.h.b16 %v4762
      %v6092 = vunpack.c.l.b16 %v4763
      %v6093 = vunpack.c.h.b16 %v4763
      %v6094 = vunpack.c.l.b16 %v4764
      %v6095 = vunpack.c.h.b16 %v4764
      %v6096 = vunpack.c.l.b16 %v4765
      %v6097 = vunpack.c.h.b16 %v4765
      %v6098 = vunpack.c.l.b16 %v4766
      %v6099 = vunpack.c.h.b16 %v4766
      %v6100 = vunpack.c.l.b16 %v4767
      %v6101 = vunpack.c.h.b16 %v4767
      %v6102 = vunpack.c.l.b16 %v4768
      %v6103 = vunpack.c.h.b16 %v4768
      %v6104 = vunpack.c.l.b16 %v4769
      %v6105 = vunpack.c.h.b16 %v4769
      %v6106 = vunpack.c.l.b16 %v4770
      %v6107 = vunpack.c.h.b16 %v4770
      %v6108 = vunpack.c.l.b16 %v4771
      %v6109 = vunpack.c.h.b16 %v4771
      %v6110 = vunpack.c.l.b16 %v4772
      %v6111 = vunpack.c.h.b16 %v4772
      %v6112 = vunpack.c.l.b16 %v4773
      %v6113 = vunpack.c.h.b16 %v4773
      %v6114 = vunpack.c.l.b16 %v4774
      %v6115 = vunpack.c.h.b16 %v4774
      %v6116 = vunpack.c.l.b16 %v4775
      %v6117 = vunpack.c.h.b16 %v4775
      %v6118 = vunpack.c.l.b16 %v4776
      %v6119 = vunpack.c.h.b16 %v4776
      %v6120 = vunpack.c.l.b16 %v4777
      %v6121 = vunpack.c.h.b16 %v4777
      %v6122 = vunpack.c.l.b16 %v4778
      %v6123 = vunpack.c.h.b16 %v4778
      %v6124 = vunpack.c.l.b16 %v4779
      %v6125 = vunpack.c.h.b16 %v4779
      %v6126 = vunpack.c.l.b16 %v4780
      %v6127 = vunpack.c.h.b16 %v4780
      %v6128 = vunpack.c.l.b16 %v4781
      %v6129 = vunpack.c.h.b16 %v4781
      %v6130 = vunpack.c.l.b16 %v4782
      %v6131 = vunpack.c.h.b16 %v4782
      %v6132 = vunpack.c.l.b16 %v4783
      %v6133 = vunpack.c.h.b16 %v4783
      %v6134 = vunpack.c.l.b16 %v4784
      %v6135 = vunpack.c.h.b16 %v4784
      %v6136 = vunpack.c.l.b16 %v4785
      %v6137 = vunpack.c.h.b16 %v4785
      %v6138 = vunpack.c.l.b16 %v4786
      %v6139 = vunpack.c.h.b16 %v4786
      %v6140 = vunpack.c.l.b16 %v4787
      %v6141 = vunpack.c.h.b16 %v4787
      %v6142 = vunpack.c.l.b16 %v4788
      %v6143 = vunpack.c.h.b16 %v4788
      %v6144 = vunpack.c.l.b16 %v4789
      %v6145 = vunpack.c.h.b16 %v4789
      %v6146 = vunpack.c.l.b16 %v4790
      %v6147 = vunpack.c.h.b16 %v4790
      %v6148 = vunpack.c.l.b16 %v4791
      %v6149 = vunpack.c.h.b16 %v4791
      %v6150 = vunpack.c.l.b16 %v4792
      %v6151 = vunpack.c.h.b16 %v4792
      %v6152 = vunpack.c.l.b16 %v4793
      %v6153 = vunpack.c.h.b16 %v4793
      %v6154 = vunpack.c.l.b16 %v4794
      %v6155 = vunpack.c.h.b16 %v4794
      %v6156 = vunpack.c.l.b16 %v4795
      %v6157 = vunpack.c.h.b16 %v4795
      %v6158 = vunpack.c.l.b16 %v4796
      %v6159 = vunpack.c.h.b16 %v4796
      %v6160 = vunpack.c.l.b16 %v4797
      %v6161 = vunpack.c.h.b16 %v4797
      %v6162 = vunpack.c.l.b16 %v4798
      %v6163 = vunpack.c.h.b16 %v4798
      %v6164 = vunpack.c.l.b16 %v4799
      %v6165 = vunpack.c.h.b16 %v4799
      %v6166 = vunpack.c.l.b16 %v4800
      %v6167 = vunpack.c.h.b16 %v4800
      %v6168 = vunpack.c.l.b16 %v4801
      %v6169 = vunpack.c.h.b16 %v4801
      %v6170 = vunpack.c.l.b16 %v4802
      %v6171 = vunpack.c.h.b16 %v4802
      %v6172 = vunpack.c.l.b16 %v4803
      %v6173 = vunpack.c.h.b16 %v4803
      %v6174 = vunpack.c.l.b16 %v4804
      %v6175 = vunpack.c.h.b16 %v4804
      %v6176 = vunpack.c.l.b16 %v4805
      %v6177 = vunpack.c.h.b16 %v4805
      %v6178 = vunpack.c.l.b16 %v4806
      %v6179 = vunpack.c.h.b16 %v4806
      %v6180 = vunpack.c.l.b16 %v4807
      %v6181 = vunpack.c.h.b16 %v4807
      %v6182 = vunpack.c.l.b16 %v4808
      %v6183 = vunpack.c.h.b16 %v4808
      %v6184 = vunpack.c.l.b16 %v4809
      %v6185 = vunpack.c.h.b16 %v4809
      %v6186 = vunpack.c.l.b16 %v4810
      %v6187 = vunpack.c.h.b16 %v4810
      %v6188 = vunpack.c.l.b16 %v4811
      %v6189 = vunpack.c.h.b16 %v4811
      %v6190 = vunpack.c.l.b16 %v4812
      %v6191 = vunpack.c.h.b16 %v4812
      %v6192 = vunpack.c.l.b16 %v4813
      %v6193 = vunpack.c.h.b16 %v4813
      %v6194 = vunpack.c.l.b16 %v4814
      %v6195 = vunpack.c.h.b16 %v4814
      %v6196 = vunpack.c.l.b16 %v4815
      %v6197 = vunpack.c.h.b16 %v4815
      %v6198 = vunpack.c.l.b16 %v4816
      %v6199 = vunpack.c.h.b16 %v4816
      %v6200 = vunpack.c.l.b16 %v4817
      %v6201 = vunpack.c.h.b16 %v4817
      %v6202 = vunpack.c.l.b16 %v4818
      %v6203 = vunpack.c.h.b16 %v4818
      %v6204 = vunpack.c.l.b16 %v4819
      %v6205 = vunpack.c.h.b16 %v4819
      %v6206 = vunpack.c.l.b16 %v4820
      %v6207 = vunpack.c.h.b16 %v4820
      %v6208 = vunpack.c.l.b16 %v4821
      %v6209 = vunpack.c.h.b16 %v4821
      %v6210 = vunpack.c.l.b16 %v4822
      %v6211 = vunpack.c.h.b16 %v4822
      %v6212 = vunpack.c.l.b16 %v4823
      %v6213 = vunpack.c.h.b16 %v4823
      %v6214 = vunpack.c.l.b16 %v4824
      %v6215 = vunpack.c.h.b16 %v4824
      %v6216 = vunpack.c.l.b16 %v4825
      %v6217 = vunpack.c.h.b16 %v4825
      %v6218 = vunpack.c.l.b16 %v4826
      %v6219 = vunpack.c.h.b16 %v4826
      %v6220 = vunpack.c.l.b16 %v4827
      %v6221 = vunpack.c.h.b16 %v4827
      %v6222 = vunpack.c.l.b16 %v4828
      %v6223 = vunpack.c.h.b16 %v4828
      %v6224 = vunpack.c.l.b16 %v4829
      %v6225 = vunpack.c.h.b16 %v4829
      %v6226 = vunpack.c.l.b16 %v4830
      %v6227 = vunpack.c.h.b16 %v4830
      %v6228 = vunpack.c.l.b16 %v4831
      %v6229 = vunpack.c.h.b16 %v4831
      %v6230 = vunpack.c.l.b16 %v4832
      %v6231 = vunpack.c.h.b16 %v4832
      %v6232 = vunpack.c.l.b16 %v4833
      %v6233 = vunpack.c.h.b16 %v4833
      %v6234 = vunpack.c.l.b16 %v4834
      %v6235 = vunpack.c.h.b16 %v4834
      %v6236 = vunpack.c.l.b16 %v4835
      %v6237 = vunpack.c.h.b16 %v4835
      %v6238 = vunpack.c.l.b16 %v4836
      %v6239 = vunpack.c.h.b16 %v4836
      %v6240 = vunpack.c.l.b16 %v4837
      %v6241 = vunpack.c.h.b16 %v4837
      %v6242 = vunpack.c.l.b16 %v4838
      %v6243 = vunpack.c.h.b16 %v4838
      %v6244 = vunpack.c.l.b16 %v4839
      %v6245 = vunpack.c.h.b16 %v4839
      %v6246 = vunpack.c.l.b16 %v4840
      %v6247 = vunpack.c.h.b16 %v4840
      %v6248 = vunpack.c.l.b16 %v4841
      %v6249 = vunpack.c.h.b16 %v4841
      %v6250 = vunpack.c.l.b16 %v4842
      %v6251 = vunpack.c.h.b16 %v4842
      %v6252 = vunpack.c.l.b16 %v4843
      %v6253 = vunpack.c.h.b16 %v4843
      %v6254 = vunpack.c.l.b16 %v4844
      %v6255 = vunpack.c.h.b16 %v4844
      %v6256 = vunpack.c.l.b16 %v4845
      %v6257 = vunpack.c.h.b16 %v4845
      %v6258 = vunpack.c.l.b16 %v4846
      %v6259 = vunpack.c.h.b16 %v4846
      %v6260 = vunpack.c.l.b16 %v4847
      %v6261 = vunpack.c.h.b16 %v4847
      %v6262 = vunpack.c.l.b16 %v4848
      %v6263 = vunpack.c.h.b16 %v4848
      %v6264 = vunpack.c.l.b16 %v4849
      %v6265 = vunpack.c.h.b16 %v4849
      %v6266 = vunpack.c.l.b16 %v4850
      %v6267 = vunpack.c.h.b16 %v4850
      %v6268 = vunpack.c.l.b16 %v4851
      %v6269 = vunpack.c.h.b16 %v4851
      %v6270 = vunpack.c.l.b16 %v4852
      %v6271 = vunpack.c.h.b16 %v4852
      %v6272 = vunpack.c.l.b16 %v4853
      %v6273 = vunpack.c.h.b16 %v4853
      %v6274 = vunpack.c.l.b16 %v4854
      %v6275 = vunpack.c.h.b16 %v4854
      %v6276 = vunpack.c.l.b16 %v4855
      %v6277 = vunpack.c.h.b16 %v4855
      %v6278 = vunpack.c.l.b16 %v4856
      %v6279 = vunpack.c.h.b16 %v4856
      %v6280 = vunpack.c.l.b16 %v4857
      %v6281 = vunpack.c.h.b16 %v4857
      %v6282 = vunpack.c.l.b16 %v4858
      %v6283 = vunpack.c.h.b16 %v4858
      %v6284 = vunpack.c.l.b16 %v4859
      %v6285 = vunpack.c.h.b16 %v4859
      %v6286 = vunpack.c.l.b16 %v4860
      %v6287 = vunpack.c.h.b16 %v4860
      %v6288 = vunpack.c.l.b16 %v4861
      %v6289 = vunpack.c.h.b16 %v4861
      %v6290 = vunpack.c.l.b16 %v4862
      %v6291 = vunpack.c.h.b16 %v4862
      %v6292 = vunpack.c.l.b16 %v4863
      %v6293 = vunpack.c.h.b16 %v4863
      %v6294 = vunpack.c.l.b16 %v4864
      %v6295 = vunpack.c.h.b16 %v4864
      %v6296 = vunpack.c.l.b16 %v4865
      %v6297 = vunpack.c.h.b16 %v4865
      %v6298 = vunpack.c.l.b16 %v4866
      %v6299 = vunpack.c.h.b16 %v4866
      %v6300 = vunpack.c.l.b16 %v4867
      %v6301 = vunpack.c.h.b16 %v4867
      %v6302 = vunpack.c.l.b16 %v4868
      %v6303 = vunpack.c.h.b16 %v4868
      %v6304 = vunpack.c.l.b16 %v4869
      %v6305 = vunpack.c.h.b16 %v4869
      %v6306 = vunpack.c.l.b16 %v4870
      %v6307 = vunpack.c.h.b16 %v4870
      %v6308 = vunpack.c.l.b16 %v4871
      %v6309 = vunpack.c.h.b16 %v4871
      %v6310 = vunpack.c.l.b16 %v4872
      %v6311 = vunpack.c.h.b16 %v4872
      %v6312 = vunpack.c.l.b16 %v4873
      %v6313 = vunpack.c.h.b16 %v4873
      %v6314 = vunpack.c.l.b16 %v4874
      %v6315 = vunpack.c.h.b16 %v4874
      %v6316 = vunpack.c.l.b16 %v4875
      %v6317 = vunpack.c.h.b16 %v4875
      %v6318 = vunpack.c.l.b16 %v4876
      %v6319 = vunpack.c.h.b16 %v4876
      %v6320 = vunpack.c.l.b16 %v4877
      %v6321 = vunpack.c.h.b16 %v4877
      %v6322 = vunpack.c.l.b16 %v4878
      %v6323 = vunpack.c.h.b16 %v4878
      %v6324 = vunpack.c.l.b16 %v4879
      %v6325 = vunpack.c.h.b16 %v4879
      %v6326 = vunpack.c.l.b16 %v4880
      %v6327 = vunpack.c.h.b16 %v4880
      %v6328 = vunpack.c.l.b16 %v4881
      %v6329 = vunpack.c.h.b16 %v4881
      %v6330 = vunpack.c.l.b16 %v4882
      %v6331 = vunpack.c.h.b16 %v4882
      %v6332 = vunpack.c.l.b16 %v4883
      %v6333 = vunpack.c.h.b16 %v4883
      %v6334 = vunpack.c.l.b16 %v4884
      %v6335 = vunpack.c.h.b16 %v4884
      %v6336 = vunpack.c.l.b16 %v4885
      %v6337 = vunpack.c.h.b16 %v4885
      %v6338 = vunpack.c.l.b16 %v4886
      %v6339 = vunpack.c.h.b16 %v4886
      %v6340 = vunpack.c.l.b16 %v4887
      %v6341 = vunpack.c.h.b16 %v4887
      %v6342 = vunpack.c.l.b16 %v4888
      %v6343 = vunpack.c.h.b16 %v4888
      %v6344 = vunpack.c.l.b16 %v4889
      %v6345 = vunpack.c.h.b16 %v4889
      %v6346 = vunpack.c.l.b16 %v4890
      %v6347 = vunpack.c.h.b16 %v4890
      %v6348 = vunpack.c.l.b16 %v4891
      %v6349 = vunpack.c.h.b16 %v4891
      %v6350 = vunpack.c.l.b16 %v4892
      %v6351 = vunpack.c.h.b16 %v4892
      %v6352 = vunpack.c.l.b16 %v4893
      %v6353 = vunpack.c.h.b16 %v4893
      %v6354 = vunpack.c.l.b16 %v4894
      %v6355 = vunpack.c.h.b16 %v4894
      %v6356 = vunpack.c.l.b16 %v4895
      %v6357 = vunpack.c.h.b16 %v4895
      %v6358 = vunpack.c.l.b16 %v4896
      %v6359 = vunpack.c.h.b16 %v4896
      %v6360 = vunpack.c.l.b16 %v4897
      %v6361 = vunpack.c.h.b16 %v4897
      %v6362 = vunpack.c.l.b16 %v4898
      %v6363 = vunpack.c.h.b16 %v4898
      %v6364 = vunpack.c.l.b16 %v4899
      %v6365 = vunpack.c.h.b16 %v4899
      %v6366 = vunpack.c.l.b16 %v4900
      %v6367 = vunpack.c.h.b16 %v4900
      %v6368 = vunpack.c.l.b16 %v4901
      %v6369 = vunpack.c.h.b16 %v4901
      %v6370 = vunpack.c.l.b16 %v4902
      %v6371 = vunpack.c.h.b16 %v4902
      %v6372 = vunpack.c.l.b16 %v4903
      %v6373 = vunpack.c.h.b16 %v4903
      %v6374 = vunpack.c.l.b16 %v4904
      %v6375 = vunpack.c.h.b16 %v4904
      %v6376 = vunpack.c.l.b16 %v4905
      %v6377 = vunpack.c.h.b16 %v4905
      %v6378 = vunpack.c.l.b16 %v4906
      %v6379 = vunpack.c.h.b16 %v4906
      %v6380 = vunpack.c.l.b16 %v4907
      %v6381 = vunpack.c.h.b16 %v4907
      %v6382 = vunpack.c.l.b16 %v4908
      %v6383 = vunpack.c.h.b16 %v4908
      %v6384 = vunpack.c.l.b16 %v4909
      %v6385 = vunpack.c.h.b16 %v4909
      %v6386 = vunpack.c.l.b16 %v4910
      %v6387 = vunpack.c.h.b16 %v4910
      %v6388 = vunpack.c.l.b16 %v4911
      %v6389 = vunpack.c.h.b16 %v4911
      %v6390 = vunpack.c.l.b16 %v4912
      %v6391 = vunpack.c.h.b16 %v4912
      %v6392 = vunpack.c.l.b16 %v4913
      %v6393 = vunpack.c.h.b16 %v4913
      %v6394 = vunpack.c.l.b16 %v4914
      %v6395 = vunpack.c.h.b16 %v4914
      %v6396 = vunpack.c.l.b16 %v4915
      %v6397 = vunpack.c.h.b16 %v4915
      %v6398 = vunpack.c.l.b16 %v4916
      %v6399 = vunpack.c.h.b16 %v4916
      %v6400 = vunpack.c.l.b16 %v4917
      %v6401 = vunpack.c.h.b16 %v4917
      %v6402 = vunpack.c.l.b16 %v4918
      %v6403 = vunpack.c.h.b16 %v4918
      %v6404 = vunpack.c.l.b16 %v4919
      %v6405 = vunpack.c.h.b16 %v4919
      %v6406 = vunpack.c.l.b16 %v4920
      %v6407 = vunpack.c.h.b16 %v4920
      %v6408 = vunpack.c.l.b16 %v4921
      %v6409 = vunpack.c.h.b16 %v4921
      %v6410 = vunpack.c.l.b16 %v4922
      %v6411 = vunpack.c.h.b16 %v4922
      %v6412 = vunpack.c.l.b16 %v4923
      %v6413 = vunpack.c.h.b16 %v4923
      %v6414 = vunpack.c.l.b16 %v4924
      %v6415 = vunpack.c.h.b16 %v4924
      %v6416 = vunpack.c.l.b16 %v4925
      %v6417 = vunpack.c.h.b16 %v4925
      %v6418 = vunpack.c.l.b16 %v4926
      %v6419 = vunpack.c.h.b16 %v4926
      %v6420 = vunpack.c.l.b16 %v4927
      %v6421 = vunpack.c.h.b16 %v4927
      %v6422 = vunpack.c.l.b16 %v4928
      %v6423 = vunpack.c.h.b16 %v4928
      %v6424 = vunpack.c.l.b16 %v4929
      %v6425 = vunpack.c.h.b16 %v4929
      %v6426 = vunpack.c.l.b16 %v4930
      %v6427 = vunpack.c.h.b16 %v4930
      %v6428 = vunpack.c.l.b16 %v4931
      %v6429 = vunpack.c.h.b16 %v4931
      %v6430 = vunpack.c.l.b16 %v4932
      %v6431 = vunpack.c.h.b16 %v4932
      %v6432 = vunpack.c.l.b16 %v4933
      %v6433 = vunpack.c.h.b16 %v4933
      %v6434 = vunpack.c.l.b16 %v4934
      %v6435 = vunpack.c.h.b16 %v4934
      %v6436 = vunpack.c.l.b16 %v4935
      %v6437 = vunpack.c.h.b16 %v4935
      %v6438 = vunpack.c.l.b16 %v4936
      %v6439 = vunpack.c.h.b16 %v4936
      %v6440 = vunpack.c.l.b16 %v4937
      %v6441 = vunpack.c.h.b16 %v4937
      %v6442 = vunpack.c.l.b16 %v4938
      %v6443 = vunpack.c.h.b16 %v4938
      %v6444 = vunpack.c.l.b16 %v4939
      %v6445 = vunpack.c.h.b16 %v4939
      %v6446 = vunpack.c.l.b16 %v4940
      %v6447 = vunpack.c.h.b16 %v4940
      %v6448 = vunpack.c.l.b16 %v4941
      %v6449 = vunpack.c.h.b16 %v4941
      %v6450 = vunpack.c.l.b16 %v4942
      %v6451 = vunpack.c.h.b16 %v4942
      %v6452 = vunpack.c.l.b16 %v4943
      %v6453 = vunpack.c.h.b16 %v4943
      %v6454 = vunpack.c.l.b16 %v4944
      %v6455 = vunpack.c.h.b16 %v4944
      %v6456 = vunpack.c.l.b16 %v4945
      %v6457 = vunpack.c.h.b16 %v4945
      %v6458 = vunpack.c.l.b16 %v4946
      %v6459 = vunpack.c.h.b16 %v4946
      %v6460 = vpack.c.b16 %v5496, %v5492
      %v6461 = vpack.c.b16 %v5497, %v5493
      %v6462 = vpack.c.b16 %v5498, %v5494
      %v6463 = vpack.c.b16 %v5499, %v5495
      %v6464 = vpack.c.b16 %v5504, %v5500
      %v6465 = vpack.c.b16 %v5505, %v5501
      %v6466 = vpack.c.b16 %v5506, %v5502
      %v6467 = vpack.c.b16 %v5507, %v5503
      %v6468 = vpack.c.b16 %v5512, %v5508
      %v6469 = vpack.c.b16 %v5513, %v5509
      %v6470 = vpack.c.b16 %v5514, %v5510
      %v6471 = vpack.c.b16 %v5515, %v5511
      %v6472 = vpack.c.b16 %v5520, %v5516
      %v6473 = vpack.c.b16 %v5521, %v5517
      %v6474 = vpack.c.b16 %v5522, %v5518
      %v6475 = vpack.c.b16 %v5523, %v5519
      %v6476 = vpack.c.b16 %v5528, %v5524
      %v6477 = vpack.c.b16 %v5529, %v5525
      %v6478 = vpack.c.b16 %v5530, %v5526
      %v6479 = vpack.c.b16 %v5531, %v5527
      %v6480 = vpack.c.b16 %v5536, %v5532
      %v6481 = vpack.c.b16 %v5537, %v5533
      %v6482 = vpack.c.b16 %v5538, %v5534
      %v6483 = vpack.c.b16 %v5539, %v5535
      %v6484 = vpack.c.b16 %v5544, %v5540
      %v6485 = vpack.c.b16 %v5545, %v5541
      %v6486 = vpack.c.b16 %v5546, %v5542
      %v6487 = vpack.c.b16 %v5547, %v5543
      %v6488 = vpack.c.b16 %v5552, %v5548
      %v6489 = vpack.c.b16 %v5553, %v5549
      %v6490 = vpack.c.b16 %v5554, %v5550
      %v6491 = vpack.c.b16 %v5555, %v5551
      %v6492 = vpack.c.b16 %v5560, %v5556
      %v6493 = vpack.c.b16 %v5561, %v5557
      %v6494 = vpack.c.b16 %v5562, %v5558
      %v6495 = vpack.c.b16 %v5563, %v5559
      %v6496 = vpack.c.b16 %v5568, %v5564
      %v6497 = vpack.c.b16 %v5569, %v5565
      %v6498 = vpack.c.b16 %v5570, %v5566
      %v6499 = vpack.c.b16 %v5571, %v5567
      %v6500 = vpack.c.b16 %v5576, %v5572
      %v6501 = vpack.c.b16 %v5577, %v5573
      %v6502 = vpack.c.b16 %v5578, %v5574
      %v6503 = vpack.c.b16 %v5579, %v5575
      %v6504 = vpack.c.b16 %v5584, %v5580
      %v6505 = vpack.c.b16 %v5585, %v5581
      %v6506 = vpack.c.b16 %v5586, %v5582
      %v6507 = vpack.c.b16 %v5587, %v5583
      %v6508 = vpack.c.b16 %v5592, %v5588
      %v6509 = vpack.c.b16 %v5593, %v5589
      %v6510 = vpack.c.b16 %v5594, %v5590
      %v6511 = vpack.c.b16 %v5595, %v5591
      %v6512 = vpack.c.b16 %v5600, %v5596
      %v6513 = vpack.c.b16 %v5601, %v5597
      %v6514 = vpack.c.b16 %v5602, %v5598
      %v6515 = vpack.c.b16 %v5603, %v5599
      %v6516 = vpack.c.b16 %v5608, %v5604
      %v6517 = vpack.c.b16 %v5609, %v5605
      %v6518 = vpack.c.b16 %v5610, %v5606
      %v6519 = vpack.c.b16 %v5611, %v5607
      %v6520 = vpack.c.b16 %v5616, %v5612
      %v6521 = vpack.c.b16 %v5617, %v5613
      %v6522 = vpack.c.b16 %v5618, %v5614
      %v6523 = vpack.c.b16 %v5619, %v5615
      %v6524 = vpack.c.b16 %v5624, %v5620
      %v6525 = vpack.c.b16 %v5625, %v5621
      %v6526 = vpack.c.b16 %v5626, %v5622
      %v6527 = vpack.c.b16 %v5627, %v5623
      %v6528 = vpack.c.b16 %v5632, %v5628
      %v6529 = vpack.c.b16 %v5633, %v5629
      %v6530 = vpack.c.b16 %v5634, %v5630
      %v6531 = vpack.c.b16 %v5635, %v5631
      %v6532 = vpack.c.b16 %v5640, %v5636
      %v6533 = vpack.c.b16 %v5641, %v5637
      %v6534 = vpack.c.b16 %v5642, %v5638
      %v6535 = vpack.c.b16 %v5643, %v5639
      %v6536 = vpack.c.b16 %v5648, %v5644
      %v6537 = vpack.c.b16 %v5649, %v5645
      %v6538 = vpack.c.b16 %v5650, %v5646
      %v6539 = vpack.c.b16 %v5651, %v5647
      %v6540 = vpack.c.b16 %v5656, %v5652
      %v6541 = vpack.c.b16 %v5657, %v5653
      %v6542 = vpack.c.b16 %v5658, %v5654
      %v6543 = vpack.c.b16 %v5659, %v5655
      %v6544 = vpack.c.b16 %v5664, %v5660
      %v6545 = vpack.c.b16 %v5665, %v5661
      %v6546 = vpack.c.b16 %v5666, %v5662
      %v6547 = vpack.c.b16 %v5667, %v5663
      %v6548 = vpack.c.b16 %v5672, %v5668
      %v6549 = vpack.c.b16 %v5673, %v5669
      %v6550 = vpack.c.b16 %v5674, %v5670
      %v6551 = vpack.c.b16 %v5675, %v5671
      %v6552 = vpack.c.b16 %v5680, %v5676
      %v6553 = vpack.c.b16 %v5681, %v5677
      %v6554 = vpack.c.b16 %v5682, %v5678
      %v6555 = vpack.c.b16 %v5683, %v5679
      %v6556 = vpack.c.b16 %v5688, %v5684
      %v6557 = vpack.c.b16 %v5689, %v5685
      %v6558 = vpack.c.b16 %v5690, %v5686
      %v6559 = vpack.c.b16 %v5691, %v5687
      %v6560 = vpack.c.b16 %v5696, %v5692
      %v6561 = vpack.c.b16 %v5697, %v5693
      %v6562 = vpack.c.b16 %v5698, %v5694
      %v6563 = vpack.c.b16 %v5699, %v5695
      %v6564 = vpack.c.b16 %v5704, %v5700
      %v6565 = vpack.c.b16 %v5705, %v5701
      %v6566 = vpack.c.b16 %v5706, %v5702
      %v6567 = vpack.c.b16 %v5707, %v5703
      %v6568 = vpack.c.b16 %v5712, %v5708
      %v6569 = vpack.c.b16 %v5713, %v5709
      %v6570 = vpack.c.b16 %v5714, %v5710
      %v6571 = vpack.c.b16 %v5715, %v5711
      %v6572 = vpack.c.b16 %v5720, %v5716
      %v6573 = vpack.c.b16 %v5721, %v5717
      %v6574 = vpack.c.b16 %v5722, %v5718
      %v6575 = vpack.c.b16 %v5723, %v5719
      %v6576 = vpack.c.b16 %v5728, %v5724
      %v6577 = vpack.c.b16 %v5729, %v5725
      %v6578 = vpack.c.b16 %v5730, %v5726
      %v6579 = vpack.c.b16 %v5731, %v5727
      %v6580 = vpack.c.b16 %v5736, %v5732
      %v6581 = vpack.c.b16 %v5737, %v5733
      %v6582 = vpack.c.b16 %v5738, %v5734
      %v6583 = vpack.c.b16 %v5739, %v5735
      %v6584 = vpack.c.b16 %v5744, %v5740
      %v6585 = vpack.c.b16 %v5745, %v5741
      %v6586 = vpack.c.b16 %v5746, %v5742
      %v6587 = vpack.c.b16 %v5747, %v5743
      %v6588 = vpack.c.b16 %v5752, %v5748
      %v6589 = vpack.c.b16 %v5753, %v5749
      %v6590 = vpack.c.b16 %v5754, %v5750
      %v6591 = vpack.c.b16 %v5755, %v5751
      %v6592 = vpack.c.b16 %v5760, %v5756
      %v6593 = vpack.c.b16 %v5761, %v5757
      %v6594 = vpack.c.b16 %v5762, %v5758
      %v6595 = vpack.c.b16 %v5763, %v5759
      %v6596 = vpack.c.b16 %v5768, %v5764
      %v6597 = vpack.c.b16 %v5769, %v5765
      %v6598 = vpack.c.b16 %v5770, %v5766
      %v6599 = vpack.c.b16 %v5771, %v5767
      %v6600 = vpack.c.b16 %v5776, %v5772
      %v6601 = vpack.c.b16 %v5777, %v5773
      %v6602 = vpack.c.b16 %v5778, %v5774
      %v6603 = vpack.c.b16 %v5779, %v5775
      %v6604 = vpack.c.b16 %v5784, %v5780
      %v6605 = vpack.c.b16 %v5785, %v5781
      %v6606 = vpack.c.b16 %v5786, %v5782
      %v6607 = vpack.c.b16 %v5787, %v5783
      %v6608 = vpack.c.b16 %v5792, %v5788
      %v6609 = vpack.c.b16 %v5793, %v5789
      %v6610 = vpack.c.b16 %v5794, %v5790
      %v6611 = vpack.c.b16 %v5795, %v5791
      %v6612 = vpack.c.b16 %v5800, %v5796
      %v6613 = vpack.c.b16 %v5801, %v5797
      %v6614 = vpack.c.b16 %v5802, %v5798
      %v6615 = vpack.c.b16 %v5803, %v5799
      %v6616 = vpack.c.b16 %v5808, %v5804
      %v6617 = vpack.c.b16 %v5809, %v5805
      %v6618 = vpack.c.b16 %v5810, %v5806
      %v6619 = vpack.c.b16 %v5811, %v5807
      %v6620 = vpack.c.b16 %v5816, %v5812
      %v6621 = vpack.c.b16 %v5817, %v5813
      %v6622 = vpack.c.b16 %v5818, %v5814
      %v6623 = vpack.c.b16 %v5819, %v5815
      %v6624 = vpack.c.b16 %v5824, %v5820
      %v6625 = vpack.c.b16 %v5825, %v5821
      %v6626 = vpack.c.b16 %v5826, %v5822
      %v6627 = vpack.c.b16 %v5827, %v5823
      %v6628 = vpack.c.b16 %v5832, %v5828
      %v6629 = vpack.c.b16 %v5833, %v5829
      %v6630 = vpack.c.b16 %v5834, %v5830
      %v6631 = vpack.c.b16 %v5835, %v5831
      %v6632 = vpack.c.b16 %v5840, %v5836
      %v6633 = vpack.c.b16 %v5841, %v5837
      %v6634 = vpack.c.b16 %v5842, %v5838
      %v6635 = vpack.c.b16 %v5843, %v5839
      %v6636 = vpack.c.b16 %v5848, %v5844
      %v6637 = vpack.c.b16 %v5849, %v5845
      %v6638 = vpack.c.b16 %v5850, %v5846
      %v6639 = vpack.c.b16 %v5851, %v5847
      %v6640 = vpack.c.b16 %v5856, %v5852
      %v6641 = vpack.c.b16 %v5857, %v5853
      %v6642 = vpack.c.b16 %v5858, %v5854
      %v6643 = vpack.c.b16 %v5859, %v5855
      %v6644 = vpack.c.b16 %v5864, %v5860
      %v6645 = vpack.c.b16 %v5865, %v5861
      %v6646 = vpack.c.b16 %v5866, %v5862
      %v6647 = vpack.c.b16 %v5867, %v5863
      %v6648 = vpack.c.b16 %v5872, %v5868
      %v6649 = vpack.c.b16 %v5873, %v5869
      %v6650 = vpack.c.b16 %v5874, %v5870
      %v6651 = vpack.c.b16 %v5875, %v5871
      %v6652 = vpack.c.b16 %v5880, %v5876
      %v6653 = vpack.c.b16 %v5881, %v5877
      %v6654 = vpack.c.b16 %v5882, %v5878
      %v6655 = vpack.c.b16 %v5883, %v5879
      %v6656 = vpack.c.b16 %v5888, %v5884
      %v6657 = vpack.c.b16 %v5889, %v5885
      %v6658 = vpack.c.b16 %v5890, %v5886
      %v6659 = vpack.c.b16 %v5891, %v5887
      %v6660 = vpack.c.b16 %v5896, %v5892
      %v6661 = vpack.c.b16 %v5897, %v5893
      %v6662 = vpack.c.b16 %v5898, %v5894
      %v6663 = vpack.c.b16 %v5899, %v5895
      %v6664 = vpack.c.b16 %v5904, %v5900
      %v6665 = vpack.c.b16 %v5905, %v5901
      %v6666 = vpack.c.b16 %v5906, %v5902
      %v6667 = vpack.c.b16 %v5907, %v5903
      %v6668 = vpack.c.b16 %v5912, %v5908
      %v6669 = vpack.c.b16 %v5913, %v5909
      %v6670 = vpack.c.b16 %v5914, %v5910
      %v6671 = vpack.c.b16 %v5915, %v5911
      %v6672 = vpack.c.b16 %v5920, %v5916
      %v6673 = vpack.c.b16 %v5921, %v5917
      %v6674 = vpack.c.b16 %v5922, %v5918
      %v6675 = vpack.c.b16 %v5923, %v5919
      %v6676 = vpack.c.b16 %v5928, %v5924
      %v6677 = vpack.c.b16 %v5929, %v5925
      %v6678 = vpack.c.b16 %v5930, %v5926
      %v6679 = vpack.c.b16 %v5931, %v5927
      %v6680 = vpack.c.b16 %v5936, %v5932
      %v6681 = vpack.c.b16 %v5937, %v5933
      %v6682 = vpack.c.b16 %v5938, %v5934
      %v6683 = vpack.c.b16 %v5939, %v5935
      %v6684 = vpack.c.b16 %v5944, %v5940
      %v6685 = vpack.c.b16 %v5945, %v5941
      %v6686 = vpack.c.b16 %v5946, %v5942
      %v6687 = vpack.c.b16 %v5947, %v5943
      %v6688 = vpack.c.b16 %v5952, %v5948
      %v6689 = vpack.c.b16 %v5953, %v5949
      %v6690 = vpack.c.b16 %v5954, %v5950
      %v6691 = vpack.c.b16 %v5955, %v5951
      %v6692 = vpack.c.b16 %v5960, %v5956
      %v6693 = vpack.c.b16 %v5961, %v5957
      %v6694 = vpack.c.b16 %v5962, %v5958
      %v6695 = vpack.c.b16 %v5963, %v5959
      %v6696 = vpack.c.b16 %v5968, %v5964
      %v6697 = vpack.c.b16 %v5969, %v5965
      %v6698 = vpack.c.b16 %v5970, %v5966
      %v6699 = vpack.c.b16 %v5971, %v5967
      %v6700 = vpack.c.b16 %v5976, %v5972
      %v6701 = vpack.c.b16 %v5977, %v5973
      %v6702 = vpack.c.b16 %v5978, %v5974
      %v6703 = vpack.c.b16 %v5979, %v5975
      %v6704 = vpack.c.b16 %v5984, %v5980
      %v6705 = vpack.c.b16 %v5985, %v5981
      %v6706 = vpack.c.b16 %v5986, %v5982
      %v6707 = vpack.c.b16 %v5987, %v5983
      %v6708 = vpack.c.b16 %v5992, %v5988
      %v6709 = vpack.c.b16 %v5993, %v5989
      %v6710 = vpack.c.b16 %v5994, %v5990
      %v6711 = vpack.c.b16 %v5995, %v5991
      %v6712 = vpack.c.b16 %v6000, %v5996
      %v6713 = vpack.c.b16 %v6001, %v5997
      %v6714 = vpack.c.b16 %v6002, %v5998
      %v6715 = vpack.c.b16 %v6003, %v5999
      %v6716 = vpack.c.b16 %v6008, %v6004
      %v6717 = vpack.c.b16 %v6009, %v6005
      %v6718 = vpack.c.b16 %v6010, %v6006
      %v6719 = vpack.c.b16 %v6011, %v6007
      %v6720 = vpack.c.b16 %v6016, %v6012
      %v6721 = vpack.c.b16 %v6017, %v6013
      %v6722 = vpack.c.b16 %v6018, %v6014
      %v6723 = vpack.c.b16 %v6019, %v6015
      %v6724 = vpack.c.b16 %v6024, %v6020
      %v6725 = vpack.c.b16 %v6025, %v6021
      %v6726 = vpack.c.b16 %v6026, %v6022
      %v6727 = vpack.c.b16 %v6027, %v6023
      %v6728 = vpack.c.b16 %v6032, %v6028
      %v6729 = vpack.c.b16 %v6033, %v6029
      %v6730 = vpack.c.b16 %v6034, %v6030
      %v6731 = vpack.c.b16 %v6035, %v6031
      %v6732 = vpack.c.b16 %v6040, %v6036
      %v6733 = vpack.c.b16 %v6041, %v6037
      %v6734 = vpack.c.b16 %v6042, %v6038
      %v6735 = vpack.c.b16 %v6043, %v6039
      %v6736 = vpack.c.b16 %v6048, %v6044
      %v6737 = vpack.c.b16 %v6049, %v6045
      %v6738 = vpack.c.b16 %v6050, %v6046
      %v6739 = vpack.c.b16 %v6051, %v6047
      %v6740 = vpack.c.b16 %v6056, %v6052
      %v6741 = vpack.c.b16 %v6057, %v6053
      %v6742 = vpack.c.b16 %v6058, %v6054
      %v6743 = vpack.c.b16 %v6059, %v6055
      %v6744 = vpack.c.b16 %v6064, %v6060
      %v6745 = vpack.c.b16 %v6065, %v6061
      %v6746 = vpack.c.b16 %v6066, %v6062
      %v6747 = vpack.c.b16 %v6067, %v6063
      %v6748 = vpack.c.b16 %v6072, %v6068
      %v6749 = vpack.c.b16 %v6073, %v6069
      %v6750 = vpack.c.b16 %v6074, %v6070
      %v6751 = vpack.c.b16 %v6075, %v6071
      %v6752 = vpack.c.b16 %v6080, %v6076
      %v6753 = vpack.c.b16 %v6081, %v6077
      %v6754 = vpack.c.b16 %v6082, %v6078
      %v6755 = vpack.c.b16 %v6083, %v6079
      %v6756 = vpack.c.b16 %v6088, %v6084
      %v6757 = vpack.c.b16 %v6089, %v6085
      %v6758 = vpack.c.b16 %v6090, %v6086
      %v6759 = vpack.c.b16 %v6091, %v6087
      %v6760 = vpack.c.b16 %v6096, %v6092
      %v6761 = vpack.c.b16 %v6097, %v6093
      %v6762 = vpack.c.b16 %v6098, %v6094
      %v6763 = vpack.c.b16 %v6099, %v6095
      %v6764 = vpack.c.b16 %v6104, %v6100
      %v6765 = vpack.c.b16 %v6105, %v6101
      %v6766 = vpack.c.b16 %v6106, %v6102
      %v6767 = vpack.c.b16 %v6107, %v6103
      %v6768 = vpack.c.b16 %v6112, %v6108
      %v6769 = vpack.c.b16 %v6113, %v6109
      %v6770 = vpack.c.b16 %v6114, %v6110
      %v6771 = vpack.c.b16 %v6115, %v6111
      %v6772 = vpack.c.b16 %v6120, %v6116
      %v6773 = vpack.c.b16 %v6121, %v6117
      %v6774 = vpack.c.b16 %v6122, %v6118
      %v6775 = vpack.c.b16 %v6123, %v6119
      %v6776 = vpack.c.b16 %v6128, %v6124
      %v6777 = vpack.c.b16 %v6129, %v6125
      %v6778 = vpack.c.b16 %v6130, %v6126
      %v6779 = vpack.c.b16 %v6131, %v6127
      %v6780 = vpack.c.b16 %v6136, %v6132
      %v6781 = vpack.c.b16 %v6137, %v6133
      %v6782 = vpack.c.b16 %v6138, %v6134
      %v6783 = vpack.c.b16 %v6139, %v6135
      %v6784 = vpack.c.b16 %v6144, %v6140
      %v6785 = vpack.c.b16 %v6145, %v6141
      %v6786 = vpack.c.b16 %v6146, %v6142
      %v6787 = vpack.c.b16 %v6147, %v6143
      %v6788 = vpack.c.b16 %v6152, %v6148
      %v6789 = vpack.c.b16 %v6153, %v6149
      %v6790 = vpack.c.b16 %v6154, %v6150
      %v6791 = vpack.c.b16 %v6155, %v6151
      %v6792 = vpack.c.b16 %v6160, %v6156
      %v6793 = vpack.c.b16 %v6161, %v6157
      %v6794 = vpack.c.b16 %v6162, %v6158
      %v6795 = vpack.c.b16 %v6163, %v6159
      %v6796 = vpack.c.b16 %v6168, %v6164
      %v6797 = vpack.c.b16 %v6169, %v6165
      %v6798 = vpack.c.b16 %v6170, %v6166
      %v6799 = vpack.c.b16 %v6171, %v6167
      %v6800 = vpack.c.b16 %v6176, %v6172
      %v6801 = vpack.c.b16 %v6177, %v6173
      %v6802 = vpack.c.b16 %v6178, %v6174
      %v6803 = vpack.c.b16 %v6179, %v6175
      %v6804 = vpack.c.b16 %v6184, %v6180
      %v6805 = vpack.c.b16 %v6185, %v6181
      %v6806 = vpack.c.b16 %v6186, %v6182
      %v6807 = vpack.c.b16 %v6187, %v6183
      %v6808 = vpack.c.b16 %v6192, %v6188
      %v6809 = vpack.c.b16 %v6193, %v6189
      %v6810 = vpack.c.b16 %v6194, %v6190
      %v6811 = vpack.c.b16 %v6195, %v6191
      %v6812 = vpack.c.b16 %v6200, %v6196
      %v6813 = vpack.c.b16 %v6201, %v6197
      %v6814 = vpack.c.b16 %v6202, %v6198
      %v6815 = vpack.c.b16 %v6203, %v6199
      %v6816 = vpack.c.b16 %v6208, %v6204
      %v6817 = vpack.c.b16 %v6209, %v6205
      %v6818 = vpack.c.b16 %v6210, %v6206
      %v6819 = vpack.c.b16 %v6211, %v6207
      %v6820 = vpack.c.b16 %v6216, %v6212
      %v6821 = vpack.c.b16 %v6217, %v6213
      %v6822 = vpack.c.b16 %v6218, %v6214
      %v6823 = vpack.c.b16 %v6219, %v6215
      %v6824 = vpack.c.b16 %v6224, %v6220
      %v6825 = vpack.c.b16 %v6225, %v6221
      %v6826 = vpack.c.b16 %v6226, %v6222
      %v6827 = vpack.c.b16 %v6227, %v6223
      %v6828 = vpack.c.b16 %v6232, %v6228
      %v6829 = vpack.c.b16 %v6233, %v6229
      %v6830 = vpack.c.b16 %v6234, %v6230
      %v6831 = vpack.c.b16 %v6235, %v6231
      %v6832 = vpack.c.b16 %v6240, %v6236
      %v6833 = vpack.c.b16 %v6241, %v6237
      %v6834 = vpack.c.b16 %v6242, %v6238
      %v6835 = vpack.c.b16 %v6243, %v6239
      %v6836 = vpack.c.b16 %v6248, %v6244
      %v6837 = vpack.c.b16 %v6249, %v6245
      %v6838 = vpack.c.b16 %v6250, %v6246
      %v6839 = vpack.c.b16 %v6251, %v6247
      %v6840 = vpack.c.b16 %v6256, %v6252
      %v6841 = vpack.c.b16 %v6257, %v6253
      %v6842 = vpack.c.b16 %v6258, %v6254
      %v6843 = vpack.c.b16 %v6259, %v6255
      %v6844 = vpack.c.b16 %v6264, %v6260
      %v6845 = vpack.c.b16 %v6265, %v6261
      %v6846 = vpack.c.b16 %v6266, %v6262
      %v6847 = vpack.c.b16 %v6267, %v6263
      %v6848 = vpack.c.b16 %v6272, %v6268
      %v6849 = vpack.c.b16 %v6273, %v6269
      %v6850 = vpack.c.b16 %v6274, %v6270
      %v6851 = vpack.c.b16 %v6275, %v6271
      %v6852 = vpack.c.b16 %v6280, %v6276
      %v6853 = vpack.c.b16 %v6281, %v6277
      %v6854 = vpack.c.b16 %v6282, %v6278
      %v6855 = vpack.c.b16 %v6283, %v6279
      %v6856 = vpack.c.b16 %v6288, %v6284
      %v6857 = vpack.c.b16 %v6289, %v6285
      %v6858 = vpack.c.b16 %v6290, %v6286
      %v6859 = vpack.c.b16 %v6291, %v6287
      %v6860 = vpack.c.b16 %v6296, %v6292
      %v6861 = vpack.c.b16 %v6297, %v6293
      %v6862 = vpack.c.b16 %v6298, %v6294
      %v6863 = vpack.c.b16 %v6299, %v6295
      %v6864 = vpack.c.b16 %v6304, %v6300
      %v6865 = vpack.c.b16 %v6305, %v6301
      %v6866 = vpack.c.b16 %v6306, %v6302
      %v6867 = vpack.c.b16 %v6307, %v6303
      %v6868 = vpack.c.b16 %v6312, %v6308
      %v6869 = vpack.c.b16 %v6313, %v6309
      %v6870 = vpack.c.b16 %v6314, %v6310
      %v6871 = vpack.c.b16 %v6315, %v6311
      %v6872 = vpack.c.b16 %v6320, %v6316
      %v6873 = vpack.c.b16 %v6321, %v6317
      %v6874 = vpack.c.b16 %v6322, %v6318
      %v6875 = vpack.c.b16 %v6323, %v6319
      %v6876 = vpack.c.b16 %v6328, %v6324
      %v6877 = vpack.c.b16 %v6329, %v6325
      %v6878 = vpack.c.b16 %v6330, %v6326
      %v6879 = vpack.c.b16 %v6331, %v6327
      %v6880 = vpack.c.b16 %v6336, %v6332
      %v6881 = vpack.c.b16 %v6337, %v6333
      %v6882 = vpack.c.b16 %v6338, %v6334
      %v6883 = vpack.c.b16 %v6339, %v6335
      %v6884 = vpack.c.b16 %v6344, %v6340
      %v6885 = vpack.c.b16 %v6345, %v6341
      %v6886 = vpack.c.b16 %v6346, %v6342
      %v6887 = vpack.c.b16 %v6347, %v6343
      %v6888 = vpack.c.b16 %v6352, %v6348
      %v6889 = vpack.c.b16 %v6353, %v6349
      %v6890 = vpack.c.b16 %v6354, %v6350
      %v6891 = vpack.c.b16 %v6355, %v6351
      %v6892 = vpack.c.b16 %v6360, %v6356
      %v6893 = vpack.c.b16 %v6361, %v6357
      %v6894 = vpack.c.b16 %v6362, %v6358
      %v6895 = vpack.c.b16 %v6363, %v6359
      %v6896 = vpack.c.b16 %v6368, %v6364
      %v6897 = vpack.c.b16 %v6369, %v6365
      %v6898 = vpack.c.b16 %v6370, %v6366
      %v6899 = vpack.c.b16 %v6371, %v6367
      %v6900 = vpack.c.b16 %v6376, %v6372
      %v6901 = vpack.c.b16 %v6377, %v6373
      %v6902 = vpack.c.b16 %v6378, %v6374
      %v6903 = vpack.c.b16 %v6379, %v6375
      %v6904 = vpack.c.b16 %v6384, %v6380
      %v6905 = vpack.c.b16 %v6385, %v6381
      %v6906 = vpack.c.b16 %v6386, %v6382
      %v6907 = vpack.c.b16 %v6387, %v6383
      %v6908 = vpack.c.b16 %v6392, %v6388
      %v6909 = vpack.c.b16 %v6393, %v6389
      %v6910 = vpack.c.b16 %v6394, %v6390
      %v6911 = vpack.c.b16 %v6395, %v6391
      %v6912 = vpack.c.b16 %v6400, %v6396
      %v6913 = vpack.c.b16 %v6401, %v6397
      %v6914 = vpack.c.b16 %v6402, %v6398
      %v6915 = vpack.c.b16 %v6403, %v6399
      %v6916 = vpack.c.b16 %v6408, %v6404
      %v6917 = vpack.c.b16 %v6409, %v6405
      %v6918 = vpack.c.b16 %v6410, %v6406
      %v6919 = vpack.c.b16 %v6411, %v6407
      %v6920 = vpack.c.b16 %v6416, %v6412
      %v6921 = vpack.c.b16 %v6417, %v6413
      %v6922 = vpack.c.b16 %v6418, %v6414
      %v6923 = vpack.c.b16 %v6419, %v6415
      %v6924 = vpack.c.b16 %v6424, %v6420
      %v6925 = vpack.c.b16 %v6425, %v6421
      %v6926 = vpack.c.b16 %v6426, %v6422
      %v6927 = vpack.c.b16 %v6427, %v6423
      %v6928 = vpack.c.b16 %v6432, %v6428
      %v6929 = vpack.c.b16 %v6433, %v6429
      %v6930 = vpack.c.b16 %v6434, %v6430
      %v6931 = vpack.c.b16 %v6435, %v6431
      %v6932 = vpack.c.b16 %v6440, %v6436
      %v6933 = vpack.c.b16 %v6441, %v6437
      %v6934 = vpack.c.b16 %v6442, %v6438
      %v6935 = vpack.c.b16 %v6443, %v6439
      %v6936 = vpack.c.b16 %v6448, %v6444
      %v6937 = vpack.c.b16 %v6449, %v6445
      %v6938 = vpack.c.b16 %v6450, %v6446
      %v6939 = vpack.c.b16 %v6451, %v6447
      %v6940 = vpack.c.b16 %v6456, %v6452
      %v6941 = vpack.c.b16 %v6457, %v6453
      %v6942 = vpack.c.b16 %v6458, %v6454
      %v6943 = vpack.c.b16 %v6459, %v6455
      %vm7428 = vcmask 130048
      %v7430 = vsel %vm7428, %v4992, 0
      %7432 = vmatprep.subr.bf16.mxu0 %v6489
      %7433 = vmatpush1.bf16.msra.mxu0 %v6488
      %7434 = vmatprep.subr.bf16.mxu0 %v6485
      %7435 = vmatpush1.bf16.msra.mxu0 %v6484
      %7436 = vmatprep.subr.bf16.mxu0 %v6481
      %7437 = vmatpush1.bf16.msra.mxu0 %v6480
      %7438 = vmatprep.subr.bf16.mxu0 %v6477
      %7439 = vmatpush1.bf16.msra.mxu0 %v6476
      %7440 = vmatprep.subr.bf16.mxu0 %v6473
      %7441 = vmatpush1.bf16.msra.mxu0 %v6472
      %7442 = vmatprep.subr.bf16.mxu0 %v6469
      %7443 = vmatpush1.bf16.msra.mxu0 %v6468
      %7444 = vmatprep.subr.bf16.mxu0 %v6465
      %7445 = vmatpush1.bf16.msra.mxu0 %v6464
      %7446 = vmatprep.subr.bf16.mxu0 %v6461
      %7447 = vmatpush1.bf16.msra.mxu0 %v6460
      %7448 = vmatprep.subr.bf16.mxu0 %v6521
      %7449 = vmatpush2.bf16.msra.mxu0 %v6520
      %7450 = vmatprep.subr.bf16.mxu0 %v6517
      %7451 = vmatpush2.bf16.msra.mxu0 %v6516
      %7452 = vmatprep.subr.bf16.mxu0 %v6513
      %7453 = vmatpush2.bf16.msra.mxu0 %v6512
      %7454 = vmatprep.subr.bf16.mxu0 %v6509
      %7455 = vmatpush2.bf16.msra.mxu0 %v6508
      %7456 = vmatprep.subr.bf16.mxu0 %v6505
      %7457 = vmatpush2.bf16.msra.mxu0 %v6504
      %7458 = vmatprep.subr.bf16.mxu0 %v6501
      %7459 = vmatpush2.bf16.msra.mxu0 %v6500
      %7460 = vmatprep.subr.bf16.mxu0 %v6497
      %7461 = vmatpush2.bf16.msra.mxu0 %v6496
      %7462 = vmatprep.subr.bf16.mxu0 %v6493
      %7463 = vmatpush2.bf16.msra.mxu0 %v6492
      %7464 = vmatprep.mubr.bf16.mxu0 %v4978
      %7465 = vmatmul.mubr.bf16.gmra.mxu0 %v4977
      %v7466 = vpop.f32.mrf.mxu0
      %v7467 = vadd.f32 %v4951, %v7466
      %v7468 = vpop.f32.mrf.mxu0
      %v7469 = vadd.f32 %v4951, %v7468
      %v7470 = vpop.f32.mrf.mxu0
      %v7471 = vpop.f32.mrf.mxu0
      %7472 = vdwg.mxu0
      %7473 = vmatprep.subr.bf16.mxu0 %v6553
      %7474 = vmatpush1.bf16.msra.mxu0 %v6552
      %7475 = vmatprep.subr.bf16.mxu0 %v6549
      %7476 = vmatpush1.bf16.msra.mxu0 %v6548
      %7477 = vmatprep.subr.bf16.mxu0 %v6545
      %7478 = vmatpush1.bf16.msra.mxu0 %v6544
      %7479 = vmatprep.subr.bf16.mxu0 %v6541
      %7480 = vmatpush1.bf16.msra.mxu0 %v6540
      %7481 = vmatprep.subr.bf16.mxu0 %v6537
      %7482 = vmatpush1.bf16.msra.mxu0 %v6536
      %7483 = vmatprep.subr.bf16.mxu0 %v6533
      %7484 = vmatpush1.bf16.msra.mxu0 %v6532
      %7485 = vmatprep.subr.bf16.mxu0 %v6529
      %7486 = vmatpush1.bf16.msra.mxu0 %v6528
      %7487 = vmatprep.subr.bf16.mxu0 %v6525
      %7488 = vmatpush1.bf16.msra.mxu0 %v6524
      %7489 = vmatprep.subr.bf16.mxu0 %v6585
      %7490 = vmatpush2.bf16.msra.mxu0 %v6584
      %7491 = vmatprep.subr.bf16.mxu0 %v6581
      %7492 = vmatpush2.bf16.msra.mxu0 %v6580
      %7493 = vmatprep.subr.bf16.mxu0 %v6577
      %7494 = vmatpush2.bf16.msra.mxu0 %v6576
      %7495 = vmatprep.subr.bf16.mxu0 %v6573
      %7496 = vmatpush2.bf16.msra.mxu0 %v6572
      %7497 = vmatprep.subr.bf16.mxu0 %v6569
      %7498 = vmatpush2.bf16.msra.mxu0 %v6568
      %7499 = vmatprep.subr.bf16.mxu0 %v6565
      %7500 = vmatpush2.bf16.msra.mxu0 %v6564
      %7501 = vmatprep.subr.bf16.mxu0 %v6561
      %7502 = vmatpush2.bf16.msra.mxu0 %v6560
      %7503 = vmatprep.subr.bf16.mxu0 %v6557
      %7504 = vmatpush2.bf16.msra.mxu0 %v6556
      %7505 = vmatprep.mubr.bf16.mxu0 %v4980
      %7506 = vmatmul.mubr.bf16.gmra.mxu0 %v4979
      %v7507 = vpop.f32.mrf.mxu0
      %v7508 = vadd.f32 %v7467, %v7507
      %v7509 = vpop.f32.mrf.mxu0
      %v7510 = vadd.f32 %v7469, %v7509
      %v7511 = vpop.f32.mrf.mxu0
      %v7512 = vpop.f32.mrf.mxu0
      %7513 = vdwg.mxu0
      %7514 = vmatprep.subr.bf16.mxu0 %v6617
      %7515 = vmatpush1.bf16.msra.mxu0 %v6616
      %7516 = vmatprep.subr.bf16.mxu0 %v6613
      %7517 = vmatpush1.bf16.msra.mxu0 %v6612
      %7518 = vmatprep.subr.bf16.mxu0 %v6609
      %7519 = vmatpush1.bf16.msra.mxu0 %v6608
      %7520 = vmatprep.subr.bf16.mxu0 %v6605
      %7521 = vmatpush1.bf16.msra.mxu0 %v6604
      %7522 = vmatprep.subr.bf16.mxu0 %v6601
      %7523 = vmatpush1.bf16.msra.mxu0 %v6600
      %7524 = vmatprep.subr.bf16.mxu0 %v6597
      %7525 = vmatpush1.bf16.msra.mxu0 %v6596
      %7526 = vmatprep.subr.bf16.mxu0 %v6593
      %7527 = vmatpush1.bf16.msra.mxu0 %v6592
      %7528 = vmatprep.subr.bf16.mxu0 %v6589
      %7529 = vmatpush1.bf16.msra.mxu0 %v6588
      %7530 = vmatprep.subr.bf16.mxu0 %v6649
      %7531 = vmatpush2.bf16.msra.mxu0 %v6648
      %7532 = vmatprep.subr.bf16.mxu0 %v6645
      %7533 = vmatpush2.bf16.msra.mxu0 %v6644
      %7534 = vmatprep.subr.bf16.mxu0 %v6641
      %7535 = vmatpush2.bf16.msra.mxu0 %v6640
      %7536 = vmatprep.subr.bf16.mxu0 %v6637
      %7537 = vmatpush2.bf16.msra.mxu0 %v6636
      %7538 = vmatprep.subr.bf16.mxu0 %v6633
      %7539 = vmatpush2.bf16.msra.mxu0 %v6632
      %7540 = vmatprep.subr.bf16.mxu0 %v6629
      %7541 = vmatpush2.bf16.msra.mxu0 %v6628
      %7542 = vmatprep.subr.bf16.mxu0 %v6625
      %7543 = vmatpush2.bf16.msra.mxu0 %v6624
      %7544 = vmatprep.subr.bf16.mxu0 %v6621
      %7545 = vmatpush2.bf16.msra.mxu0 %v6620
      %7546 = vmatprep.mubr.bf16.mxu0 %v4982
      %7547 = vmatmul.mubr.bf16.gmra.mxu0 %v4981
      %v7548 = vpop.f32.mrf.mxu0
      %v7549 = vadd.f32 %v7508, %v7548
      %v7550 = vpop.f32.mrf.mxu0
      %v7551 = vadd.f32 %v7510, %v7550
      %v7552 = vpop.f32.mrf.mxu0
      %v7553 = vpop.f32.mrf.mxu0
      %7554 = vdwg.mxu0
      %7555 = vmatprep.subr.bf16.mxu0 %v6681
      %7556 = vmatpush1.bf16.msra.mxu0 %v6680
      %7557 = vmatprep.subr.bf16.mxu0 %v6677
      %7558 = vmatpush1.bf16.msra.mxu0 %v6676
      %7559 = vmatprep.subr.bf16.mxu0 %v6673
      %7560 = vmatpush1.bf16.msra.mxu0 %v6672
      %7561 = vmatprep.subr.bf16.mxu0 %v6669
      %7562 = vmatpush1.bf16.msra.mxu0 %v6668
      %7563 = vmatprep.subr.bf16.mxu0 %v6665
      %7564 = vmatpush1.bf16.msra.mxu0 %v6664
      %7565 = vmatprep.subr.bf16.mxu0 %v6661
      %7566 = vmatpush1.bf16.msra.mxu0 %v6660
      %7567 = vmatprep.subr.bf16.mxu0 %v6657
      %7568 = vmatpush1.bf16.msra.mxu0 %v6656
      %7569 = vmatprep.subr.bf16.mxu0 %v6653
      %7570 = vmatpush1.bf16.msra.mxu0 %v6652
      %7571 = vmatprep.subr.bf16.mxu0 %v6713
      %7572 = vmatpush2.bf16.msra.mxu0 %v6712
      %7573 = vmatprep.subr.bf16.mxu0 %v6709
      %7574 = vmatpush2.bf16.msra.mxu0 %v6708
      %7575 = vmatprep.subr.bf16.mxu0 %v6705
      %7576 = vmatpush2.bf16.msra.mxu0 %v6704
      %7577 = vmatprep.subr.bf16.mxu0 %v6701
      %7578 = vmatpush2.bf16.msra.mxu0 %v6700
      %7579 = vmatprep.subr.bf16.mxu0 %v6697
      %7580 = vmatpush2.bf16.msra.mxu0 %v6696
      %7581 = vmatprep.subr.bf16.mxu0 %v6693
      %7582 = vmatpush2.bf16.msra.mxu0 %v6692
      %7583 = vmatprep.subr.bf16.mxu0 %v6689
      %7584 = vmatpush2.bf16.msra.mxu0 %v6688
      %7585 = vmatprep.subr.bf16.mxu0 %v6685
      %7586 = vmatpush2.bf16.msra.mxu0 %v6684
      %7587 = vmatprep.mubr.bf16.mxu0 %v4984
      %7588 = vmatmul.mubr.bf16.gmra.mxu0 %v4983
      %v7589 = vpop.f32.mrf.mxu0
      %v7590 = vadd.f32 %v7549, %v7589
      %v7591 = vpop.f32.mrf.mxu0
      %v7592 = vadd.f32 %v7551, %v7591
      %v7593 = vpop.f32.mrf.mxu0
      %v7594 = vpop.f32.mrf.mxu0
      %7595 = vdwg.mxu0
      %7596 = vmatprep.subr.bf16.mxu0 %v6745
      %7597 = vmatpush1.bf16.msra.mxu0 %v6744
      %7598 = vmatprep.subr.bf16.mxu0 %v6741
      %7599 = vmatpush1.bf16.msra.mxu0 %v6740
      %7600 = vmatprep.subr.bf16.mxu0 %v6737
      %7601 = vmatpush1.bf16.msra.mxu0 %v6736
      %7602 = vmatprep.subr.bf16.mxu0 %v6733
      %7603 = vmatpush1.bf16.msra.mxu0 %v6732
      %7604 = vmatprep.subr.bf16.mxu0 %v6729
      %7605 = vmatpush1.bf16.msra.mxu0 %v6728
      %7606 = vmatprep.subr.bf16.mxu0 %v6725
      %7607 = vmatpush1.bf16.msra.mxu0 %v6724
      %7608 = vmatprep.subr.bf16.mxu0 %v6721
      %7609 = vmatpush1.bf16.msra.mxu0 %v6720
      %7610 = vmatprep.subr.bf16.mxu0 %v6717
      %7611 = vmatpush1.bf16.msra.mxu0 %v6716
      %7612 = vmatprep.subr.bf16.mxu0 %v6777
      %7613 = vmatpush2.bf16.msra.mxu0 %v6776
      %7614 = vmatprep.subr.bf16.mxu0 %v6773
      %7615 = vmatpush2.bf16.msra.mxu0 %v6772
      %7616 = vmatprep.subr.bf16.mxu0 %v6769
      %7617 = vmatpush2.bf16.msra.mxu0 %v6768
      %7618 = vmatprep.subr.bf16.mxu0 %v6765
      %7619 = vmatpush2.bf16.msra.mxu0 %v6764
      %7620 = vmatprep.subr.bf16.mxu0 %v6761
      %7621 = vmatpush2.bf16.msra.mxu0 %v6760
      %7622 = vmatprep.subr.bf16.mxu0 %v6757
      %7623 = vmatpush2.bf16.msra.mxu0 %v6756
      %7624 = vmatprep.subr.bf16.mxu0 %v6753
      %7625 = vmatpush2.bf16.msra.mxu0 %v6752
      %7626 = vmatprep.subr.bf16.mxu0 %v6749
      %7627 = vmatpush2.bf16.msra.mxu0 %v6748
      %7628 = vmatprep.mubr.bf16.mxu0 %v4986
      %7629 = vmatmul.mubr.bf16.gmra.mxu0 %v4985
      %v7630 = vpop.f32.mrf.mxu0
      %v7631 = vadd.f32 %v7590, %v7630
      %v7632 = vpop.f32.mrf.mxu0
      %v7633 = vadd.f32 %v7592, %v7632
      %v7634 = vpop.f32.mrf.mxu0
      %v7635 = vpop.f32.mrf.mxu0
      %7636 = vdwg.mxu0
      %7637 = vmatprep.subr.bf16.mxu0 %v6809
      %7638 = vmatpush1.bf16.msra.mxu0 %v6808
      %7639 = vmatprep.subr.bf16.mxu0 %v6805
      %7640 = vmatpush1.bf16.msra.mxu0 %v6804
      %7641 = vmatprep.subr.bf16.mxu0 %v6801
      %7642 = vmatpush1.bf16.msra.mxu0 %v6800
      %7643 = vmatprep.subr.bf16.mxu0 %v6797
      %7644 = vmatpush1.bf16.msra.mxu0 %v6796
      %7645 = vmatprep.subr.bf16.mxu0 %v6793
      %7646 = vmatpush1.bf16.msra.mxu0 %v6792
      %7647 = vmatprep.subr.bf16.mxu0 %v6789
      %7648 = vmatpush1.bf16.msra.mxu0 %v6788
      %7649 = vmatprep.subr.bf16.mxu0 %v6785
      %7650 = vmatpush1.bf16.msra.mxu0 %v6784
      %7651 = vmatprep.subr.bf16.mxu0 %v6781
      %7652 = vmatpush1.bf16.msra.mxu0 %v6780
      %7653 = vmatprep.subr.bf16.mxu0 %v6841
      %7654 = vmatpush2.bf16.msra.mxu0 %v6840
      %7655 = vmatprep.subr.bf16.mxu0 %v6837
      %7656 = vmatpush2.bf16.msra.mxu0 %v6836
      %7657 = vmatprep.subr.bf16.mxu0 %v6833
      %7658 = vmatpush2.bf16.msra.mxu0 %v6832
      %7659 = vmatprep.subr.bf16.mxu0 %v6829
      %7660 = vmatpush2.bf16.msra.mxu0 %v6828
      %7661 = vmatprep.subr.bf16.mxu0 %v6825
      %7662 = vmatpush2.bf16.msra.mxu0 %v6824
      %7663 = vmatprep.subr.bf16.mxu0 %v6821
      %7664 = vmatpush2.bf16.msra.mxu0 %v6820
      %7665 = vmatprep.subr.bf16.mxu0 %v6817
      %7666 = vmatpush2.bf16.msra.mxu0 %v6816
      %7667 = vmatprep.subr.bf16.mxu0 %v6813
      %7668 = vmatpush2.bf16.msra.mxu0 %v6812
      %7669 = vmatprep.mubr.bf16.mxu0 %v4988
      %7670 = vmatmul.mubr.bf16.gmra.mxu0 %v4987
      %v7671 = vpop.f32.mrf.mxu0
      %v7672 = vadd.f32 %v7631, %v7671
      %v7673 = vpop.f32.mrf.mxu0
      %v7674 = vadd.f32 %v7633, %v7673
      %v7675 = vpop.f32.mrf.mxu0
      %v7676 = vpop.f32.mrf.mxu0
      %7677 = vdwg.mxu0
      %7678 = vmatprep.subr.bf16.mxu0 %v6873
      %7679 = vmatpush1.bf16.msra.mxu0 %v6872
      %7680 = vmatprep.subr.bf16.mxu0 %v6869
      %7681 = vmatpush1.bf16.msra.mxu0 %v6868
      %7682 = vmatprep.subr.bf16.mxu0 %v6865
      %7683 = vmatpush1.bf16.msra.mxu0 %v6864
      %7684 = vmatprep.subr.bf16.mxu0 %v6861
      %7685 = vmatpush1.bf16.msra.mxu0 %v6860
      %7686 = vmatprep.subr.bf16.mxu0 %v6857
      %7687 = vmatpush1.bf16.msra.mxu0 %v6856
      %7688 = vmatprep.subr.bf16.mxu0 %v6853
      %7689 = vmatpush1.bf16.msra.mxu0 %v6852
      %7690 = vmatprep.subr.bf16.mxu0 %v6849
      %7691 = vmatpush1.bf16.msra.mxu0 %v6848
      %7692 = vmatprep.subr.bf16.mxu0 %v6845
      %7693 = vmatpush1.bf16.msra.mxu0 %v6844
      %7694 = vmatprep.subr.bf16.mxu0 %v6905
      %7695 = vmatpush2.bf16.msra.mxu0 %v6904
      %7696 = vmatprep.subr.bf16.mxu0 %v6901
      %7697 = vmatpush2.bf16.msra.mxu0 %v6900
      %7698 = vmatprep.subr.bf16.mxu0 %v6897
      %7699 = vmatpush2.bf16.msra.mxu0 %v6896
      %7700 = vmatprep.subr.bf16.mxu0 %v6893
      %7701 = vmatpush2.bf16.msra.mxu0 %v6892
      %7702 = vmatprep.subr.bf16.mxu0 %v6889
      %7703 = vmatpush2.bf16.msra.mxu0 %v6888
      %7704 = vmatprep.subr.bf16.mxu0 %v6885
      %7705 = vmatpush2.bf16.msra.mxu0 %v6884
      %7706 = vmatprep.subr.bf16.mxu0 %v6881
      %7707 = vmatpush2.bf16.msra.mxu0 %v6880
      %7708 = vmatprep.subr.bf16.mxu0 %v6877
      %7709 = vmatpush2.bf16.msra.mxu0 %v6876
      %7710 = vmatprep.mubr.bf16.mxu0 %v4990
      %7711 = vmatmul.mubr.bf16.gmra.mxu0 %v4989
      %v7712 = vpop.f32.mrf.mxu0
      %v7713 = vadd.f32 %v7672, %v7712
      %v7714 = vpop.f32.mrf.mxu0
      %v7715 = vadd.f32 %v7674, %v7714
      %v7716 = vpop.f32.mrf.mxu0
      %v7717 = vpop.f32.mrf.mxu0
      %7718 = vdwg.mxu0
      %7719 = vmatprep.subr.bf16.mxu0 %v6937
      %7720 = vmatpush1.bf16.msra.mxu0 %v6936
      %7721 = vmatprep.subr.bf16.mxu0 %v6933
      %7722 = vmatpush1.bf16.msra.mxu0 %v6932
      %7723 = vmatprep.subr.bf16.mxu0 %v6929
      %7724 = vmatpush1.bf16.msra.mxu0 %v6928
      %7725 = vmatprep.subr.bf16.mxu0 %v6925
      %7726 = vmatpush1.bf16.msra.mxu0 %v6924
      %7727 = vmatprep.subr.bf16.mxu0 %v6921
      %7728 = vmatpush1.bf16.msra.mxu0 %v6920
      %7729 = vmatprep.subr.bf16.mxu0 %v6917
      %7730 = vmatpush1.bf16.msra.mxu0 %v6916
      %7731 = vmatprep.subr.bf16.mxu0 %v6913
      %7732 = vmatpush1.bf16.msra.mxu0 %v6912
      %7733 = vmatprep.subr.bf16.mxu0 %v6909
      %7734 = vmatpush1.bf16.msra.mxu0 %v6908
      %7735 = vmatprep.subr.bf16.mxu0 0
      %7736 = vmatpush2.bf16.msra.mxu0 0
      %7737 = vmatprep.subr.bf16.mxu0 0
      %7738 = vmatpush2.bf16.msra.mxu0 0
      %7739 = vmatprep.subr.bf16.mxu0 0
      %7740 = vmatpush2.bf16.msra.mxu0 0
      %7741 = vmatprep.subr.bf16.mxu0 0
      %7742 = vmatpush2.bf16.msra.mxu0 0
      %7743 = vmatprep.subr.bf16.mxu0 0
      %7744 = vmatpush2.bf16.msra.mxu0 0
      %7745 = vmatprep.subr.bf16.mxu0 0
      %7746 = vmatpush2.bf16.msra.mxu0 0
      %7747 = vmatprep.subr.bf16.mxu0 0
      %7748 = vmatpush2.bf16.msra.mxu0 0
      %7749 = vmatprep.subr.bf16.mxu0 %v6941
      %7750 = vmatpush2.bf16.msra.mxu0 %v6940
      %7751 = vmatprep.mubr.bf16.mxu0 %v7430
      %7752 = vmatmul.mubr.bf16.gmra.mxu0 %v4991
      %v7753 = vpop.f32.mrf.mxu0
      %v7754 = vadd.f32 %v7713, %v7753
      %v7755 = vpop.f32.mrf.mxu0
      %v7756 = vadd.f32 %v7715, %v7755
      %v7757 = vpop.f32.mrf.mxu0
      %v7758 = vpop.f32.mrf.mxu0
      %7759 = vdwg.mxu0
      %7760 = vmatprep.subr.bf16.mxu0 %v6491
      %7761 = vmatpush1.bf16.msra.mxu0 %v6490
      %7762 = vmatprep.subr.bf16.mxu0 %v6487
      %7763 = vmatpush1.bf16.msra.mxu0 %v6486
      %7764 = vmatprep.subr.bf16.mxu0 %v6483
      %7765 = vmatpush1.bf16.msra.mxu0 %v6482
      %7766 = vmatprep.subr.bf16.mxu0 %v6479
      %7767 = vmatpush1.bf16.msra.mxu0 %v6478
      %7768 = vmatprep.subr.bf16.mxu0 %v6475
      %7769 = vmatpush1.bf16.msra.mxu0 %v6474
      %7770 = vmatprep.subr.bf16.mxu0 %v6471
      %7771 = vmatpush1.bf16.msra.mxu0 %v6470
      %7772 = vmatprep.subr.bf16.mxu0 %v6467
      %7773 = vmatpush1.bf16.msra.mxu0 %v6466
      %7774 = vmatprep.subr.bf16.mxu0 %v6463
      %7775 = vmatpush1.bf16.msra.mxu0 %v6462
      %7776 = vmatprep.subr.bf16.mxu0 %v6523
      %7777 = vmatpush2.bf16.msra.mxu0 %v6522
      %7778 = vmatprep.subr.bf16.mxu0 %v6519
      %7779 = vmatpush2.bf16.msra.mxu0 %v6518
      %7780 = vmatprep.subr.bf16.mxu0 %v6515
      %7781 = vmatpush2.bf16.msra.mxu0 %v6514
      %7782 = vmatprep.subr.bf16.mxu0 %v6511
      %7783 = vmatpush2.bf16.msra.mxu0 %v6510
      %7784 = vmatprep.subr.bf16.mxu0 %v6507
      %7785 = vmatpush2.bf16.msra.mxu0 %v6506
      %7786 = vmatprep.subr.bf16.mxu0 %v6503
      %7787 = vmatpush2.bf16.msra.mxu0 %v6502
      %7788 = vmatprep.subr.bf16.mxu0 %v6499
      %7789 = vmatpush2.bf16.msra.mxu0 %v6498
      %7790 = vmatprep.subr.bf16.mxu0 %v6495
      %7791 = vmatpush2.bf16.msra.mxu0 %v6494
      %7792 = vmatprep.mubr.bf16.mxu0 %v4978
      %7793 = vmatmul.mubr.bf16.gmra.mxu0 %v4977
      %v7794 = vpop.f32.mrf.mxu0
      %v7795 = vadd.f32 %v4951, %v7794
      %v7796 = vpop.f32.mrf.mxu0
      %v7797 = vadd.f32 %v4951, %v7796
      %v7798 = vpop.f32.mrf.mxu0
      %v7799 = vpop.f32.mrf.mxu0
      %7800 = vdwg.mxu0
      %7801 = vmatprep.subr.bf16.mxu0 %v6555
      %7802 = vmatpush1.bf16.msra.mxu0 %v6554
      %7803 = vmatprep.subr.bf16.mxu0 %v6551
      %7804 = vmatpush1.bf16.msra.mxu0 %v6550
      %7805 = vmatprep.subr.bf16.mxu0 %v6547
      %7806 = vmatpush1.bf16.msra.mxu0 %v6546
      %7807 = vmatprep.subr.bf16.mxu0 %v6543
      %7808 = vmatpush1.bf16.msra.mxu0 %v6542
      %7809 = vmatprep.subr.bf16.mxu0 %v6539
      %7810 = vmatpush1.bf16.msra.mxu0 %v6538
      %7811 = vmatprep.subr.bf16.mxu0 %v6535
      %7812 = vmatpush1.bf16.msra.mxu0 %v6534
      %7813 = vmatprep.subr.bf16.mxu0 %v6531
      %7814 = vmatpush1.bf16.msra.mxu0 %v6530
      %7815 = vmatprep.subr.bf16.mxu0 %v6527
      %7816 = vmatpush1.bf16.msra.mxu0 %v6526
      %7817 = vmatprep.subr.bf16.mxu0 %v6587
      %7818 = vmatpush2.bf16.msra.mxu0 %v6586
      %7819 = vmatprep.subr.bf16.mxu0 %v6583
      %7820 = vmatpush2.bf16.msra.mxu0 %v6582
      %7821 = vmatprep.subr.bf16.mxu0 %v6579
      %7822 = vmatpush2.bf16.msra.mxu0 %v6578
      %7823 = vmatprep.subr.bf16.mxu0 %v6575
      %7824 = vmatpush2.bf16.msra.mxu0 %v6574
      %7825 = vmatprep.subr.bf16.mxu0 %v6571
      %7826 = vmatpush2.bf16.msra.mxu0 %v6570
      %7827 = vmatprep.subr.bf16.mxu0 %v6567
      %7828 = vmatpush2.bf16.msra.mxu0 %v6566
      %7829 = vmatprep.subr.bf16.mxu0 %v6563
      %7830 = vmatpush2.bf16.msra.mxu0 %v6562
      %7831 = vmatprep.subr.bf16.mxu0 %v6559
      %7832 = vmatpush2.bf16.msra.mxu0 %v6558
      %7833 = vmatprep.mubr.bf16.mxu0 %v4980
      %7834 = vmatmul.mubr.bf16.gmra.mxu0 %v4979
      %v7835 = vpop.f32.mrf.mxu0
      %v7836 = vadd.f32 %v7795, %v7835
      %v7837 = vpop.f32.mrf.mxu0
      %v7838 = vadd.f32 %v7797, %v7837
      %v7839 = vpop.f32.mrf.mxu0
      %v7840 = vpop.f32.mrf.mxu0
      %7841 = vdwg.mxu0
      %7842 = vmatprep.subr.bf16.mxu0 %v6619
      %7843 = vmatpush1.bf16.msra.mxu0 %v6618
      %7844 = vmatprep.subr.bf16.mxu0 %v6615
      %7845 = vmatpush1.bf16.msra.mxu0 %v6614
      %7846 = vmatprep.subr.bf16.mxu0 %v6611
      %7847 = vmatpush1.bf16.msra.mxu0 %v6610
      %7848 = vmatprep.subr.bf16.mxu0 %v6607
      %7849 = vmatpush1.bf16.msra.mxu0 %v6606
      %7850 = vmatprep.subr.bf16.mxu0 %v6603
      %7851 = vmatpush1.bf16.msra.mxu0 %v6602
      %7852 = vmatprep.subr.bf16.mxu0 %v6599
      %7853 = vmatpush1.bf16.msra.mxu0 %v6598
      %7854 = vmatprep.subr.bf16.mxu0 %v6595
      %7855 = vmatpush1.bf16.msra.mxu0 %v6594
      %7856 = vmatprep.subr.bf16.mxu0 %v6591
      %7857 = vmatpush1.bf16.msra.mxu0 %v6590
      %7858 = vmatprep.subr.bf16.mxu0 %v6651
      %7859 = vmatpush2.bf16.msra.mxu0 %v6650
      %7860 = vmatprep.subr.bf16.mxu0 %v6647
      %7861 = vmatpush2.bf16.msra.mxu0 %v6646
      %7862 = vmatprep.subr.bf16.mxu0 %v6643
      %7863 = vmatpush2.bf16.msra.mxu0 %v6642
      %7864 = vmatprep.subr.bf16.mxu0 %v6639
      %7865 = vmatpush2.bf16.msra.mxu0 %v6638
      %7866 = vmatprep.subr.bf16.mxu0 %v6635
      %7867 = vmatpush2.bf16.msra.mxu0 %v6634
      %7868 = vmatprep.subr.bf16.mxu0 %v6631
      %7869 = vmatpush2.bf16.msra.mxu0 %v6630
      %7870 = vmatprep.subr.bf16.mxu0 %v6627
      %7871 = vmatpush2.bf16.msra.mxu0 %v6626
      %7872 = vmatprep.subr.bf16.mxu0 %v6623
      %7873 = vmatpush2.bf16.msra.mxu0 %v6622
      %7874 = vmatprep.mubr.bf16.mxu0 %v4982
      %7875 = vmatmul.mubr.bf16.gmra.mxu0 %v4981
      %v7876 = vpop.f32.mrf.mxu0
      %v7877 = vadd.f32 %v7836, %v7876
      %v7878 = vpop.f32.mrf.mxu0
      %v7879 = vadd.f32 %v7838, %v7878
      %v7880 = vpop.f32.mrf.mxu0
      %v7881 = vpop.f32.mrf.mxu0
      %7882 = vdwg.mxu0
      %7883 = vmatprep.subr.bf16.mxu0 %v6683
      %7884 = vmatpush1.bf16.msra.mxu0 %v6682
      %7885 = vmatprep.subr.bf16.mxu0 %v6679
      %7886 = vmatpush1.bf16.msra.mxu0 %v6678
      %7887 = vmatprep.subr.bf16.mxu0 %v6675
      %7888 = vmatpush1.bf16.msra.mxu0 %v6674
      %7889 = vmatprep.subr.bf16.mxu0 %v6671
      %7890 = vmatpush1.bf16.msra.mxu0 %v6670
      %7891 = vmatprep.subr.bf16.mxu0 %v6667
      %7892 = vmatpush1.bf16.msra.mxu0 %v6666
      %7893 = vmatprep.subr.bf16.mxu0 %v6663
      %7894 = vmatpush1.bf16.msra.mxu0 %v6662
      %7895 = vmatprep.subr.bf16.mxu0 %v6659
      %7896 = vmatpush1.bf16.msra.mxu0 %v6658
      %7897 = vmatprep.subr.bf16.mxu0 %v6655
      %7898 = vmatpush1.bf16.msra.mxu0 %v6654
      %7899 = vmatprep.subr.bf16.mxu0 %v6715
      %7900 = vmatpush2.bf16.msra.mxu0 %v6714
      %7901 = vmatprep.subr.bf16.mxu0 %v6711
      %7902 = vmatpush2.bf16.msra.mxu0 %v6710
      %7903 = vmatprep.subr.bf16.mxu0 %v6707
      %7904 = vmatpush2.bf16.msra.mxu0 %v6706
      %7905 = vmatprep.subr.bf16.mxu0 %v6703
      %7906 = vmatpush2.bf16.msra.mxu0 %v6702
      %7907 = vmatprep.subr.bf16.mxu0 %v6699
      %7908 = vmatpush2.bf16.msra.mxu0 %v6698
      %7909 = vmatprep.subr.bf16.mxu0 %v6695
      %7910 = vmatpush2.bf16.msra.mxu0 %v6694
      %7911 = vmatprep.subr.bf16.mxu0 %v6691
      %7912 = vmatpush2.bf16.msra.mxu0 %v6690
      %7913 = vmatprep.subr.bf16.mxu0 %v6687
      %7914 = vmatpush2.bf16.msra.mxu0 %v6686
      %7915 = vmatprep.mubr.bf16.mxu0 %v4984
      %7916 = vmatmul.mubr.bf16.gmra.mxu0 %v4983
      %v7917 = vpop.f32.mrf.mxu0
      %v7918 = vadd.f32 %v7877, %v7917
      %v7919 = vpop.f32.mrf.mxu0
      %v7920 = vadd.f32 %v7879, %v7919
      %v7921 = vpop.f32.mrf.mxu0
      %v7922 = vpop.f32.mrf.mxu0
      %7923 = vdwg.mxu0
      %7924 = vmatprep.subr.bf16.mxu0 %v6747
      %7925 = vmatpush1.bf16.msra.mxu0 %v6746
      %7926 = vmatprep.subr.bf16.mxu0 %v6743
      %7927 = vmatpush1.bf16.msra.mxu0 %v6742
      %7928 = vmatprep.subr.bf16.mxu0 %v6739
      %7929 = vmatpush1.bf16.msra.mxu0 %v6738
      %7930 = vmatprep.subr.bf16.mxu0 %v6735
      %7931 = vmatpush1.bf16.msra.mxu0 %v6734
      %7932 = vmatprep.subr.bf16.mxu0 %v6731
      %7933 = vmatpush1.bf16.msra.mxu0 %v6730
      %7934 = vmatprep.subr.bf16.mxu0 %v6727
      %7935 = vmatpush1.bf16.msra.mxu0 %v6726
      %7936 = vmatprep.subr.bf16.mxu0 %v6723
      %7937 = vmatpush1.bf16.msra.mxu0 %v6722
      %7938 = vmatprep.subr.bf16.mxu0 %v6719
      %7939 = vmatpush1.bf16.msra.mxu0 %v6718
      %7940 = vmatprep.subr.bf16.mxu0 %v6779
      %7941 = vmatpush2.bf16.msra.mxu0 %v6778
      %7942 = vmatprep.subr.bf16.mxu0 %v6775
      %7943 = vmatpush2.bf16.msra.mxu0 %v6774
      %7944 = vmatprep.subr.bf16.mxu0 %v6771
      %7945 = vmatpush2.bf16.msra.mxu0 %v6770
      %7946 = vmatprep.subr.bf16.mxu0 %v6767
      %7947 = vmatpush2.bf16.msra.mxu0 %v6766
      %7948 = vmatprep.subr.bf16.mxu0 %v6763
      %7949 = vmatpush2.bf16.msra.mxu0 %v6762
      %7950 = vmatprep.subr.bf16.mxu0 %v6759
      %7951 = vmatpush2.bf16.msra.mxu0 %v6758
      %7952 = vmatprep.subr.bf16.mxu0 %v6755
      %7953 = vmatpush2.bf16.msra.mxu0 %v6754
      %7954 = vmatprep.subr.bf16.mxu0 %v6751
      %7955 = vmatpush2.bf16.msra.mxu0 %v6750
      %7956 = vmatprep.mubr.bf16.mxu0 %v4986
      %7957 = vmatmul.mubr.bf16.gmra.mxu0 %v4985
      %v7958 = vpop.f32.mrf.mxu0
      %v7959 = vadd.f32 %v7918, %v7958
      %v7960 = vpop.f32.mrf.mxu0
      %v7961 = vadd.f32 %v7920, %v7960
      %v7962 = vpop.f32.mrf.mxu0
      %v7963 = vpop.f32.mrf.mxu0
      %7964 = vdwg.mxu0
      %7965 = vmatprep.subr.bf16.mxu0 %v6811
      %7966 = vmatpush1.bf16.msra.mxu0 %v6810
      %7967 = vmatprep.subr.bf16.mxu0 %v6807
      %7968 = vmatpush1.bf16.msra.mxu0 %v6806
      %7969 = vmatprep.subr.bf16.mxu0 %v6803
      %7970 = vmatpush1.bf16.msra.mxu0 %v6802
      %7971 = vmatprep.subr.bf16.mxu0 %v6799
      %7972 = vmatpush1.bf16.msra.mxu0 %v6798
      %7973 = vmatprep.subr.bf16.mxu0 %v6795
      %7974 = vmatpush1.bf16.msra.mxu0 %v6794
      %7975 = vmatprep.subr.bf16.mxu0 %v6791
      %7976 = vmatpush1.bf16.msra.mxu0 %v6790
      %7977 = vmatprep.subr.bf16.mxu0 %v6787
      %7978 = vmatpush1.bf16.msra.mxu0 %v6786
      %7979 = vmatprep.subr.bf16.mxu0 %v6783
      %7980 = vmatpush1.bf16.msra.mxu0 %v6782
      %7981 = vmatprep.subr.bf16.mxu0 %v6843
      %7982 = vmatpush2.bf16.msra.mxu0 %v6842
      %7983 = vmatprep.subr.bf16.mxu0 %v6839
      %7984 = vmatpush2.bf16.msra.mxu0 %v6838
      %7985 = vmatprep.subr.bf16.mxu0 %v6835
      %7986 = vmatpush2.bf16.msra.mxu0 %v6834
      %7987 = vmatprep.subr.bf16.mxu0 %v6831
      %7988 = vmatpush2.bf16.msra.mxu0 %v6830
      %7989 = vmatprep.subr.bf16.mxu0 %v6827
      %7990 = vmatpush2.bf16.msra.mxu0 %v6826
      %7991 = vmatprep.subr.bf16.mxu0 %v6823
      %7992 = vmatpush2.bf16.msra.mxu0 %v6822
      %7993 = vmatprep.subr.bf16.mxu0 %v6819
      %7994 = vmatpush2.bf16.msra.mxu0 %v6818
      %7995 = vmatprep.subr.bf16.mxu0 %v6815
      %7996 = vmatpush2.bf16.msra.mxu0 %v6814
      %7997 = vmatprep.mubr.bf16.mxu0 %v4988
      %7998 = vmatmul.mubr.bf16.gmra.mxu0 %v4987
      %v7999 = vpop.f32.mrf.mxu0
      %v8000 = vadd.f32 %v7959, %v7999
      %v8001 = vpop.f32.mrf.mxu0
      %v8002 = vadd.f32 %v7961, %v8001
      %v8003 = vpop.f32.mrf.mxu0
      %v8004 = vpop.f32.mrf.mxu0
      %8005 = vdwg.mxu0
      %8006 = vmatprep.subr.bf16.mxu0 %v6875
      %8007 = vmatpush1.bf16.msra.mxu0 %v6874
      %8008 = vmatprep.subr.bf16.mxu0 %v6871
      %8009 = vmatpush1.bf16.msra.mxu0 %v6870
      %8010 = vmatprep.subr.bf16.mxu0 %v6867
      %8011 = vmatpush1.bf16.msra.mxu0 %v6866
      %8012 = vmatprep.subr.bf16.mxu0 %v6863
      %8013 = vmatpush1.bf16.msra.mxu0 %v6862
      %8014 = vmatprep.subr.bf16.mxu0 %v6859
      %8015 = vmatpush1.bf16.msra.mxu0 %v6858
      %8016 = vmatprep.subr.bf16.mxu0 %v6855
      %8017 = vmatpush1.bf16.msra.mxu0 %v6854
      %8018 = vmatprep.subr.bf16.mxu0 %v6851
      %8019 = vmatpush1.bf16.msra.mxu0 %v6850
      %8020 = vmatprep.subr.bf16.mxu0 %v6847
      %8021 = vmatpush1.bf16.msra.mxu0 %v6846
      %8022 = vmatprep.subr.bf16.mxu0 %v6907
      %8023 = vmatpush2.bf16.msra.mxu0 %v6906
      %8024 = vmatprep.subr.bf16.mxu0 %v6903
      %8025 = vmatpush2.bf16.msra.mxu0 %v6902
      %8026 = vmatprep.subr.bf16.mxu0 %v6899
      %8027 = vmatpush2.bf16.msra.mxu0 %v6898
      %8028 = vmatprep.subr.bf16.mxu0 %v6895
      %8029 = vmatpush2.bf16.msra.mxu0 %v6894
      %8030 = vmatprep.subr.bf16.mxu0 %v6891
      %8031 = vmatpush2.bf16.msra.mxu0 %v6890
      %8032 = vmatprep.subr.bf16.mxu0 %v6887
      %8033 = vmatpush2.bf16.msra.mxu0 %v6886
      %8034 = vmatprep.subr.bf16.mxu0 %v6883
      %8035 = vmatpush2.bf16.msra.mxu0 %v6882
      %8036 = vmatprep.subr.bf16.mxu0 %v6879
      %8037 = vmatpush2.bf16.msra.mxu0 %v6878
      %8038 = vmatprep.mubr.bf16.mxu0 %v4990
      %8039 = vmatmul.mubr.bf16.gmra.mxu0 %v4989
      %v8040 = vpop.f32.mrf.mxu0
      %v8041 = vadd.f32 %v8000, %v8040
      %v8042 = vpop.f32.mrf.mxu0
      %v8043 = vadd.f32 %v8002, %v8042
      %v8044 = vpop.f32.mrf.mxu0
      %v8045 = vpop.f32.mrf.mxu0
      %8046 = vdwg.mxu0
      %8047 = vmatprep.subr.bf16.mxu0 %v6939
      %8048 = vmatpush1.bf16.msra.mxu0 %v6938
      %8049 = vmatprep.subr.bf16.mxu0 %v6935
      %8050 = vmatpush1.bf16.msra.mxu0 %v6934
      %8051 = vmatprep.subr.bf16.mxu0 %v6931
      %8052 = vmatpush1.bf16.msra.mxu0 %v6930
      %8053 = vmatprep.subr.bf16.mxu0 %v6927
      %8054 = vmatpush1.bf16.msra.mxu0 %v6926
      %8055 = vmatprep.subr.bf16.mxu0 %v6923
      %8056 = vmatpush1.bf16.msra.mxu0 %v6922
      %8057 = vmatprep.subr.bf16.mxu0 %v6919
      %8058 = vmatpush1.bf16.msra.mxu0 %v6918
      %8059 = vmatprep.subr.bf16.mxu0 %v6915
      %8060 = vmatpush1.bf16.msra.mxu0 %v6914
      %8061 = vmatprep.subr.bf16.mxu0 %v6911
      %8062 = vmatpush1.bf16.msra.mxu0 %v6910
      %8063 = vmatprep.subr.bf16.mxu0 0
      %8064 = vmatpush2.bf16.msra.mxu0 0
      %8065 = vmatprep.subr.bf16.mxu0 0
      %8066 = vmatpush2.bf16.msra.mxu0 0
      %8067 = vmatprep.subr.bf16.mxu0 0
      %8068 = vmatpush2.bf16.msra.mxu0 0
      %8069 = vmatprep.subr.bf16.mxu0 0
      %8070 = vmatpush2.bf16.msra.mxu0 0
      %8071 = vmatprep.subr.bf16.mxu0 0
      %8072 = vmatpush2.bf16.msra.mxu0 0
      %8073 = vmatprep.subr.bf16.mxu0 0
      %8074 = vmatpush2.bf16.msra.mxu0 0
      %8075 = vmatprep.subr.bf16.mxu0 0
      %8076 = vmatpush2.bf16.msra.mxu0 0
      %8077 = vmatprep.subr.bf16.mxu0 %v6943
      %8078 = vmatpush2.bf16.msra.mxu0 %v6942
      %8079 = vmatprep.mubr.bf16.mxu0 %v7430
      %8080 = vmatmul.mubr.bf16.gmra.mxu0 %v4991
      %v8081 = vpop.f32.mrf.mxu0
      %v8082 = vadd.f32 %v8041, %v8081
      %v8083 = vpop.f32.mrf.mxu0
      %v8084 = vadd.f32 %v8043, %v8083
      %v8085 = vpop.f32.mrf.mxu0
      %v8086 = vpop.f32.mrf.mxu0
      %8087 = vdwg.mxu0
      %8088 = vst [vmem:[%s170] sm:$0xff] %v7754
      %8089 = vst [vmem:[%s170 + $0x8] sm:$0xff] %v7756
      %8090 = vst [vmem:[%s170 + $0x10] sm:$0xff] %v8082
      %8091 = vst [vmem:[%s170 + $0x18] sm:$0xff] %v8084
      %p8092 = scmp.lt.s32.totalorder %s14, 1
      %s8093 = scalar_select %p8092, %s14, 1
      %s8094 = smul.addr %s8093, 4
      %s8095 = smul.addr %s8094, 8
      %s8096 = scalar_lea.vmem %s3, %s8095
      // Predicated region
      $region33: #{inception_block_v1_pallas.1} parent=31 // pred_check
        %p8097 = pneg %p100
      $region34: #{inception_block_v1_pallas.1} parent=31 // pred_check_branch
        %8099 = sbr.rel (%p8097) target = $region36
      $region35: #{inception_block_v1_pallas.1} parent=31 // pred_region
        _
      $region36: #{inception_block_v1_pallas.1} parent=31 // pred_fallthru
        _
    $region32: #{inception_block_v1_pallas.1} parent=5 // pred_fallthru
      _
    %p8100 = scmp.le.s32.totalorder 2, %s9
    // Predicated region
    $region37: #{inception_block_v1_pallas.1} parent=5 // pred_check
      %p8101 = pneg %p8100
    $region38: #{inception_block_v1_pallas.1} parent=5 // pred_check_branch
      %8103 = sbr.rel (%p8101) target = $region40
    $region39: #{inception_block_v1_pallas.1} parent=5 // pred_region
      %s8104 = ssub.s32 %s9, 2
      // Predicated region
      $region41: #{inception_block_v1_pallas.1} parent=39 // pred_check
        %p8105 = pneg %p106
      $region42: #{inception_block_v1_pallas.1} parent=39 // pred_check_branch
        %8107 = sbr.rel (%p8105) target = $region44
      $region43: #{inception_block_v1_pallas.1} parent=39 // pred_region
        %p8108 = scmp.lt.s32.totalorder %s15, 1
        %s8109 = scalar_select %p8108, %s15, 1
        %s8110 = smul.addr %s8109, 4
        %s8111 = smul.addr %s8110, 8
        %s8112 = scalar_lea.vmem %s3, %s8111
      $region44: #{inception_block_v1_pallas.1} parent=39 // pred_fallthru
        _
    $region40: #{inception_block_v1_pallas.1} parent=5 // pred_fallthru
      _
  $region6: #{inception_block_v1_pallas.1} parent=0 // loop_footer
    %s13 = sadd.s32 1, %s9
  $region7: #{inception_block_v1_pallas.1} parent=0 // loop_footer_branch
    %8 = sbr.rel target = $region3
  $region8: #{inception_block_v1_pallas.1} parent=0 // loop_exit
    _

</llo_original>
